<compile_context>
chip_gen: v6e
topology: v6e:2x2x1
jax: 0.10.0
libtpu: 0.0.40
codegen_flags: <defaults>
</compile_context>

<pallas_src>
import functools

import jax
import jax.numpy as jnp
import numpy as np
from jax.experimental import pallas as pl
from jax.experimental.pallas import tpu as pltpu

LANE = 128


def _round_up(x, m):
    return (x + m - 1) // m * m


def downblock_kernel(x_ref, w_ref, b_ref, g_ref, be_ref, o_ref, *scratch,
                     norm, pool, kh_size, kw_size, k_used):
    patch_ref = scratch[0]
    _, H, W, Cin = x_ref.shape
    Hout = H - kh_size + 1
    Wout = W - kw_size + 1
    S, Kp = patch_ref.shape

    x = x_ref[0]                                        # (H, W, Cin), input dtype

    # Zero the K-padding lanes once so stale VMEM can never reach the MXU
    # (the padded weight rows are zero, but NaN * 0 == NaN).
    if Kp > k_used:
        patch_ref[:, k_used:] = jnp.zeros((S, Kp - k_used), patch_ref.dtype)

    # im2col: build the (Hout*Wout, KH*KW*Cin) patch ONCE, taps packed along lanes.
    for ih in range(kh_size):
        for iw in range(kw_size):
            t = (ih * kw_size + iw) * Cin
            piece = x[ih:ih + Hout, iw:iw + Wout, :].reshape(S, Cin)
            patch_ref[:, t:t + Cin] = piece

    # Single fused-K matmul on the MXU (K padded to 128, Cout padded to 128 lanes).
    acc = jnp.dot(patch_ref[...], w_ref[...], preferred_element_type=jnp.float32)

    if norm:
        # InstanceNorm2d (affine, biased variance, eps=1e-5), stats over spatial.
        # The conv bias is a per-channel constant, exactly cancelled by the mean
        # subtraction -> skip the bias add entirely.
        mean = jnp.mean(acc, axis=0, keepdims=True)
        cen = acc - mean
        var = jnp.mean(cen * cen, axis=0, keepdims=True)
        acc = cen * jax.lax.rsqrt(var + 1e-5)
        acc = acc * g_ref[...] + be_ref[...]
    else:
        acc = acc + b_ref[...]

    # LeakyReLU(0.2)
    acc = jnp.where(acc >= 0, acc, 0.2 * acc)

    if pool:
        # 2x2 / stride-2 average pool (floor mode): strided-slice reads + VPU adds.
        y_ref = scratch[1]
        y_ref[...] = acc                                # (Hout*Wout, Coutp) f32 staging
        Hp, Wp = Hout // 2, Wout // 2
        for hp in range(Hp):
            r0 = (2 * hp) * Wout                        # even conv row
            r1 = r0 + Wout                              # odd conv row
            pooled = (y_ref[pl.ds(r0, Wp, stride=2), :]
                      + y_ref[pl.ds(r0 + 1, Wp, stride=2), :]
                      + y_ref[pl.ds(r1, Wp, stride=2), :]
                      + y_ref[pl.ds(r1 + 1, Wp, stride=2), :]) * 0.25
            o_ref[0, hp] = pooled.astype(o_ref.dtype)
    else:
        o_ref[0] = acc.astype(o_ref.dtype)


def down_block2d(x_nchw, weight_oihw, bias, gamma, beta, *, norm=True, pool=True):
    N, Cin, H, W = x_nchw.shape
    Cout, Cin_w, KH, KW = weight_oihw.shape
    assert Cin_w == Cin
    Hout, Wout = H - KH + 1, W - KW + 1
    Hp, Wp = Hout // 2, Wout // 2
    S = Hout * Wout
    K = KH * KW * Cin
    Kp = _round_up(K, LANE)
    Coutp = _round_up(Cout, LANE)

    dtype = x_nchw.dtype
    x = jnp.transpose(x_nchw, (0, 2, 3, 1))                          # NHWC, dtype preserved

    # (Cout, Cin, KH, KW) -> (KH, KW, Cin, Cout) -> (K, Cout), zero-padded to (Kp, Coutp).
    w = jnp.transpose(weight_oihw, (2, 3, 1, 0)).reshape(K, Cout).astype(dtype)
    w = jnp.pad(w, ((0, Kp - K), (0, Coutp - Cout)))

    def pad_vec(v):
        return jnp.pad(v.astype(jnp.float32), (0, Coutp - Cout)).reshape(1, Coutp)

    b, g, be = pad_vec(bias), pad_vec(gamma), pad_vec(beta)

    in_specs = [
        pl.BlockSpec((1, H, W, Cin), lambda n: (n, 0, 0, 0)),
        pl.BlockSpec((Kp, Coutp), lambda n: (0, 0)),
        pl.BlockSpec((1, Coutp), lambda n: (0, 0)),
        pl.BlockSpec((1, Coutp), lambda n: (0, 0)),
        pl.BlockSpec((1, Coutp), lambda n: (0, 0)),
    ]
    scratch_shapes = [pltpu.VMEM((S, Kp), dtype)]
    if pool:
        out_shape = jax.ShapeDtypeStruct((N, Hp, Wp, Coutp), dtype)
        out_spec = pl.BlockSpec((1, Hp, Wp, Coutp), lambda n: (n, 0, 0, 0))
        scratch_shapes.append(pltpu.VMEM((S, Coutp), jnp.float32))
    else:
        out_shape = jax.ShapeDtypeStruct((N, S, Coutp), dtype)
        out_spec = pl.BlockSpec((1, S, Coutp), lambda n: (n, 0, 0))

    kernel = functools.partial(downblock_kernel, norm=norm, pool=pool,
                               kh_size=KH, kw_size=KW, k_used=K)

    out = pl.pallas_call(
        kernel,
        out_shape=out_shape,
        grid_spec=pltpu.PrefetchScalarGridSpec(
            num_scalar_prefetch=0,
            grid=(N,),
            in_specs=in_specs,
            out_specs=out_spec,
            scratch_shapes=scratch_shapes,
        ),
        compiler_params=pltpu.CompilerParams(dimension_semantics=("parallel",)),
    )(x, w, b, g, be)

    out = out[..., :Cout]                                            # drop lane padding
    if pool:
        return jnp.transpose(out, (0, 3, 1, 2))                      # NCHW
    return jnp.transpose(out.reshape(N, Hout, Wout, Cout), (0, 3, 1, 2))


def ref_forward(x, weight, bias, gamma, beta, *, norm=True, pool=True):
    out = jax.lax.conv_general_dilated(
        x, weight, window_strides=(1, 1), padding="VALID",
        dimension_numbers=("NCHW", "OIHW", "NCHW"))
    out = out + bias[None, :, None, None]
    if norm:
        mean = out.mean(axis=(2, 3), keepdims=True)
        var = ((out - mean) ** 2).mean(axis=(2, 3), keepdims=True)
        out = (out - mean) / jnp.sqrt(var + 1e-5)
        out = out * gamma[None, :, None, None] + beta[None, :, None, None]
    out = jnp.where(out >= 0, out, 0.2 * out)
    if pool:
        N, C, H, W = out.shape
        Hp, Wp = H // 2, W // 2
        out = out[:, :, :Hp * 2, :Wp * 2].reshape(N, C, Hp, 2, Wp, 2).mean(axis=(3, 5))
    return out


if __name__ == "__main__":
    key = jax.random.PRNGKey(0)
    k_x, k_w, k_b, k_g, k_be = jax.random.split(key, 5)

    N, Cin, Cout, H, W, K = 2, 4, 8, 16, 16, 4

    x = jax.random.normal(k_x, (N, Cin, H, W), jnp.float32)
    weight = jax.random.normal(k_w, (Cout, Cin, K, K), jnp.float32) * 0.1   # Conv2d weight (OIHW)
    bias = jax.random.normal(k_b, (Cout,), jnp.float32) * 0.1
    gamma = 1.0 + 0.1 * jax.random.normal(k_g, (Cout,), jnp.float32)        # InstanceNorm affine
    beta = 0.1 * jax.random.normal(k_be, (Cout,), jnp.float32)

    # norm=True, pool=True (the fused discriminator configuration)
    out = jax.block_until_ready(down_block2d(x, weight, bias, gamma, beta, norm=True, pool=True))
    ref = jax.block_until_ready(ref_forward(x, weight, bias, gamma, beta, norm=True, pool=True))
    assert out.shape == ref.shape, (out.shape, ref.shape)
    np.testing.assert_allclose(np.asarray(out), np.asarray(ref), rtol=2e-3, atol=2e-3)

    # norm=False, pool=False (module defaults): bias path + un-pooled output path
    out2 = jax.block_until_ready(down_block2d(x, weight, bias, gamma, beta, norm=False, pool=False))
    ref2 = jax.block_until_ready(ref_forward(x, weight, bias, gamma, beta, norm=False, pool=False))
    assert out2.shape == ref2.shape, (out2.shape, ref2.shape)
    np.testing.assert_allclose(np.asarray(out2), np.asarray(ref2), rtol=2e-3, atol=2e-3)

    print("KERNEL_OK")
</pallas_src>

<mosaic_0001>
module attributes {stable_mosaic.version = 11 : i64} {
  func.func @downblock_kernel(%arg0: i32, %arg1: memref<1x16x16x4xf32, #tpu.memory_space<vmem>>, %arg2: memref<128x128xf32, #tpu.memory_space<vmem>>, %arg3: memref<1x128xf32, #tpu.memory_space<vmem>>, %arg4: memref<1x128xf32, #tpu.memory_space<vmem>>, %arg5: memref<1x128xf32, #tpu.memory_space<vmem>>, %arg6: memref<1x6x6x128xf32, #tpu.memory_space<vmem>>, %arg7: memref<169x128xf32, #tpu.memory_space<vmem>>, %arg8: memref<169x128xf32, #tpu.memory_space<vmem>>) attributes {dimension_semantics = [#tpu.dimension_semantics<parallel>], iteration_bounds = array<i64: 2>, scalar_prefetch = 0 : i64, scratch_operands = 2 : i64, tpu.core_type = #tpu.core_type<tc>, window_params = [{transform_indices = @transform_0, window_bounds = array<i64: 1, 16, 16, 4>}, {pipeline_mode = #tpu.pipeline_mode<synchronous>, transform_indices = @transform_1, window_bounds = array<i64: 128, 128>}, {pipeline_mode = #tpu.pipeline_mode<synchronous>, transform_indices = @transform_2, window_bounds = array<i64: 1, 128>}, {pipeline_mode = #tpu.pipeline_mode<synchronous>, transform_indices = @transform_3, window_bounds = array<i64: 1, 128>}, {pipeline_mode = #tpu.pipeline_mode<synchronous>, transform_indices = @transform_4, window_bounds = array<i64: 1, 128>}, {transform_indices = @transform_5, window_bounds = array<i64: 1, 6, 6, 128>}]} {
    %c0 = arith.constant 0 : index
    %c0_0 = arith.constant 0 : index
    %c0_1 = arith.constant 0 : index
    %c0_2 = arith.constant 0 : index
    %0 = vector.load %arg1[%c0, %c0_0, %c0_1, %c0_2] : memref<1x16x16x4xf32, #tpu.memory_space<vmem>>, vector<1x16x16x4xf32>
    %1 = vector.shape_cast %0 : vector<1x16x16x4xf32> to vector<16x16x4xf32>
    %cst = arith.constant 0.000000e+00 : f32
    %2 = vector.broadcast %cst : f32 to vector<169x64xf32>
    %c0_3 = arith.constant 0 : index
    %c64 = arith.constant 64 : index
    %3 = vector.load %arg7[%c0_3, %c64] : memref<169x128xf32, #tpu.memory_space<vmem>>, vector<169x64xf32>
    tpu.vector_store %arg7[%c0_3, %c64], %2 {strides = array<i32>} : memref<169x128xf32, #tpu.memory_space<vmem>>, vector<169x64xf32>,
    %4 = vector.extract_strided_slice %1 {offsets = [0, 0, 0], sizes = [13, 13, 4], strides = [1, 1, 1]} : vector<16x16x4xf32> to vector<13x13x4xf32>
    %5 = vector.shape_cast %4 : vector<13x13x4xf32> to vector<169x4xf32>
    %c0_4 = arith.constant 0 : index
    %c0_5 = arith.constant 0 : index
    %6 = vector.load %arg7[%c0_4, %c0_5] : memref<169x128xf32, #tpu.memory_space<vmem>>, vector<169x4xf32>
    tpu.vector_store %arg7[%c0_4, %c0_5], %5 {strides = array<i32>} : memref<169x128xf32, #tpu.memory_space<vmem>>, vector<169x4xf32>,
    %7 = vector.extract_strided_slice %1 {offsets = [0, 1, 0], sizes = [13, 13, 4], strides = [1, 1, 1]} : vector<16x16x4xf32> to vector<13x13x4xf32>
    %8 = vector.shape_cast %7 : vector<13x13x4xf32> to vector<169x4xf32>
    %c0_6 = arith.constant 0 : index
    %c4 = arith.constant 4 : index
    %9 = vector.load %arg7[%c0_6, %c4] : memref<169x128xf32, #tpu.memory_space<vmem>>, vector<169x4xf32>
    tpu.vector_store %arg7[%c0_6, %c4], %8 {strides = array<i32>} : memref<169x128xf32, #tpu.memory_space<vmem>>, vector<169x4xf32>,
    %10 = vector.extract_strided_slice %1 {offsets = [0, 2, 0], sizes = [13, 13, 4], strides = [1, 1, 1]} : vector<16x16x4xf32> to vector<13x13x4xf32>
    %11 = vector.shape_cast %10 : vector<13x13x4xf32> to vector<169x4xf32>
    %c0_7 = arith.constant 0 : index
    %c8 = arith.constant 8 : index
    %12 = vector.load %arg7[%c0_7, %c8] : memref<169x128xf32, #tpu.memory_space<vmem>>, vector<169x4xf32>
    tpu.vector_store %arg7[%c0_7, %c8], %11 {strides = array<i32>} : memref<169x128xf32, #tpu.memory_space<vmem>>, vector<169x4xf32>,
    %13 = vector.extract_strided_slice %1 {offsets = [0, 3, 0], sizes = [13, 13, 4], strides = [1, 1, 1]} : vector<16x16x4xf32> to vector<13x13x4xf32>
    %14 = vector.shape_cast %13 : vector<13x13x4xf32> to vector<169x4xf32>
    %c0_8 = arith.constant 0 : index
    %c12 = arith.constant 12 : index
    %15 = vector.load %arg7[%c0_8, %c12] : memref<169x128xf32, #tpu.memory_space<vmem>>, vector<169x4xf32>
    tpu.vector_store %arg7[%c0_8, %c12], %14 {strides = array<i32>} : memref<169x128xf32, #tpu.memory_space<vmem>>, vector<169x4xf32>,
    %16 = vector.extract_strided_slice %1 {offsets = [1, 0, 0], sizes = [13, 13, 4], strides = [1, 1, 1]} : vector<16x16x4xf32> to vector<13x13x4xf32>
    %17 = vector.shape_cast %16 : vector<13x13x4xf32> to vector<169x4xf32>
    %c0_9 = arith.constant 0 : index
    %c16 = arith.constant 16 : index
    %18 = vector.load %arg7[%c0_9, %c16] : memref<169x128xf32, #tpu.memory_space<vmem>>, vector<169x4xf32>
    tpu.vector_store %arg7[%c0_9, %c16], %17 {strides = array<i32>} : memref<169x128xf32, #tpu.memory_space<vmem>>, vector<169x4xf32>,
    %19 = vector.extract_strided_slice %1 {offsets = [1, 1, 0], sizes = [13, 13, 4], strides = [1, 1, 1]} : vector<16x16x4xf32> to vector<13x13x4xf32>
    %20 = vector.shape_cast %19 : vector<13x13x4xf32> to vector<169x4xf32>
    %c0_10 = arith.constant 0 : index
    %c20 = arith.constant 20 : index
    %21 = vector.load %arg7[%c0_10, %c20] : memref<169x128xf32, #tpu.memory_space<vmem>>, vector<169x4xf32>
    tpu.vector_store %arg7[%c0_10, %c20], %20 {strides = array<i32>} : memref<169x128xf32, #tpu.memory_space<vmem>>, vector<169x4xf32>,
    %22 = vector.extract_strided_slice %1 {offsets = [1, 2, 0], sizes = [13, 13, 4], strides = [1, 1, 1]} : vector<16x16x4xf32> to vector<13x13x4xf32>
    %23 = vector.shape_cast %22 : vector<13x13x4xf32> to vector<169x4xf32>
    %c0_11 = arith.constant 0 : index
    %c24 = arith.constant 24 : index
    %24 = vector.load %arg7[%c0_11, %c24] : memref<169x128xf32, #tpu.memory_space<vmem>>, vector<169x4xf32>
    tpu.vector_store %arg7[%c0_11, %c24], %23 {strides = array<i32>} : memref<169x128xf32, #tpu.memory_space<vmem>>, vector<169x4xf32>,
    %25 = vector.extract_strided_slice %1 {offsets = [1, 3, 0], sizes = [13, 13, 4], strides = [1, 1, 1]} : vector<16x16x4xf32> to vector<13x13x4xf32>
    %26 = vector.shape_cast %25 : vector<13x13x4xf32> to vector<169x4xf32>
    %c0_12 = arith.constant 0 : index
    %c28 = arith.constant 28 : index
    %27 = vector.load %arg7[%c0_12, %c28] : memref<169x128xf32, #tpu.memory_space<vmem>>, vector<169x4xf32>
    tpu.vector_store %arg7[%c0_12, %c28], %26 {strides = array<i32>} : memref<169x128xf32, #tpu.memory_space<vmem>>, vector<169x4xf32>,
    %28 = vector.extract_strided_slice %1 {offsets = [2, 0, 0], sizes = [13, 13, 4], strides = [1, 1, 1]} : vector<16x16x4xf32> to vector<13x13x4xf32>
    %29 = vector.shape_cast %28 : vector<13x13x4xf32> to vector<169x4xf32>
    %c0_13 = arith.constant 0 : index
    %c32 = arith.constant 32 : index
    %30 = vector.load %arg7[%c0_13, %c32] : memref<169x128xf32, #tpu.memory_space<vmem>>, vector<169x4xf32>
    tpu.vector_store %arg7[%c0_13, %c32], %29 {strides = array<i32>} : memref<169x128xf32, #tpu.memory_space<vmem>>, vector<169x4xf32>,
    %31 = vector.extract_strided_slice %1 {offsets = [2, 1, 0], sizes = [13, 13, 4], strides = [1, 1, 1]} : vector<16x16x4xf32> to vector<13x13x4xf32>
    %32 = vector.shape_cast %31 : vector<13x13x4xf32> to vector<169x4xf32>
    %c0_14 = arith.constant 0 : index
    %c36 = arith.constant 36 : index
    %33 = vector.load %arg7[%c0_14, %c36] : memref<169x128xf32, #tpu.memory_space<vmem>>, vector<169x4xf32>
    tpu.vector_store %arg7[%c0_14, %c36], %32 {strides = array<i32>} : memref<169x128xf32, #tpu.memory_space<vmem>>, vector<169x4xf32>,
    %34 = vector.extract_strided_slice %1 {offsets = [2, 2, 0], sizes = [13, 13, 4], strides = [1, 1, 1]} : vector<16x16x4xf32> to vector<13x13x4xf32>
    %35 = vector.shape_cast %34 : vector<13x13x4xf32> to vector<169x4xf32>
    %c0_15 = arith.constant 0 : index
    %c40 = arith.constant 40 : index
    %36 = vector.load %arg7[%c0_15, %c40] : memref<169x128xf32, #tpu.memory_space<vmem>>, vector<169x4xf32>
    tpu.vector_store %arg7[%c0_15, %c40], %35 {strides = array<i32>} : memref<169x128xf32, #tpu.memory_space<vmem>>, vector<169x4xf32>,
    %37 = vector.extract_strided_slice %1 {offsets = [2, 3, 0], sizes = [13, 13, 4], strides = [1, 1, 1]} : vector<16x16x4xf32> to vector<13x13x4xf32>
    %38 = vector.shape_cast %37 : vector<13x13x4xf32> to vector<169x4xf32>
    %c0_16 = arith.constant 0 : index
    %c44 = arith.constant 44 : index
    %39 = vector.load %arg7[%c0_16, %c44] : memref<169x128xf32, #tpu.memory_space<vmem>>, vector<169x4xf32>
    tpu.vector_store %arg7[%c0_16, %c44], %38 {strides = array<i32>} : memref<169x128xf32, #tpu.memory_space<vmem>>, vector<169x4xf32>,
    %40 = vector.extract_strided_slice %1 {offsets = [3, 0, 0], sizes = [13, 13, 4], strides = [1, 1, 1]} : vector<16x16x4xf32> to vector<13x13x4xf32>
    %41 = vector.shape_cast %40 : vector<13x13x4xf32> to vector<169x4xf32>
    %c0_17 = arith.constant 0 : index
    %c48 = arith.constant 48 : index
    %42 = vector.load %arg7[%c0_17, %c48] : memref<169x128xf32, #tpu.memory_space<vmem>>, vector<169x4xf32>
    tpu.vector_store %arg7[%c0_17, %c48], %41 {strides = array<i32>} : memref<169x128xf32, #tpu.memory_space<vmem>>, vector<169x4xf32>,
    %43 = vector.extract_strided_slice %1 {offsets = [3, 1, 0], sizes = [13, 13, 4], strides = [1, 1, 1]} : vector<16x16x4xf32> to vector<13x13x4xf32>
    %44 = vector.shape_cast %43 : vector<13x13x4xf32> to vector<169x4xf32>
    %c0_18 = arith.constant 0 : index
    %c52 = arith.constant 52 : index
    %45 = vector.load %arg7[%c0_18, %c52] : memref<169x128xf32, #tpu.memory_space<vmem>>, vector<169x4xf32>
    tpu.vector_store %arg7[%c0_18, %c52], %44 {strides = array<i32>} : memref<169x128xf32, #tpu.memory_space<vmem>>, vector<169x4xf32>,
    %46 = vector.extract_strided_slice %1 {offsets = [3, 2, 0], sizes = [13, 13, 4], strides = [1, 1, 1]} : vector<16x16x4xf32> to vector<13x13x4xf32>
    %47 = vector.shape_cast %46 : vector<13x13x4xf32> to vector<169x4xf32>
    %c0_19 = arith.constant 0 : index
    %c56 = arith.constant 56 : index
    %48 = vector.load %arg7[%c0_19, %c56] : memref<169x128xf32, #tpu.memory_space<vmem>>, vector<169x4xf32>
    tpu.vector_store %arg7[%c0_19, %c56], %47 {strides = array<i32>} : memref<169x128xf32, #tpu.memory_space<vmem>>, vector<169x4xf32>,
    %49 = vector.extract_strided_slice %1 {offsets = [3, 3, 0], sizes = [13, 13, 4], strides = [1, 1, 1]} : vector<16x16x4xf32> to vector<13x13x4xf32>
    %50 = vector.shape_cast %49 : vector<13x13x4xf32> to vector<169x4xf32>
    %c0_20 = arith.constant 0 : index
    %c60 = arith.constant 60 : index
    %51 = vector.load %arg7[%c0_20, %c60] : memref<169x128xf32, #tpu.memory_space<vmem>>, vector<169x4xf32>
    tpu.vector_store %arg7[%c0_20, %c60], %50 {strides = array<i32>} : memref<169x128xf32, #tpu.memory_space<vmem>>, vector<169x4xf32>,
    %c0_21 = arith.constant 0 : index
    %c0_22 = arith.constant 0 : index
    %52 = vector.load %arg7[%c0_21, %c0_22] : memref<169x128xf32, #tpu.memory_space<vmem>>, vector<169x128xf32>
    %c0_23 = arith.constant 0 : index
    %c0_24 = arith.constant 0 : index
    %53 = vector.load %arg2[%c0_23, %c0_24] : memref<128x128xf32, #tpu.memory_space<vmem>>, vector<128x128xf32>
    %cst_25 = arith.constant dense<0.000000e+00> : vector<169x128xf32>
    %54 = tpu.matmul %52, %53, %cst_25 {dimension_numbers = #tpu.dot_dimension_numbers<[1], [0], [0], [1], [0, 0, 1, 1], [], []>} : vector<169x128xf32>, vector<128x128xf32>, vector<169x128xf32> -> vector<169x128xf32>
    %cst_26 = arith.constant dense<0.000000e+00> : vector<128xf32>
    %55 = vector.multi_reduction <add>, %54, %cst_26 [0] : vector<169x128xf32> to vector<128xf32>
    %56 = vector.shape_cast %55 : vector<128xf32> to vector<1x128xf32>
    %cst_27 = arith.constant 1.690000e+02 : f32
    %57 = vector.broadcast %cst_27 : f32 to vector<1x128xf32>
    %58 = arith.divf %56, %57 : vector<1x128xf32>
    %59 = vector.broadcast %58 : vector<1x128xf32> to vector<169x128xf32>
    %60 = arith.subf %54, %59 : vector<169x128xf32>
    %61 = arith.mulf %60, %60 : vector<169x128xf32>
    %cst_28 = arith.constant dense<0.000000e+00> : vector<128xf32>
    %62 = vector.multi_reduction <add>, %61, %cst_28 [0] : vector<169x128xf32> to vector<128xf32>
    %63 = vector.shape_cast %62 : vector<128xf32> to vector<1x128xf32>
    %cst_29 = arith.constant 1.690000e+02 : f32
    %64 = vector.broadcast %cst_29 : f32 to vector<1x128xf32>
    %65 = arith.divf %63, %64 : vector<1x128xf32>
    %cst_30 = arith.constant 9.99999974E-6 : f32
    %66 = vector.broadcast %cst_30 : f32 to vector<1x128xf32>
    %67 = arith.addf %65, %66 : vector<1x128xf32>
    %68 = math.rsqrt %67 : vector<1x128xf32>
    %69 = vector.broadcast %68 : vector<1x128xf32> to vector<169x128xf32>
    %70 = arith.mulf %60, %69 : vector<169x128xf32>
    %c0_31 = arith.constant 0 : index
    %c0_32 = arith.constant 0 : index
    %71 = vector.load %arg4[%c0_31, %c0_32] : memref<1x128xf32, #tpu.memory_space<vmem>>, vector<1x128xf32>
    %72 = vector.broadcast %71 : vector<1x128xf32> to vector<169x128xf32>
    %73 = arith.mulf %70, %72 : vector<169x128xf32>
    %c0_33 = arith.constant 0 : index
    %c0_34 = arith.constant 0 : index
    %74 = vector.load %arg5[%c0_33, %c0_34] : memref<1x128xf32, #tpu.memory_space<vmem>>, vector<1x128xf32>
    %75 = vector.broadcast %74 : vector<1x128xf32> to vector<169x128xf32>
    %76 = arith.addf %73, %75 : vector<169x128xf32>
    %cst_35 = arith.constant 0.000000e+00 : f32
    %77 = vector.broadcast %cst_35 : f32 to vector<169x128xf32>
    %78 = arith.cmpf oge, %76, %77 : vector<169x128xf32>
    %cst_36 = arith.constant 2.000000e-01 : f32
    %79 = vector.broadcast %cst_36 : f32 to vector<169x128xf32>
    %80 = arith.mulf %79, %76 : vector<169x128xf32>
    %81 = arith.select %78, %76, %80 : vector<169x128xi1>, vector<169x128xf32>
    %c0_37 = arith.constant 0 : index
    %c0_38 = arith.constant 0 : index
    %82 = vector.load %arg8[%c0_37, %c0_38] : memref<169x128xf32, #tpu.memory_space<vmem>>, vector<169x128xf32>
    tpu.vector_store %arg8[%c0_37, %c0_38], %81 {strides = array<i32>} : memref<169x128xf32, #tpu.memory_space<vmem>>, vector<169x128xf32>,
    %c0_39 = arith.constant 0 : index
    %c0_40 = arith.constant 0 : index
    %83 = tpu.strided_load %arg8[%c0_39, %c0_40] {strides = array<i32: 2, 1>} : memref<169x128xf32, #tpu.memory_space<vmem>>, vector<6x128xf32>
    %c1 = arith.constant 1 : index
    %c0_41 = arith.constant 0 : index
    %84 = tpu.strided_load %arg8[%c1, %c0_41] {strides = array<i32: 2, 1>} : memref<169x128xf32, #tpu.memory_space<vmem>>, vector<6x128xf32>
    %85 = arith.addf %83, %84 : vector<6x128xf32>
    %c13 = arith.constant 13 : index
    %c0_42 = arith.constant 0 : index
    %86 = tpu.strided_load %arg8[%c13, %c0_42] {strides = array<i32: 2, 1>} : memref<169x128xf32, #tpu.memory_space<vmem>>, vector<6x128xf32>
    %87 = arith.addf %85, %86 : vector<6x128xf32>
    %c14 = arith.constant 14 : index
    %c0_43 = arith.constant 0 : index
    %88 = tpu.strided_load %arg8[%c14, %c0_43] {strides = array<i32: 2, 1>} : memref<169x128xf32, #tpu.memory_space<vmem>>, vector<6x128xf32>
    %89 = arith.addf %87, %88 : vector<6x128xf32>
    %cst_44 = arith.constant 2.500000e-01 : f32
    %90 = vector.broadcast %cst_44 : f32 to vector<6x128xf32>
    %91 = arith.mulf %89, %90 : vector<6x128xf32>
    %c0_45 = arith.constant 0 : index
    %c0_46 = arith.constant 0 : index
    %c0_47 = arith.constant 0 : index
    %c0_48 = arith.constant 0 : index
    %92 = vector.load %arg6[%c0_45, %c0_46, %c0_47, %c0_48] : memref<1x6x6x128xf32, #tpu.memory_space<vmem>>, vector<1x1x6x128xf32>
    %93 = vector.shape_cast %92 : vector<1x1x6x128xf32> to vector<6x128xf32>
    %94 = vector.shape_cast %91 : vector<6x128xf32> to vector<1x1x6x128xf32>
    tpu.vector_store %arg6[%c0_45, %c0_46, %c0_47, %c0_48], %94 {strides = array<i32>} : memref<1x6x6x128xf32, #tpu.memory_space<vmem>>, vector<1x1x6x128xf32>,
    %c26 = arith.constant 26 : index
    %c0_49 = arith.constant 0 : index
    %95 = tpu.strided_load %arg8[%c26, %c0_49] {strides = array<i32: 2, 1>} : memref<169x128xf32, #tpu.memory_space<vmem>>, vector<6x128xf32>
    %c27 = arith.constant 27 : index
    %c0_50 = arith.constant 0 : index
    %96 = tpu.strided_load %arg8[%c27, %c0_50] {strides = array<i32: 2, 1>} : memref<169x128xf32, #tpu.memory_space<vmem>>, vector<6x128xf32>
    %97 = arith.addf %95, %96 : vector<6x128xf32>
    %c39 = arith.constant 39 : index
    %c0_51 = arith.constant 0 : index
    %98 = tpu.strided_load %arg8[%c39, %c0_51] {strides = array<i32: 2, 1>} : memref<169x128xf32, #tpu.memory_space<vmem>>, vector<6x128xf32>
    %99 = arith.addf %97, %98 : vector<6x128xf32>
    %c40_52 = arith.constant 40 : index
    %c0_53 = arith.constant 0 : index
    %100 = tpu.strided_load %arg8[%c40_52, %c0_53] {strides = array<i32: 2, 1>} : memref<169x128xf32, #tpu.memory_space<vmem>>, vector<6x128xf32>
    %101 = arith.addf %99, %100 : vector<6x128xf32>
    %cst_54 = arith.constant 2.500000e-01 : f32
    %102 = vector.broadcast %cst_54 : f32 to vector<6x128xf32>
    %103 = arith.mulf %101, %102 : vector<6x128xf32>
    %c0_55 = arith.constant 0 : index
    %c1_56 = arith.constant 1 : index
    %c0_57 = arith.constant 0 : index
    %c0_58 = arith.constant 0 : index
    %104 = vector.load %arg6[%c0_55, %c1_56, %c0_57, %c0_58] : memref<1x6x6x128xf32, #tpu.memory_space<vmem>>, vector<1x1x6x128xf32>
    %105 = vector.shape_cast %104 : vector<1x1x6x128xf32> to vector<6x128xf32>
    %106 = vector.shape_cast %103 : vector<6x128xf32> to vector<1x1x6x128xf32>
    tpu.vector_store %arg6[%c0_55, %c1_56, %c0_57, %c0_58], %106 {strides = array<i32>} : memref<1x6x6x128xf32, #tpu.memory_space<vmem>>, vector<1x1x6x128xf32>,
    %c52_59 = arith.constant 52 : index
    %c0_60 = arith.constant 0 : index
    %107 = tpu.strided_load %arg8[%c52_59, %c0_60] {strides = array<i32: 2, 1>} : memref<169x128xf32, #tpu.memory_space<vmem>>, vector<6x128xf32>
    %c53 = arith.constant 53 : index
    %c0_61 = arith.constant 0 : index
    %108 = tpu.strided_load %arg8[%c53, %c0_61] {strides = array<i32: 2, 1>} : memref<169x128xf32, #tpu.memory_space<vmem>>, vector<6x128xf32>
    %109 = arith.addf %107, %108 : vector<6x128xf32>
    %c65 = arith.constant 65 : index
    %c0_62 = arith.constant 0 : index
    %110 = tpu.strided_load %arg8[%c65, %c0_62] {strides = array<i32: 2, 1>} : memref<169x128xf32, #tpu.memory_space<vmem>>, vector<6x128xf32>
    %111 = arith.addf %109, %110 : vector<6x128xf32>
    %c66 = arith.constant 66 : index
    %c0_63 = arith.constant 0 : index
    %112 = tpu.strided_load %arg8[%c66, %c0_63] {strides = array<i32: 2, 1>} : memref<169x128xf32, #tpu.memory_space<vmem>>, vector<6x128xf32>
    %113 = arith.addf %111, %112 : vector<6x128xf32>
    %cst_64 = arith.constant 2.500000e-01 : f32
    %114 = vector.broadcast %cst_64 : f32 to vector<6x128xf32>
    %115 = arith.mulf %113, %114 : vector<6x128xf32>
    %c0_65 = arith.constant 0 : index
    %c2 = arith.constant 2 : index
    %c0_66 = arith.constant 0 : index
    %c0_67 = arith.constant 0 : index
    %116 = vector.load %arg6[%c0_65, %c2, %c0_66, %c0_67] : memref<1x6x6x128xf32, #tpu.memory_space<vmem>>, vector<1x1x6x128xf32>
    %117 = vector.shape_cast %116 : vector<1x1x6x128xf32> to vector<6x128xf32>
    %118 = vector.shape_cast %115 : vector<6x128xf32> to vector<1x1x6x128xf32>
    tpu.vector_store %arg6[%c0_65, %c2, %c0_66, %c0_67], %118 {strides = array<i32>} : memref<1x6x6x128xf32, #tpu.memory_space<vmem>>, vector<1x1x6x128xf32>,
    %c78 = arith.constant 78 : index
    %c0_68 = arith.constant 0 : index
    %119 = tpu.strided_load %arg8[%c78, %c0_68] {strides = array<i32: 2, 1>} : memref<169x128xf32, #tpu.memory_space<vmem>>, vector<6x128xf32>
    %c79 = arith.constant 79 : index
    %c0_69 = arith.constant 0 : index
    %120 = tpu.strided_load %arg8[%c79, %c0_69] {strides = array<i32: 2, 1>} : memref<169x128xf32, #tpu.memory_space<vmem>>, vector<6x128xf32>
    %121 = arith.addf %119, %120 : vector<6x128xf32>
    %c91 = arith.constant 91 : index
    %c0_70 = arith.constant 0 : index
    %122 = tpu.strided_load %arg8[%c91, %c0_70] {strides = array<i32: 2, 1>} : memref<169x128xf32, #tpu.memory_space<vmem>>, vector<6x128xf32>
    %123 = arith.addf %121, %122 : vector<6x128xf32>
    %c92 = arith.constant 92 : index
    %c0_71 = arith.constant 0 : index
    %124 = tpu.strided_load %arg8[%c92, %c0_71] {strides = array<i32: 2, 1>} : memref<169x128xf32, #tpu.memory_space<vmem>>, vector<6x128xf32>
    %125 = arith.addf %123, %124 : vector<6x128xf32>
    %cst_72 = arith.constant 2.500000e-01 : f32
    %126 = vector.broadcast %cst_72 : f32 to vector<6x128xf32>
    %127 = arith.mulf %125, %126 : vector<6x128xf32>
    %c0_73 = arith.constant 0 : index
    %c3 = arith.constant 3 : index
    %c0_74 = arith.constant 0 : index
    %c0_75 = arith.constant 0 : index
    %128 = vector.load %arg6[%c0_73, %c3, %c0_74, %c0_75] : memref<1x6x6x128xf32, #tpu.memory_space<vmem>>, vector<1x1x6x128xf32>
    %129 = vector.shape_cast %128 : vector<1x1x6x128xf32> to vector<6x128xf32>
    %130 = vector.shape_cast %127 : vector<6x128xf32> to vector<1x1x6x128xf32>
    tpu.vector_store %arg6[%c0_73, %c3, %c0_74, %c0_75], %130 {strides = array<i32>} : memref<1x6x6x128xf32, #tpu.memory_space<vmem>>, vector<1x1x6x128xf32>,
    %c104 = arith.constant 104 : index
    %c0_76 = arith.constant 0 : index
    %131 = tpu.strided_load %arg8[%c104, %c0_76] {strides = array<i32: 2, 1>} : memref<169x128xf32, #tpu.memory_space<vmem>>, vector<6x128xf32>
    %c105 = arith.constant 105 : index
    %c0_77 = arith.constant 0 : index
    %132 = tpu.strided_load %arg8[%c105, %c0_77] {strides = array<i32: 2, 1>} : memref<169x128xf32, #tpu.memory_space<vmem>>, vector<6x128xf32>
    %133 = arith.addf %131, %132 : vector<6x128xf32>
    %c117 = arith.constant 117 : index
    %c0_78 = arith.constant 0 : index
    %134 = tpu.strided_load %arg8[%c117, %c0_78] {strides = array<i32: 2, 1>} : memref<169x128xf32, #tpu.memory_space<vmem>>, vector<6x128xf32>
    %135 = arith.addf %133, %134 : vector<6x128xf32>
    %c118 = arith.constant 118 : index
    %c0_79 = arith.constant 0 : index
    %136 = tpu.strided_load %arg8[%c118, %c0_79] {strides = array<i32: 2, 1>} : memref<169x128xf32, #tpu.memory_space<vmem>>, vector<6x128xf32>
    %137 = arith.addf %135, %136 : vector<6x128xf32>
    %cst_80 = arith.constant 2.500000e-01 : f32
    %138 = vector.broadcast %cst_80 : f32 to vector<6x128xf32>
    %139 = arith.mulf %137, %138 : vector<6x128xf32>
    %c0_81 = arith.constant 0 : index
    %c4_82 = arith.constant 4 : index
    %c0_83 = arith.constant 0 : index
    %c0_84 = arith.constant 0 : index
    %140 = vector.load %arg6[%c0_81, %c4_82, %c0_83, %c0_84] : memref<1x6x6x128xf32, #tpu.memory_space<vmem>>, vector<1x1x6x128xf32>
    %141 = vector.shape_cast %140 : vector<1x1x6x128xf32> to vector<6x128xf32>
    %142 = vector.shape_cast %139 : vector<6x128xf32> to vector<1x1x6x128xf32>
    tpu.vector_store %arg6[%c0_81, %c4_82, %c0_83, %c0_84], %142 {strides = array<i32>} : memref<1x6x6x128xf32, #tpu.memory_space<vmem>>, vector<1x1x6x128xf32>,
    %c130 = arith.constant 130 : index
    %c0_85 = arith.constant 0 : index
    %143 = tpu.strided_load %arg8[%c130, %c0_85] {strides = array<i32: 2, 1>} : memref<169x128xf32, #tpu.memory_space<vmem>>, vector<6x128xf32>
    %c131 = arith.constant 131 : index
    %c0_86 = arith.constant 0 : index
    %144 = tpu.strided_load %arg8[%c131, %c0_86] {strides = array<i32: 2, 1>} : memref<169x128xf32, #tpu.memory_space<vmem>>, vector<6x128xf32>
    %145 = arith.addf %143, %144 : vector<6x128xf32>
    %c143 = arith.constant 143 : index
    %c0_87 = arith.constant 0 : index
    %146 = tpu.strided_load %arg8[%c143, %c0_87] {strides = array<i32: 2, 1>} : memref<169x128xf32, #tpu.memory_space<vmem>>, vector<6x128xf32>
    %147 = arith.addf %145, %146 : vector<6x128xf32>
    %c144 = arith.constant 144 : index
    %c0_88 = arith.constant 0 : index
    %148 = tpu.strided_load %arg8[%c144, %c0_88] {strides = array<i32: 2, 1>} : memref<169x128xf32, #tpu.memory_space<vmem>>, vector<6x128xf32>
    %149 = arith.addf %147, %148 : vector<6x128xf32>
    %cst_89 = arith.constant 2.500000e-01 : f32
    %150 = vector.broadcast %cst_89 : f32 to vector<6x128xf32>
    %151 = arith.mulf %149, %150 : vector<6x128xf32>
    %c0_90 = arith.constant 0 : index
    %c5 = arith.constant 5 : index
    %c0_91 = arith.constant 0 : index
    %c0_92 = arith.constant 0 : index
    %152 = vector.load %arg6[%c0_90, %c5, %c0_91, %c0_92] : memref<1x6x6x128xf32, #tpu.memory_space<vmem>>, vector<1x1x6x128xf32>
    %153 = vector.shape_cast %152 : vector<1x1x6x128xf32> to vector<6x128xf32>
    %154 = vector.shape_cast %151 : vector<6x128xf32> to vector<1x1x6x128xf32>
    tpu.vector_store %arg6[%c0_90, %c5, %c0_91, %c0_92], %154 {strides = array<i32>} : memref<1x6x6x128xf32, #tpu.memory_space<vmem>>, vector<1x1x6x128xf32>,
    return
  }
  func.func @transform_0(%arg0: i32) -> (i32, i32, i32, i32) {
    %c0_i32 = arith.constant 0 : i32
    %c0_i32_0 = arith.constant 0 : i32
    %c0_i32_1 = arith.constant 0 : i32
    %c0_i32_2 = arith.constant 0 : i32
    return %arg0, %c0_i32, %c0_i32_0, %c0_i32_1 : i32, i32, i32, i32
  }
  func.func @transform_1(%arg0: i32) -> (i32, i32) {
    %c0_i32 = arith.constant 0 : i32
    %c0_i32_0 = arith.constant 0 : i32
    %c0_i32_1 = arith.constant 0 : i32
    return %c0_i32, %c0_i32_0 : i32, i32
  }
  func.func @transform_2(%arg0: i32) -> (i32, i32) {
    %c0_i32 = arith.constant 0 : i32
    %c0_i32_0 = arith.constant 0 : i32
    %c0_i32_1 = arith.constant 0 : i32
    return %c0_i32, %c0_i32_0 : i32, i32
  }
  func.func @transform_3(%arg0: i32) -> (i32, i32) {
    %c0_i32 = arith.constant 0 : i32
    %c0_i32_0 = arith.constant 0 : i32
    %c0_i32_1 = arith.constant 0 : i32
    return %c0_i32, %c0_i32_0 : i32, i32
  }
  func.func @transform_4(%arg0: i32) -> (i32, i32) {
    %c0_i32 = arith.constant 0 : i32
    %c0_i32_0 = arith.constant 0 : i32
    %c0_i32_1 = arith.constant 0 : i32
    return %c0_i32, %c0_i32_0 : i32, i32
  }
  func.func @transform_5(%arg0: i32) -> (i32, i32, i32, i32) {
    %c0_i32 = arith.constant 0 : i32
    %c0_i32_0 = arith.constant 0 : i32
    %c0_i32_1 = arith.constant 0 : i32
    %c0_i32_2 = arith.constant 0 : i32
    return %arg0, %c0_i32, %c0_i32_0, %c0_i32_1 : i32, i32, i32, i32
  }
}

</mosaic_0001>

<llo_original>
// kernel: tpu_custom_call.1
$region0: #{tpu_custom_call.1}
  #allocation0 [shape = 'u32[]', space=smem, size = 0x4, offset = 0x4, fixed_abs, tag = 'smem constant byte address 0x4 - core index']
  #allocation1 [shape = 'u32[144,128]{1,0:T(1,128)}', space=vmem, size = 0x12000, scoped, tag = 'internal scratch']
  #allocation2 [shape = 'f32[169,128]{1,0:T(8,128)}', space=vmem, size = 0x16000, scoped, tag = 'scratch operand']
  #allocation3 [shape = 'f32[169,128]{1,0:T(8,128)}', space=vmem, size = 0x16000, scoped, tag = 'scratch operand']
  %s0 = inlined_call_operand.vmem [shape: f32[2,16,16,4], index: 0, kind: input, shape index: {}]
  %s1 = inlined_call_operand.vmem [shape: f32[128,128], index: 1, kind: input, shape index: {}]
  %s2 = inlined_call_operand.vmem [shape: f32[1,128], index: 2, kind: input, shape index: {}]
  %s3 = inlined_call_operand.vmem [shape: f32[1,128], index: 3, kind: input, shape index: {}]
  %s4 = inlined_call_operand.vmem [shape: f32[1,128], index: 4, kind: input, shape index: {}]
  %s5 = inlined_call_operand.vmem [shape: f32[2,6,6,128], index: 5, kind: output, shape index: {}]
  %s6 = sld [smem:[#allocation0]]
  $region53: #{tpu_custom_call.1} parent=0
    _
  %s8 = ssub.s32 1, %s6
  %s9 = scalar_select 0, %s8, %s6
  loop: start=0, step=1, limit=4
  $region2: #{tpu_custom_call.1} parent=0 // loop_pre_header
    _
  $region3: #{tpu_custom_call.1} parent=0 // loop_header
    %s11 = sphi 0, %s15
    %p12 = scmp.ge.s32.totalorder %s11, 4
    %s21 = sphi 0, %s23
    %s24 = sphi 0, %s21
    %s25 = sphi 0, %s24
    %s41 = sphi 0, %s25
    %s45 = sphi 0, %s45
    %s47 = sphi 0, %s45
    %s48 = sphi 0, %s47
    %s62 = sphi 0, %s48
    %s66 = sphi 0, %s66
    %s68 = sphi 0, %s66
    %s69 = sphi 0, %s68
    %s83 = sphi 0, %s69
    %s87 = sphi 0, %s87
    %s89 = sphi 0, %s87
    %s90 = sphi 0, %s89
    %s104 = sphi 0, %s90
    %s108 = sphi 0, %s108
    %s110 = sphi 0, %s108
    %s111 = sphi 0, %s110
    %s125 = sphi 0, %s111
    %s131 = sphi 0, %s133
    %s134 = sphi 0, %s131
    %s135 = sphi 0, %s134
    %s151 = sphi 0, %s135
  $region4: #{tpu_custom_call.1} parent=0 // loop_header_branch
    %14 = sbr.rel (%p12) target = $region8
  $region5: #{tpu_custom_call.1} parent=0 // loop_body
    %s16 = ssub.s32 %s11, 1
    %s17 = ssub.s32 %s11, 2
    %s18 = sadd.s32 %s11, 1
    %s19 = ssub.s32 %s11, %s18
    %p20 = scmp.eq.s32.totalorder %s19, 0
    %s22 = sadd.s32 %s21, 1
    %s23 = scalar_select %p20, %s21, %s22
    %p26 = pneg %p20
    %p27 = scmp.eq.s32.totalorder %s11, 1
    %p28 = por %p26, %p27
    %p29 = scmp.ne.s32.totalorder %s21, %s24
    %p30 = scmp.eq.s32.totalorder %s11, 0
    %p31 = por %p29, %p30
    %p32 = scmp.ne.s32.totalorder %s21, %s24
    %p33 = scmp.eq.s32.totalorder %s16, 1
    %p34 = por %p32, %p33
    %p35 = scmp.ne.s32.totalorder %s24, %s25
    %p36 = scmp.eq.s32.totalorder %s16, 0
    %p37 = por %p35, %p36
    %p38 = scmp.ne.s32.totalorder %s24, %s25
    %p39 = scmp.eq.s32.totalorder %s17, 1
    %p40 = por %p38, %p39
    %p42 = scmp.ne.s32.totalorder %s25, %s41
    %p43 = scmp.eq.s32.totalorder %s17, 0
    %p44 = por %p42, %p43
    %s46 = sadd.s32 %s45, 1
    %p49 = scmp.eq.s32.totalorder %s11, 1
    %p50 = scmp.ne.s32.totalorder %s45, %s47
    %p51 = scmp.eq.s32.totalorder %s11, 0
    %p52 = por %p50, %p51
    %p53 = scmp.ne.s32.totalorder %s45, %s47
    %p54 = scmp.eq.s32.totalorder %s16, 1
    %p55 = por %p53, %p54
    %p56 = scmp.ne.s32.totalorder %s47, %s48
    %p57 = scmp.eq.s32.totalorder %s16, 0
    %p58 = por %p56, %p57
    %p59 = scmp.ne.s32.totalorder %s47, %s48
    %p60 = scmp.eq.s32.totalorder %s17, 1
    %p61 = por %p59, %p60
    %p63 = scmp.ne.s32.totalorder %s48, %s62
    %p64 = scmp.eq.s32.totalorder %s17, 0
    %p65 = por %p63, %p64
    %s67 = sadd.s32 %s66, 1
    %p70 = scmp.eq.s32.totalorder %s11, 1
    %p71 = scmp.ne.s32.totalorder %s66, %s68
    %p72 = scmp.eq.s32.totalorder %s11, 0
    %p73 = por %p71, %p72
    %p74 = scmp.ne.s32.totalorder %s66, %s68
    %p75 = scmp.eq.s32.totalorder %s16, 1
    %p76 = por %p74, %p75
    %p77 = scmp.ne.s32.totalorder %s68, %s69
    %p78 = scmp.eq.s32.totalorder %s16, 0
    %p79 = por %p77, %p78
    %p80 = scmp.ne.s32.totalorder %s68, %s69
    %p81 = scmp.eq.s32.totalorder %s17, 1
    %p82 = por %p80, %p81
    %p84 = scmp.ne.s32.totalorder %s69, %s83
    %p85 = scmp.eq.s32.totalorder %s17, 0
    %p86 = por %p84, %p85
    %s88 = sadd.s32 %s87, 1
    %p91 = scmp.eq.s32.totalorder %s11, 1
    %p92 = scmp.ne.s32.totalorder %s87, %s89
    %p93 = scmp.eq.s32.totalorder %s11, 0
    %p94 = por %p92, %p93
    %p95 = scmp.ne.s32.totalorder %s87, %s89
    %p96 = scmp.eq.s32.totalorder %s16, 1
    %p97 = por %p95, %p96
    %p98 = scmp.ne.s32.totalorder %s89, %s90
    %p99 = scmp.eq.s32.totalorder %s16, 0
    %p100 = por %p98, %p99
    %p101 = scmp.ne.s32.totalorder %s89, %s90
    %p102 = scmp.eq.s32.totalorder %s17, 1
    %p103 = por %p101, %p102
    %p105 = scmp.ne.s32.totalorder %s90, %s104
    %p106 = scmp.eq.s32.totalorder %s17, 0
    %p107 = por %p105, %p106
    %s109 = sadd.s32 %s108, 1
    %p112 = scmp.eq.s32.totalorder %s11, 1
    %p113 = scmp.ne.s32.totalorder %s108, %s110
    %p114 = scmp.eq.s32.totalorder %s11, 0
    %p115 = por %p113, %p114
    %p116 = scmp.ne.s32.totalorder %s108, %s110
    %p117 = scmp.eq.s32.totalorder %s16, 1
    %p118 = por %p116, %p117
    %p119 = scmp.ne.s32.totalorder %s110, %s111
    %p120 = scmp.eq.s32.totalorder %s16, 0
    %p121 = por %p119, %p120
    %p122 = scmp.ne.s32.totalorder %s110, %s111
    %p123 = scmp.eq.s32.totalorder %s17, 1
    %p124 = por %p122, %p123
    %p126 = scmp.ne.s32.totalorder %s111, %s125
    %p127 = scmp.eq.s32.totalorder %s17, 0
    %p128 = por %p126, %p127
    %s129 = ssub.s32 %s11, %s18
    %p130 = scmp.eq.s32.totalorder %s129, 0
    %s132 = sadd.s32 %s131, 1
    %s133 = scalar_select %p130, %s131, %s132
    %p136 = pneg %p130
    %p137 = scmp.eq.s32.totalorder %s11, 1
    %p138 = por %p136, %p137
    %p139 = scmp.ne.s32.totalorder %s131, %s134
    %p140 = scmp.eq.s32.totalorder %s11, 0
    %p141 = por %p139, %p140
    %p142 = scmp.ne.s32.totalorder %s131, %s134
    %p143 = scmp.eq.s32.totalorder %s16, 1
    %p144 = por %p142, %p143
    %p145 = scmp.ne.s32.totalorder %s134, %s135
    %p146 = scmp.eq.s32.totalorder %s16, 0
    %p147 = por %p145, %p146
    %p148 = scmp.ne.s32.totalorder %s134, %s135
    %p149 = scmp.eq.s32.totalorder %s17, 1
    %p150 = por %p148, %p149
    %p152 = scmp.ne.s32.totalorder %s135, %s151
    %p153 = scmp.eq.s32.totalorder %s17, 0
    %p154 = por %p152, %p153
    %p155 = scmp.le.s32.totalorder 1, %s11
    %p156 = scmp.lt.s32.totalorder %s11, 3
    %p157 = pnand %p155, %p156
    %p158 = pneg %p157
    // Predicated region
    $region9: #{tpu_custom_call.1} parent=5 // pred_check
      _
    $region10: #{tpu_custom_call.1} parent=5 // pred_check_branch
      %160 = sbr.rel (%p157) target = $region12
    $region11: #{tpu_custom_call.1} parent=5 // pred_region
      %s161 = ssub.s32 %s11, 1
      // Predicated region
      $region13: #{tpu_custom_call.1} parent=11 // pred_check
        %p162 = pneg %p58
      $region14: #{tpu_custom_call.1} parent=11 // pred_check_branch
        %164 = sbr.rel (%p162) target = $region16
      $region15: #{tpu_custom_call.1} parent=11 // pred_region
        _
      $region16: #{tpu_custom_call.1} parent=11 // pred_fallthru
        _
      // Predicated region
      $region17: #{tpu_custom_call.1} parent=11 // pred_check
        %p165 = pneg %p79
      $region18: #{tpu_custom_call.1} parent=11 // pred_check_branch
        %167 = sbr.rel (%p165) target = $region20
      $region19: #{tpu_custom_call.1} parent=11 // pred_region
        _
      $region20: #{tpu_custom_call.1} parent=11 // pred_fallthru
        _
      // Predicated region
      $region21: #{tpu_custom_call.1} parent=11 // pred_check
        %p168 = pneg %p100
      $region22: #{tpu_custom_call.1} parent=11 // pred_check_branch
        %170 = sbr.rel (%p168) target = $region24
      $region23: #{tpu_custom_call.1} parent=11 // pred_region
        _
      $region24: #{tpu_custom_call.1} parent=11 // pred_fallthru
        _
      // Predicated region
      $region25: #{tpu_custom_call.1} parent=11 // pred_check
        %p171 = pneg %p121
      $region26: #{tpu_custom_call.1} parent=11 // pred_check_branch
        %173 = sbr.rel (%p171) target = $region28
      $region27: #{tpu_custom_call.1} parent=11 // pred_region
        _
      $region28: #{tpu_custom_call.1} parent=11 // pred_fallthru
        _
    $region12: #{tpu_custom_call.1} parent=5 // pred_fallthru
      _
    %p174 = scmp.lt.s32.totalorder %s11, 2
    // Predicated region
    $region29: #{tpu_custom_call.1} parent=5 // pred_check
      %p175 = pneg %p174
    $region30: #{tpu_custom_call.1} parent=5 // pred_check_branch
      %177 = sbr.rel (%p175) target = $region32
    $region31: #{tpu_custom_call.1} parent=5 // pred_region
      // Predicated region
      $region33: #{tpu_custom_call.1} parent=31 // pred_check
        %p178 = pneg %p31
      $region34: #{tpu_custom_call.1} parent=31 // pred_check_branch
        %180 = sbr.rel (%p178) target = $region36
      $region35: #{tpu_custom_call.1} parent=31 // pred_region
        %p181 = scmp.lt.s32.totalorder %s11, 1
        %s182 = scalar_select %p181, %s11, 1
        %s183 = smul.addr %s182, 32
        %s184 = smul.addr %s183, 8
        %s185 = scalar_lea.vmem %s0, %s184
      $region36: #{tpu_custom_call.1} parent=31 // pred_fallthru
        _
    $region32: #{tpu_custom_call.1} parent=5 // pred_fallthru
      _
    %p186 = scmp.le.s32.totalorder 1, %s11
    %p187 = scmp.lt.s32.totalorder %s11, 3
    %p188 = pnand %p186, %p187
    %p189 = pneg %p188
    // Predicated region
    $region37: #{tpu_custom_call.1} parent=5 // pred_check
      _
    $region38: #{tpu_custom_call.1} parent=5 // pred_check_branch
      %191 = sbr.rel (%p188) target = $region40
    $region39: #{tpu_custom_call.1} parent=5 // pred_region
      %s192 = ssub.s32 %s11, 1
      %p193 = scmp.lt.s32.totalorder %s16, 1
      %s194 = scalar_select %p193, %s16, 1
      %s195 = smul.addr %s194, 32
      %s196 = smul.addr %s195, 8
      %s197 = scalar_lea.vmem %s0, %s196
      %p198 = pneg %p37
      %p199 = pneg %p34
      %p200 = pneg %p58
      %p201 = pneg %p55
      %p202 = pneg %p79
      %p203 = pneg %p76
      %p204 = pneg %p100
      %p205 = pneg %p97
      %p206 = pneg %p121
      %p207 = pneg %p118
      %p208 = pneg %p147
      %p209 = pneg %p144
      %p210 = scmp.lt.s32.totalorder %s16, 1
      %s211 = scalar_select %p210, %s16, 1
      %s212 = smul.addr %s211, 6
      %s213 = smul.addr %s212, 8
      %s214 = scalar_lea.vmem %s5, %s213
      %p215 = scmp.lt.s32.totalorder %s16, 1
      %s216 = scalar_select %p215, %s16, 1
      %s217 = smul.addr %s216, 32
      %s218 = smul.addr %s217, 8
      %s219 = scalar_lea.vmem %s0, %s218
      %p220 = scmp.lt.s32.totalorder %s16, 1
      %s221 = scalar_select %p220, %s16, 1
      %s222 = smul.addr %s221, 6
      %s223 = smul.addr %s222, 8
      %s224 = scalar_lea.vmem %s5, %s223
      %v225 = vld [vmem:[%s219] sm:$0xff]
      %v226 = vld [vmem:[%s219 + $0x8] sm:$0xff]
      %v227 = vld [vmem:[%s219 + $0x10] sm:$0xff]
      %v228 = vld [vmem:[%s219 + $0x18] sm:$0xff]
      %v229 = vld [vmem:[%s219 + $0x20] sm:$0xff]
      %v230 = vld [vmem:[%s219 + $0x28] sm:$0xff]
      %v231 = vld [vmem:[%s219 + $0x30] sm:$0xff]
      %v232 = vld [vmem:[%s219 + $0x38] sm:$0xff]
      %v233 = vld [vmem:[%s219 + $0x40] sm:$0xff]
      %v234 = vld [vmem:[%s219 + $0x48] sm:$0xff]
      %v235 = vld [vmem:[%s219 + $0x50] sm:$0xff]
      %v236 = vld [vmem:[%s219 + $0x58] sm:$0xff]
      %v237 = vld [vmem:[%s219 + $0x60] sm:$0xff]
      %v238 = vld [vmem:[%s219 + $0x68] sm:$0xff]
      %v239 = vld [vmem:[%s219 + $0x70] sm:$0xff]
      %v240 = vld [vmem:[%s219 + $0x78] sm:$0xff]
      %v241 = vld [vmem:[%s219 + $0x80] sm:$0xff]
      %v242 = vld [vmem:[%s219 + $0x88] sm:$0xff]
      %v243 = vld [vmem:[%s219 + $0x90] sm:$0xff]
      %v244 = vld [vmem:[%s219 + $0x98] sm:$0xff]
      %v245 = vld [vmem:[%s219 + $0xa0] sm:$0xff]
      %v246 = vld [vmem:[%s219 + $0xa8] sm:$0xff]
      %v247 = vld [vmem:[%s219 + $0xb0] sm:$0xff]
      %v248 = vld [vmem:[%s219 + $0xb8] sm:$0xff]
      %v249 = vld [vmem:[%s219 + $0xc0] sm:$0xff]
      %v250 = vld [vmem:[%s219 + $0xc8] sm:$0xff]
      %v251 = vld [vmem:[%s219 + $0xd0] sm:$0xff]
      %v252 = vld [vmem:[%s219 + $0xd8] sm:$0xff]
      %v253 = vld [vmem:[%s219 + $0xe0] sm:$0xff]
      %v254 = vld [vmem:[%s219 + $0xe8] sm:$0xff]
      %v255 = vld [vmem:[%s219 + $0xf0] sm:$0xff]
      %v256 = vld [vmem:[%s219 + $0xf8] sm:$0xff]
      %vm257 = vcmask 1048064
      %258 = vst.msk [vmem:[#allocation2] sm:$0xff] %vm257, 0.0
      %259 = vst.msk [vmem:[#allocation2 + $0x8] sm:$0xff] %vm257, 0.0
      %260 = vst.msk [vmem:[#allocation2 + $0x10] sm:$0xff] %vm257, 0.0
      %261 = vst.msk [vmem:[#allocation2 + $0x18] sm:$0xff] %vm257, 0.0
      %262 = vst.msk [vmem:[#allocation2 + $0x20] sm:$0xff] %vm257, 0.0
      %263 = vst.msk [vmem:[#allocation2 + $0x28] sm:$0xff] %vm257, 0.0
      %264 = vst.msk [vmem:[#allocation2 + $0x30] sm:$0xff] %vm257, 0.0
      %265 = vst.msk [vmem:[#allocation2 + $0x38] sm:$0xff] %vm257, 0.0
      %266 = vst.msk [vmem:[#allocation2 + $0x40] sm:$0xff] %vm257, 0.0
      %267 = vst.msk [vmem:[#allocation2 + $0x48] sm:$0xff] %vm257, 0.0
      %268 = vst.msk [vmem:[#allocation2 + $0x50] sm:$0xff] %vm257, 0.0
      %269 = vst.msk [vmem:[#allocation2 + $0x58] sm:$0xff] %vm257, 0.0
      %270 = vst.msk [vmem:[#allocation2 + $0x60] sm:$0xff] %vm257, 0.0
      %271 = vst.msk [vmem:[#allocation2 + $0x68] sm:$0xff] %vm257, 0.0
      %272 = vst.msk [vmem:[#allocation2 + $0x70] sm:$0xff] %vm257, 0.0
      %273 = vst.msk [vmem:[#allocation2 + $0x78] sm:$0xff] %vm257, 0.0
      %274 = vst.msk [vmem:[#allocation2 + $0x80] sm:$0xff] %vm257, 0.0
      %275 = vst.msk [vmem:[#allocation2 + $0x88] sm:$0xff] %vm257, 0.0
      %276 = vst.msk [vmem:[#allocation2 + $0x90] sm:$0xff] %vm257, 0.0
      %277 = vst.msk [vmem:[#allocation2 + $0x98] sm:$0xff] %vm257, 0.0
      %278 = vst.msk [vmem:[#allocation2 + $0xa0] sm:$0xff] %vm257, 0.0
      %vm279 = vcmask 1040896
      %280 = vst.msk [vmem:[#allocation2 + $0xa8] sm:$0x1] %vm279, 0.0
      %v307 = vcombine.high %v225, %v225
      %v309 = vunpack.c.l.s4 1966171168
      %v310 = vunpack.c.0.s8 %v309
      %v311 = vlaneseq
      %v312 = vshrl.u32 %v311, 7
      %v313 = vsub.s32 %v310, %v312
      %v314 = vrot.slane %v225, %v313
      %v316 = vunpack.c.l.s4 1966171168
      %v317 = vunpack.c.0.s8 %v316
      %v318 = vlaneseq
      %v319 = vshrl.u32 %v318, 7
      %v320 = vsub.s32 %v317, %v319
      %v321 = vrot.slane %v307, %v320
      %v322 = vcombine.high %v314, %v314
      %v323 = vcombine.high %v321, %v321
      %v325 = vunpack.c.l.s4 1966171168
      %v326 = vunpack.c.0.s8 %v325
      %v327 = vlaneseq
      %v328 = vshrl.u32 %v327, 7
      %v329 = vsub.s32 %v326, %v328
      %v330 = vrot.slane %v314, %v329
      %v332 = vunpack.c.l.s4 1966171168
      %v333 = vunpack.c.0.s8 %v332
      %v334 = vlaneseq
      %v335 = vshrl.u32 %v334, 7
      %v336 = vsub.s32 %v333, %v335
      %v337 = vrot.slane %v321, %v336
      %v339 = vunpack.c.l.s4 1966171168
      %v340 = vunpack.c.0.s8 %v339
      %v341 = vlaneseq
      %v342 = vshrl.u32 %v341, 7
      %v343 = vsub.s32 %v340, %v342
      %v344 = vrot.slane %v322, %v343
      %v346 = vunpack.c.l.s4 1966171168
      %v347 = vunpack.c.0.s8 %v346
      %v348 = vlaneseq
      %v349 = vshrl.u32 %v348, 7
      %v350 = vsub.s32 %v347, %v349
      %v351 = vrot.slane %v323, %v350
      %v352 = vcombine.high %v330, %v330
      %v353 = vcombine.high %v337, %v337
      %v354 = vcombine.high %v344, %v344
      %v355 = vcombine.high %v351, %v351
      %v356 = vcombine.high %v226, %v226
      %v358 = vunpack.c.l.s4 1966171168
      %v359 = vunpack.c.0.s8 %v358
      %v360 = vlaneseq
      %v361 = vshrl.u32 %v360, 7
      %v362 = vsub.s32 %v359, %v361
      %v363 = vrot.slane %v226, %v362
      %v365 = vunpack.c.l.s4 1966171168
      %v366 = vunpack.c.0.s8 %v365
      %v367 = vlaneseq
      %v368 = vshrl.u32 %v367, 7
      %v369 = vsub.s32 %v366, %v368
      %v370 = vrot.slane %v356, %v369
      %v371 = vcombine.high %v363, %v363
      %v373 = vunpack.c.l.s4 1966171168
      %v374 = vunpack.c.0.s8 %v373
      %v375 = vlaneseq
      %v376 = vshrl.u32 %v375, 7
      %v377 = vsub.s32 %v374, %v376
      %v378 = vrot.slane %v363, %v377
      %v380 = vunpack.c.l.s4 1966171168
      %v381 = vunpack.c.0.s8 %v380
      %v382 = vlaneseq
      %v383 = vshrl.u32 %v382, 7
      %v384 = vsub.s32 %v381, %v383
      %v385 = vrot.slane %v370, %v384
      %v387 = vunpack.c.l.s4 1966171168
      %v388 = vunpack.c.0.s8 %v387
      %v389 = vlaneseq
      %v390 = vshrl.u32 %v389, 7
      %v391 = vsub.s32 %v388, %v390
      %v392 = vrot.slane %v371, %v391
      %v393 = vcombine.high %v378, %v378
      %v394 = vcombine.high %v392, %v392
      %v395 = vcombine.high %v227, %v227
      %v397 = vunpack.c.l.s4 1966171168
      %v398 = vunpack.c.0.s8 %v397
      %v399 = vlaneseq
      %v400 = vshrl.u32 %v399, 7
      %v401 = vsub.s32 %v398, %v400
      %v402 = vrot.slane %v227, %v401
      %v404 = vunpack.c.l.s4 1966171168
      %v405 = vunpack.c.0.s8 %v404
      %v406 = vlaneseq
      %v407 = vshrl.u32 %v406, 7
      %v408 = vsub.s32 %v405, %v407
      %v409 = vrot.slane %v395, %v408
      %v410 = vcombine.high %v402, %v402
      %v411 = vcombine.high %v409, %v409
      %v413 = vunpack.c.l.s4 1966171168
      %v414 = vunpack.c.0.s8 %v413
      %v415 = vlaneseq
      %v416 = vshrl.u32 %v415, 7
      %v417 = vsub.s32 %v414, %v416
      %v418 = vrot.slane %v402, %v417
      %v420 = vunpack.c.l.s4 1966171168
      %v421 = vunpack.c.0.s8 %v420
      %v422 = vlaneseq
      %v423 = vshrl.u32 %v422, 7
      %v424 = vsub.s32 %v421, %v423
      %v425 = vrot.slane %v409, %v424
      %v427 = vunpack.c.l.s4 1966171168
      %v428 = vunpack.c.0.s8 %v427
      %v429 = vlaneseq
      %v430 = vshrl.u32 %v429, 7
      %v431 = vsub.s32 %v428, %v430
      %v432 = vrot.slane %v410, %v431
      %v434 = vunpack.c.l.s4 1966171168
      %v435 = vunpack.c.0.s8 %v434
      %v436 = vlaneseq
      %v437 = vshrl.u32 %v436, 7
      %v438 = vsub.s32 %v435, %v437
      %v439 = vrot.slane %v411, %v438
      %v440 = vcombine.high %v418, %v418
      %v441 = vcombine.high %v425, %v425
      %v442 = vcombine.high %v432, %v432
      %v443 = vcombine.high %v439, %v439
      %v444 = vcombine.high %v228, %v228
      %v446 = vunpack.c.l.s4 1966171168
      %v447 = vunpack.c.0.s8 %v446
      %v448 = vlaneseq
      %v449 = vshrl.u32 %v448, 7
      %v450 = vsub.s32 %v447, %v449
      %v451 = vrot.slane %v228, %v450
      %v453 = vunpack.c.l.s4 1966171168
      %v454 = vunpack.c.0.s8 %v453
      %v455 = vlaneseq
      %v456 = vshrl.u32 %v455, 7
      %v457 = vsub.s32 %v454, %v456
      %v458 = vrot.slane %v444, %v457
      %v459 = vcombine.high %v451, %v451
      %v461 = vunpack.c.l.s4 1966171168
      %v462 = vunpack.c.0.s8 %v461
      %v463 = vlaneseq
      %v464 = vshrl.u32 %v463, 7
      %v465 = vsub.s32 %v462, %v464
      %v466 = vrot.slane %v451, %v465
      %v468 = vunpack.c.l.s4 1966171168
      %v469 = vunpack.c.0.s8 %v468
      %v470 = vlaneseq
      %v471 = vshrl.u32 %v470, 7
      %v472 = vsub.s32 %v469, %v471
      %v473 = vrot.slane %v458, %v472
      %v475 = vunpack.c.l.s4 1966171168
      %v476 = vunpack.c.0.s8 %v475
      %v477 = vlaneseq
      %v478 = vshrl.u32 %v477, 7
      %v479 = vsub.s32 %v476, %v478
      %v480 = vrot.slane %v459, %v479
      %v481 = vcombine.high %v466, %v466
      %v482 = vcombine.high %v480, %v480
      %v483 = vcombine.high %v229, %v229
      %v485 = vunpack.c.l.s4 1966171168
      %v486 = vunpack.c.0.s8 %v485
      %v487 = vlaneseq
      %v488 = vshrl.u32 %v487, 7
      %v489 = vsub.s32 %v486, %v488
      %v490 = vrot.slane %v229, %v489
      %v492 = vunpack.c.l.s4 1966171168
      %v493 = vunpack.c.0.s8 %v492
      %v494 = vlaneseq
      %v495 = vshrl.u32 %v494, 7
      %v496 = vsub.s32 %v493, %v495
      %v497 = vrot.slane %v483, %v496
      %v498 = vcombine.high %v490, %v490
      %v499 = vcombine.high %v497, %v497
      %v501 = vunpack.c.l.s4 1966171168
      %v502 = vunpack.c.0.s8 %v501
      %v503 = vlaneseq
      %v504 = vshrl.u32 %v503, 7
      %v505 = vsub.s32 %v502, %v504
      %v506 = vrot.slane %v490, %v505
      %v508 = vunpack.c.l.s4 1966171168
      %v509 = vunpack.c.0.s8 %v508
      %v510 = vlaneseq
      %v511 = vshrl.u32 %v510, 7
      %v512 = vsub.s32 %v509, %v511
      %v513 = vrot.slane %v497, %v512
      %v515 = vunpack.c.l.s4 1966171168
      %v516 = vunpack.c.0.s8 %v515
      %v517 = vlaneseq
      %v518 = vshrl.u32 %v517, 7
      %v519 = vsub.s32 %v516, %v518
      %v520 = vrot.slane %v498, %v519
      %v522 = vunpack.c.l.s4 1966171168
      %v523 = vunpack.c.0.s8 %v522
      %v524 = vlaneseq
      %v525 = vshrl.u32 %v524, 7
      %v526 = vsub.s32 %v523, %v525
      %v527 = vrot.slane %v499, %v526
      %v528 = vcombine.high %v506, %v506
      %v529 = vcombine.high %v513, %v513
      %v530 = vcombine.high %v520, %v520
      %v531 = vcombine.high %v527, %v527
      %v532 = vcombine.high %v230, %v230
      %v534 = vunpack.c.l.s4 1966171168
      %v535 = vunpack.c.0.s8 %v534
      %v536 = vlaneseq
      %v537 = vshrl.u32 %v536, 7
      %v538 = vsub.s32 %v535, %v537
      %v539 = vrot.slane %v230, %v538
      %v541 = vunpack.c.l.s4 1966171168
      %v542 = vunpack.c.0.s8 %v541
      %v543 = vlaneseq
      %v544 = vshrl.u32 %v543, 7
      %v545 = vsub.s32 %v542, %v544
      %v546 = vrot.slane %v532, %v545
      %v547 = vcombine.high %v539, %v539
      %v549 = vunpack.c.l.s4 1966171168
      %v550 = vunpack.c.0.s8 %v549
      %v551 = vlaneseq
      %v552 = vshrl.u32 %v551, 7
      %v553 = vsub.s32 %v550, %v552
      %v554 = vrot.slane %v539, %v553
      %v556 = vunpack.c.l.s4 1966171168
      %v557 = vunpack.c.0.s8 %v556
      %v558 = vlaneseq
      %v559 = vshrl.u32 %v558, 7
      %v560 = vsub.s32 %v557, %v559
      %v561 = vrot.slane %v546, %v560
      %v563 = vunpack.c.l.s4 1966171168
      %v564 = vunpack.c.0.s8 %v563
      %v565 = vlaneseq
      %v566 = vshrl.u32 %v565, 7
      %v567 = vsub.s32 %v564, %v566
      %v568 = vrot.slane %v547, %v567
      %v569 = vcombine.high %v554, %v554
      %v570 = vcombine.high %v568, %v568
      %v571 = vcombine.high %v231, %v231
      %v573 = vunpack.c.l.s4 1966171168
      %v574 = vunpack.c.0.s8 %v573
      %v575 = vlaneseq
      %v576 = vshrl.u32 %v575, 7
      %v577 = vsub.s32 %v574, %v576
      %v578 = vrot.slane %v231, %v577
      %v580 = vunpack.c.l.s4 1966171168
      %v581 = vunpack.c.0.s8 %v580
      %v582 = vlaneseq
      %v583 = vshrl.u32 %v582, 7
      %v584 = vsub.s32 %v581, %v583
      %v585 = vrot.slane %v571, %v584
      %v586 = vcombine.high %v578, %v578
      %v587 = vcombine.high %v585, %v585
      %v589 = vunpack.c.l.s4 1966171168
      %v590 = vunpack.c.0.s8 %v589
      %v591 = vlaneseq
      %v592 = vshrl.u32 %v591, 7
      %v593 = vsub.s32 %v590, %v592
      %v594 = vrot.slane %v578, %v593
      %v596 = vunpack.c.l.s4 1966171168
      %v597 = vunpack.c.0.s8 %v596
      %v598 = vlaneseq
      %v599 = vshrl.u32 %v598, 7
      %v600 = vsub.s32 %v597, %v599
      %v601 = vrot.slane %v585, %v600
      %v603 = vunpack.c.l.s4 1966171168
      %v604 = vunpack.c.0.s8 %v603
      %v605 = vlaneseq
      %v606 = vshrl.u32 %v605, 7
      %v607 = vsub.s32 %v604, %v606
      %v608 = vrot.slane %v586, %v607
      %v610 = vunpack.c.l.s4 1966171168
      %v611 = vunpack.c.0.s8 %v610
      %v612 = vlaneseq
      %v613 = vshrl.u32 %v612, 7
      %v614 = vsub.s32 %v611, %v613
      %v615 = vrot.slane %v587, %v614
      %v616 = vcombine.high %v594, %v594
      %v617 = vcombine.high %v601, %v601
      %v618 = vcombine.high %v608, %v608
      %v619 = vcombine.high %v615, %v615
      %v620 = vcombine.high %v232, %v232
      %v622 = vunpack.c.l.s4 1966171168
      %v623 = vunpack.c.0.s8 %v622
      %v624 = vlaneseq
      %v625 = vshrl.u32 %v624, 7
      %v626 = vsub.s32 %v623, %v625
      %v627 = vrot.slane %v232, %v626
      %v629 = vunpack.c.l.s4 1966171168
      %v630 = vunpack.c.0.s8 %v629
      %v631 = vlaneseq
      %v632 = vshrl.u32 %v631, 7
      %v633 = vsub.s32 %v630, %v632
      %v634 = vrot.slane %v620, %v633
      %v635 = vcombine.high %v627, %v627
      %v637 = vunpack.c.l.s4 1966171168
      %v638 = vunpack.c.0.s8 %v637
      %v639 = vlaneseq
      %v640 = vshrl.u32 %v639, 7
      %v641 = vsub.s32 %v638, %v640
      %v642 = vrot.slane %v627, %v641
      %v644 = vunpack.c.l.s4 1966171168
      %v645 = vunpack.c.0.s8 %v644
      %v646 = vlaneseq
      %v647 = vshrl.u32 %v646, 7
      %v648 = vsub.s32 %v645, %v647
      %v649 = vrot.slane %v634, %v648
      %v651 = vunpack.c.l.s4 1966171168
      %v652 = vunpack.c.0.s8 %v651
      %v653 = vlaneseq
      %v654 = vshrl.u32 %v653, 7
      %v655 = vsub.s32 %v652, %v654
      %v656 = vrot.slane %v635, %v655
      %v657 = vcombine.high %v642, %v642
      %v658 = vcombine.high %v656, %v656
      %v659 = vcombine.high %v233, %v233
      %v661 = vunpack.c.l.s4 1966171168
      %v662 = vunpack.c.0.s8 %v661
      %v663 = vlaneseq
      %v664 = vshrl.u32 %v663, 7
      %v665 = vsub.s32 %v662, %v664
      %v666 = vrot.slane %v233, %v665
      %v668 = vunpack.c.l.s4 1966171168
      %v669 = vunpack.c.0.s8 %v668
      %v670 = vlaneseq
      %v671 = vshrl.u32 %v670, 7
      %v672 = vsub.s32 %v669, %v671
      %v673 = vrot.slane %v659, %v672
      %v674 = vcombine.high %v666, %v666
      %v675 = vcombine.high %v673, %v673
      %v677 = vunpack.c.l.s4 1966171168
      %v678 = vunpack.c.0.s8 %v677
      %v679 = vlaneseq
      %v680 = vshrl.u32 %v679, 7
      %v681 = vsub.s32 %v678, %v680
      %v682 = vrot.slane %v666, %v681
      %v684 = vunpack.c.l.s4 1966171168
      %v685 = vunpack.c.0.s8 %v684
      %v686 = vlaneseq
      %v687 = vshrl.u32 %v686, 7
      %v688 = vsub.s32 %v685, %v687
      %v689 = vrot.slane %v673, %v688
      %v691 = vunpack.c.l.s4 1966171168
      %v692 = vunpack.c.0.s8 %v691
      %v693 = vlaneseq
      %v694 = vshrl.u32 %v693, 7
      %v695 = vsub.s32 %v692, %v694
      %v696 = vrot.slane %v674, %v695
      %v698 = vunpack.c.l.s4 1966171168
      %v699 = vunpack.c.0.s8 %v698
      %v700 = vlaneseq
      %v701 = vshrl.u32 %v700, 7
      %v702 = vsub.s32 %v699, %v701
      %v703 = vrot.slane %v675, %v702
      %v704 = vcombine.high %v682, %v682
      %v705 = vcombine.high %v689, %v689
      %v706 = vcombine.high %v696, %v696
      %v707 = vcombine.high %v703, %v703
      %v708 = vcombine.high %v234, %v234
      %v710 = vunpack.c.l.s4 1966171168
      %v711 = vunpack.c.0.s8 %v710
      %v712 = vlaneseq
      %v713 = vshrl.u32 %v712, 7
      %v714 = vsub.s32 %v711, %v713
      %v715 = vrot.slane %v234, %v714
      %v717 = vunpack.c.l.s4 1966171168
      %v718 = vunpack.c.0.s8 %v717
      %v719 = vlaneseq
      %v720 = vshrl.u32 %v719, 7
      %v721 = vsub.s32 %v718, %v720
      %v722 = vrot.slane %v708, %v721
      %v723 = vcombine.high %v715, %v715
      %v725 = vunpack.c.l.s4 1966171168
      %v726 = vunpack.c.0.s8 %v725
      %v727 = vlaneseq
      %v728 = vshrl.u32 %v727, 7
      %v729 = vsub.s32 %v726, %v728
      %v730 = vrot.slane %v715, %v729
      %v732 = vunpack.c.l.s4 1966171168
      %v733 = vunpack.c.0.s8 %v732
      %v734 = vlaneseq
      %v735 = vshrl.u32 %v734, 7
      %v736 = vsub.s32 %v733, %v735
      %v737 = vrot.slane %v722, %v736
      %v739 = vunpack.c.l.s4 1966171168
      %v740 = vunpack.c.0.s8 %v739
      %v741 = vlaneseq
      %v742 = vshrl.u32 %v741, 7
      %v743 = vsub.s32 %v740, %v742
      %v744 = vrot.slane %v723, %v743
      %v745 = vcombine.high %v730, %v730
      %v746 = vcombine.high %v744, %v744
      %v747 = vcombine.high %v235, %v235
      %v749 = vunpack.c.l.s4 1966171168
      %v750 = vunpack.c.0.s8 %v749
      %v751 = vlaneseq
      %v752 = vshrl.u32 %v751, 7
      %v753 = vsub.s32 %v750, %v752
      %v754 = vrot.slane %v235, %v753
      %v756 = vunpack.c.l.s4 1966171168
      %v757 = vunpack.c.0.s8 %v756
      %v758 = vlaneseq
      %v759 = vshrl.u32 %v758, 7
      %v760 = vsub.s32 %v757, %v759
      %v761 = vrot.slane %v747, %v760
      %v762 = vcombine.high %v754, %v754
      %v763 = vcombine.high %v761, %v761
      %v765 = vunpack.c.l.s4 1966171168
      %v766 = vunpack.c.0.s8 %v765
      %v767 = vlaneseq
      %v768 = vshrl.u32 %v767, 7
      %v769 = vsub.s32 %v766, %v768
      %v770 = vrot.slane %v754, %v769
      %v772 = vunpack.c.l.s4 1966171168
      %v773 = vunpack.c.0.s8 %v772
      %v774 = vlaneseq
      %v775 = vshrl.u32 %v774, 7
      %v776 = vsub.s32 %v773, %v775
      %v777 = vrot.slane %v761, %v776
      %v779 = vunpack.c.l.s4 1966171168
      %v780 = vunpack.c.0.s8 %v779
      %v781 = vlaneseq
      %v782 = vshrl.u32 %v781, 7
      %v783 = vsub.s32 %v780, %v782
      %v784 = vrot.slane %v762, %v783
      %v786 = vunpack.c.l.s4 1966171168
      %v787 = vunpack.c.0.s8 %v786
      %v788 = vlaneseq
      %v789 = vshrl.u32 %v788, 7
      %v790 = vsub.s32 %v787, %v789
      %v791 = vrot.slane %v763, %v790
      %v792 = vcombine.high %v770, %v770
      %v793 = vcombine.high %v777, %v777
      %v794 = vcombine.high %v784, %v784
      %v795 = vcombine.high %v791, %v791
      %v796 = vcombine.high %v236, %v236
      %v798 = vunpack.c.l.s4 1966171168
      %v799 = vunpack.c.0.s8 %v798
      %v800 = vlaneseq
      %v801 = vshrl.u32 %v800, 7
      %v802 = vsub.s32 %v799, %v801
      %v803 = vrot.slane %v236, %v802
      %v805 = vunpack.c.l.s4 1966171168
      %v806 = vunpack.c.0.s8 %v805
      %v807 = vlaneseq
      %v808 = vshrl.u32 %v807, 7
      %v809 = vsub.s32 %v806, %v808
      %v810 = vrot.slane %v796, %v809
      %v811 = vcombine.high %v803, %v803
      %v813 = vunpack.c.l.s4 1966171168
      %v814 = vunpack.c.0.s8 %v813
      %v815 = vlaneseq
      %v816 = vshrl.u32 %v815, 7
      %v817 = vsub.s32 %v814, %v816
      %v818 = vrot.slane %v803, %v817
      %v820 = vunpack.c.l.s4 1966171168
      %v821 = vunpack.c.0.s8 %v820
      %v822 = vlaneseq
      %v823 = vshrl.u32 %v822, 7
      %v824 = vsub.s32 %v821, %v823
      %v825 = vrot.slane %v810, %v824
      %v827 = vunpack.c.l.s4 1966171168
      %v828 = vunpack.c.0.s8 %v827
      %v829 = vlaneseq
      %v830 = vshrl.u32 %v829, 7
      %v831 = vsub.s32 %v828, %v830
      %v832 = vrot.slane %v811, %v831
      %v833 = vcombine.high %v818, %v818
      %v834 = vcombine.high %v832, %v832
      %v835 = vcombine.high %v237, %v237
      %v837 = vunpack.c.l.s4 1966171168
      %v838 = vunpack.c.0.s8 %v837
      %v839 = vlaneseq
      %v840 = vshrl.u32 %v839, 7
      %v841 = vsub.s32 %v838, %v840
      %v842 = vrot.slane %v237, %v841
      %v844 = vunpack.c.l.s4 1966171168
      %v845 = vunpack.c.0.s8 %v844
      %v846 = vlaneseq
      %v847 = vshrl.u32 %v846, 7
      %v848 = vsub.s32 %v845, %v847
      %v849 = vrot.slane %v835, %v848
      %v850 = vcombine.high %v842, %v842
      %v851 = vcombine.high %v849, %v849
      %v853 = vunpack.c.l.s4 1966171168
      %v854 = vunpack.c.0.s8 %v853
      %v855 = vlaneseq
      %v856 = vshrl.u32 %v855, 7
      %v857 = vsub.s32 %v854, %v856
      %v858 = vrot.slane %v842, %v857
      %v860 = vunpack.c.l.s4 1966171168
      %v861 = vunpack.c.0.s8 %v860
      %v862 = vlaneseq
      %v863 = vshrl.u32 %v862, 7
      %v864 = vsub.s32 %v861, %v863
      %v865 = vrot.slane %v849, %v864
      %v867 = vunpack.c.l.s4 1966171168
      %v868 = vunpack.c.0.s8 %v867
      %v869 = vlaneseq
      %v870 = vshrl.u32 %v869, 7
      %v871 = vsub.s32 %v868, %v870
      %v872 = vrot.slane %v850, %v871
      %v874 = vunpack.c.l.s4 1966171168
      %v875 = vunpack.c.0.s8 %v874
      %v876 = vlaneseq
      %v877 = vshrl.u32 %v876, 7
      %v878 = vsub.s32 %v875, %v877
      %v879 = vrot.slane %v851, %v878
      %v880 = vcombine.high %v858, %v858
      %v881 = vcombine.high %v865, %v865
      %v882 = vcombine.high %v872, %v872
      %v883 = vcombine.high %v879, %v879
      %v884 = vcombine.high %v238, %v238
      %v886 = vunpack.c.l.s4 1966171168
      %v887 = vunpack.c.0.s8 %v886
      %v888 = vlaneseq
      %v889 = vshrl.u32 %v888, 7
      %v890 = vsub.s32 %v887, %v889
      %v891 = vrot.slane %v238, %v890
      %v893 = vunpack.c.l.s4 1966171168
      %v894 = vunpack.c.0.s8 %v893
      %v895 = vlaneseq
      %v896 = vshrl.u32 %v895, 7
      %v897 = vsub.s32 %v894, %v896
      %v898 = vrot.slane %v884, %v897
      %v899 = vcombine.high %v891, %v891
      %v901 = vunpack.c.l.s4 1966171168
      %v902 = vunpack.c.0.s8 %v901
      %v903 = vlaneseq
      %v904 = vshrl.u32 %v903, 7
      %v905 = vsub.s32 %v902, %v904
      %v906 = vrot.slane %v891, %v905
      %v908 = vunpack.c.l.s4 1966171168
      %v909 = vunpack.c.0.s8 %v908
      %v910 = vlaneseq
      %v911 = vshrl.u32 %v910, 7
      %v912 = vsub.s32 %v909, %v911
      %v913 = vrot.slane %v898, %v912
      %v915 = vunpack.c.l.s4 1966171168
      %v916 = vunpack.c.0.s8 %v915
      %v917 = vlaneseq
      %v918 = vshrl.u32 %v917, 7
      %v919 = vsub.s32 %v916, %v918
      %v920 = vrot.slane %v899, %v919
      %v921 = vcombine.high %v906, %v906
      %v922 = vcombine.high %v920, %v920
      %v923 = vcombine.high %v239, %v239
      %v925 = vunpack.c.l.s4 1966171168
      %v926 = vunpack.c.0.s8 %v925
      %v927 = vlaneseq
      %v928 = vshrl.u32 %v927, 7
      %v929 = vsub.s32 %v926, %v928
      %v930 = vrot.slane %v239, %v929
      %v932 = vunpack.c.l.s4 1966171168
      %v933 = vunpack.c.0.s8 %v932
      %v934 = vlaneseq
      %v935 = vshrl.u32 %v934, 7
      %v936 = vsub.s32 %v933, %v935
      %v937 = vrot.slane %v923, %v936
      %v938 = vcombine.high %v930, %v930
      %v939 = vcombine.high %v937, %v937
      %v941 = vunpack.c.l.s4 1966171168
      %v942 = vunpack.c.0.s8 %v941
      %v943 = vlaneseq
      %v944 = vshrl.u32 %v943, 7
      %v945 = vsub.s32 %v942, %v944
      %v946 = vrot.slane %v930, %v945
      %v948 = vunpack.c.l.s4 1966171168
      %v949 = vunpack.c.0.s8 %v948
      %v950 = vlaneseq
      %v951 = vshrl.u32 %v950, 7
      %v952 = vsub.s32 %v949, %v951
      %v953 = vrot.slane %v937, %v952
      %v955 = vunpack.c.l.s4 1966171168
      %v956 = vunpack.c.0.s8 %v955
      %v957 = vlaneseq
      %v958 = vshrl.u32 %v957, 7
      %v959 = vsub.s32 %v956, %v958
      %v960 = vrot.slane %v938, %v959
      %v962 = vunpack.c.l.s4 1966171168
      %v963 = vunpack.c.0.s8 %v962
      %v964 = vlaneseq
      %v965 = vshrl.u32 %v964, 7
      %v966 = vsub.s32 %v963, %v965
      %v967 = vrot.slane %v939, %v966
      %v968 = vcombine.high %v946, %v946
      %v969 = vcombine.high %v953, %v953
      %v970 = vcombine.high %v960, %v960
      %v971 = vcombine.high %v967, %v967
      %v972 = vcombine.high %v240, %v240
      %v974 = vunpack.c.l.s4 1966171168
      %v975 = vunpack.c.0.s8 %v974
      %v976 = vlaneseq
      %v977 = vshrl.u32 %v976, 7
      %v978 = vsub.s32 %v975, %v977
      %v979 = vrot.slane %v240, %v978
      %v981 = vunpack.c.l.s4 1966171168
      %v982 = vunpack.c.0.s8 %v981
      %v983 = vlaneseq
      %v984 = vshrl.u32 %v983, 7
      %v985 = vsub.s32 %v982, %v984
      %v986 = vrot.slane %v972, %v985
      %v987 = vcombine.high %v979, %v979
      %v989 = vunpack.c.l.s4 1966171168
      %v990 = vunpack.c.0.s8 %v989
      %v991 = vlaneseq
      %v992 = vshrl.u32 %v991, 7
      %v993 = vsub.s32 %v990, %v992
      %v994 = vrot.slane %v979, %v993
      %v996 = vunpack.c.l.s4 1966171168
      %v997 = vunpack.c.0.s8 %v996
      %v998 = vlaneseq
      %v999 = vshrl.u32 %v998, 7
      %v1000 = vsub.s32 %v997, %v999
      %v1001 = vrot.slane %v986, %v1000
      %v1003 = vunpack.c.l.s4 1966171168
      %v1004 = vunpack.c.0.s8 %v1003
      %v1005 = vlaneseq
      %v1006 = vshrl.u32 %v1005, 7
      %v1007 = vsub.s32 %v1004, %v1006
      %v1008 = vrot.slane %v987, %v1007
      %v1009 = vcombine.high %v994, %v994
      %v1010 = vcombine.high %v1008, %v1008
      %v1011 = vcombine.high %v241, %v241
      %v1013 = vunpack.c.l.s4 1966171168
      %v1014 = vunpack.c.0.s8 %v1013
      %v1015 = vlaneseq
      %v1016 = vshrl.u32 %v1015, 7
      %v1017 = vsub.s32 %v1014, %v1016
      %v1018 = vrot.slane %v241, %v1017
      %v1020 = vunpack.c.l.s4 1966171168
      %v1021 = vunpack.c.0.s8 %v1020
      %v1022 = vlaneseq
      %v1023 = vshrl.u32 %v1022, 7
      %v1024 = vsub.s32 %v1021, %v1023
      %v1025 = vrot.slane %v1011, %v1024
      %v1026 = vcombine.high %v1018, %v1018
      %v1027 = vcombine.high %v1025, %v1025
      %v1029 = vunpack.c.l.s4 1966171168
      %v1030 = vunpack.c.0.s8 %v1029
      %v1031 = vlaneseq
      %v1032 = vshrl.u32 %v1031, 7
      %v1033 = vsub.s32 %v1030, %v1032
      %v1034 = vrot.slane %v1018, %v1033
      %v1036 = vunpack.c.l.s4 1966171168
      %v1037 = vunpack.c.0.s8 %v1036
      %v1038 = vlaneseq
      %v1039 = vshrl.u32 %v1038, 7
      %v1040 = vsub.s32 %v1037, %v1039
      %v1041 = vrot.slane %v1025, %v1040
      %v1043 = vunpack.c.l.s4 1966171168
      %v1044 = vunpack.c.0.s8 %v1043
      %v1045 = vlaneseq
      %v1046 = vshrl.u32 %v1045, 7
      %v1047 = vsub.s32 %v1044, %v1046
      %v1048 = vrot.slane %v1026, %v1047
      %v1050 = vunpack.c.l.s4 1966171168
      %v1051 = vunpack.c.0.s8 %v1050
      %v1052 = vlaneseq
      %v1053 = vshrl.u32 %v1052, 7
      %v1054 = vsub.s32 %v1051, %v1053
      %v1055 = vrot.slane %v1027, %v1054
      %v1056 = vcombine.high %v1034, %v1034
      %v1057 = vcombine.high %v1041, %v1041
      %v1058 = vcombine.high %v1048, %v1048
      %v1059 = vcombine.high %v1055, %v1055
      %v1060 = vcombine.high %v242, %v242
      %v1062 = vunpack.c.l.s4 1966171168
      %v1063 = vunpack.c.0.s8 %v1062
      %v1064 = vlaneseq
      %v1065 = vshrl.u32 %v1064, 7
      %v1066 = vsub.s32 %v1063, %v1065
      %v1067 = vrot.slane %v242, %v1066
      %v1069 = vunpack.c.l.s4 1966171168
      %v1070 = vunpack.c.0.s8 %v1069
      %v1071 = vlaneseq
      %v1072 = vshrl.u32 %v1071, 7
      %v1073 = vsub.s32 %v1070, %v1072
      %v1074 = vrot.slane %v1060, %v1073
      %v1075 = vcombine.high %v1067, %v1067
      %v1077 = vunpack.c.l.s4 1966171168
      %v1078 = vunpack.c.0.s8 %v1077
      %v1079 = vlaneseq
      %v1080 = vshrl.u32 %v1079, 7
      %v1081 = vsub.s32 %v1078, %v1080
      %v1082 = vrot.slane %v1067, %v1081
      %v1084 = vunpack.c.l.s4 1966171168
      %v1085 = vunpack.c.0.s8 %v1084
      %v1086 = vlaneseq
      %v1087 = vshrl.u32 %v1086, 7
      %v1088 = vsub.s32 %v1085, %v1087
      %v1089 = vrot.slane %v1074, %v1088
      %v1091 = vunpack.c.l.s4 1966171168
      %v1092 = vunpack.c.0.s8 %v1091
      %v1093 = vlaneseq
      %v1094 = vshrl.u32 %v1093, 7
      %v1095 = vsub.s32 %v1092, %v1094
      %v1096 = vrot.slane %v1075, %v1095
      %v1097 = vcombine.high %v1082, %v1082
      %v1098 = vcombine.high %v1096, %v1096
      %v1099 = vcombine.high %v243, %v243
      %v1101 = vunpack.c.l.s4 1966171168
      %v1102 = vunpack.c.0.s8 %v1101
      %v1103 = vlaneseq
      %v1104 = vshrl.u32 %v1103, 7
      %v1105 = vsub.s32 %v1102, %v1104
      %v1106 = vrot.slane %v243, %v1105
      %v1108 = vunpack.c.l.s4 1966171168
      %v1109 = vunpack.c.0.s8 %v1108
      %v1110 = vlaneseq
      %v1111 = vshrl.u32 %v1110, 7
      %v1112 = vsub.s32 %v1109, %v1111
      %v1113 = vrot.slane %v1099, %v1112
      %v1114 = vcombine.high %v1106, %v1106
      %v1115 = vcombine.high %v1113, %v1113
      %v1117 = vunpack.c.l.s4 1966171168
      %v1118 = vunpack.c.0.s8 %v1117
      %v1119 = vlaneseq
      %v1120 = vshrl.u32 %v1119, 7
      %v1121 = vsub.s32 %v1118, %v1120
      %v1122 = vrot.slane %v1106, %v1121
      %v1124 = vunpack.c.l.s4 1966171168
      %v1125 = vunpack.c.0.s8 %v1124
      %v1126 = vlaneseq
      %v1127 = vshrl.u32 %v1126, 7
      %v1128 = vsub.s32 %v1125, %v1127
      %v1129 = vrot.slane %v1113, %v1128
      %v1131 = vunpack.c.l.s4 1966171168
      %v1132 = vunpack.c.0.s8 %v1131
      %v1133 = vlaneseq
      %v1134 = vshrl.u32 %v1133, 7
      %v1135 = vsub.s32 %v1132, %v1134
      %v1136 = vrot.slane %v1114, %v1135
      %v1138 = vunpack.c.l.s4 1966171168
      %v1139 = vunpack.c.0.s8 %v1138
      %v1140 = vlaneseq
      %v1141 = vshrl.u32 %v1140, 7
      %v1142 = vsub.s32 %v1139, %v1141
      %v1143 = vrot.slane %v1115, %v1142
      %v1144 = vcombine.high %v1122, %v1122
      %v1145 = vcombine.high %v1129, %v1129
      %v1146 = vcombine.high %v1136, %v1136
      %v1147 = vcombine.high %v1143, %v1143
      %v1148 = vcombine.high %v244, %v244
      %v1150 = vunpack.c.l.s4 1966171168
      %v1151 = vunpack.c.0.s8 %v1150
      %v1152 = vlaneseq
      %v1153 = vshrl.u32 %v1152, 7
      %v1154 = vsub.s32 %v1151, %v1153
      %v1155 = vrot.slane %v244, %v1154
      %v1157 = vunpack.c.l.s4 1966171168
      %v1158 = vunpack.c.0.s8 %v1157
      %v1159 = vlaneseq
      %v1160 = vshrl.u32 %v1159, 7
      %v1161 = vsub.s32 %v1158, %v1160
      %v1162 = vrot.slane %v1148, %v1161
      %v1163 = vcombine.high %v1155, %v1155
      %v1165 = vunpack.c.l.s4 1966171168
      %v1166 = vunpack.c.0.s8 %v1165
      %v1167 = vlaneseq
      %v1168 = vshrl.u32 %v1167, 7
      %v1169 = vsub.s32 %v1166, %v1168
      %v1170 = vrot.slane %v1155, %v1169
      %v1172 = vunpack.c.l.s4 1966171168
      %v1173 = vunpack.c.0.s8 %v1172
      %v1174 = vlaneseq
      %v1175 = vshrl.u32 %v1174, 7
      %v1176 = vsub.s32 %v1173, %v1175
      %v1177 = vrot.slane %v1162, %v1176
      %v1179 = vunpack.c.l.s4 1966171168
      %v1180 = vunpack.c.0.s8 %v1179
      %v1181 = vlaneseq
      %v1182 = vshrl.u32 %v1181, 7
      %v1183 = vsub.s32 %v1180, %v1182
      %v1184 = vrot.slane %v1163, %v1183
      %v1185 = vcombine.high %v1170, %v1170
      %v1186 = vcombine.high %v1184, %v1184
      %v1187 = vcombine.high %v245, %v245
      %v1189 = vunpack.c.l.s4 1966171168
      %v1190 = vunpack.c.0.s8 %v1189
      %v1191 = vlaneseq
      %v1192 = vshrl.u32 %v1191, 7
      %v1193 = vsub.s32 %v1190, %v1192
      %v1194 = vrot.slane %v245, %v1193
      %v1196 = vunpack.c.l.s4 1966171168
      %v1197 = vunpack.c.0.s8 %v1196
      %v1198 = vlaneseq
      %v1199 = vshrl.u32 %v1198, 7
      %v1200 = vsub.s32 %v1197, %v1199
      %v1201 = vrot.slane %v1187, %v1200
      %v1202 = vcombine.high %v1194, %v1194
      %v1203 = vcombine.high %v1201, %v1201
      %v1205 = vunpack.c.l.s4 1966171168
      %v1206 = vunpack.c.0.s8 %v1205
      %v1207 = vlaneseq
      %v1208 = vshrl.u32 %v1207, 7
      %v1209 = vsub.s32 %v1206, %v1208
      %v1210 = vrot.slane %v1194, %v1209
      %v1212 = vunpack.c.l.s4 1966171168
      %v1213 = vunpack.c.0.s8 %v1212
      %v1214 = vlaneseq
      %v1215 = vshrl.u32 %v1214, 7
      %v1216 = vsub.s32 %v1213, %v1215
      %v1217 = vrot.slane %v1201, %v1216
      %v1219 = vunpack.c.l.s4 1966171168
      %v1220 = vunpack.c.0.s8 %v1219
      %v1221 = vlaneseq
      %v1222 = vshrl.u32 %v1221, 7
      %v1223 = vsub.s32 %v1220, %v1222
      %v1224 = vrot.slane %v1202, %v1223
      %v1226 = vunpack.c.l.s4 1966171168
      %v1227 = vunpack.c.0.s8 %v1226
      %v1228 = vlaneseq
      %v1229 = vshrl.u32 %v1228, 7
      %v1230 = vsub.s32 %v1227, %v1229
      %v1231 = vrot.slane %v1203, %v1230
      %v1232 = vcombine.high %v1210, %v1210
      %v1233 = vcombine.high %v1217, %v1217
      %v1234 = vcombine.high %v1224, %v1224
      %v1235 = vcombine.high %v1231, %v1231
      %v1236 = vcombine.high %v246, %v246
      %v1238 = vunpack.c.l.s4 1966171168
      %v1239 = vunpack.c.0.s8 %v1238
      %v1240 = vlaneseq
      %v1241 = vshrl.u32 %v1240, 7
      %v1242 = vsub.s32 %v1239, %v1241
      %v1243 = vrot.slane %v246, %v1242
      %v1245 = vunpack.c.l.s4 1966171168
      %v1246 = vunpack.c.0.s8 %v1245
      %v1247 = vlaneseq
      %v1248 = vshrl.u32 %v1247, 7
      %v1249 = vsub.s32 %v1246, %v1248
      %v1250 = vrot.slane %v1236, %v1249
      %v1251 = vcombine.high %v1243, %v1243
      %v1253 = vunpack.c.l.s4 1966171168
      %v1254 = vunpack.c.0.s8 %v1253
      %v1255 = vlaneseq
      %v1256 = vshrl.u32 %v1255, 7
      %v1257 = vsub.s32 %v1254, %v1256
      %v1258 = vrot.slane %v1243, %v1257
      %v1260 = vunpack.c.l.s4 1966171168
      %v1261 = vunpack.c.0.s8 %v1260
      %v1262 = vlaneseq
      %v1263 = vshrl.u32 %v1262, 7
      %v1264 = vsub.s32 %v1261, %v1263
      %v1265 = vrot.slane %v1250, %v1264
      %v1267 = vunpack.c.l.s4 1966171168
      %v1268 = vunpack.c.0.s8 %v1267
      %v1269 = vlaneseq
      %v1270 = vshrl.u32 %v1269, 7
      %v1271 = vsub.s32 %v1268, %v1270
      %v1272 = vrot.slane %v1251, %v1271
      %v1273 = vcombine.high %v1258, %v1258
      %v1274 = vcombine.high %v1272, %v1272
      %v1275 = vcombine.high %v247, %v247
      %v1277 = vunpack.c.l.s4 1966171168
      %v1278 = vunpack.c.0.s8 %v1277
      %v1279 = vlaneseq
      %v1280 = vshrl.u32 %v1279, 7
      %v1281 = vsub.s32 %v1278, %v1280
      %v1282 = vrot.slane %v247, %v1281
      %v1284 = vunpack.c.l.s4 1966171168
      %v1285 = vunpack.c.0.s8 %v1284
      %v1286 = vlaneseq
      %v1287 = vshrl.u32 %v1286, 7
      %v1288 = vsub.s32 %v1285, %v1287
      %v1289 = vrot.slane %v1275, %v1288
      %v1290 = vcombine.high %v1282, %v1282
      %v1291 = vcombine.high %v1289, %v1289
      %v1293 = vunpack.c.l.s4 1966171168
      %v1294 = vunpack.c.0.s8 %v1293
      %v1295 = vlaneseq
      %v1296 = vshrl.u32 %v1295, 7
      %v1297 = vsub.s32 %v1294, %v1296
      %v1298 = vrot.slane %v1282, %v1297
      %v1300 = vunpack.c.l.s4 1966171168
      %v1301 = vunpack.c.0.s8 %v1300
      %v1302 = vlaneseq
      %v1303 = vshrl.u32 %v1302, 7
      %v1304 = vsub.s32 %v1301, %v1303
      %v1305 = vrot.slane %v1289, %v1304
      %v1307 = vunpack.c.l.s4 1966171168
      %v1308 = vunpack.c.0.s8 %v1307
      %v1309 = vlaneseq
      %v1310 = vshrl.u32 %v1309, 7
      %v1311 = vsub.s32 %v1308, %v1310
      %v1312 = vrot.slane %v1290, %v1311
      %v1314 = vunpack.c.l.s4 1966171168
      %v1315 = vunpack.c.0.s8 %v1314
      %v1316 = vlaneseq
      %v1317 = vshrl.u32 %v1316, 7
      %v1318 = vsub.s32 %v1315, %v1317
      %v1319 = vrot.slane %v1291, %v1318
      %v1320 = vcombine.high %v1298, %v1298
      %v1321 = vcombine.high %v1305, %v1305
      %v1322 = vcombine.high %v1312, %v1312
      %v1323 = vcombine.high %v1319, %v1319
      %v1324 = vcombine.high %v248, %v248
      %v1326 = vunpack.c.l.s4 1966171168
      %v1327 = vunpack.c.0.s8 %v1326
      %v1328 = vlaneseq
      %v1329 = vshrl.u32 %v1328, 7
      %v1330 = vsub.s32 %v1327, %v1329
      %v1331 = vrot.slane %v248, %v1330
      %v1333 = vunpack.c.l.s4 1966171168
      %v1334 = vunpack.c.0.s8 %v1333
      %v1335 = vlaneseq
      %v1336 = vshrl.u32 %v1335, 7
      %v1337 = vsub.s32 %v1334, %v1336
      %v1338 = vrot.slane %v1324, %v1337
      %v1339 = vcombine.high %v1331, %v1331
      %v1341 = vunpack.c.l.s4 1966171168
      %v1342 = vunpack.c.0.s8 %v1341
      %v1343 = vlaneseq
      %v1344 = vshrl.u32 %v1343, 7
      %v1345 = vsub.s32 %v1342, %v1344
      %v1346 = vrot.slane %v1331, %v1345
      %v1348 = vunpack.c.l.s4 1966171168
      %v1349 = vunpack.c.0.s8 %v1348
      %v1350 = vlaneseq
      %v1351 = vshrl.u32 %v1350, 7
      %v1352 = vsub.s32 %v1349, %v1351
      %v1353 = vrot.slane %v1338, %v1352
      %v1355 = vunpack.c.l.s4 1966171168
      %v1356 = vunpack.c.0.s8 %v1355
      %v1357 = vlaneseq
      %v1358 = vshrl.u32 %v1357, 7
      %v1359 = vsub.s32 %v1356, %v1358
      %v1360 = vrot.slane %v1339, %v1359
      %v1361 = vcombine.high %v1346, %v1346
      %v1362 = vcombine.high %v1360, %v1360
      %v1363 = vcombine.high %v249, %v249
      %v1365 = vunpack.c.l.s4 1966171168
      %v1366 = vunpack.c.0.s8 %v1365
      %v1367 = vlaneseq
      %v1368 = vshrl.u32 %v1367, 7
      %v1369 = vsub.s32 %v1366, %v1368
      %v1370 = vrot.slane %v249, %v1369
      %v1372 = vunpack.c.l.s4 1966171168
      %v1373 = vunpack.c.0.s8 %v1372
      %v1374 = vlaneseq
      %v1375 = vshrl.u32 %v1374, 7
      %v1376 = vsub.s32 %v1373, %v1375
      %v1377 = vrot.slane %v1363, %v1376
      %v1378 = vcombine.high %v1370, %v1370
      %v1379 = vcombine.high %v1377, %v1377
      %v1381 = vunpack.c.l.s4 1966171168
      %v1382 = vunpack.c.0.s8 %v1381
      %v1383 = vlaneseq
      %v1384 = vshrl.u32 %v1383, 7
      %v1385 = vsub.s32 %v1382, %v1384
      %v1386 = vrot.slane %v1370, %v1385
      %v1388 = vunpack.c.l.s4 1966171168
      %v1389 = vunpack.c.0.s8 %v1388
      %v1390 = vlaneseq
      %v1391 = vshrl.u32 %v1390, 7
      %v1392 = vsub.s32 %v1389, %v1391
      %v1393 = vrot.slane %v1377, %v1392
      %v1395 = vunpack.c.l.s4 1966171168
      %v1396 = vunpack.c.0.s8 %v1395
      %v1397 = vlaneseq
      %v1398 = vshrl.u32 %v1397, 7
      %v1399 = vsub.s32 %v1396, %v1398
      %v1400 = vrot.slane %v1378, %v1399
      %v1402 = vunpack.c.l.s4 1966171168
      %v1403 = vunpack.c.0.s8 %v1402
      %v1404 = vlaneseq
      %v1405 = vshrl.u32 %v1404, 7
      %v1406 = vsub.s32 %v1403, %v1405
      %v1407 = vrot.slane %v1379, %v1406
      %v1408 = vcombine.high %v1386, %v1386
      %v1409 = vcombine.high %v1393, %v1393
      %v1410 = vcombine.high %v1400, %v1400
      %v1411 = vcombine.high %v1407, %v1407
      %v1412 = vcombine.high %v250, %v250
      %v1414 = vunpack.c.l.s4 1966171168
      %v1415 = vunpack.c.0.s8 %v1414
      %v1416 = vlaneseq
      %v1417 = vshrl.u32 %v1416, 7
      %v1418 = vsub.s32 %v1415, %v1417
      %v1419 = vrot.slane %v250, %v1418
      %v1421 = vunpack.c.l.s4 1966171168
      %v1422 = vunpack.c.0.s8 %v1421
      %v1423 = vlaneseq
      %v1424 = vshrl.u32 %v1423, 7
      %v1425 = vsub.s32 %v1422, %v1424
      %v1426 = vrot.slane %v1412, %v1425
      %v1427 = vcombine.high %v1419, %v1419
      %v1429 = vunpack.c.l.s4 1966171168
      %v1430 = vunpack.c.0.s8 %v1429
      %v1431 = vlaneseq
      %v1432 = vshrl.u32 %v1431, 7
      %v1433 = vsub.s32 %v1430, %v1432
      %v1434 = vrot.slane %v1419, %v1433
      %v1436 = vunpack.c.l.s4 1966171168
      %v1437 = vunpack.c.0.s8 %v1436
      %v1438 = vlaneseq
      %v1439 = vshrl.u32 %v1438, 7
      %v1440 = vsub.s32 %v1437, %v1439
      %v1441 = vrot.slane %v1426, %v1440
      %v1443 = vunpack.c.l.s4 1966171168
      %v1444 = vunpack.c.0.s8 %v1443
      %v1445 = vlaneseq
      %v1446 = vshrl.u32 %v1445, 7
      %v1447 = vsub.s32 %v1444, %v1446
      %v1448 = vrot.slane %v1427, %v1447
      %v1449 = vcombine.high %v1434, %v1434
      %v1450 = vcombine.high %v1448, %v1448
      %v1451 = vcombine.low %v330, %v344
      %v1452 = vcombine.low %v352, %v354
      %v1453 = vcombine.low %v337, %v351
      %v1454 = vcombine.low %v353, %v355
      %v1456 = vunpack.c.l.s4 1966171168
      %v1457 = vunpack.c.0.s8 %v1456
      %v1458 = vlaneseq
      %v1459 = vshrl.u32 %v1458, 7
      %v1460 = vsub.s32 %v1457, %v1459
      %v1461 = vrot.slane %v1451, %v1460
      %v1463 = vunpack.c.l.s4 1966171168
      %v1464 = vunpack.c.0.s8 %v1463
      %v1465 = vlaneseq
      %v1466 = vshrl.u32 %v1465, 7
      %v1467 = vsub.s32 %v1464, %v1466
      %v1468 = vrot.slane %v1452, %v1467
      %v1470 = vunpack.c.l.s4 1966171168
      %v1471 = vunpack.c.0.s8 %v1470
      %v1472 = vlaneseq
      %v1473 = vshrl.u32 %v1472, 7
      %v1474 = vsub.s32 %v1471, %v1473
      %v1475 = vrot.slane %v1453, %v1474
      %v1477 = vunpack.c.l.s4 1966171168
      %v1478 = vunpack.c.0.s8 %v1477
      %v1479 = vlaneseq
      %v1480 = vshrl.u32 %v1479, 7
      %v1481 = vsub.s32 %v1478, %v1480
      %v1482 = vrot.slane %v1454, %v1481
      %v1483 = vcombine.low %v1461, %v1468
      %v1484 = vcombine.low %v1475, %v1482
      %v1486 = vunpack.c.l.s4 1966171168
      %v1487 = vunpack.c.0.s8 %v1486
      %v1488 = vlaneseq
      %v1489 = vshrl.u32 %v1488, 7
      %v1490 = vsub.s32 %v1487, %v1489
      %v1491 = vrot.slane %v1483, %v1490
      %v1493 = vunpack.c.l.s4 1966171168
      %v1494 = vunpack.c.0.s8 %v1493
      %v1495 = vlaneseq
      %v1496 = vshrl.u32 %v1495, 7
      %v1497 = vsub.s32 %v1494, %v1496
      %v1498 = vrot.slane %v1484, %v1497
      %v1499 = vcombine.low %v1491, %v1498
      %v1500 = vcombine.low %v378, %v392
      %v1501 = vcombine.low %v393, %v394
      %v1502 = vcombine.low %v385, %v418
      %v1503 = vcombine.low %v432, %v440
      %v1505 = vunpack.c.l.s4 1966171168
      %v1506 = vunpack.c.0.s8 %v1505
      %v1507 = vlaneseq
      %v1508 = vshrl.u32 %v1507, 7
      %v1509 = vsub.s32 %v1506, %v1508
      %v1510 = vrot.slane %v1500, %v1509
      %v1512 = vunpack.c.l.s4 1966171168
      %v1513 = vunpack.c.0.s8 %v1512
      %v1514 = vlaneseq
      %v1515 = vshrl.u32 %v1514, 7
      %v1516 = vsub.s32 %v1513, %v1515
      %v1517 = vrot.slane %v1501, %v1516
      %v1519 = vunpack.c.l.s4 1966171168
      %v1520 = vunpack.c.0.s8 %v1519
      %v1521 = vlaneseq
      %v1522 = vshrl.u32 %v1521, 7
      %v1523 = vsub.s32 %v1520, %v1522
      %v1524 = vrot.slane %v1502, %v1523
      %v1526 = vunpack.c.l.s4 1966171168
      %v1527 = vunpack.c.0.s8 %v1526
      %v1528 = vlaneseq
      %v1529 = vshrl.u32 %v1528, 7
      %v1530 = vsub.s32 %v1527, %v1529
      %v1531 = vrot.slane %v1503, %v1530
      %v1532 = vcombine.low %v1510, %v1517
      %v1533 = vcombine.low %v1524, %v1531
      %v1535 = vunpack.c.l.s4 1966171168
      %v1536 = vunpack.c.0.s8 %v1535
      %v1537 = vlaneseq
      %v1538 = vshrl.u32 %v1537, 7
      %v1539 = vsub.s32 %v1536, %v1538
      %v1540 = vrot.slane %v1532, %v1539
      %v1542 = vunpack.c.l.s4 1966171168
      %v1543 = vunpack.c.0.s8 %v1542
      %v1544 = vlaneseq
      %v1545 = vshrl.u32 %v1544, 7
      %v1546 = vsub.s32 %v1543, %v1545
      %v1547 = vrot.slane %v1533, %v1546
      %v1548 = vcombine.low %v1540, %v1547
      %v1549 = vcombine.low %v442, %v425
      %v1550 = vcombine.low %v439, %v441
      %v1551 = vcombine.low %v443, %v466
      %v1552 = vcombine.low %v480, %v481
      %v1554 = vunpack.c.l.s4 1966171168
      %v1555 = vunpack.c.0.s8 %v1554
      %v1556 = vlaneseq
      %v1557 = vshrl.u32 %v1556, 7
      %v1558 = vsub.s32 %v1555, %v1557
      %v1559 = vrot.slane %v1549, %v1558
      %v1561 = vunpack.c.l.s4 1966171168
      %v1562 = vunpack.c.0.s8 %v1561
      %v1563 = vlaneseq
      %v1564 = vshrl.u32 %v1563, 7
      %v1565 = vsub.s32 %v1562, %v1564
      %v1566 = vrot.slane %v1550, %v1565
      %v1568 = vunpack.c.l.s4 1966171168
      %v1569 = vunpack.c.0.s8 %v1568
      %v1570 = vlaneseq
      %v1571 = vshrl.u32 %v1570, 7
      %v1572 = vsub.s32 %v1569, %v1571
      %v1573 = vrot.slane %v1551, %v1572
      %v1575 = vunpack.c.l.s4 1966171168
      %v1576 = vunpack.c.0.s8 %v1575
      %v1577 = vlaneseq
      %v1578 = vshrl.u32 %v1577, 7
      %v1579 = vsub.s32 %v1576, %v1578
      %v1580 = vrot.slane %v1552, %v1579
      %v1581 = vcombine.low %v1559, %v1566
      %v1582 = vcombine.low %v1573, %v1580
      %v1584 = vunpack.c.l.s4 1966171168
      %v1585 = vunpack.c.0.s8 %v1584
      %v1586 = vlaneseq
      %v1587 = vshrl.u32 %v1586, 7
      %v1588 = vsub.s32 %v1585, %v1587
      %v1589 = vrot.slane %v1581, %v1588
      %v1591 = vunpack.c.l.s4 1966171168
      %v1592 = vunpack.c.0.s8 %v1591
      %v1593 = vlaneseq
      %v1594 = vshrl.u32 %v1593, 7
      %v1595 = vsub.s32 %v1592, %v1594
      %v1596 = vrot.slane %v1582, %v1595
      %v1597 = vcombine.low %v1589, %v1596
      %v1598 = vcombine.low %v482, %v473
      %v1599 = vcombine.low %v506, %v520
      %v1600 = vcombine.low %v528, %v530
      %v1601 = vcombine.low %v513, %v527
      %v1603 = vunpack.c.l.s4 1966171168
      %v1604 = vunpack.c.0.s8 %v1603
      %v1605 = vlaneseq
      %v1606 = vshrl.u32 %v1605, 7
      %v1607 = vsub.s32 %v1604, %v1606
      %v1608 = vrot.slane %v1598, %v1607
      %v1610 = vunpack.c.l.s4 1966171168
      %v1611 = vunpack.c.0.s8 %v1610
      %v1612 = vlaneseq
      %v1613 = vshrl.u32 %v1612, 7
      %v1614 = vsub.s32 %v1611, %v1613
      %v1615 = vrot.slane %v1599, %v1614
      %v1617 = vunpack.c.l.s4 1966171168
      %v1618 = vunpack.c.0.s8 %v1617
      %v1619 = vlaneseq
      %v1620 = vshrl.u32 %v1619, 7
      %v1621 = vsub.s32 %v1618, %v1620
      %v1622 = vrot.slane %v1600, %v1621
      %v1624 = vunpack.c.l.s4 1966171168
      %v1625 = vunpack.c.0.s8 %v1624
      %v1626 = vlaneseq
      %v1627 = vshrl.u32 %v1626, 7
      %v1628 = vsub.s32 %v1625, %v1627
      %v1629 = vrot.slane %v1601, %v1628
      %v1630 = vcombine.low %v1608, %v1615
      %v1631 = vcombine.low %v1622, %v1629
      %v1633 = vunpack.c.l.s4 1966171168
      %v1634 = vunpack.c.0.s8 %v1633
      %v1635 = vlaneseq
      %v1636 = vshrl.u32 %v1635, 7
      %v1637 = vsub.s32 %v1634, %v1636
      %v1638 = vrot.slane %v1630, %v1637
      %v1640 = vunpack.c.l.s4 1966171168
      %v1641 = vunpack.c.0.s8 %v1640
      %v1642 = vlaneseq
      %v1643 = vshrl.u32 %v1642, 7
      %v1644 = vsub.s32 %v1641, %v1643
      %v1645 = vrot.slane %v1631, %v1644
      %v1646 = vcombine.low %v1638, %v1645
      %v1647 = vcombine.low %v529, %v531
      %v1648 = vcombine.low %v554, %v568
      %v1649 = vcombine.low %v569, %v570
      %v1650 = vcombine.low %v561, %v594
      %v1652 = vunpack.c.l.s4 1966171168
      %v1653 = vunpack.c.0.s8 %v1652
      %v1654 = vlaneseq
      %v1655 = vshrl.u32 %v1654, 7
      %v1656 = vsub.s32 %v1653, %v1655
      %v1657 = vrot.slane %v1647, %v1656
      %v1659 = vunpack.c.l.s4 1966171168
      %v1660 = vunpack.c.0.s8 %v1659
      %v1661 = vlaneseq
      %v1662 = vshrl.u32 %v1661, 7
      %v1663 = vsub.s32 %v1660, %v1662
      %v1664 = vrot.slane %v1648, %v1663
      %v1666 = vunpack.c.l.s4 1966171168
      %v1667 = vunpack.c.0.s8 %v1666
      %v1668 = vlaneseq
      %v1669 = vshrl.u32 %v1668, 7
      %v1670 = vsub.s32 %v1667, %v1669
      %v1671 = vrot.slane %v1649, %v1670
      %v1673 = vunpack.c.l.s4 1966171168
      %v1674 = vunpack.c.0.s8 %v1673
      %v1675 = vlaneseq
      %v1676 = vshrl.u32 %v1675, 7
      %v1677 = vsub.s32 %v1674, %v1676
      %v1678 = vrot.slane %v1650, %v1677
      %v1679 = vcombine.low %v1657, %v1664
      %v1680 = vcombine.low %v1671, %v1678
      %v1682 = vunpack.c.l.s4 1966171168
      %v1683 = vunpack.c.0.s8 %v1682
      %v1684 = vlaneseq
      %v1685 = vshrl.u32 %v1684, 7
      %v1686 = vsub.s32 %v1683, %v1685
      %v1687 = vrot.slane %v1679, %v1686
      %v1689 = vunpack.c.l.s4 1966171168
      %v1690 = vunpack.c.0.s8 %v1689
      %v1691 = vlaneseq
      %v1692 = vshrl.u32 %v1691, 7
      %v1693 = vsub.s32 %v1690, %v1692
      %v1694 = vrot.slane %v1680, %v1693
      %v1695 = vcombine.low %v1687, %v1694
      %v1696 = vcombine.low %v608, %v616
      %v1697 = vcombine.low %v618, %v601
      %v1698 = vcombine.low %v615, %v617
      %v1699 = vcombine.low %v619, %v642
      %v1701 = vunpack.c.l.s4 1966171168
      %v1702 = vunpack.c.0.s8 %v1701
      %v1703 = vlaneseq
      %v1704 = vshrl.u32 %v1703, 7
      %v1705 = vsub.s32 %v1702, %v1704
      %v1706 = vrot.slane %v1696, %v1705
      %v1708 = vunpack.c.l.s4 1966171168
      %v1709 = vunpack.c.0.s8 %v1708
      %v1710 = vlaneseq
      %v1711 = vshrl.u32 %v1710, 7
      %v1712 = vsub.s32 %v1709, %v1711
      %v1713 = vrot.slane %v1697, %v1712
      %v1715 = vunpack.c.l.s4 1966171168
      %v1716 = vunpack.c.0.s8 %v1715
      %v1717 = vlaneseq
      %v1718 = vshrl.u32 %v1717, 7
      %v1719 = vsub.s32 %v1716, %v1718
      %v1720 = vrot.slane %v1698, %v1719
      %v1722 = vunpack.c.l.s4 1966171168
      %v1723 = vunpack.c.0.s8 %v1722
      %v1724 = vlaneseq
      %v1725 = vshrl.u32 %v1724, 7
      %v1726 = vsub.s32 %v1723, %v1725
      %v1727 = vrot.slane %v1699, %v1726
      %v1728 = vcombine.low %v1706, %v1713
      %v1729 = vcombine.low %v1720, %v1727
      %v1731 = vunpack.c.l.s4 1966171168
      %v1732 = vunpack.c.0.s8 %v1731
      %v1733 = vlaneseq
      %v1734 = vshrl.u32 %v1733, 7
      %v1735 = vsub.s32 %v1732, %v1734
      %v1736 = vrot.slane %v1728, %v1735
      %v1738 = vunpack.c.l.s4 1966171168
      %v1739 = vunpack.c.0.s8 %v1738
      %v1740 = vlaneseq
      %v1741 = vshrl.u32 %v1740, 7
      %v1742 = vsub.s32 %v1739, %v1741
      %v1743 = vrot.slane %v1729, %v1742
      %v1744 = vcombine.low %v1736, %v1743
      %v1745 = vcombine.low %v656, %v657
      %v1746 = vcombine.low %v658, %v649
      %v1747 = vcombine.low %v682, %v696
      %v1748 = vcombine.low %v704, %v706
      %v1750 = vunpack.c.l.s4 1966171168
      %v1751 = vunpack.c.0.s8 %v1750
      %v1752 = vlaneseq
      %v1753 = vshrl.u32 %v1752, 7
      %v1754 = vsub.s32 %v1751, %v1753
      %v1755 = vrot.slane %v1745, %v1754
      %v1757 = vunpack.c.l.s4 1966171168
      %v1758 = vunpack.c.0.s8 %v1757
      %v1759 = vlaneseq
      %v1760 = vshrl.u32 %v1759, 7
      %v1761 = vsub.s32 %v1758, %v1760
      %v1762 = vrot.slane %v1746, %v1761
      %v1764 = vunpack.c.l.s4 1966171168
      %v1765 = vunpack.c.0.s8 %v1764
      %v1766 = vlaneseq
      %v1767 = vshrl.u32 %v1766, 7
      %v1768 = vsub.s32 %v1765, %v1767
      %v1769 = vrot.slane %v1747, %v1768
      %v1771 = vunpack.c.l.s4 1966171168
      %v1772 = vunpack.c.0.s8 %v1771
      %v1773 = vlaneseq
      %v1774 = vshrl.u32 %v1773, 7
      %v1775 = vsub.s32 %v1772, %v1774
      %v1776 = vrot.slane %v1748, %v1775
      %v1777 = vcombine.low %v1755, %v1762
      %v1778 = vcombine.low %v1769, %v1776
      %v1780 = vunpack.c.l.s4 1966171168
      %v1781 = vunpack.c.0.s8 %v1780
      %v1782 = vlaneseq
      %v1783 = vshrl.u32 %v1782, 7
      %v1784 = vsub.s32 %v1781, %v1783
      %v1785 = vrot.slane %v1777, %v1784
      %v1787 = vunpack.c.l.s4 1966171168
      %v1788 = vunpack.c.0.s8 %v1787
      %v1789 = vlaneseq
      %v1790 = vshrl.u32 %v1789, 7
      %v1791 = vsub.s32 %v1788, %v1790
      %v1792 = vrot.slane %v1778, %v1791
      %v1793 = vcombine.low %v1785, %v1792
      %v1794 = vcombine.low %v689, %v703
      %v1795 = vcombine.low %v705, %v707
      %v1796 = vcombine.low %v730, %v744
      %v1797 = vcombine.low %v745, %v746
      %v1799 = vunpack.c.l.s4 1966171168
      %v1800 = vunpack.c.0.s8 %v1799
      %v1801 = vlaneseq
      %v1802 = vshrl.u32 %v1801, 7
      %v1803 = vsub.s32 %v1800, %v1802
      %v1804 = vrot.slane %v1794, %v1803
      %v1806 = vunpack.c.l.s4 1966171168
      %v1807 = vunpack.c.0.s8 %v1806
      %v1808 = vlaneseq
      %v1809 = vshrl.u32 %v1808, 7
      %v1810 = vsub.s32 %v1807, %v1809
      %v1811 = vrot.slane %v1795, %v1810
      %v1813 = vunpack.c.l.s4 1966171168
      %v1814 = vunpack.c.0.s8 %v1813
      %v1815 = vlaneseq
      %v1816 = vshrl.u32 %v1815, 7
      %v1817 = vsub.s32 %v1814, %v1816
      %v1818 = vrot.slane %v1796, %v1817
      %v1820 = vunpack.c.l.s4 1966171168
      %v1821 = vunpack.c.0.s8 %v1820
      %v1822 = vlaneseq
      %v1823 = vshrl.u32 %v1822, 7
      %v1824 = vsub.s32 %v1821, %v1823
      %v1825 = vrot.slane %v1797, %v1824
      %v1826 = vcombine.low %v1804, %v1811
      %v1827 = vcombine.low %v1818, %v1825
      %v1829 = vunpack.c.l.s4 1966171168
      %v1830 = vunpack.c.0.s8 %v1829
      %v1831 = vlaneseq
      %v1832 = vshrl.u32 %v1831, 7
      %v1833 = vsub.s32 %v1830, %v1832
      %v1834 = vrot.slane %v1826, %v1833
      %v1836 = vunpack.c.l.s4 1966171168
      %v1837 = vunpack.c.0.s8 %v1836
      %v1838 = vlaneseq
      %v1839 = vshrl.u32 %v1838, 7
      %v1840 = vsub.s32 %v1837, %v1839
      %v1841 = vrot.slane %v1827, %v1840
      %v1842 = vcombine.low %v1834, %v1841
      %v1843 = vcombine.low %v737, %v770
      %v1844 = vcombine.low %v784, %v792
      %v1845 = vcombine.low %v794, %v777
      %v1846 = vcombine.low %v791, %v793
      %v1848 = vunpack.c.l.s4 1966171168
      %v1849 = vunpack.c.0.s8 %v1848
      %v1850 = vlaneseq
      %v1851 = vshrl.u32 %v1850, 7
      %v1852 = vsub.s32 %v1849, %v1851
      %v1853 = vrot.slane %v1843, %v1852
      %v1855 = vunpack.c.l.s4 1966171168
      %v1856 = vunpack.c.0.s8 %v1855
      %v1857 = vlaneseq
      %v1858 = vshrl.u32 %v1857, 7
      %v1859 = vsub.s32 %v1856, %v1858
      %v1860 = vrot.slane %v1844, %v1859
      %v1862 = vunpack.c.l.s4 1966171168
      %v1863 = vunpack.c.0.s8 %v1862
      %v1864 = vlaneseq
      %v1865 = vshrl.u32 %v1864, 7
      %v1866 = vsub.s32 %v1863, %v1865
      %v1867 = vrot.slane %v1845, %v1866
      %v1869 = vunpack.c.l.s4 1966171168
      %v1870 = vunpack.c.0.s8 %v1869
      %v1871 = vlaneseq
      %v1872 = vshrl.u32 %v1871, 7
      %v1873 = vsub.s32 %v1870, %v1872
      %v1874 = vrot.slane %v1846, %v1873
      %v1875 = vcombine.low %v1853, %v1860
      %v1876 = vcombine.low %v1867, %v1874
      %v1878 = vunpack.c.l.s4 1966171168
      %v1879 = vunpack.c.0.s8 %v1878
      %v1880 = vlaneseq
      %v1881 = vshrl.u32 %v1880, 7
      %v1882 = vsub.s32 %v1879, %v1881
      %v1883 = vrot.slane %v1875, %v1882
      %v1885 = vunpack.c.l.s4 1966171168
      %v1886 = vunpack.c.0.s8 %v1885
      %v1887 = vlaneseq
      %v1888 = vshrl.u32 %v1887, 7
      %v1889 = vsub.s32 %v1886, %v1888
      %v1890 = vrot.slane %v1876, %v1889
      %v1891 = vcombine.low %v1883, %v1890
      %v1892 = vcombine.low %v795, %v818
      %v1893 = vcombine.low %v832, %v833
      %v1894 = vcombine.low %v834, %v825
      %v1895 = vcombine.low %v858, %v872
      %v1897 = vunpack.c.l.s4 1966171168
      %v1898 = vunpack.c.0.s8 %v1897
      %v1899 = vlaneseq
      %v1900 = vshrl.u32 %v1899, 7
      %v1901 = vsub.s32 %v1898, %v1900
      %v1902 = vrot.slane %v1892, %v1901
      %v1904 = vunpack.c.l.s4 1966171168
      %v1905 = vunpack.c.0.s8 %v1904
      %v1906 = vlaneseq
      %v1907 = vshrl.u32 %v1906, 7
      %v1908 = vsub.s32 %v1905, %v1907
      %v1909 = vrot.slane %v1893, %v1908
      %v1911 = vunpack.c.l.s4 1966171168
      %v1912 = vunpack.c.0.s8 %v1911
      %v1913 = vlaneseq
      %v1914 = vshrl.u32 %v1913, 7
      %v1915 = vsub.s32 %v1912, %v1914
      %v1916 = vrot.slane %v1894, %v1915
      %v1918 = vunpack.c.l.s4 1966171168
      %v1919 = vunpack.c.0.s8 %v1918
      %v1920 = vlaneseq
      %v1921 = vshrl.u32 %v1920, 7
      %v1922 = vsub.s32 %v1919, %v1921
      %v1923 = vrot.slane %v1895, %v1922
      %v1924 = vcombine.low %v1902, %v1909
      %v1925 = vcombine.low %v1916, %v1923
      %v1927 = vunpack.c.l.s4 1966171168
      %v1928 = vunpack.c.0.s8 %v1927
      %v1929 = vlaneseq
      %v1930 = vshrl.u32 %v1929, 7
      %v1931 = vsub.s32 %v1928, %v1930
      %v1932 = vrot.slane %v1924, %v1931
      %v1934 = vunpack.c.l.s4 1966171168
      %v1935 = vunpack.c.0.s8 %v1934
      %v1936 = vlaneseq
      %v1937 = vshrl.u32 %v1936, 7
      %v1938 = vsub.s32 %v1935, %v1937
      %v1939 = vrot.slane %v1925, %v1938
      %v1940 = vcombine.low %v1932, %v1939
      %v1941 = vcombine.low %v880, %v882
      %v1942 = vcombine.low %v865, %v879
      %v1943 = vcombine.low %v881, %v883
      %v1944 = vcombine.low %v906, %v920
      %v1946 = vunpack.c.l.s4 1966171168
      %v1947 = vunpack.c.0.s8 %v1946
      %v1948 = vlaneseq
      %v1949 = vshrl.u32 %v1948, 7
      %v1950 = vsub.s32 %v1947, %v1949
      %v1951 = vrot.slane %v1941, %v1950
      %v1953 = vunpack.c.l.s4 1966171168
      %v1954 = vunpack.c.0.s8 %v1953
      %v1955 = vlaneseq
      %v1956 = vshrl.u32 %v1955, 7
      %v1957 = vsub.s32 %v1954, %v1956
      %v1958 = vrot.slane %v1942, %v1957
      %v1960 = vunpack.c.l.s4 1966171168
      %v1961 = vunpack.c.0.s8 %v1960
      %v1962 = vlaneseq
      %v1963 = vshrl.u32 %v1962, 7
      %v1964 = vsub.s32 %v1961, %v1963
      %v1965 = vrot.slane %v1943, %v1964
      %v1967 = vunpack.c.l.s4 1966171168
      %v1968 = vunpack.c.0.s8 %v1967
      %v1969 = vlaneseq
      %v1970 = vshrl.u32 %v1969, 7
      %v1971 = vsub.s32 %v1968, %v1970
      %v1972 = vrot.slane %v1944, %v1971
      %v1973 = vcombine.low %v1951, %v1958
      %v1974 = vcombine.low %v1965, %v1972
      %v1976 = vunpack.c.l.s4 1966171168
      %v1977 = vunpack.c.0.s8 %v1976
      %v1978 = vlaneseq
      %v1979 = vshrl.u32 %v1978, 7
      %v1980 = vsub.s32 %v1977, %v1979
      %v1981 = vrot.slane %v1973, %v1980
      %v1983 = vunpack.c.l.s4 1966171168
      %v1984 = vunpack.c.0.s8 %v1983
      %v1985 = vlaneseq
      %v1986 = vshrl.u32 %v1985, 7
      %v1987 = vsub.s32 %v1984, %v1986
      %v1988 = vrot.slane %v1974, %v1987
      %v1989 = vcombine.low %v1981, %v1988
      %v1990 = vcombine.low %v921, %v922
      %v1991 = vcombine.low %v913, %v946
      %v1992 = vcombine.low %v960, %v968
      %v1993 = vcombine.low %v970, %v953
      %v1995 = vunpack.c.l.s4 1966171168
      %v1996 = vunpack.c.0.s8 %v1995
      %v1997 = vlaneseq
      %v1998 = vshrl.u32 %v1997, 7
      %v1999 = vsub.s32 %v1996, %v1998
      %v2000 = vrot.slane %v1990, %v1999
      %v2002 = vunpack.c.l.s4 1966171168
      %v2003 = vunpack.c.0.s8 %v2002
      %v2004 = vlaneseq
      %v2005 = vshrl.u32 %v2004, 7
      %v2006 = vsub.s32 %v2003, %v2005
      %v2007 = vrot.slane %v1991, %v2006
      %v2009 = vunpack.c.l.s4 1966171168
      %v2010 = vunpack.c.0.s8 %v2009
      %v2011 = vlaneseq
      %v2012 = vshrl.u32 %v2011, 7
      %v2013 = vsub.s32 %v2010, %v2012
      %v2014 = vrot.slane %v1992, %v2013
      %v2016 = vunpack.c.l.s4 1966171168
      %v2017 = vunpack.c.0.s8 %v2016
      %v2018 = vlaneseq
      %v2019 = vshrl.u32 %v2018, 7
      %v2020 = vsub.s32 %v2017, %v2019
      %v2021 = vrot.slane %v1993, %v2020
      %v2022 = vcombine.low %v2000, %v2007
      %v2023 = vcombine.low %v2014, %v2021
      %v2025 = vunpack.c.l.s4 1966171168
      %v2026 = vunpack.c.0.s8 %v2025
      %v2027 = vlaneseq
      %v2028 = vshrl.u32 %v2027, 7
      %v2029 = vsub.s32 %v2026, %v2028
      %v2030 = vrot.slane %v2022, %v2029
      %v2032 = vunpack.c.l.s4 1966171168
      %v2033 = vunpack.c.0.s8 %v2032
      %v2034 = vlaneseq
      %v2035 = vshrl.u32 %v2034, 7
      %v2036 = vsub.s32 %v2033, %v2035
      %v2037 = vrot.slane %v2023, %v2036
      %v2038 = vcombine.low %v2030, %v2037
      %v2039 = vcombine.low %v967, %v969
      %v2040 = vcombine.low %v971, %v994
      %v2041 = vcombine.low %v1008, %v1009
      %v2042 = vcombine.low %v1010, %v1001
      %v2044 = vunpack.c.l.s4 1966171168
      %v2045 = vunpack.c.0.s8 %v2044
      %v2046 = vlaneseq
      %v2047 = vshrl.u32 %v2046, 7
      %v2048 = vsub.s32 %v2045, %v2047
      %v2049 = vrot.slane %v2039, %v2048
      %v2051 = vunpack.c.l.s4 1966171168
      %v2052 = vunpack.c.0.s8 %v2051
      %v2053 = vlaneseq
      %v2054 = vshrl.u32 %v2053, 7
      %v2055 = vsub.s32 %v2052, %v2054
      %v2056 = vrot.slane %v2040, %v2055
      %v2058 = vunpack.c.l.s4 1966171168
      %v2059 = vunpack.c.0.s8 %v2058
      %v2060 = vlaneseq
      %v2061 = vshrl.u32 %v2060, 7
      %v2062 = vsub.s32 %v2059, %v2061
      %v2063 = vrot.slane %v2041, %v2062
      %v2065 = vunpack.c.l.s4 1966171168
      %v2066 = vunpack.c.0.s8 %v2065
      %v2067 = vlaneseq
      %v2068 = vshrl.u32 %v2067, 7
      %v2069 = vsub.s32 %v2066, %v2068
      %v2070 = vrot.slane %v2042, %v2069
      %v2071 = vcombine.low %v2049, %v2056
      %v2072 = vcombine.low %v2063, %v2070
      %v2074 = vunpack.c.l.s4 1966171168
      %v2075 = vunpack.c.0.s8 %v2074
      %v2076 = vlaneseq
      %v2077 = vshrl.u32 %v2076, 7
      %v2078 = vsub.s32 %v2075, %v2077
      %v2079 = vrot.slane %v2071, %v2078
      %v2081 = vunpack.c.l.s4 1966171168
      %v2082 = vunpack.c.0.s8 %v2081
      %v2083 = vlaneseq
      %v2084 = vshrl.u32 %v2083, 7
      %v2085 = vsub.s32 %v2082, %v2084
      %v2086 = vrot.slane %v2072, %v2085
      %v2087 = vcombine.low %v2079, %v2086
      %v2088 = vcombine.low %v1034, %v1048
      %v2089 = vcombine.low %v1056, %v1058
      %v2090 = vcombine.low %v1041, %v1055
      %v2091 = vcombine.low %v1057, %v1059
      %v2093 = vunpack.c.l.s4 1966171168
      %v2094 = vunpack.c.0.s8 %v2093
      %v2095 = vlaneseq
      %v2096 = vshrl.u32 %v2095, 7
      %v2097 = vsub.s32 %v2094, %v2096
      %v2098 = vrot.slane %v2088, %v2097
      %v2100 = vunpack.c.l.s4 1966171168
      %v2101 = vunpack.c.0.s8 %v2100
      %v2102 = vlaneseq
      %v2103 = vshrl.u32 %v2102, 7
      %v2104 = vsub.s32 %v2101, %v2103
      %v2105 = vrot.slane %v2089, %v2104
      %v2107 = vunpack.c.l.s4 1966171168
      %v2108 = vunpack.c.0.s8 %v2107
      %v2109 = vlaneseq
      %v2110 = vshrl.u32 %v2109, 7
      %v2111 = vsub.s32 %v2108, %v2110
      %v2112 = vrot.slane %v2090, %v2111
      %v2114 = vunpack.c.l.s4 1966171168
      %v2115 = vunpack.c.0.s8 %v2114
      %v2116 = vlaneseq
      %v2117 = vshrl.u32 %v2116, 7
      %v2118 = vsub.s32 %v2115, %v2117
      %v2119 = vrot.slane %v2091, %v2118
      %v2120 = vcombine.low %v2098, %v2105
      %v2121 = vcombine.low %v2112, %v2119
      %v2123 = vunpack.c.l.s4 1966171168
      %v2124 = vunpack.c.0.s8 %v2123
      %v2125 = vlaneseq
      %v2126 = vshrl.u32 %v2125, 7
      %v2127 = vsub.s32 %v2124, %v2126
      %v2128 = vrot.slane %v2120, %v2127
      %v2130 = vunpack.c.l.s4 1966171168
      %v2131 = vunpack.c.0.s8 %v2130
      %v2132 = vlaneseq
      %v2133 = vshrl.u32 %v2132, 7
      %v2134 = vsub.s32 %v2131, %v2133
      %v2135 = vrot.slane %v2121, %v2134
      %v2136 = vcombine.low %v2128, %v2135
      %v2137 = vcombine.low %v1082, %v1096
      %v2138 = vcombine.low %v1097, %v1098
      %v2139 = vcombine.low %v1089, %v1122
      %v2140 = vcombine.low %v1136, %v1144
      %v2142 = vunpack.c.l.s4 1966171168
      %v2143 = vunpack.c.0.s8 %v2142
      %v2144 = vlaneseq
      %v2145 = vshrl.u32 %v2144, 7
      %v2146 = vsub.s32 %v2143, %v2145
      %v2147 = vrot.slane %v2137, %v2146
      %v2149 = vunpack.c.l.s4 1966171168
      %v2150 = vunpack.c.0.s8 %v2149
      %v2151 = vlaneseq
      %v2152 = vshrl.u32 %v2151, 7
      %v2153 = vsub.s32 %v2150, %v2152
      %v2154 = vrot.slane %v2138, %v2153
      %v2156 = vunpack.c.l.s4 1966171168
      %v2157 = vunpack.c.0.s8 %v2156
      %v2158 = vlaneseq
      %v2159 = vshrl.u32 %v2158, 7
      %v2160 = vsub.s32 %v2157, %v2159
      %v2161 = vrot.slane %v2139, %v2160
      %v2163 = vunpack.c.l.s4 1966171168
      %v2164 = vunpack.c.0.s8 %v2163
      %v2165 = vlaneseq
      %v2166 = vshrl.u32 %v2165, 7
      %v2167 = vsub.s32 %v2164, %v2166
      %v2168 = vrot.slane %v2140, %v2167
      %v2169 = vcombine.low %v2147, %v2154
      %v2170 = vcombine.low %v2161, %v2168
      %v2172 = vunpack.c.l.s4 1966171168
      %v2173 = vunpack.c.0.s8 %v2172
      %v2174 = vlaneseq
      %v2175 = vshrl.u32 %v2174, 7
      %v2176 = vsub.s32 %v2173, %v2175
      %v2177 = vrot.slane %v2169, %v2176
      %v2179 = vunpack.c.l.s4 1966171168
      %v2180 = vunpack.c.0.s8 %v2179
      %v2181 = vlaneseq
      %v2182 = vshrl.u32 %v2181, 7
      %v2183 = vsub.s32 %v2180, %v2182
      %v2184 = vrot.slane %v2170, %v2183
      %v2185 = vcombine.low %v2177, %v2184
      %v2186 = vcombine.low %v1146, %v1129
      %v2187 = vcombine.low %v1143, %v1145
      %v2188 = vcombine.low %v1147, %v1170
      %v2189 = vcombine.low %v1184, %v1185
      %v2191 = vunpack.c.l.s4 1966171168
      %v2192 = vunpack.c.0.s8 %v2191
      %v2193 = vlaneseq
      %v2194 = vshrl.u32 %v2193, 7
      %v2195 = vsub.s32 %v2192, %v2194
      %v2196 = vrot.slane %v2186, %v2195
      %v2198 = vunpack.c.l.s4 1966171168
      %v2199 = vunpack.c.0.s8 %v2198
      %v2200 = vlaneseq
      %v2201 = vshrl.u32 %v2200, 7
      %v2202 = vsub.s32 %v2199, %v2201
      %v2203 = vrot.slane %v2187, %v2202
      %v2205 = vunpack.c.l.s4 1966171168
      %v2206 = vunpack.c.0.s8 %v2205
      %v2207 = vlaneseq
      %v2208 = vshrl.u32 %v2207, 7
      %v2209 = vsub.s32 %v2206, %v2208
      %v2210 = vrot.slane %v2188, %v2209
      %v2212 = vunpack.c.l.s4 1966171168
      %v2213 = vunpack.c.0.s8 %v2212
      %v2214 = vlaneseq
      %v2215 = vshrl.u32 %v2214, 7
      %v2216 = vsub.s32 %v2213, %v2215
      %v2217 = vrot.slane %v2189, %v2216
      %v2218 = vcombine.low %v2196, %v2203
      %v2219 = vcombine.low %v2210, %v2217
      %v2221 = vunpack.c.l.s4 1966171168
      %v2222 = vunpack.c.0.s8 %v2221
      %v2223 = vlaneseq
      %v2224 = vshrl.u32 %v2223, 7
      %v2225 = vsub.s32 %v2222, %v2224
      %v2226 = vrot.slane %v2218, %v2225
      %v2228 = vunpack.c.l.s4 1966171168
      %v2229 = vunpack.c.0.s8 %v2228
      %v2230 = vlaneseq
      %v2231 = vshrl.u32 %v2230, 7
      %v2232 = vsub.s32 %v2229, %v2231
      %v2233 = vrot.slane %v2219, %v2232
      %v2234 = vcombine.low %v2226, %v2233
      %v2235 = vcombine.low %v1186, %v1177
      %v2236 = vcombine.low %v1210, %v1224
      %v2237 = vcombine.low %v1232, %v1234
      %v2238 = vcombine.low %v1217, %v1231
      %v2240 = vunpack.c.l.s4 1966171168
      %v2241 = vunpack.c.0.s8 %v2240
      %v2242 = vlaneseq
      %v2243 = vshrl.u32 %v2242, 7
      %v2244 = vsub.s32 %v2241, %v2243
      %v2245 = vrot.slane %v2235, %v2244
      %v2247 = vunpack.c.l.s4 1966171168
      %v2248 = vunpack.c.0.s8 %v2247
      %v2249 = vlaneseq
      %v2250 = vshrl.u32 %v2249, 7
      %v2251 = vsub.s32 %v2248, %v2250
      %v2252 = vrot.slane %v2236, %v2251
      %v2254 = vunpack.c.l.s4 1966171168
      %v2255 = vunpack.c.0.s8 %v2254
      %v2256 = vlaneseq
      %v2257 = vshrl.u32 %v2256, 7
      %v2258 = vsub.s32 %v2255, %v2257
      %v2259 = vrot.slane %v2237, %v2258
      %v2261 = vunpack.c.l.s4 1966171168
      %v2262 = vunpack.c.0.s8 %v2261
      %v2263 = vlaneseq
      %v2264 = vshrl.u32 %v2263, 7
      %v2265 = vsub.s32 %v2262, %v2264
      %v2266 = vrot.slane %v2238, %v2265
      %v2267 = vcombine.low %v2245, %v2252
      %v2268 = vcombine.low %v2259, %v2266
      %v2270 = vunpack.c.l.s4 1966171168
      %v2271 = vunpack.c.0.s8 %v2270
      %v2272 = vlaneseq
      %v2273 = vshrl.u32 %v2272, 7
      %v2274 = vsub.s32 %v2271, %v2273
      %v2275 = vrot.slane %v2267, %v2274
      %v2277 = vunpack.c.l.s4 1966171168
      %v2278 = vunpack.c.0.s8 %v2277
      %v2279 = vlaneseq
      %v2280 = vshrl.u32 %v2279, 7
      %v2281 = vsub.s32 %v2278, %v2280
      %v2282 = vrot.slane %v2268, %v2281
      %v2283 = vcombine.low %v2275, %v2282
      %v2284 = vcombine.low %v1233, %v1235
      %v2285 = vcombine.low %v1258, %v1272
      %v2286 = vcombine.low %v1273, %v1274
      %v2287 = vcombine.low %v1265, %v1298
      %v2289 = vunpack.c.l.s4 1966171168
      %v2290 = vunpack.c.0.s8 %v2289
      %v2291 = vlaneseq
      %v2292 = vshrl.u32 %v2291, 7
      %v2293 = vsub.s32 %v2290, %v2292
      %v2294 = vrot.slane %v2284, %v2293
      %v2296 = vunpack.c.l.s4 1966171168
      %v2297 = vunpack.c.0.s8 %v2296
      %v2298 = vlaneseq
      %v2299 = vshrl.u32 %v2298, 7
      %v2300 = vsub.s32 %v2297, %v2299
      %v2301 = vrot.slane %v2285, %v2300
      %v2303 = vunpack.c.l.s4 1966171168
      %v2304 = vunpack.c.0.s8 %v2303
      %v2305 = vlaneseq
      %v2306 = vshrl.u32 %v2305, 7
      %v2307 = vsub.s32 %v2304, %v2306
      %v2308 = vrot.slane %v2286, %v2307
      %v2310 = vunpack.c.l.s4 1966171168
      %v2311 = vunpack.c.0.s8 %v2310
      %v2312 = vlaneseq
      %v2313 = vshrl.u32 %v2312, 7
      %v2314 = vsub.s32 %v2311, %v2313
      %v2315 = vrot.slane %v2287, %v2314
      %v2316 = vcombine.low %v2294, %v2301
      %v2317 = vcombine.low %v2308, %v2315
      %v2319 = vunpack.c.l.s4 1966171168
      %v2320 = vunpack.c.0.s8 %v2319
      %v2321 = vlaneseq
      %v2322 = vshrl.u32 %v2321, 7
      %v2323 = vsub.s32 %v2320, %v2322
      %v2324 = vrot.slane %v2316, %v2323
      %v2326 = vunpack.c.l.s4 1966171168
      %v2327 = vunpack.c.0.s8 %v2326
      %v2328 = vlaneseq
      %v2329 = vshrl.u32 %v2328, 7
      %v2330 = vsub.s32 %v2327, %v2329
      %v2331 = vrot.slane %v2317, %v2330
      %v2332 = vcombine.low %v2324, %v2331
      %v2333 = vcombine.low %v1312, %v1320
      %v2334 = vcombine.low %v1322, %v1305
      %v2335 = vcombine.low %v1319, %v1321
      %v2336 = vcombine.low %v1323, %v1346
      %v2338 = vunpack.c.l.s4 1966171168
      %v2339 = vunpack.c.0.s8 %v2338
      %v2340 = vlaneseq
      %v2341 = vshrl.u32 %v2340, 7
      %v2342 = vsub.s32 %v2339, %v2341
      %v2343 = vrot.slane %v2333, %v2342
      %v2345 = vunpack.c.l.s4 1966171168
      %v2346 = vunpack.c.0.s8 %v2345
      %v2347 = vlaneseq
      %v2348 = vshrl.u32 %v2347, 7
      %v2349 = vsub.s32 %v2346, %v2348
      %v2350 = vrot.slane %v2334, %v2349
      %v2352 = vunpack.c.l.s4 1966171168
      %v2353 = vunpack.c.0.s8 %v2352
      %v2354 = vlaneseq
      %v2355 = vshrl.u32 %v2354, 7
      %v2356 = vsub.s32 %v2353, %v2355
      %v2357 = vrot.slane %v2335, %v2356
      %v2359 = vunpack.c.l.s4 1966171168
      %v2360 = vunpack.c.0.s8 %v2359
      %v2361 = vlaneseq
      %v2362 = vshrl.u32 %v2361, 7
      %v2363 = vsub.s32 %v2360, %v2362
      %v2364 = vrot.slane %v2336, %v2363
      %v2365 = vcombine.low %v2343, %v2350
      %v2366 = vcombine.low %v2357, %v2364
      %v2368 = vunpack.c.l.s4 1966171168
      %v2369 = vunpack.c.0.s8 %v2368
      %v2370 = vlaneseq
      %v2371 = vshrl.u32 %v2370, 7
      %v2372 = vsub.s32 %v2369, %v2371
      %v2373 = vrot.slane %v2365, %v2372
      %v2375 = vunpack.c.l.s4 1966171168
      %v2376 = vunpack.c.0.s8 %v2375
      %v2377 = vlaneseq
      %v2378 = vshrl.u32 %v2377, 7
      %v2379 = vsub.s32 %v2376, %v2378
      %v2380 = vrot.slane %v2366, %v2379
      %v2381 = vcombine.low %v2373, %v2380
      %v2382 = vcombine.low %v1360, %v1361
      %v2383 = vcombine.low %v1362, %v1353
      %v2384 = vcombine.low %v1386, %v1400
      %v2385 = vcombine.low %v1408, %v1410
      %v2387 = vunpack.c.l.s4 1966171168
      %v2388 = vunpack.c.0.s8 %v2387
      %v2389 = vlaneseq
      %v2390 = vshrl.u32 %v2389, 7
      %v2391 = vsub.s32 %v2388, %v2390
      %v2392 = vrot.slane %v2382, %v2391
      %v2394 = vunpack.c.l.s4 1966171168
      %v2395 = vunpack.c.0.s8 %v2394
      %v2396 = vlaneseq
      %v2397 = vshrl.u32 %v2396, 7
      %v2398 = vsub.s32 %v2395, %v2397
      %v2399 = vrot.slane %v2383, %v2398
      %v2401 = vunpack.c.l.s4 1966171168
      %v2402 = vunpack.c.0.s8 %v2401
      %v2403 = vlaneseq
      %v2404 = vshrl.u32 %v2403, 7
      %v2405 = vsub.s32 %v2402, %v2404
      %v2406 = vrot.slane %v2384, %v2405
      %v2408 = vunpack.c.l.s4 1966171168
      %v2409 = vunpack.c.0.s8 %v2408
      %v2410 = vlaneseq
      %v2411 = vshrl.u32 %v2410, 7
      %v2412 = vsub.s32 %v2409, %v2411
      %v2413 = vrot.slane %v2385, %v2412
      %v2414 = vcombine.low %v2392, %v2399
      %v2415 = vcombine.low %v2406, %v2413
      %v2417 = vunpack.c.l.s4 1966171168
      %v2418 = vunpack.c.0.s8 %v2417
      %v2419 = vlaneseq
      %v2420 = vshrl.u32 %v2419, 7
      %v2421 = vsub.s32 %v2418, %v2420
      %v2422 = vrot.slane %v2414, %v2421
      %v2424 = vunpack.c.l.s4 1966171168
      %v2425 = vunpack.c.0.s8 %v2424
      %v2426 = vlaneseq
      %v2427 = vshrl.u32 %v2426, 7
      %v2428 = vsub.s32 %v2425, %v2427
      %v2429 = vrot.slane %v2415, %v2428
      %v2430 = vcombine.low %v2422, %v2429
      %v2431 = vcombine.low %v1393, %v1407
      %v2432 = vcombine.low %v1409, %v1411
      %v2433 = vcombine.low %v1434, %v1448
      %v2434 = vcombine.low %v1449, %v1450
      %v2436 = vunpack.c.l.s4 1966171168
      %v2437 = vunpack.c.0.s8 %v2436
      %v2438 = vlaneseq
      %v2439 = vshrl.u32 %v2438, 7
      %v2440 = vsub.s32 %v2437, %v2439
      %v2441 = vrot.slane %v2431, %v2440
      %v2443 = vunpack.c.l.s4 1966171168
      %v2444 = vunpack.c.0.s8 %v2443
      %v2445 = vlaneseq
      %v2446 = vshrl.u32 %v2445, 7
      %v2447 = vsub.s32 %v2444, %v2446
      %v2448 = vrot.slane %v2432, %v2447
      %v2450 = vunpack.c.l.s4 1966171168
      %v2451 = vunpack.c.0.s8 %v2450
      %v2452 = vlaneseq
      %v2453 = vshrl.u32 %v2452, 7
      %v2454 = vsub.s32 %v2451, %v2453
      %v2455 = vrot.slane %v2433, %v2454
      %v2457 = vunpack.c.l.s4 1966171168
      %v2458 = vunpack.c.0.s8 %v2457
      %v2459 = vlaneseq
      %v2460 = vshrl.u32 %v2459, 7
      %v2461 = vsub.s32 %v2458, %v2460
      %v2462 = vrot.slane %v2434, %v2461
      %v2463 = vcombine.low %v2441, %v2448
      %v2464 = vcombine.low %v2455, %v2462
      %v2466 = vunpack.c.l.s4 1966171168
      %v2467 = vunpack.c.0.s8 %v2466
      %v2468 = vlaneseq
      %v2469 = vshrl.u32 %v2468, 7
      %v2470 = vsub.s32 %v2467, %v2469
      %v2471 = vrot.slane %v2463, %v2470
      %v2473 = vunpack.c.l.s4 1966171168
      %v2474 = vunpack.c.0.s8 %v2473
      %v2475 = vlaneseq
      %v2476 = vshrl.u32 %v2475, 7
      %v2477 = vsub.s32 %v2474, %v2476
      %v2478 = vrot.slane %v2464, %v2477
      %v2479 = vcombine.low %v2471, %v2478
      %v2481 = vunpack.c.l.s4 1966171168
      %v2482 = vunpack.c.0.s8 %v2481
      %v2483 = vlaneseq
      %v2484 = vshrl.u32 %v2483, 7
      %v2485 = vsub.s32 %v2482, %v2484
      %v2486 = vrot.slane %v1441, %v2485
      %v2488 = vunpack.c.l.s4 1966171168
      %v2489 = vunpack.c.0.s8 %v2488
      %v2490 = vlaneseq
      %v2491 = vshrl.u32 %v2490, 7
      %v2492 = vsub.s32 %v2489, %v2491
      %v2493 = vrot.slane %v2486, %v2492
      %vm2516 = vcmask 31744
      %2517 = vst.msk [vmem:[#allocation2] sm:$0xff] %vm2516, %v1499
      %2518 = vst.msk [vmem:[#allocation2 + $0x8] sm:$0xff] %vm2516, %v1548
      %2519 = vst.msk [vmem:[#allocation2 + $0x10] sm:$0xff] %vm2516, %v1597
      %2520 = vst.msk [vmem:[#allocation2 + $0x18] sm:$0xff] %vm2516, %v1646
      %2521 = vst.msk [vmem:[#allocation2 + $0x20] sm:$0xff] %vm2516, %v1695
      %2522 = vst.msk [vmem:[#allocation2 + $0x28] sm:$0xff] %vm2516, %v1744
      %2523 = vst.msk [vmem:[#allocation2 + $0x30] sm:$0xff] %vm2516, %v1793
      %2524 = vst.msk [vmem:[#allocation2 + $0x38] sm:$0xff] %vm2516, %v1842
      %2525 = vst.msk [vmem:[#allocation2 + $0x40] sm:$0xff] %vm2516, %v1891
      %2526 = vst.msk [vmem:[#allocation2 + $0x48] sm:$0xff] %vm2516, %v1940
      %2527 = vst.msk [vmem:[#allocation2 + $0x50] sm:$0xff] %vm2516, %v1989
      %2528 = vst.msk [vmem:[#allocation2 + $0x58] sm:$0xff] %vm2516, %v2038
      %2529 = vst.msk [vmem:[#allocation2 + $0x60] sm:$0xff] %vm2516, %v2087
      %2530 = vst.msk [vmem:[#allocation2 + $0x68] sm:$0xff] %vm2516, %v2136
      %2531 = vst.msk [vmem:[#allocation2 + $0x70] sm:$0xff] %vm2516, %v2185
      %2532 = vst.msk [vmem:[#allocation2 + $0x78] sm:$0xff] %vm2516, %v2234
      %2533 = vst.msk [vmem:[#allocation2 + $0x80] sm:$0xff] %vm2516, %v2283
      %2534 = vst.msk [vmem:[#allocation2 + $0x88] sm:$0xff] %vm2516, %v2332
      %2535 = vst.msk [vmem:[#allocation2 + $0x90] sm:$0xff] %vm2516, %v2381
      %2536 = vst.msk [vmem:[#allocation2 + $0x98] sm:$0xff] %vm2516, %v2430
      %2537 = vst.msk [vmem:[#allocation2 + $0xa0] sm:$0xff] %vm2516, %v2479
      %vm2538 = vcmask 24576
      %2539 = vst.msk [vmem:[#allocation2 + $0xa8] sm:$0x1] %vm2538, %v2493
      %v2540 = vcombine.high %v370, %v370
      %v2542 = vunpack.c.l.s4 1966171168
      %v2543 = vunpack.c.0.s8 %v2542
      %v2544 = vlaneseq
      %v2545 = vshrl.u32 %v2544, 7
      %v2546 = vsub.s32 %v2543, %v2545
      %v2547 = vrot.slane %v2540, %v2546
      %v2548 = vcombine.high %v458, %v458
      %v2550 = vunpack.c.l.s4 1966171168
      %v2551 = vunpack.c.0.s8 %v2550
      %v2552 = vlaneseq
      %v2553 = vshrl.u32 %v2552, 7
      %v2554 = vsub.s32 %v2551, %v2553
      %v2555 = vrot.slane %v2548, %v2554
      %v2556 = vcombine.high %v546, %v546
      %v2558 = vunpack.c.l.s4 1966171168
      %v2559 = vunpack.c.0.s8 %v2558
      %v2560 = vlaneseq
      %v2561 = vshrl.u32 %v2560, 7
      %v2562 = vsub.s32 %v2559, %v2561
      %v2563 = vrot.slane %v2556, %v2562
      %v2564 = vcombine.high %v634, %v634
      %v2566 = vunpack.c.l.s4 1966171168
      %v2567 = vunpack.c.0.s8 %v2566
      %v2568 = vlaneseq
      %v2569 = vshrl.u32 %v2568, 7
      %v2570 = vsub.s32 %v2567, %v2569
      %v2571 = vrot.slane %v2564, %v2570
      %v2572 = vcombine.high %v722, %v722
      %v2574 = vunpack.c.l.s4 1966171168
      %v2575 = vunpack.c.0.s8 %v2574
      %v2576 = vlaneseq
      %v2577 = vshrl.u32 %v2576, 7
      %v2578 = vsub.s32 %v2575, %v2577
      %v2579 = vrot.slane %v2572, %v2578
      %v2580 = vcombine.high %v810, %v810
      %v2582 = vunpack.c.l.s4 1966171168
      %v2583 = vunpack.c.0.s8 %v2582
      %v2584 = vlaneseq
      %v2585 = vshrl.u32 %v2584, 7
      %v2586 = vsub.s32 %v2583, %v2585
      %v2587 = vrot.slane %v2580, %v2586
      %v2588 = vcombine.high %v898, %v898
      %v2590 = vunpack.c.l.s4 1966171168
      %v2591 = vunpack.c.0.s8 %v2590
      %v2592 = vlaneseq
      %v2593 = vshrl.u32 %v2592, 7
      %v2594 = vsub.s32 %v2591, %v2593
      %v2595 = vrot.slane %v2588, %v2594
      %v2596 = vcombine.high %v986, %v986
      %v2598 = vunpack.c.l.s4 1966171168
      %v2599 = vunpack.c.0.s8 %v2598
      %v2600 = vlaneseq
      %v2601 = vshrl.u32 %v2600, 7
      %v2602 = vsub.s32 %v2599, %v2601
      %v2603 = vrot.slane %v2596, %v2602
      %v2604 = vcombine.high %v1074, %v1074
      %v2606 = vunpack.c.l.s4 1966171168
      %v2607 = vunpack.c.0.s8 %v2606
      %v2608 = vlaneseq
      %v2609 = vshrl.u32 %v2608, 7
      %v2610 = vsub.s32 %v2607, %v2609
      %v2611 = vrot.slane %v2604, %v2610
      %v2612 = vcombine.high %v1162, %v1162
      %v2614 = vunpack.c.l.s4 1966171168
      %v2615 = vunpack.c.0.s8 %v2614
      %v2616 = vlaneseq
      %v2617 = vshrl.u32 %v2616, 7
      %v2618 = vsub.s32 %v2615, %v2617
      %v2619 = vrot.slane %v2612, %v2618
      %v2620 = vcombine.high %v1250, %v1250
      %v2622 = vunpack.c.l.s4 1966171168
      %v2623 = vunpack.c.0.s8 %v2622
      %v2624 = vlaneseq
      %v2625 = vshrl.u32 %v2624, 7
      %v2626 = vsub.s32 %v2623, %v2625
      %v2627 = vrot.slane %v2620, %v2626
      %v2628 = vcombine.high %v1338, %v1338
      %v2630 = vunpack.c.l.s4 1966171168
      %v2631 = vunpack.c.0.s8 %v2630
      %v2632 = vlaneseq
      %v2633 = vshrl.u32 %v2632, 7
      %v2634 = vsub.s32 %v2631, %v2633
      %v2635 = vrot.slane %v2628, %v2634
      %v2636 = vcombine.high %v1426, %v1426
      %v2638 = vunpack.c.l.s4 1966171168
      %v2639 = vunpack.c.0.s8 %v2638
      %v2640 = vlaneseq
      %v2641 = vshrl.u32 %v2640, 7
      %v2642 = vsub.s32 %v2639, %v2641
      %v2643 = vrot.slane %v2636, %v2642
      %v2644 = vcombine.low %v344, %v352
      %v2645 = vcombine.low %v354, %v337
      %v2646 = vcombine.low %v351, %v353
      %v2647 = vcombine.low %v355, %v378
      %v2649 = vunpack.c.l.s4 1966171168
      %v2650 = vunpack.c.0.s8 %v2649
      %v2651 = vlaneseq
      %v2652 = vshrl.u32 %v2651, 7
      %v2653 = vsub.s32 %v2650, %v2652
      %v2654 = vrot.slane %v2644, %v2653
      %v2656 = vunpack.c.l.s4 1966171168
      %v2657 = vunpack.c.0.s8 %v2656
      %v2658 = vlaneseq
      %v2659 = vshrl.u32 %v2658, 7
      %v2660 = vsub.s32 %v2657, %v2659
      %v2661 = vrot.slane %v2645, %v2660
      %v2663 = vunpack.c.l.s4 1966171168
      %v2664 = vunpack.c.0.s8 %v2663
      %v2665 = vlaneseq
      %v2666 = vshrl.u32 %v2665, 7
      %v2667 = vsub.s32 %v2664, %v2666
      %v2668 = vrot.slane %v2646, %v2667
      %v2670 = vunpack.c.l.s4 1966171168
      %v2671 = vunpack.c.0.s8 %v2670
      %v2672 = vlaneseq
      %v2673 = vshrl.u32 %v2672, 7
      %v2674 = vsub.s32 %v2671, %v2673
      %v2675 = vrot.slane %v2647, %v2674
      %v2676 = vcombine.low %v2654, %v2661
      %v2677 = vcombine.low %v2668, %v2675
      %v2679 = vunpack.c.l.s4 1966171168
      %v2680 = vunpack.c.0.s8 %v2679
      %v2681 = vlaneseq
      %v2682 = vshrl.u32 %v2681, 7
      %v2683 = vsub.s32 %v2680, %v2682
      %v2684 = vrot.slane %v2676, %v2683
      %v2686 = vunpack.c.l.s4 1966171168
      %v2687 = vunpack.c.0.s8 %v2686
      %v2688 = vlaneseq
      %v2689 = vshrl.u32 %v2688, 7
      %v2690 = vsub.s32 %v2687, %v2689
      %v2691 = vrot.slane %v2677, %v2690
      %v2692 = vcombine.low %v2684, %v2691
      %v2693 = vcombine.low %v392, %v393
      %v2694 = vcombine.low %v394, %v385
      %v2695 = vcombine.low %v2547, %v432
      %v2696 = vcombine.low %v440, %v442
      %v2698 = vunpack.c.l.s4 1966171168
      %v2699 = vunpack.c.0.s8 %v2698
      %v2700 = vlaneseq
      %v2701 = vshrl.u32 %v2700, 7
      %v2702 = vsub.s32 %v2699, %v2701
      %v2703 = vrot.slane %v2693, %v2702
      %v2705 = vunpack.c.l.s4 1966171168
      %v2706 = vunpack.c.0.s8 %v2705
      %v2707 = vlaneseq
      %v2708 = vshrl.u32 %v2707, 7
      %v2709 = vsub.s32 %v2706, %v2708
      %v2710 = vrot.slane %v2694, %v2709
      %v2712 = vunpack.c.l.s4 1966171168
      %v2713 = vunpack.c.0.s8 %v2712
      %v2714 = vlaneseq
      %v2715 = vshrl.u32 %v2714, 7
      %v2716 = vsub.s32 %v2713, %v2715
      %v2717 = vrot.slane %v2695, %v2716
      %v2719 = vunpack.c.l.s4 1966171168
      %v2720 = vunpack.c.0.s8 %v2719
      %v2721 = vlaneseq
      %v2722 = vshrl.u32 %v2721, 7
      %v2723 = vsub.s32 %v2720, %v2722
      %v2724 = vrot.slane %v2696, %v2723
      %v2725 = vcombine.low %v2703, %v2710
      %v2726 = vcombine.low %v2717, %v2724
      %v2728 = vunpack.c.l.s4 1966171168
      %v2729 = vunpack.c.0.s8 %v2728
      %v2730 = vlaneseq
      %v2731 = vshrl.u32 %v2730, 7
      %v2732 = vsub.s32 %v2729, %v2731
      %v2733 = vrot.slane %v2725, %v2732
      %v2735 = vunpack.c.l.s4 1966171168
      %v2736 = vunpack.c.0.s8 %v2735
      %v2737 = vlaneseq
      %v2738 = vshrl.u32 %v2737, 7
      %v2739 = vsub.s32 %v2736, %v2738
      %v2740 = vrot.slane %v2726, %v2739
      %v2741 = vcombine.low %v2733, %v2740
      %v2742 = vcombine.low %v425, %v439
      %v2743 = vcombine.low %v441, %v443
      %v2744 = vcombine.low %v466, %v480
      %v2745 = vcombine.low %v481, %v482
      %v2747 = vunpack.c.l.s4 1966171168
      %v2748 = vunpack.c.0.s8 %v2747
      %v2749 = vlaneseq
      %v2750 = vshrl.u32 %v2749, 7
      %v2751 = vsub.s32 %v2748, %v2750
      %v2752 = vrot.slane %v2742, %v2751
      %v2754 = vunpack.c.l.s4 1966171168
      %v2755 = vunpack.c.0.s8 %v2754
      %v2756 = vlaneseq
      %v2757 = vshrl.u32 %v2756, 7
      %v2758 = vsub.s32 %v2755, %v2757
      %v2759 = vrot.slane %v2743, %v2758
      %v2761 = vunpack.c.l.s4 1966171168
      %v2762 = vunpack.c.0.s8 %v2761
      %v2763 = vlaneseq
      %v2764 = vshrl.u32 %v2763, 7
      %v2765 = vsub.s32 %v2762, %v2764
      %v2766 = vrot.slane %v2744, %v2765
      %v2768 = vunpack.c.l.s4 1966171168
      %v2769 = vunpack.c.0.s8 %v2768
      %v2770 = vlaneseq
      %v2771 = vshrl.u32 %v2770, 7
      %v2772 = vsub.s32 %v2769, %v2771
      %v2773 = vrot.slane %v2745, %v2772
      %v2774 = vcombine.low %v2752, %v2759
      %v2775 = vcombine.low %v2766, %v2773
      %v2777 = vunpack.c.l.s4 1966171168
      %v2778 = vunpack.c.0.s8 %v2777
      %v2779 = vlaneseq
      %v2780 = vshrl.u32 %v2779, 7
      %v2781 = vsub.s32 %v2778, %v2780
      %v2782 = vrot.slane %v2774, %v2781
      %v2784 = vunpack.c.l.s4 1966171168
      %v2785 = vunpack.c.0.s8 %v2784
      %v2786 = vlaneseq
      %v2787 = vshrl.u32 %v2786, 7
      %v2788 = vsub.s32 %v2785, %v2787
      %v2789 = vrot.slane %v2775, %v2788
      %v2790 = vcombine.low %v2782, %v2789
      %v2791 = vcombine.low %v473, %v2555
      %v2792 = vcombine.low %v520, %v528
      %v2793 = vcombine.low %v530, %v513
      %v2794 = vcombine.low %v527, %v529
      %v2796 = vunpack.c.l.s4 1966171168
      %v2797 = vunpack.c.0.s8 %v2796
      %v2798 = vlaneseq
      %v2799 = vshrl.u32 %v2798, 7
      %v2800 = vsub.s32 %v2797, %v2799
      %v2801 = vrot.slane %v2791, %v2800
      %v2803 = vunpack.c.l.s4 1966171168
      %v2804 = vunpack.c.0.s8 %v2803
      %v2805 = vlaneseq
      %v2806 = vshrl.u32 %v2805, 7
      %v2807 = vsub.s32 %v2804, %v2806
      %v2808 = vrot.slane %v2792, %v2807
      %v2810 = vunpack.c.l.s4 1966171168
      %v2811 = vunpack.c.0.s8 %v2810
      %v2812 = vlaneseq
      %v2813 = vshrl.u32 %v2812, 7
      %v2814 = vsub.s32 %v2811, %v2813
      %v2815 = vrot.slane %v2793, %v2814
      %v2817 = vunpack.c.l.s4 1966171168
      %v2818 = vunpack.c.0.s8 %v2817
      %v2819 = vlaneseq
      %v2820 = vshrl.u32 %v2819, 7
      %v2821 = vsub.s32 %v2818, %v2820
      %v2822 = vrot.slane %v2794, %v2821
      %v2823 = vcombine.low %v2801, %v2808
      %v2824 = vcombine.low %v2815, %v2822
      %v2826 = vunpack.c.l.s4 1966171168
      %v2827 = vunpack.c.0.s8 %v2826
      %v2828 = vlaneseq
      %v2829 = vshrl.u32 %v2828, 7
      %v2830 = vsub.s32 %v2827, %v2829
      %v2831 = vrot.slane %v2823, %v2830
      %v2833 = vunpack.c.l.s4 1966171168
      %v2834 = vunpack.c.0.s8 %v2833
      %v2835 = vlaneseq
      %v2836 = vshrl.u32 %v2835, 7
      %v2837 = vsub.s32 %v2834, %v2836
      %v2838 = vrot.slane %v2824, %v2837
      %v2839 = vcombine.low %v2831, %v2838
      %v2840 = vcombine.low %v531, %v554
      %v2841 = vcombine.low %v568, %v569
      %v2842 = vcombine.low %v570, %v561
      %v2843 = vcombine.low %v2563, %v608
      %v2845 = vunpack.c.l.s4 1966171168
      %v2846 = vunpack.c.0.s8 %v2845
      %v2847 = vlaneseq
      %v2848 = vshrl.u32 %v2847, 7
      %v2849 = vsub.s32 %v2846, %v2848
      %v2850 = vrot.slane %v2840, %v2849
      %v2852 = vunpack.c.l.s4 1966171168
      %v2853 = vunpack.c.0.s8 %v2852
      %v2854 = vlaneseq
      %v2855 = vshrl.u32 %v2854, 7
      %v2856 = vsub.s32 %v2853, %v2855
      %v2857 = vrot.slane %v2841, %v2856
      %v2859 = vunpack.c.l.s4 1966171168
      %v2860 = vunpack.c.0.s8 %v2859
      %v2861 = vlaneseq
      %v2862 = vshrl.u32 %v2861, 7
      %v2863 = vsub.s32 %v2860, %v2862
      %v2864 = vrot.slane %v2842, %v2863
      %v2866 = vunpack.c.l.s4 1966171168
      %v2867 = vunpack.c.0.s8 %v2866
      %v2868 = vlaneseq
      %v2869 = vshrl.u32 %v2868, 7
      %v2870 = vsub.s32 %v2867, %v2869
      %v2871 = vrot.slane %v2843, %v2870
      %v2872 = vcombine.low %v2850, %v2857
      %v2873 = vcombine.low %v2864, %v2871
      %v2875 = vunpack.c.l.s4 1966171168
      %v2876 = vunpack.c.0.s8 %v2875
      %v2877 = vlaneseq
      %v2878 = vshrl.u32 %v2877, 7
      %v2879 = vsub.s32 %v2876, %v2878
      %v2880 = vrot.slane %v2872, %v2879
      %v2882 = vunpack.c.l.s4 1966171168
      %v2883 = vunpack.c.0.s8 %v2882
      %v2884 = vlaneseq
      %v2885 = vshrl.u32 %v2884, 7
      %v2886 = vsub.s32 %v2883, %v2885
      %v2887 = vrot.slane %v2873, %v2886
      %v2888 = vcombine.low %v2880, %v2887
      %v2889 = vcombine.low %v616, %v618
      %v2890 = vcombine.low %v601, %v615
      %v2891 = vcombine.low %v617, %v619
      %v2892 = vcombine.low %v642, %v656
      %v2894 = vunpack.c.l.s4 1966171168
      %v2895 = vunpack.c.0.s8 %v2894
      %v2896 = vlaneseq
      %v2897 = vshrl.u32 %v2896, 7
      %v2898 = vsub.s32 %v2895, %v2897
      %v2899 = vrot.slane %v2889, %v2898
      %v2901 = vunpack.c.l.s4 1966171168
      %v2902 = vunpack.c.0.s8 %v2901
      %v2903 = vlaneseq
      %v2904 = vshrl.u32 %v2903, 7
      %v2905 = vsub.s32 %v2902, %v2904
      %v2906 = vrot.slane %v2890, %v2905
      %v2908 = vunpack.c.l.s4 1966171168
      %v2909 = vunpack.c.0.s8 %v2908
      %v2910 = vlaneseq
      %v2911 = vshrl.u32 %v2910, 7
      %v2912 = vsub.s32 %v2909, %v2911
      %v2913 = vrot.slane %v2891, %v2912
      %v2915 = vunpack.c.l.s4 1966171168
      %v2916 = vunpack.c.0.s8 %v2915
      %v2917 = vlaneseq
      %v2918 = vshrl.u32 %v2917, 7
      %v2919 = vsub.s32 %v2916, %v2918
      %v2920 = vrot.slane %v2892, %v2919
      %v2921 = vcombine.low %v2899, %v2906
      %v2922 = vcombine.low %v2913, %v2920
      %v2924 = vunpack.c.l.s4 1966171168
      %v2925 = vunpack.c.0.s8 %v2924
      %v2926 = vlaneseq
      %v2927 = vshrl.u32 %v2926, 7
      %v2928 = vsub.s32 %v2925, %v2927
      %v2929 = vrot.slane %v2921, %v2928
      %v2931 = vunpack.c.l.s4 1966171168
      %v2932 = vunpack.c.0.s8 %v2931
      %v2933 = vlaneseq
      %v2934 = vshrl.u32 %v2933, 7
      %v2935 = vsub.s32 %v2932, %v2934
      %v2936 = vrot.slane %v2922, %v2935
      %v2937 = vcombine.low %v2929, %v2936
      %v2938 = vcombine.low %v657, %v658
      %v2939 = vcombine.low %v649, %v2571
      %v2940 = vcombine.low %v696, %v704
      %v2941 = vcombine.low %v706, %v689
      %v2943 = vunpack.c.l.s4 1966171168
      %v2944 = vunpack.c.0.s8 %v2943
      %v2945 = vlaneseq
      %v2946 = vshrl.u32 %v2945, 7
      %v2947 = vsub.s32 %v2944, %v2946
      %v2948 = vrot.slane %v2938, %v2947
      %v2950 = vunpack.c.l.s4 1966171168
      %v2951 = vunpack.c.0.s8 %v2950
      %v2952 = vlaneseq
      %v2953 = vshrl.u32 %v2952, 7
      %v2954 = vsub.s32 %v2951, %v2953
      %v2955 = vrot.slane %v2939, %v2954
      %v2957 = vunpack.c.l.s4 1966171168
      %v2958 = vunpack.c.0.s8 %v2957
      %v2959 = vlaneseq
      %v2960 = vshrl.u32 %v2959, 7
      %v2961 = vsub.s32 %v2958, %v2960
      %v2962 = vrot.slane %v2940, %v2961
      %v2964 = vunpack.c.l.s4 1966171168
      %v2965 = vunpack.c.0.s8 %v2964
      %v2966 = vlaneseq
      %v2967 = vshrl.u32 %v2966, 7
      %v2968 = vsub.s32 %v2965, %v2967
      %v2969 = vrot.slane %v2941, %v2968
      %v2970 = vcombine.low %v2948, %v2955
      %v2971 = vcombine.low %v2962, %v2969
      %v2973 = vunpack.c.l.s4 1966171168
      %v2974 = vunpack.c.0.s8 %v2973
      %v2975 = vlaneseq
      %v2976 = vshrl.u32 %v2975, 7
      %v2977 = vsub.s32 %v2974, %v2976
      %v2978 = vrot.slane %v2970, %v2977
      %v2980 = vunpack.c.l.s4 1966171168
      %v2981 = vunpack.c.0.s8 %v2980
      %v2982 = vlaneseq
      %v2983 = vshrl.u32 %v2982, 7
      %v2984 = vsub.s32 %v2981, %v2983
      %v2985 = vrot.slane %v2971, %v2984
      %v2986 = vcombine.low %v2978, %v2985
      %v2987 = vcombine.low %v703, %v705
      %v2988 = vcombine.low %v707, %v730
      %v2989 = vcombine.low %v744, %v745
      %v2990 = vcombine.low %v746, %v737
      %v2992 = vunpack.c.l.s4 1966171168
      %v2993 = vunpack.c.0.s8 %v2992
      %v2994 = vlaneseq
      %v2995 = vshrl.u32 %v2994, 7
      %v2996 = vsub.s32 %v2993, %v2995
      %v2997 = vrot.slane %v2987, %v2996
      %v2999 = vunpack.c.l.s4 1966171168
      %v3000 = vunpack.c.0.s8 %v2999
      %v3001 = vlaneseq
      %v3002 = vshrl.u32 %v3001, 7
      %v3003 = vsub.s32 %v3000, %v3002
      %v3004 = vrot.slane %v2988, %v3003
      %v3006 = vunpack.c.l.s4 1966171168
      %v3007 = vunpack.c.0.s8 %v3006
      %v3008 = vlaneseq
      %v3009 = vshrl.u32 %v3008, 7
      %v3010 = vsub.s32 %v3007, %v3009
      %v3011 = vrot.slane %v2989, %v3010
      %v3013 = vunpack.c.l.s4 1966171168
      %v3014 = vunpack.c.0.s8 %v3013
      %v3015 = vlaneseq
      %v3016 = vshrl.u32 %v3015, 7
      %v3017 = vsub.s32 %v3014, %v3016
      %v3018 = vrot.slane %v2990, %v3017
      %v3019 = vcombine.low %v2997, %v3004
      %v3020 = vcombine.low %v3011, %v3018
      %v3022 = vunpack.c.l.s4 1966171168
      %v3023 = vunpack.c.0.s8 %v3022
      %v3024 = vlaneseq
      %v3025 = vshrl.u32 %v3024, 7
      %v3026 = vsub.s32 %v3023, %v3025
      %v3027 = vrot.slane %v3019, %v3026
      %v3029 = vunpack.c.l.s4 1966171168
      %v3030 = vunpack.c.0.s8 %v3029
      %v3031 = vlaneseq
      %v3032 = vshrl.u32 %v3031, 7
      %v3033 = vsub.s32 %v3030, %v3032
      %v3034 = vrot.slane %v3020, %v3033
      %v3035 = vcombine.low %v3027, %v3034
      %v3036 = vcombine.low %v2579, %v784
      %v3037 = vcombine.low %v792, %v794
      %v3038 = vcombine.low %v777, %v791
      %v3039 = vcombine.low %v793, %v795
      %v3041 = vunpack.c.l.s4 1966171168
      %v3042 = vunpack.c.0.s8 %v3041
      %v3043 = vlaneseq
      %v3044 = vshrl.u32 %v3043, 7
      %v3045 = vsub.s32 %v3042, %v3044
      %v3046 = vrot.slane %v3036, %v3045
      %v3048 = vunpack.c.l.s4 1966171168
      %v3049 = vunpack.c.0.s8 %v3048
      %v3050 = vlaneseq
      %v3051 = vshrl.u32 %v3050, 7
      %v3052 = vsub.s32 %v3049, %v3051
      %v3053 = vrot.slane %v3037, %v3052
      %v3055 = vunpack.c.l.s4 1966171168
      %v3056 = vunpack.c.0.s8 %v3055
      %v3057 = vlaneseq
      %v3058 = vshrl.u32 %v3057, 7
      %v3059 = vsub.s32 %v3056, %v3058
      %v3060 = vrot.slane %v3038, %v3059
      %v3062 = vunpack.c.l.s4 1966171168
      %v3063 = vunpack.c.0.s8 %v3062
      %v3064 = vlaneseq
      %v3065 = vshrl.u32 %v3064, 7
      %v3066 = vsub.s32 %v3063, %v3065
      %v3067 = vrot.slane %v3039, %v3066
      %v3068 = vcombine.low %v3046, %v3053
      %v3069 = vcombine.low %v3060, %v3067
      %v3071 = vunpack.c.l.s4 1966171168
      %v3072 = vunpack.c.0.s8 %v3071
      %v3073 = vlaneseq
      %v3074 = vshrl.u32 %v3073, 7
      %v3075 = vsub.s32 %v3072, %v3074
      %v3076 = vrot.slane %v3068, %v3075
      %v3078 = vunpack.c.l.s4 1966171168
      %v3079 = vunpack.c.0.s8 %v3078
      %v3080 = vlaneseq
      %v3081 = vshrl.u32 %v3080, 7
      %v3082 = vsub.s32 %v3079, %v3081
      %v3083 = vrot.slane %v3069, %v3082
      %v3084 = vcombine.low %v3076, %v3083
      %v3085 = vcombine.low %v818, %v832
      %v3086 = vcombine.low %v833, %v834
      %v3087 = vcombine.low %v825, %v2587
      %v3088 = vcombine.low %v872, %v880
      %v3090 = vunpack.c.l.s4 1966171168
      %v3091 = vunpack.c.0.s8 %v3090
      %v3092 = vlaneseq
      %v3093 = vshrl.u32 %v3092, 7
      %v3094 = vsub.s32 %v3091, %v3093
      %v3095 = vrot.slane %v3085, %v3094
      %v3097 = vunpack.c.l.s4 1966171168
      %v3098 = vunpack.c.0.s8 %v3097
      %v3099 = vlaneseq
      %v3100 = vshrl.u32 %v3099, 7
      %v3101 = vsub.s32 %v3098, %v3100
      %v3102 = vrot.slane %v3086, %v3101
      %v3104 = vunpack.c.l.s4 1966171168
      %v3105 = vunpack.c.0.s8 %v3104
      %v3106 = vlaneseq
      %v3107 = vshrl.u32 %v3106, 7
      %v3108 = vsub.s32 %v3105, %v3107
      %v3109 = vrot.slane %v3087, %v3108
      %v3111 = vunpack.c.l.s4 1966171168
      %v3112 = vunpack.c.0.s8 %v3111
      %v3113 = vlaneseq
      %v3114 = vshrl.u32 %v3113, 7
      %v3115 = vsub.s32 %v3112, %v3114
      %v3116 = vrot.slane %v3088, %v3115
      %v3117 = vcombine.low %v3095, %v3102
      %v3118 = vcombine.low %v3109, %v3116
      %v3120 = vunpack.c.l.s4 1966171168
      %v3121 = vunpack.c.0.s8 %v3120
      %v3122 = vlaneseq
      %v3123 = vshrl.u32 %v3122, 7
      %v3124 = vsub.s32 %v3121, %v3123
      %v3125 = vrot.slane %v3117, %v3124
      %v3127 = vunpack.c.l.s4 1966171168
      %v3128 = vunpack.c.0.s8 %v3127
      %v3129 = vlaneseq
      %v3130 = vshrl.u32 %v3129, 7
      %v3131 = vsub.s32 %v3128, %v3130
      %v3132 = vrot.slane %v3118, %v3131
      %v3133 = vcombine.low %v3125, %v3132
      %v3134 = vcombine.low %v882, %v865
      %v3135 = vcombine.low %v879, %v881
      %v3136 = vcombine.low %v883, %v906
      %v3137 = vcombine.low %v920, %v921
      %v3139 = vunpack.c.l.s4 1966171168
      %v3140 = vunpack.c.0.s8 %v3139
      %v3141 = vlaneseq
      %v3142 = vshrl.u32 %v3141, 7
      %v3143 = vsub.s32 %v3140, %v3142
      %v3144 = vrot.slane %v3134, %v3143
      %v3146 = vunpack.c.l.s4 1966171168
      %v3147 = vunpack.c.0.s8 %v3146
      %v3148 = vlaneseq
      %v3149 = vshrl.u32 %v3148, 7
      %v3150 = vsub.s32 %v3147, %v3149
      %v3151 = vrot.slane %v3135, %v3150
      %v3153 = vunpack.c.l.s4 1966171168
      %v3154 = vunpack.c.0.s8 %v3153
      %v3155 = vlaneseq
      %v3156 = vshrl.u32 %v3155, 7
      %v3157 = vsub.s32 %v3154, %v3156
      %v3158 = vrot.slane %v3136, %v3157
      %v3160 = vunpack.c.l.s4 1966171168
      %v3161 = vunpack.c.0.s8 %v3160
      %v3162 = vlaneseq
      %v3163 = vshrl.u32 %v3162, 7
      %v3164 = vsub.s32 %v3161, %v3163
      %v3165 = vrot.slane %v3137, %v3164
      %v3166 = vcombine.low %v3144, %v3151
      %v3167 = vcombine.low %v3158, %v3165
      %v3169 = vunpack.c.l.s4 1966171168
      %v3170 = vunpack.c.0.s8 %v3169
      %v3171 = vlaneseq
      %v3172 = vshrl.u32 %v3171, 7
      %v3173 = vsub.s32 %v3170, %v3172
      %v3174 = vrot.slane %v3166, %v3173
      %v3176 = vunpack.c.l.s4 1966171168
      %v3177 = vunpack.c.0.s8 %v3176
      %v3178 = vlaneseq
      %v3179 = vshrl.u32 %v3178, 7
      %v3180 = vsub.s32 %v3177, %v3179
      %v3181 = vrot.slane %v3167, %v3180
      %v3182 = vcombine.low %v3174, %v3181
      %v3183 = vcombine.low %v922, %v913
      %v3184 = vcombine.low %v2595, %v960
      %v3185 = vcombine.low %v968, %v970
      %v3186 = vcombine.low %v953, %v967
      %v3188 = vunpack.c.l.s4 1966171168
      %v3189 = vunpack.c.0.s8 %v3188
      %v3190 = vlaneseq
      %v3191 = vshrl.u32 %v3190, 7
      %v3192 = vsub.s32 %v3189, %v3191
      %v3193 = vrot.slane %v3183, %v3192
      %v3195 = vunpack.c.l.s4 1966171168
      %v3196 = vunpack.c.0.s8 %v3195
      %v3197 = vlaneseq
      %v3198 = vshrl.u32 %v3197, 7
      %v3199 = vsub.s32 %v3196, %v3198
      %v3200 = vrot.slane %v3184, %v3199
      %v3202 = vunpack.c.l.s4 1966171168
      %v3203 = vunpack.c.0.s8 %v3202
      %v3204 = vlaneseq
      %v3205 = vshrl.u32 %v3204, 7
      %v3206 = vsub.s32 %v3203, %v3205
      %v3207 = vrot.slane %v3185, %v3206
      %v3209 = vunpack.c.l.s4 1966171168
      %v3210 = vunpack.c.0.s8 %v3209
      %v3211 = vlaneseq
      %v3212 = vshrl.u32 %v3211, 7
      %v3213 = vsub.s32 %v3210, %v3212
      %v3214 = vrot.slane %v3186, %v3213
      %v3215 = vcombine.low %v3193, %v3200
      %v3216 = vcombine.low %v3207, %v3214
      %v3218 = vunpack.c.l.s4 1966171168
      %v3219 = vunpack.c.0.s8 %v3218
      %v3220 = vlaneseq
      %v3221 = vshrl.u32 %v3220, 7
      %v3222 = vsub.s32 %v3219, %v3221
      %v3223 = vrot.slane %v3215, %v3222
      %v3225 = vunpack.c.l.s4 1966171168
      %v3226 = vunpack.c.0.s8 %v3225
      %v3227 = vlaneseq
      %v3228 = vshrl.u32 %v3227, 7
      %v3229 = vsub.s32 %v3226, %v3228
      %v3230 = vrot.slane %v3216, %v3229
      %v3231 = vcombine.low %v3223, %v3230
      %v3232 = vcombine.low %v969, %v971
      %v3233 = vcombine.low %v994, %v1008
      %v3234 = vcombine.low %v1009, %v1010
      %v3235 = vcombine.low %v1001, %v2603
      %v3237 = vunpack.c.l.s4 1966171168
      %v3238 = vunpack.c.0.s8 %v3237
      %v3239 = vlaneseq
      %v3240 = vshrl.u32 %v3239, 7
      %v3241 = vsub.s32 %v3238, %v3240
      %v3242 = vrot.slane %v3232, %v3241
      %v3244 = vunpack.c.l.s4 1966171168
      %v3245 = vunpack.c.0.s8 %v3244
      %v3246 = vlaneseq
      %v3247 = vshrl.u32 %v3246, 7
      %v3248 = vsub.s32 %v3245, %v3247
      %v3249 = vrot.slane %v3233, %v3248
      %v3251 = vunpack.c.l.s4 1966171168
      %v3252 = vunpack.c.0.s8 %v3251
      %v3253 = vlaneseq
      %v3254 = vshrl.u32 %v3253, 7
      %v3255 = vsub.s32 %v3252, %v3254
      %v3256 = vrot.slane %v3234, %v3255
      %v3258 = vunpack.c.l.s4 1966171168
      %v3259 = vunpack.c.0.s8 %v3258
      %v3260 = vlaneseq
      %v3261 = vshrl.u32 %v3260, 7
      %v3262 = vsub.s32 %v3259, %v3261
      %v3263 = vrot.slane %v3235, %v3262
      %v3264 = vcombine.low %v3242, %v3249
      %v3265 = vcombine.low %v3256, %v3263
      %v3267 = vunpack.c.l.s4 1966171168
      %v3268 = vunpack.c.0.s8 %v3267
      %v3269 = vlaneseq
      %v3270 = vshrl.u32 %v3269, 7
      %v3271 = vsub.s32 %v3268, %v3270
      %v3272 = vrot.slane %v3264, %v3271
      %v3274 = vunpack.c.l.s4 1966171168
      %v3275 = vunpack.c.0.s8 %v3274
      %v3276 = vlaneseq
      %v3277 = vshrl.u32 %v3276, 7
      %v3278 = vsub.s32 %v3275, %v3277
      %v3279 = vrot.slane %v3265, %v3278
      %v3280 = vcombine.low %v3272, %v3279
      %v3281 = vcombine.low %v1048, %v1056
      %v3282 = vcombine.low %v1058, %v1041
      %v3283 = vcombine.low %v1055, %v1057
      %v3284 = vcombine.low %v1059, %v1082
      %v3286 = vunpack.c.l.s4 1966171168
      %v3287 = vunpack.c.0.s8 %v3286
      %v3288 = vlaneseq
      %v3289 = vshrl.u32 %v3288, 7
      %v3290 = vsub.s32 %v3287, %v3289
      %v3291 = vrot.slane %v3281, %v3290
      %v3293 = vunpack.c.l.s4 1966171168
      %v3294 = vunpack.c.0.s8 %v3293
      %v3295 = vlaneseq
      %v3296 = vshrl.u32 %v3295, 7
      %v3297 = vsub.s32 %v3294, %v3296
      %v3298 = vrot.slane %v3282, %v3297
      %v3300 = vunpack.c.l.s4 1966171168
      %v3301 = vunpack.c.0.s8 %v3300
      %v3302 = vlaneseq
      %v3303 = vshrl.u32 %v3302, 7
      %v3304 = vsub.s32 %v3301, %v3303
      %v3305 = vrot.slane %v3283, %v3304
      %v3307 = vunpack.c.l.s4 1966171168
      %v3308 = vunpack.c.0.s8 %v3307
      %v3309 = vlaneseq
      %v3310 = vshrl.u32 %v3309, 7
      %v3311 = vsub.s32 %v3308, %v3310
      %v3312 = vrot.slane %v3284, %v3311
      %v3313 = vcombine.low %v3291, %v3298
      %v3314 = vcombine.low %v3305, %v3312
      %v3316 = vunpack.c.l.s4 1966171168
      %v3317 = vunpack.c.0.s8 %v3316
      %v3318 = vlaneseq
      %v3319 = vshrl.u32 %v3318, 7
      %v3320 = vsub.s32 %v3317, %v3319
      %v3321 = vrot.slane %v3313, %v3320
      %v3323 = vunpack.c.l.s4 1966171168
      %v3324 = vunpack.c.0.s8 %v3323
      %v3325 = vlaneseq
      %v3326 = vshrl.u32 %v3325, 7
      %v3327 = vsub.s32 %v3324, %v3326
      %v3328 = vrot.slane %v3314, %v3327
      %v3329 = vcombine.low %v3321, %v3328
      %v3330 = vcombine.low %v1096, %v1097
      %v3331 = vcombine.low %v1098, %v1089
      %v3332 = vcombine.low %v2611, %v1136
      %v3333 = vcombine.low %v1144, %v1146
      %v3335 = vunpack.c.l.s4 1966171168
      %v3336 = vunpack.c.0.s8 %v3335
      %v3337 = vlaneseq
      %v3338 = vshrl.u32 %v3337, 7
      %v3339 = vsub.s32 %v3336, %v3338
      %v3340 = vrot.slane %v3330, %v3339
      %v3342 = vunpack.c.l.s4 1966171168
      %v3343 = vunpack.c.0.s8 %v3342
      %v3344 = vlaneseq
      %v3345 = vshrl.u32 %v3344, 7
      %v3346 = vsub.s32 %v3343, %v3345
      %v3347 = vrot.slane %v3331, %v3346
      %v3349 = vunpack.c.l.s4 1966171168
      %v3350 = vunpack.c.0.s8 %v3349
      %v3351 = vlaneseq
      %v3352 = vshrl.u32 %v3351, 7
      %v3353 = vsub.s32 %v3350, %v3352
      %v3354 = vrot.slane %v3332, %v3353
      %v3356 = vunpack.c.l.s4 1966171168
      %v3357 = vunpack.c.0.s8 %v3356
      %v3358 = vlaneseq
      %v3359 = vshrl.u32 %v3358, 7
      %v3360 = vsub.s32 %v3357, %v3359
      %v3361 = vrot.slane %v3333, %v3360
      %v3362 = vcombine.low %v3340, %v3347
      %v3363 = vcombine.low %v3354, %v3361
      %v3365 = vunpack.c.l.s4 1966171168
      %v3366 = vunpack.c.0.s8 %v3365
      %v3367 = vlaneseq
      %v3368 = vshrl.u32 %v3367, 7
      %v3369 = vsub.s32 %v3366, %v3368
      %v3370 = vrot.slane %v3362, %v3369
      %v3372 = vunpack.c.l.s4 1966171168
      %v3373 = vunpack.c.0.s8 %v3372
      %v3374 = vlaneseq
      %v3375 = vshrl.u32 %v3374, 7
      %v3376 = vsub.s32 %v3373, %v3375
      %v3377 = vrot.slane %v3363, %v3376
      %v3378 = vcombine.low %v3370, %v3377
      %v3379 = vcombine.low %v1129, %v1143
      %v3380 = vcombine.low %v1145, %v1147
      %v3381 = vcombine.low %v1170, %v1184
      %v3382 = vcombine.low %v1185, %v1186
      %v3384 = vunpack.c.l.s4 1966171168
      %v3385 = vunpack.c.0.s8 %v3384
      %v3386 = vlaneseq
      %v3387 = vshrl.u32 %v3386, 7
      %v3388 = vsub.s32 %v3385, %v3387
      %v3389 = vrot.slane %v3379, %v3388
      %v3391 = vunpack.c.l.s4 1966171168
      %v3392 = vunpack.c.0.s8 %v3391
      %v3393 = vlaneseq
      %v3394 = vshrl.u32 %v3393, 7
      %v3395 = vsub.s32 %v3392, %v3394
      %v3396 = vrot.slane %v3380, %v3395
      %v3398 = vunpack.c.l.s4 1966171168
      %v3399 = vunpack.c.0.s8 %v3398
      %v3400 = vlaneseq
      %v3401 = vshrl.u32 %v3400, 7
      %v3402 = vsub.s32 %v3399, %v3401
      %v3403 = vrot.slane %v3381, %v3402
      %v3405 = vunpack.c.l.s4 1966171168
      %v3406 = vunpack.c.0.s8 %v3405
      %v3407 = vlaneseq
      %v3408 = vshrl.u32 %v3407, 7
      %v3409 = vsub.s32 %v3406, %v3408
      %v3410 = vrot.slane %v3382, %v3409
      %v3411 = vcombine.low %v3389, %v3396
      %v3412 = vcombine.low %v3403, %v3410
      %v3414 = vunpack.c.l.s4 1966171168
      %v3415 = vunpack.c.0.s8 %v3414
      %v3416 = vlaneseq
      %v3417 = vshrl.u32 %v3416, 7
      %v3418 = vsub.s32 %v3415, %v3417
      %v3419 = vrot.slane %v3411, %v3418
      %v3421 = vunpack.c.l.s4 1966171168
      %v3422 = vunpack.c.0.s8 %v3421
      %v3423 = vlaneseq
      %v3424 = vshrl.u32 %v3423, 7
      %v3425 = vsub.s32 %v3422, %v3424
      %v3426 = vrot.slane %v3412, %v3425
      %v3427 = vcombine.low %v3419, %v3426
      %v3428 = vcombine.low %v1177, %v2619
      %v3429 = vcombine.low %v1224, %v1232
      %v3430 = vcombine.low %v1234, %v1217
      %v3431 = vcombine.low %v1231, %v1233
      %v3433 = vunpack.c.l.s4 1966171168
      %v3434 = vunpack.c.0.s8 %v3433
      %v3435 = vlaneseq
      %v3436 = vshrl.u32 %v3435, 7
      %v3437 = vsub.s32 %v3434, %v3436
      %v3438 = vrot.slane %v3428, %v3437
      %v3440 = vunpack.c.l.s4 1966171168
      %v3441 = vunpack.c.0.s8 %v3440
      %v3442 = vlaneseq
      %v3443 = vshrl.u32 %v3442, 7
      %v3444 = vsub.s32 %v3441, %v3443
      %v3445 = vrot.slane %v3429, %v3444
      %v3447 = vunpack.c.l.s4 1966171168
      %v3448 = vunpack.c.0.s8 %v3447
      %v3449 = vlaneseq
      %v3450 = vshrl.u32 %v3449, 7
      %v3451 = vsub.s32 %v3448, %v3450
      %v3452 = vrot.slane %v3430, %v3451
      %v3454 = vunpack.c.l.s4 1966171168
      %v3455 = vunpack.c.0.s8 %v3454
      %v3456 = vlaneseq
      %v3457 = vshrl.u32 %v3456, 7
      %v3458 = vsub.s32 %v3455, %v3457
      %v3459 = vrot.slane %v3431, %v3458
      %v3460 = vcombine.low %v3438, %v3445
      %v3461 = vcombine.low %v3452, %v3459
      %v3463 = vunpack.c.l.s4 1966171168
      %v3464 = vunpack.c.0.s8 %v3463
      %v3465 = vlaneseq
      %v3466 = vshrl.u32 %v3465, 7
      %v3467 = vsub.s32 %v3464, %v3466
      %v3468 = vrot.slane %v3460, %v3467
      %v3470 = vunpack.c.l.s4 1966171168
      %v3471 = vunpack.c.0.s8 %v3470
      %v3472 = vlaneseq
      %v3473 = vshrl.u32 %v3472, 7
      %v3474 = vsub.s32 %v3471, %v3473
      %v3475 = vrot.slane %v3461, %v3474
      %v3476 = vcombine.low %v3468, %v3475
      %v3477 = vcombine.low %v1235, %v1258
      %v3478 = vcombine.low %v1272, %v1273
      %v3479 = vcombine.low %v1274, %v1265
      %v3480 = vcombine.low %v2627, %v1312
      %v3482 = vunpack.c.l.s4 1966171168
      %v3483 = vunpack.c.0.s8 %v3482
      %v3484 = vlaneseq
      %v3485 = vshrl.u32 %v3484, 7
      %v3486 = vsub.s32 %v3483, %v3485
      %v3487 = vrot.slane %v3477, %v3486
      %v3489 = vunpack.c.l.s4 1966171168
      %v3490 = vunpack.c.0.s8 %v3489
      %v3491 = vlaneseq
      %v3492 = vshrl.u32 %v3491, 7
      %v3493 = vsub.s32 %v3490, %v3492
      %v3494 = vrot.slane %v3478, %v3493
      %v3496 = vunpack.c.l.s4 1966171168
      %v3497 = vunpack.c.0.s8 %v3496
      %v3498 = vlaneseq
      %v3499 = vshrl.u32 %v3498, 7
      %v3500 = vsub.s32 %v3497, %v3499
      %v3501 = vrot.slane %v3479, %v3500
      %v3503 = vunpack.c.l.s4 1966171168
      %v3504 = vunpack.c.0.s8 %v3503
      %v3505 = vlaneseq
      %v3506 = vshrl.u32 %v3505, 7
      %v3507 = vsub.s32 %v3504, %v3506
      %v3508 = vrot.slane %v3480, %v3507
      %v3509 = vcombine.low %v3487, %v3494
      %v3510 = vcombine.low %v3501, %v3508
      %v3512 = vunpack.c.l.s4 1966171168
      %v3513 = vunpack.c.0.s8 %v3512
      %v3514 = vlaneseq
      %v3515 = vshrl.u32 %v3514, 7
      %v3516 = vsub.s32 %v3513, %v3515
      %v3517 = vrot.slane %v3509, %v3516
      %v3519 = vunpack.c.l.s4 1966171168
      %v3520 = vunpack.c.0.s8 %v3519
      %v3521 = vlaneseq
      %v3522 = vshrl.u32 %v3521, 7
      %v3523 = vsub.s32 %v3520, %v3522
      %v3524 = vrot.slane %v3510, %v3523
      %v3525 = vcombine.low %v3517, %v3524
      %v3526 = vcombine.low %v1320, %v1322
      %v3527 = vcombine.low %v1305, %v1319
      %v3528 = vcombine.low %v1321, %v1323
      %v3529 = vcombine.low %v1346, %v1360
      %v3531 = vunpack.c.l.s4 1966171168
      %v3532 = vunpack.c.0.s8 %v3531
      %v3533 = vlaneseq
      %v3534 = vshrl.u32 %v3533, 7
      %v3535 = vsub.s32 %v3532, %v3534
      %v3536 = vrot.slane %v3526, %v3535
      %v3538 = vunpack.c.l.s4 1966171168
      %v3539 = vunpack.c.0.s8 %v3538
      %v3540 = vlaneseq
      %v3541 = vshrl.u32 %v3540, 7
      %v3542 = vsub.s32 %v3539, %v3541
      %v3543 = vrot.slane %v3527, %v3542
      %v3545 = vunpack.c.l.s4 1966171168
      %v3546 = vunpack.c.0.s8 %v3545
      %v3547 = vlaneseq
      %v3548 = vshrl.u32 %v3547, 7
      %v3549 = vsub.s32 %v3546, %v3548
      %v3550 = vrot.slane %v3528, %v3549
      %v3552 = vunpack.c.l.s4 1966171168
      %v3553 = vunpack.c.0.s8 %v3552
      %v3554 = vlaneseq
      %v3555 = vshrl.u32 %v3554, 7
      %v3556 = vsub.s32 %v3553, %v3555
      %v3557 = vrot.slane %v3529, %v3556
      %v3558 = vcombine.low %v3536, %v3543
      %v3559 = vcombine.low %v3550, %v3557
      %v3561 = vunpack.c.l.s4 1966171168
      %v3562 = vunpack.c.0.s8 %v3561
      %v3563 = vlaneseq
      %v3564 = vshrl.u32 %v3563, 7
      %v3565 = vsub.s32 %v3562, %v3564
      %v3566 = vrot.slane %v3558, %v3565
      %v3568 = vunpack.c.l.s4 1966171168
      %v3569 = vunpack.c.0.s8 %v3568
      %v3570 = vlaneseq
      %v3571 = vshrl.u32 %v3570, 7
      %v3572 = vsub.s32 %v3569, %v3571
      %v3573 = vrot.slane %v3559, %v3572
      %v3574 = vcombine.low %v3566, %v3573
      %v3575 = vcombine.low %v1361, %v1362
      %v3576 = vcombine.low %v1353, %v2635
      %v3577 = vcombine.low %v1400, %v1408
      %v3578 = vcombine.low %v1410, %v1393
      %v3580 = vunpack.c.l.s4 1966171168
      %v3581 = vunpack.c.0.s8 %v3580
      %v3582 = vlaneseq
      %v3583 = vshrl.u32 %v3582, 7
      %v3584 = vsub.s32 %v3581, %v3583
      %v3585 = vrot.slane %v3575, %v3584
      %v3587 = vunpack.c.l.s4 1966171168
      %v3588 = vunpack.c.0.s8 %v3587
      %v3589 = vlaneseq
      %v3590 = vshrl.u32 %v3589, 7
      %v3591 = vsub.s32 %v3588, %v3590
      %v3592 = vrot.slane %v3576, %v3591
      %v3594 = vunpack.c.l.s4 1966171168
      %v3595 = vunpack.c.0.s8 %v3594
      %v3596 = vlaneseq
      %v3597 = vshrl.u32 %v3596, 7
      %v3598 = vsub.s32 %v3595, %v3597
      %v3599 = vrot.slane %v3577, %v3598
      %v3601 = vunpack.c.l.s4 1966171168
      %v3602 = vunpack.c.0.s8 %v3601
      %v3603 = vlaneseq
      %v3604 = vshrl.u32 %v3603, 7
      %v3605 = vsub.s32 %v3602, %v3604
      %v3606 = vrot.slane %v3578, %v3605
      %v3607 = vcombine.low %v3585, %v3592
      %v3608 = vcombine.low %v3599, %v3606
      %v3610 = vunpack.c.l.s4 1966171168
      %v3611 = vunpack.c.0.s8 %v3610
      %v3612 = vlaneseq
      %v3613 = vshrl.u32 %v3612, 7
      %v3614 = vsub.s32 %v3611, %v3613
      %v3615 = vrot.slane %v3607, %v3614
      %v3617 = vunpack.c.l.s4 1966171168
      %v3618 = vunpack.c.0.s8 %v3617
      %v3619 = vlaneseq
      %v3620 = vshrl.u32 %v3619, 7
      %v3621 = vsub.s32 %v3618, %v3620
      %v3622 = vrot.slane %v3608, %v3621
      %v3623 = vcombine.low %v3615, %v3622
      %v3624 = vcombine.low %v1407, %v1409
      %v3625 = vcombine.low %v1411, %v1434
      %v3626 = vcombine.low %v1448, %v1449
      %v3627 = vcombine.low %v1450, %v1441
      %v3629 = vunpack.c.l.s4 1966171168
      %v3630 = vunpack.c.0.s8 %v3629
      %v3631 = vlaneseq
      %v3632 = vshrl.u32 %v3631, 7
      %v3633 = vsub.s32 %v3630, %v3632
      %v3634 = vrot.slane %v3624, %v3633
      %v3636 = vunpack.c.l.s4 1966171168
      %v3637 = vunpack.c.0.s8 %v3636
      %v3638 = vlaneseq
      %v3639 = vshrl.u32 %v3638, 7
      %v3640 = vsub.s32 %v3637, %v3639
      %v3641 = vrot.slane %v3625, %v3640
      %v3643 = vunpack.c.l.s4 1966171168
      %v3644 = vunpack.c.0.s8 %v3643
      %v3645 = vlaneseq
      %v3646 = vshrl.u32 %v3645, 7
      %v3647 = vsub.s32 %v3644, %v3646
      %v3648 = vrot.slane %v3626, %v3647
      %v3650 = vunpack.c.l.s4 1966171168
      %v3651 = vunpack.c.0.s8 %v3650
      %v3652 = vlaneseq
      %v3653 = vshrl.u32 %v3652, 7
      %v3654 = vsub.s32 %v3651, %v3653
      %v3655 = vrot.slane %v3627, %v3654
      %v3656 = vcombine.low %v3634, %v3641
      %v3657 = vcombine.low %v3648, %v3655
      %v3659 = vunpack.c.l.s4 1966171168
      %v3660 = vunpack.c.0.s8 %v3659
      %v3661 = vlaneseq
      %v3662 = vshrl.u32 %v3661, 7
      %v3663 = vsub.s32 %v3660, %v3662
      %v3664 = vrot.slane %v3656, %v3663
      %v3666 = vunpack.c.l.s4 1966171168
      %v3667 = vunpack.c.0.s8 %v3666
      %v3668 = vlaneseq
      %v3669 = vshrl.u32 %v3668, 7
      %v3670 = vsub.s32 %v3667, %v3669
      %v3671 = vrot.slane %v3657, %v3670
      %v3672 = vcombine.low %v3664, %v3671
      %v3674 = vunpack.c.l.s4 1966171168
      %v3675 = vunpack.c.0.s8 %v3674
      %v3676 = vlaneseq
      %v3677 = vshrl.u32 %v3676, 7
      %v3678 = vsub.s32 %v3675, %v3677
      %v3679 = vrot.slane %v2643, %v3678
      %v3681 = vunpack.c.l.s4 1966171168
      %v3682 = vunpack.c.0.s8 %v3681
      %v3683 = vlaneseq
      %v3684 = vshrl.u32 %v3683, 7
      %v3685 = vsub.s32 %v3682, %v3684
      %v3686 = vrot.slane %v3679, %v3685
      %3687 = vrot.lane.b32.xlu0 %v2692, 4
      %v3688 = vpop.permute.xlu0 %3687
      %3689 = vrot.lane.b32.xlu0 %v2741, 4
      %v3690 = vpop.permute.xlu0 %3689
      %3691 = vrot.lane.b32.xlu0 %v2790, 4
      %v3692 = vpop.permute.xlu0 %3691
      %3693 = vrot.lane.b32.xlu0 %v2839, 4
      %v3694 = vpop.permute.xlu0 %3693
      %3695 = vrot.lane.b32.xlu0 %v2888, 4
      %v3696 = vpop.permute.xlu0 %3695
      %3697 = vrot.lane.b32.xlu0 %v2937, 4
      %v3698 = vpop.permute.xlu0 %3697
      %3699 = vrot.lane.b32.xlu0 %v2986, 4
      %v3700 = vpop.permute.xlu0 %3699
      %3701 = vrot.lane.b32.xlu0 %v3035, 4
      %v3702 = vpop.permute.xlu0 %3701
      %3703 = vrot.lane.b32.xlu0 %v3084, 4
      %v3704 = vpop.permute.xlu0 %3703
      %3705 = vrot.lane.b32.xlu0 %v3133, 4
      %v3706 = vpop.permute.xlu0 %3705
      %3707 = vrot.lane.b32.xlu0 %v3182, 4
      %v3708 = vpop.permute.xlu0 %3707
      %3709 = vrot.lane.b32.xlu0 %v3231, 4
      %v3710 = vpop.permute.xlu0 %3709
      %3711 = vrot.lane.b32.xlu0 %v3280, 4
      %v3712 = vpop.permute.xlu0 %3711
      %3713 = vrot.lane.b32.xlu0 %v3329, 4
      %v3714 = vpop.permute.xlu0 %3713
      %3715 = vrot.lane.b32.xlu0 %v3378, 4
      %v3716 = vpop.permute.xlu0 %3715
      %3717 = vrot.lane.b32.xlu0 %v3427, 4
      %v3718 = vpop.permute.xlu0 %3717
      %3719 = vrot.lane.b32.xlu0 %v3476, 4
      %v3720 = vpop.permute.xlu0 %3719
      %3721 = vrot.lane.b32.xlu0 %v3525, 4
      %v3722 = vpop.permute.xlu0 %3721
      %3723 = vrot.lane.b32.xlu0 %v3574, 4
      %v3724 = vpop.permute.xlu0 %3723
      %3725 = vrot.lane.b32.xlu0 %v3623, 4
      %v3726 = vpop.permute.xlu0 %3725
      %3727 = vrot.lane.b32.xlu0 %v3672, 4
      %v3728 = vpop.permute.xlu0 %3727
      %3729 = vrot.lane.b32.xlu0 %v3686, 4
      %v3730 = vpop.permute.xlu0 %3729
      %vm3753 = vcmask 64544
      %3754 = vst.msk [vmem:[#allocation2] sm:$0xff] %vm3753, %v3688
      %3755 = vst.msk [vmem:[#allocation2 + $0x8] sm:$0xff] %vm3753, %v3690
      %3756 = vst.msk [vmem:[#allocation2 + $0x10] sm:$0xff] %vm3753, %v3692
      %3757 = vst.msk [vmem:[#allocation2 + $0x18] sm:$0xff] %vm3753, %v3694
      %3758 = vst.msk [vmem:[#allocation2 + $0x20] sm:$0xff] %vm3753, %v3696
      %3759 = vst.msk [vmem:[#allocation2 + $0x28] sm:$0xff] %vm3753, %v3698
      %3760 = vst.msk [vmem:[#allocation2 + $0x30] sm:$0xff] %vm3753, %v3700
      %3761 = vst.msk [vmem:[#allocation2 + $0x38] sm:$0xff] %vm3753, %v3702
      %3762 = vst.msk [vmem:[#allocation2 + $0x40] sm:$0xff] %vm3753, %v3704
      %3763 = vst.msk [vmem:[#allocation2 + $0x48] sm:$0xff] %vm3753, %v3706
      %3764 = vst.msk [vmem:[#allocation2 + $0x50] sm:$0xff] %vm3753, %v3708
      %3765 = vst.msk [vmem:[#allocation2 + $0x58] sm:$0xff] %vm3753, %v3710
      %3766 = vst.msk [vmem:[#allocation2 + $0x60] sm:$0xff] %vm3753, %v3712
      %3767 = vst.msk [vmem:[#allocation2 + $0x68] sm:$0xff] %vm3753, %v3714
      %3768 = vst.msk [vmem:[#allocation2 + $0x70] sm:$0xff] %vm3753, %v3716
      %3769 = vst.msk [vmem:[#allocation2 + $0x78] sm:$0xff] %vm3753, %v3718
      %3770 = vst.msk [vmem:[#allocation2 + $0x80] sm:$0xff] %vm3753, %v3720
      %3771 = vst.msk [vmem:[#allocation2 + $0x88] sm:$0xff] %vm3753, %v3722
      %3772 = vst.msk [vmem:[#allocation2 + $0x90] sm:$0xff] %vm3753, %v3724
      %3773 = vst.msk [vmem:[#allocation2 + $0x98] sm:$0xff] %vm3753, %v3726
      %3774 = vst.msk [vmem:[#allocation2 + $0xa0] sm:$0xff] %vm3753, %v3728
      %vm3775 = vcmask 57376
      %3776 = vst.msk [vmem:[#allocation2 + $0xa8] sm:$0x1] %vm3775, %v3730
      %v3777 = vcombine.high %v385, %v385
      %v3778 = vcombine.high %v473, %v473
      %v3779 = vcombine.high %v561, %v561
      %v3780 = vcombine.high %v649, %v649
      %v3781 = vcombine.high %v737, %v737
      %v3782 = vcombine.high %v825, %v825
      %v3783 = vcombine.high %v913, %v913
      %v3784 = vcombine.high %v1001, %v1001
      %v3785 = vcombine.high %v1089, %v1089
      %v3786 = vcombine.high %v1177, %v1177
      %v3787 = vcombine.high %v1265, %v1265
      %v3788 = vcombine.high %v1353, %v1353
      %v3789 = vcombine.high %v1441, %v1441
      %v3790 = vcombine.low %v1468, %v1475
      %v3791 = vcombine.low %v1482, %v1510
      %v3793 = vunpack.c.l.s4 1966171168
      %v3794 = vunpack.c.0.s8 %v3793
      %v3795 = vlaneseq
      %v3796 = vshrl.u32 %v3795, 7
      %v3797 = vsub.s32 %v3794, %v3796
      %v3798 = vrot.slane %v3790, %v3797
      %v3800 = vunpack.c.l.s4 1966171168
      %v3801 = vunpack.c.0.s8 %v3800
      %v3802 = vlaneseq
      %v3803 = vshrl.u32 %v3802, 7
      %v3804 = vsub.s32 %v3801, %v3803
      %v3805 = vrot.slane %v3791, %v3804
      %v3806 = vcombine.low %v3798, %v3805
      %v3807 = vcombine.low %v385, %v2547
      %v3808 = vcombine.low %v3777, %v440
      %v3810 = vunpack.c.l.s4 1966171168
      %v3811 = vunpack.c.0.s8 %v3810
      %v3812 = vlaneseq
      %v3813 = vshrl.u32 %v3812, 7
      %v3814 = vsub.s32 %v3811, %v3813
      %v3815 = vrot.slane %v3807, %v3814
      %v3817 = vunpack.c.l.s4 1966171168
      %v3818 = vunpack.c.0.s8 %v3817
      %v3819 = vlaneseq
      %v3820 = vshrl.u32 %v3819, 7
      %v3821 = vsub.s32 %v3818, %v3820
      %v3822 = vrot.slane %v3808, %v3821
      %v3823 = vcombine.low %v1517, %v3815
      %v3824 = vcombine.low %v3822, %v1559
      %v3826 = vunpack.c.l.s4 1966171168
      %v3827 = vunpack.c.0.s8 %v3826
      %v3828 = vlaneseq
      %v3829 = vshrl.u32 %v3828, 7
      %v3830 = vsub.s32 %v3827, %v3829
      %v3831 = vrot.slane %v3823, %v3830
      %v3833 = vunpack.c.l.s4 1966171168
      %v3834 = vunpack.c.0.s8 %v3833
      %v3835 = vlaneseq
      %v3836 = vshrl.u32 %v3835, 7
      %v3837 = vsub.s32 %v3834, %v3836
      %v3838 = vrot.slane %v3824, %v3837
      %v3839 = vcombine.low %v3831, %v3838
      %v3840 = vcombine.low %v1566, %v1573
      %v3841 = vcombine.low %v1580, %v1608
      %v3843 = vunpack.c.l.s4 1966171168
      %v3844 = vunpack.c.0.s8 %v3843
      %v3845 = vlaneseq
      %v3846 = vshrl.u32 %v3845, 7
      %v3847 = vsub.s32 %v3844, %v3846
      %v3848 = vrot.slane %v3840, %v3847
      %v3850 = vunpack.c.l.s4 1966171168
      %v3851 = vunpack.c.0.s8 %v3850
      %v3852 = vlaneseq
      %v3853 = vshrl.u32 %v3852, 7
      %v3854 = vsub.s32 %v3851, %v3853
      %v3855 = vrot.slane %v3841, %v3854
      %v3856 = vcombine.low %v3848, %v3855
      %v3857 = vcombine.low %v2555, %v3778
      %v3859 = vunpack.c.l.s4 1966171168
      %v3860 = vunpack.c.0.s8 %v3859
      %v3861 = vlaneseq
      %v3862 = vshrl.u32 %v3861, 7
      %v3863 = vsub.s32 %v3860, %v3862
      %v3864 = vrot.slane %v3857, %v3863
      %v3865 = vcombine.low %v3864, %v1622
      %v3866 = vcombine.low %v1629, %v1657
      %v3868 = vunpack.c.l.s4 1966171168
      %v3869 = vunpack.c.0.s8 %v3868
      %v3870 = vlaneseq
      %v3871 = vshrl.u32 %v3870, 7
      %v3872 = vsub.s32 %v3869, %v3871
      %v3873 = vrot.slane %v3865, %v3872
      %v3875 = vunpack.c.l.s4 1966171168
      %v3876 = vunpack.c.0.s8 %v3875
      %v3877 = vlaneseq
      %v3878 = vshrl.u32 %v3877, 7
      %v3879 = vsub.s32 %v3876, %v3878
      %v3880 = vrot.slane %v3866, %v3879
      %v3881 = vcombine.low %v3873, %v3880
      %v3882 = vcombine.low %v561, %v2563
      %v3883 = vcombine.low %v3779, %v616
      %v3885 = vunpack.c.l.s4 1966171168
      %v3886 = vunpack.c.0.s8 %v3885
      %v3887 = vlaneseq
      %v3888 = vshrl.u32 %v3887, 7
      %v3889 = vsub.s32 %v3886, %v3888
      %v3890 = vrot.slane %v3882, %v3889
      %v3892 = vunpack.c.l.s4 1966171168
      %v3893 = vunpack.c.0.s8 %v3892
      %v3894 = vlaneseq
      %v3895 = vshrl.u32 %v3894, 7
      %v3896 = vsub.s32 %v3893, %v3895
      %v3897 = vrot.slane %v3883, %v3896
      %v3898 = vcombine.low %v1664, %v1671
      %v3899 = vcombine.low %v3890, %v3897
      %v3901 = vunpack.c.l.s4 1966171168
      %v3902 = vunpack.c.0.s8 %v3901
      %v3903 = vlaneseq
      %v3904 = vshrl.u32 %v3903, 7
      %v3905 = vsub.s32 %v3902, %v3904
      %v3906 = vrot.slane %v3898, %v3905
      %v3908 = vunpack.c.l.s4 1966171168
      %v3909 = vunpack.c.0.s8 %v3908
      %v3910 = vlaneseq
      %v3911 = vshrl.u32 %v3910, 7
      %v3912 = vsub.s32 %v3909, %v3911
      %v3913 = vrot.slane %v3899, %v3912
      %v3914 = vcombine.low %v3906, %v3913
      %v3915 = vcombine.low %v1713, %v1720
      %v3916 = vcombine.low %v1727, %v1755
      %v3918 = vunpack.c.l.s4 1966171168
      %v3919 = vunpack.c.0.s8 %v3918
      %v3920 = vlaneseq
      %v3921 = vshrl.u32 %v3920, 7
      %v3922 = vsub.s32 %v3919, %v3921
      %v3923 = vrot.slane %v3915, %v3922
      %v3925 = vunpack.c.l.s4 1966171168
      %v3926 = vunpack.c.0.s8 %v3925
      %v3927 = vlaneseq
      %v3928 = vshrl.u32 %v3927, 7
      %v3929 = vsub.s32 %v3926, %v3928
      %v3930 = vrot.slane %v3916, %v3929
      %v3931 = vcombine.low %v3923, %v3930
      %v3932 = vcombine.low %v2571, %v3780
      %v3934 = vunpack.c.l.s4 1966171168
      %v3935 = vunpack.c.0.s8 %v3934
      %v3936 = vlaneseq
      %v3937 = vshrl.u32 %v3936, 7
      %v3938 = vsub.s32 %v3935, %v3937
      %v3939 = vrot.slane %v3932, %v3938
      %v3940 = vcombine.low %v1762, %v3939
      %v3941 = vcombine.low %v1776, %v1804
      %v3943 = vunpack.c.l.s4 1966171168
      %v3944 = vunpack.c.0.s8 %v3943
      %v3945 = vlaneseq
      %v3946 = vshrl.u32 %v3945, 7
      %v3947 = vsub.s32 %v3944, %v3946
      %v3948 = vrot.slane %v3940, %v3947
      %v3950 = vunpack.c.l.s4 1966171168
      %v3951 = vunpack.c.0.s8 %v3950
      %v3952 = vlaneseq
      %v3953 = vshrl.u32 %v3952, 7
      %v3954 = vsub.s32 %v3951, %v3953
      %v3955 = vrot.slane %v3941, %v3954
      %v3956 = vcombine.low %v3948, %v3955
      %v3957 = vcombine.low %v737, %v2579
      %v3959 = vunpack.c.l.s4 1966171168
      %v3960 = vunpack.c.0.s8 %v3959
      %v3961 = vlaneseq
      %v3962 = vshrl.u32 %v3961, 7
      %v3963 = vsub.s32 %v3960, %v3962
      %v3964 = vrot.slane %v3957, %v3963
      %v3965 = vcombine.low %v1811, %v1818
      %v3966 = vcombine.low %v1825, %v3964
      %v3968 = vunpack.c.l.s4 1966171168
      %v3969 = vunpack.c.0.s8 %v3968
      %v3970 = vlaneseq
      %v3971 = vshrl.u32 %v3970, 7
      %v3972 = vsub.s32 %v3969, %v3971
      %v3973 = vrot.slane %v3965, %v3972
      %v3975 = vunpack.c.l.s4 1966171168
      %v3976 = vunpack.c.0.s8 %v3975
      %v3977 = vlaneseq
      %v3978 = vshrl.u32 %v3977, 7
      %v3979 = vsub.s32 %v3976, %v3978
      %v3980 = vrot.slane %v3966, %v3979
      %v3981 = vcombine.low %v3973, %v3980
      %v3982 = vcombine.low %v3781, %v792
      %v3984 = vunpack.c.l.s4 1966171168
      %v3985 = vunpack.c.0.s8 %v3984
      %v3986 = vlaneseq
      %v3987 = vshrl.u32 %v3986, 7
      %v3988 = vsub.s32 %v3985, %v3987
      %v3989 = vrot.slane %v3982, %v3988
      %v3990 = vcombine.low %v3989, %v1867
      %v3991 = vcombine.low %v1874, %v1902
      %v3993 = vunpack.c.l.s4 1966171168
      %v3994 = vunpack.c.0.s8 %v3993
      %v3995 = vlaneseq
      %v3996 = vshrl.u32 %v3995, 7
      %v3997 = vsub.s32 %v3994, %v3996
      %v3998 = vrot.slane %v3990, %v3997
      %v4000 = vunpack.c.l.s4 1966171168
      %v4001 = vunpack.c.0.s8 %v4000
      %v4002 = vlaneseq
      %v4003 = vshrl.u32 %v4002, 7
      %v4004 = vsub.s32 %v4001, %v4003
      %v4005 = vrot.slane %v3991, %v4004
      %v4006 = vcombine.low %v3998, %v4005
      %v4007 = vcombine.low %v2587, %v3782
      %v4009 = vunpack.c.l.s4 1966171168
      %v4010 = vunpack.c.0.s8 %v4009
      %v4011 = vlaneseq
      %v4012 = vshrl.u32 %v4011, 7
      %v4013 = vsub.s32 %v4010, %v4012
      %v4014 = vrot.slane %v4007, %v4013
      %v4015 = vcombine.low %v1909, %v1916
      %v4016 = vcombine.low %v4014, %v1951
      %v4018 = vunpack.c.l.s4 1966171168
      %v4019 = vunpack.c.0.s8 %v4018
      %v4020 = vlaneseq
      %v4021 = vshrl.u32 %v4020, 7
      %v4022 = vsub.s32 %v4019, %v4021
      %v4023 = vrot.slane %v4015, %v4022
      %v4025 = vunpack.c.l.s4 1966171168
      %v4026 = vunpack.c.0.s8 %v4025
      %v4027 = vlaneseq
      %v4028 = vshrl.u32 %v4027, 7
      %v4029 = vsub.s32 %v4026, %v4028
      %v4030 = vrot.slane %v4016, %v4029
      %v4031 = vcombine.low %v4023, %v4030
      %v4032 = vcombine.low %v1958, %v1965
      %v4033 = vcombine.low %v1972, %v2000
      %v4035 = vunpack.c.l.s4 1966171168
      %v4036 = vunpack.c.0.s8 %v4035
      %v4037 = vlaneseq
      %v4038 = vshrl.u32 %v4037, 7
      %v4039 = vsub.s32 %v4036, %v4038
      %v4040 = vrot.slane %v4032, %v4039
      %v4042 = vunpack.c.l.s4 1966171168
      %v4043 = vunpack.c.0.s8 %v4042
      %v4044 = vlaneseq
      %v4045 = vshrl.u32 %v4044, 7
      %v4046 = vsub.s32 %v4043, %v4045
      %v4047 = vrot.slane %v4033, %v4046
      %v4048 = vcombine.low %v4040, %v4047
      %v4049 = vcombine.low %v913, %v2595
      %v4050 = vcombine.low %v3783, %v968
      %v4052 = vunpack.c.l.s4 1966171168
      %v4053 = vunpack.c.0.s8 %v4052
      %v4054 = vlaneseq
      %v4055 = vshrl.u32 %v4054, 7
      %v4056 = vsub.s32 %v4053, %v4055
      %v4057 = vrot.slane %v4049, %v4056
      %v4059 = vunpack.c.l.s4 1966171168
      %v4060 = vunpack.c.0.s8 %v4059
      %v4061 = vlaneseq
      %v4062 = vshrl.u32 %v4061, 7
      %v4063 = vsub.s32 %v4060, %v4062
      %v4064 = vrot.slane %v4050, %v4063
      %v4065 = vcombine.low %v4057, %v4064
      %v4066 = vcombine.low %v2021, %v2049
      %v4068 = vunpack.c.l.s4 1966171168
      %v4069 = vunpack.c.0.s8 %v4068
      %v4070 = vlaneseq
      %v4071 = vshrl.u32 %v4070, 7
      %v4072 = vsub.s32 %v4069, %v4071
      %v4073 = vrot.slane %v4065, %v4072
      %v4075 = vunpack.c.l.s4 1966171168
      %v4076 = vunpack.c.0.s8 %v4075
      %v4077 = vlaneseq
      %v4078 = vshrl.u32 %v4077, 7
      %v4079 = vsub.s32 %v4076, %v4078
      %v4080 = vrot.slane %v4066, %v4079
      %v4081 = vcombine.low %v4073, %v4080
      %v4082 = vcombine.low %v2603, %v3784
      %v4084 = vunpack.c.l.s4 1966171168
      %v4085 = vunpack.c.0.s8 %v4084
      %v4086 = vlaneseq
      %v4087 = vshrl.u32 %v4086, 7
      %v4088 = vsub.s32 %v4085, %v4087
      %v4089 = vrot.slane %v4082, %v4088
      %v4090 = vcombine.low %v2056, %v2063
      %v4091 = vcombine.low %v2070, %v4089
      %v4093 = vunpack.c.l.s4 1966171168
      %v4094 = vunpack.c.0.s8 %v4093
      %v4095 = vlaneseq
      %v4096 = vshrl.u32 %v4095, 7
      %v4097 = vsub.s32 %v4094, %v4096
      %v4098 = vrot.slane %v4090, %v4097
      %v4100 = vunpack.c.l.s4 1966171168
      %v4101 = vunpack.c.0.s8 %v4100
      %v4102 = vlaneseq
      %v4103 = vshrl.u32 %v4102, 7
      %v4104 = vsub.s32 %v4101, %v4103
      %v4105 = vrot.slane %v4091, %v4104
      %v4106 = vcombine.low %v4098, %v4105
      %v4107 = vcombine.low %v2105, %v2112
      %v4108 = vcombine.low %v2119, %v2147
      %v4110 = vunpack.c.l.s4 1966171168
      %v4111 = vunpack.c.0.s8 %v4110
      %v4112 = vlaneseq
      %v4113 = vshrl.u32 %v4112, 7
      %v4114 = vsub.s32 %v4111, %v4113
      %v4115 = vrot.slane %v4107, %v4114
      %v4117 = vunpack.c.l.s4 1966171168
      %v4118 = vunpack.c.0.s8 %v4117
      %v4119 = vlaneseq
      %v4120 = vshrl.u32 %v4119, 7
      %v4121 = vsub.s32 %v4118, %v4120
      %v4122 = vrot.slane %v4108, %v4121
      %v4123 = vcombine.low %v4115, %v4122
      %v4124 = vcombine.low %v1089, %v2611
      %v4125 = vcombine.low %v3785, %v1144
      %v4127 = vunpack.c.l.s4 1966171168
      %v4128 = vunpack.c.0.s8 %v4127
      %v4129 = vlaneseq
      %v4130 = vshrl.u32 %v4129, 7
      %v4131 = vsub.s32 %v4128, %v4130
      %v4132 = vrot.slane %v4124, %v4131
      %v4134 = vunpack.c.l.s4 1966171168
      %v4135 = vunpack.c.0.s8 %v4134
      %v4136 = vlaneseq
      %v4137 = vshrl.u32 %v4136, 7
      %v4138 = vsub.s32 %v4135, %v4137
      %v4139 = vrot.slane %v4125, %v4138
      %v4140 = vcombine.low %v2154, %v4132
      %v4141 = vcombine.low %v4139, %v2196
      %v4143 = vunpack.c.l.s4 1966171168
      %v4144 = vunpack.c.0.s8 %v4143
      %v4145 = vlaneseq
      %v4146 = vshrl.u32 %v4145, 7
      %v4147 = vsub.s32 %v4144, %v4146
      %v4148 = vrot.slane %v4140, %v4147
      %v4150 = vunpack.c.l.s4 1966171168
      %v4151 = vunpack.c.0.s8 %v4150
      %v4152 = vlaneseq
      %v4153 = vshrl.u32 %v4152, 7
      %v4154 = vsub.s32 %v4151, %v4153
      %v4155 = vrot.slane %v4141, %v4154
      %v4156 = vcombine.low %v4148, %v4155
      %v4157 = vcombine.low %v2203, %v2210
      %v4158 = vcombine.low %v2217, %v2245
      %v4160 = vunpack.c.l.s4 1966171168
      %v4161 = vunpack.c.0.s8 %v4160
      %v4162 = vlaneseq
      %v4163 = vshrl.u32 %v4162, 7
      %v4164 = vsub.s32 %v4161, %v4163
      %v4165 = vrot.slane %v4157, %v4164
      %v4167 = vunpack.c.l.s4 1966171168
      %v4168 = vunpack.c.0.s8 %v4167
      %v4169 = vlaneseq
      %v4170 = vshrl.u32 %v4169, 7
      %v4171 = vsub.s32 %v4168, %v4170
      %v4172 = vrot.slane %v4158, %v4171
      %v4173 = vcombine.low %v4165, %v4172
      %v4174 = vcombine.low %v2619, %v3786
      %v4176 = vunpack.c.l.s4 1966171168
      %v4177 = vunpack.c.0.s8 %v4176
      %v4178 = vlaneseq
      %v4179 = vshrl.u32 %v4178, 7
      %v4180 = vsub.s32 %v4177, %v4179
      %v4181 = vrot.slane %v4174, %v4180
      %v4182 = vcombine.low %v4181, %v2259
      %v4183 = vcombine.low %v2266, %v2294
      %v4185 = vunpack.c.l.s4 1966171168
      %v4186 = vunpack.c.0.s8 %v4185
      %v4187 = vlaneseq
      %v4188 = vshrl.u32 %v4187, 7
      %v4189 = vsub.s32 %v4186, %v4188
      %v4190 = vrot.slane %v4182, %v4189
      %v4192 = vunpack.c.l.s4 1966171168
      %v4193 = vunpack.c.0.s8 %v4192
      %v4194 = vlaneseq
      %v4195 = vshrl.u32 %v4194, 7
      %v4196 = vsub.s32 %v4193, %v4195
      %v4197 = vrot.slane %v4183, %v4196
      %v4198 = vcombine.low %v4190, %v4197
      %v4199 = vcombine.low %v1265, %v2627
      %v4200 = vcombine.low %v3787, %v1320
      %v4202 = vunpack.c.l.s4 1966171168
      %v4203 = vunpack.c.0.s8 %v4202
      %v4204 = vlaneseq
      %v4205 = vshrl.u32 %v4204, 7
      %v4206 = vsub.s32 %v4203, %v4205
      %v4207 = vrot.slane %v4199, %v4206
      %v4209 = vunpack.c.l.s4 1966171168
      %v4210 = vunpack.c.0.s8 %v4209
      %v4211 = vlaneseq
      %v4212 = vshrl.u32 %v4211, 7
      %v4213 = vsub.s32 %v4210, %v4212
      %v4214 = vrot.slane %v4200, %v4213
      %v4215 = vcombine.low %v2301, %v2308
      %v4216 = vcombine.low %v4207, %v4214
      %v4218 = vunpack.c.l.s4 1966171168
      %v4219 = vunpack.c.0.s8 %v4218
      %v4220 = vlaneseq
      %v4221 = vshrl.u32 %v4220, 7
      %v4222 = vsub.s32 %v4219, %v4221
      %v4223 = vrot.slane %v4215, %v4222
      %v4225 = vunpack.c.l.s4 1966171168
      %v4226 = vunpack.c.0.s8 %v4225
      %v4227 = vlaneseq
      %v4228 = vshrl.u32 %v4227, 7
      %v4229 = vsub.s32 %v4226, %v4228
      %v4230 = vrot.slane %v4216, %v4229
      %v4231 = vcombine.low %v4223, %v4230
      %v4232 = vcombine.low %v2350, %v2357
      %v4233 = vcombine.low %v2364, %v2392
      %v4235 = vunpack.c.l.s4 1966171168
      %v4236 = vunpack.c.0.s8 %v4235
      %v4237 = vlaneseq
      %v4238 = vshrl.u32 %v4237, 7
      %v4239 = vsub.s32 %v4236, %v4238
      %v4240 = vrot.slane %v4232, %v4239
      %v4242 = vunpack.c.l.s4 1966171168
      %v4243 = vunpack.c.0.s8 %v4242
      %v4244 = vlaneseq
      %v4245 = vshrl.u32 %v4244, 7
      %v4246 = vsub.s32 %v4243, %v4245
      %v4247 = vrot.slane %v4233, %v4246
      %v4248 = vcombine.low %v4240, %v4247
      %v4249 = vcombine.low %v2635, %v3788
      %v4251 = vunpack.c.l.s4 1966171168
      %v4252 = vunpack.c.0.s8 %v4251
      %v4253 = vlaneseq
      %v4254 = vshrl.u32 %v4253, 7
      %v4255 = vsub.s32 %v4252, %v4254
      %v4256 = vrot.slane %v4249, %v4255
      %v4257 = vcombine.low %v2399, %v4256
      %v4258 = vcombine.low %v2413, %v2441
      %v4260 = vunpack.c.l.s4 1966171168
      %v4261 = vunpack.c.0.s8 %v4260
      %v4262 = vlaneseq
      %v4263 = vshrl.u32 %v4262, 7
      %v4264 = vsub.s32 %v4261, %v4263
      %v4265 = vrot.slane %v4257, %v4264
      %v4267 = vunpack.c.l.s4 1966171168
      %v4268 = vunpack.c.0.s8 %v4267
      %v4269 = vlaneseq
      %v4270 = vshrl.u32 %v4269, 7
      %v4271 = vsub.s32 %v4268, %v4270
      %v4272 = vrot.slane %v4258, %v4271
      %v4273 = vcombine.low %v4265, %v4272
      %v4274 = vcombine.low %v1441, %v2643
      %v4276 = vunpack.c.l.s4 1966171168
      %v4277 = vunpack.c.0.s8 %v4276
      %v4278 = vlaneseq
      %v4279 = vshrl.u32 %v4278, 7
      %v4280 = vsub.s32 %v4277, %v4279
      %v4281 = vrot.slane %v4274, %v4280
      %v4282 = vcombine.low %v2448, %v2455
      %v4283 = vcombine.low %v2462, %v4281
      %v4285 = vunpack.c.l.s4 1966171168
      %v4286 = vunpack.c.0.s8 %v4285
      %v4287 = vlaneseq
      %v4288 = vshrl.u32 %v4287, 7
      %v4289 = vsub.s32 %v4286, %v4288
      %v4290 = vrot.slane %v4282, %v4289
      %v4292 = vunpack.c.l.s4 1966171168
      %v4293 = vunpack.c.0.s8 %v4292
      %v4294 = vlaneseq
      %v4295 = vshrl.u32 %v4294, 7
      %v4296 = vsub.s32 %v4293, %v4295
      %v4297 = vrot.slane %v4283, %v4296
      %v4298 = vcombine.low %v4290, %v4297
      %v4300 = vunpack.c.l.s4 1966171168
      %v4301 = vunpack.c.0.s8 %v4300
      %v4302 = vlaneseq
      %v4303 = vshrl.u32 %v4302, 7
      %v4304 = vsub.s32 %v4301, %v4303
      %v4305 = vrot.slane %v3789, %v4304
      %v4307 = vunpack.c.l.s4 1966171168
      %v4308 = vunpack.c.0.s8 %v4307
      %v4309 = vlaneseq
      %v4310 = vshrl.u32 %v4309, 7
      %v4311 = vsub.s32 %v4308, %v4310
      %v4312 = vrot.slane %v4305, %v4311
      %4313 = vrot.lane.b32.xlu0 %v3806, 8
      %v4314 = vpop.permute.xlu0 %4313
      %4315 = vrot.lane.b32.xlu0 %v3839, 8
      %v4316 = vpop.permute.xlu0 %4315
      %4317 = vrot.lane.b32.xlu0 %v3856, 8
      %v4318 = vpop.permute.xlu0 %4317
      %4319 = vrot.lane.b32.xlu0 %v3881, 8
      %v4320 = vpop.permute.xlu0 %4319
      %4321 = vrot.lane.b32.xlu0 %v3914, 8
      %v4322 = vpop.permute.xlu0 %4321
      %4323 = vrot.lane.b32.xlu0 %v3931, 8
      %v4324 = vpop.permute.xlu0 %4323
      %4325 = vrot.lane.b32.xlu0 %v3956, 8
      %v4326 = vpop.permute.xlu0 %4325
      %4327 = vrot.lane.b32.xlu0 %v3981, 8
      %v4328 = vpop.permute.xlu0 %4327
      %4329 = vrot.lane.b32.xlu0 %v4006, 8
      %v4330 = vpop.permute.xlu0 %4329
      %4331 = vrot.lane.b32.xlu0 %v4031, 8
      %v4332 = vpop.permute.xlu0 %4331
      %4333 = vrot.lane.b32.xlu0 %v4048, 8
      %v4334 = vpop.permute.xlu0 %4333
      %4335 = vrot.lane.b32.xlu0 %v4081, 8
      %v4336 = vpop.permute.xlu0 %4335
      %4337 = vrot.lane.b32.xlu0 %v4106, 8
      %v4338 = vpop.permute.xlu0 %4337
      %4339 = vrot.lane.b32.xlu0 %v4123, 8
      %v4340 = vpop.permute.xlu0 %4339
      %4341 = vrot.lane.b32.xlu0 %v4156, 8
      %v4342 = vpop.permute.xlu0 %4341
      %4343 = vrot.lane.b32.xlu0 %v4173, 8
      %v4344 = vpop.permute.xlu0 %4343
      %4345 = vrot.lane.b32.xlu0 %v4198, 8
      %v4346 = vpop.permute.xlu0 %4345
      %4347 = vrot.lane.b32.xlu0 %v4231, 8
      %v4348 = vpop.permute.xlu0 %4347
      %4349 = vrot.lane.b32.xlu0 %v4248, 8
      %v4350 = vpop.permute.xlu0 %4349
      %4351 = vrot.lane.b32.xlu0 %v4273, 8
      %v4352 = vpop.permute.xlu0 %4351
      %4353 = vrot.lane.b32.xlu0 %v4298, 8
      %v4354 = vpop.permute.xlu0 %4353
      %4355 = vrot.lane.b32.xlu0 %v4312, 8
      %v4356 = vpop.permute.xlu0 %4355
      %vm4379 = vcmask 97344
      %4380 = vst.msk [vmem:[#allocation2] sm:$0xff] %vm4379, %v4314
      %4381 = vst.msk [vmem:[#allocation2 + $0x8] sm:$0xff] %vm4379, %v4316
      %4382 = vst.msk [vmem:[#allocation2 + $0x10] sm:$0xff] %vm4379, %v4318
      %4383 = vst.msk [vmem:[#allocation2 + $0x18] sm:$0xff] %vm4379, %v4320
      %4384 = vst.msk [vmem:[#allocation2 + $0x20] sm:$0xff] %vm4379, %v4322
      %4385 = vst.msk [vmem:[#allocation2 + $0x28] sm:$0xff] %vm4379, %v4324
      %4386 = vst.msk [vmem:[#allocation2 + $0x30] sm:$0xff] %vm4379, %v4326
      %4387 = vst.msk [vmem:[#allocation2 + $0x38] sm:$0xff] %vm4379, %v4328
      %4388 = vst.msk [vmem:[#allocation2 + $0x40] sm:$0xff] %vm4379, %v4330
      %4389 = vst.msk [vmem:[#allocation2 + $0x48] sm:$0xff] %vm4379, %v4332
      %4390 = vst.msk [vmem:[#allocation2 + $0x50] sm:$0xff] %vm4379, %v4334
      %4391 = vst.msk [vmem:[#allocation2 + $0x58] sm:$0xff] %vm4379, %v4336
      %4392 = vst.msk [vmem:[#allocation2 + $0x60] sm:$0xff] %vm4379, %v4338
      %4393 = vst.msk [vmem:[#allocation2 + $0x68] sm:$0xff] %vm4379, %v4340
      %4394 = vst.msk [vmem:[#allocation2 + $0x70] sm:$0xff] %vm4379, %v4342
      %4395 = vst.msk [vmem:[#allocation2 + $0x78] sm:$0xff] %vm4379, %v4344
      %4396 = vst.msk [vmem:[#allocation2 + $0x80] sm:$0xff] %vm4379, %v4346
      %4397 = vst.msk [vmem:[#allocation2 + $0x88] sm:$0xff] %vm4379, %v4348
      %4398 = vst.msk [vmem:[#allocation2 + $0x90] sm:$0xff] %vm4379, %v4350
      %4399 = vst.msk [vmem:[#allocation2 + $0x98] sm:$0xff] %vm4379, %v4352
      %4400 = vst.msk [vmem:[#allocation2 + $0xa0] sm:$0xff] %vm4379, %v4354
      %vm4401 = vcmask 90176
      %4402 = vst.msk [vmem:[#allocation2 + $0xa8] sm:$0x1] %vm4401, %v4356
      %v4403 = vcombine.high %v2547, %v2547
      %v4404 = vcombine.high %v2555, %v2555
      %v4405 = vcombine.high %v2563, %v2563
      %v4406 = vcombine.high %v2571, %v2571
      %v4407 = vcombine.high %v2579, %v2579
      %v4408 = vcombine.high %v2587, %v2587
      %v4409 = vcombine.high %v2595, %v2595
      %v4410 = vcombine.high %v2603, %v2603
      %v4411 = vcombine.high %v2611, %v2611
      %v4412 = vcombine.high %v2619, %v2619
      %v4413 = vcombine.high %v2627, %v2627
      %v4414 = vcombine.high %v2635, %v2635
      %v4415 = vcombine.high %v2643, %v2643
      %v4416 = vcombine.low %v2661, %v2668
      %v4417 = vcombine.low %v2675, %v2703
      %v4419 = vunpack.c.l.s4 1966171168
      %v4420 = vunpack.c.0.s8 %v4419
      %v4421 = vlaneseq
      %v4422 = vshrl.u32 %v4421, 7
      %v4423 = vsub.s32 %v4420, %v4422
      %v4424 = vrot.slane %v4416, %v4423
      %v4426 = vunpack.c.l.s4 1966171168
      %v4427 = vunpack.c.0.s8 %v4426
      %v4428 = vlaneseq
      %v4429 = vshrl.u32 %v4428, 7
      %v4430 = vsub.s32 %v4427, %v4429
      %v4431 = vrot.slane %v4417, %v4430
      %v4432 = vcombine.low %v4424, %v4431
      %v4433 = vcombine.low %v2547, %v3777
      %v4434 = vcombine.low %v4403, %v442
      %v4436 = vunpack.c.l.s4 1966171168
      %v4437 = vunpack.c.0.s8 %v4436
      %v4438 = vlaneseq
      %v4439 = vshrl.u32 %v4438, 7
      %v4440 = vsub.s32 %v4437, %v4439
      %v4441 = vrot.slane %v4433, %v4440
      %v4443 = vunpack.c.l.s4 1966171168
      %v4444 = vunpack.c.0.s8 %v4443
      %v4445 = vlaneseq
      %v4446 = vshrl.u32 %v4445, 7
      %v4447 = vsub.s32 %v4444, %v4446
      %v4448 = vrot.slane %v4434, %v4447
      %v4449 = vcombine.low %v2710, %v4441
      %v4450 = vcombine.low %v4448, %v2752
      %v4452 = vunpack.c.l.s4 1966171168
      %v4453 = vunpack.c.0.s8 %v4452
      %v4454 = vlaneseq
      %v4455 = vshrl.u32 %v4454, 7
      %v4456 = vsub.s32 %v4453, %v4455
      %v4457 = vrot.slane %v4449, %v4456
      %v4459 = vunpack.c.l.s4 1966171168
      %v4460 = vunpack.c.0.s8 %v4459
      %v4461 = vlaneseq
      %v4462 = vshrl.u32 %v4461, 7
      %v4463 = vsub.s32 %v4460, %v4462
      %v4464 = vrot.slane %v4450, %v4463
      %v4465 = vcombine.low %v4457, %v4464
      %v4466 = vcombine.low %v2759, %v2766
      %v4467 = vcombine.low %v2773, %v2801
      %v4469 = vunpack.c.l.s4 1966171168
      %v4470 = vunpack.c.0.s8 %v4469
      %v4471 = vlaneseq
      %v4472 = vshrl.u32 %v4471, 7
      %v4473 = vsub.s32 %v4470, %v4472
      %v4474 = vrot.slane %v4466, %v4473
      %v4476 = vunpack.c.l.s4 1966171168
      %v4477 = vunpack.c.0.s8 %v4476
      %v4478 = vlaneseq
      %v4479 = vshrl.u32 %v4478, 7
      %v4480 = vsub.s32 %v4477, %v4479
      %v4481 = vrot.slane %v4467, %v4480
      %v4482 = vcombine.low %v4474, %v4481
      %v4483 = vcombine.low %v3778, %v4404
      %v4485 = vunpack.c.l.s4 1966171168
      %v4486 = vunpack.c.0.s8 %v4485
      %v4487 = vlaneseq
      %v4488 = vshrl.u32 %v4487, 7
      %v4489 = vsub.s32 %v4486, %v4488
      %v4490 = vrot.slane %v4483, %v4489
      %v4491 = vcombine.low %v4490, %v2815
      %v4492 = vcombine.low %v2822, %v2850
      %v4494 = vunpack.c.l.s4 1966171168
      %v4495 = vunpack.c.0.s8 %v4494
      %v4496 = vlaneseq
      %v4497 = vshrl.u32 %v4496, 7
      %v4498 = vsub.s32 %v4495, %v4497
      %v4499 = vrot.slane %v4491, %v4498
      %v4501 = vunpack.c.l.s4 1966171168
      %v4502 = vunpack.c.0.s8 %v4501
      %v4503 = vlaneseq
      %v4504 = vshrl.u32 %v4503, 7
      %v4505 = vsub.s32 %v4502, %v4504
      %v4506 = vrot.slane %v4492, %v4505
      %v4507 = vcombine.low %v4499, %v4506
      %v4508 = vcombine.low %v2563, %v3779
      %v4509 = vcombine.low %v4405, %v618
      %v4511 = vunpack.c.l.s4 1966171168
      %v4512 = vunpack.c.0.s8 %v4511
      %v4513 = vlaneseq
      %v4514 = vshrl.u32 %v4513, 7
      %v4515 = vsub.s32 %v4512, %v4514
      %v4516 = vrot.slane %v4508, %v4515
      %v4518 = vunpack.c.l.s4 1966171168
      %v4519 = vunpack.c.0.s8 %v4518
      %v4520 = vlaneseq
      %v4521 = vshrl.u32 %v4520, 7
      %v4522 = vsub.s32 %v4519, %v4521
      %v4523 = vrot.slane %v4509, %v4522
      %v4524 = vcombine.low %v2857, %v2864
      %v4525 = vcombine.low %v4516, %v4523
      %v4527 = vunpack.c.l.s4 1966171168
      %v4528 = vunpack.c.0.s8 %v4527
      %v4529 = vlaneseq
      %v4530 = vshrl.u32 %v4529, 7
      %v4531 = vsub.s32 %v4528, %v4530
      %v4532 = vrot.slane %v4524, %v4531
      %v4534 = vunpack.c.l.s4 1966171168
      %v4535 = vunpack.c.0.s8 %v4534
      %v4536 = vlaneseq
      %v4537 = vshrl.u32 %v4536, 7
      %v4538 = vsub.s32 %v4535, %v4537
      %v4539 = vrot.slane %v4525, %v4538
      %v4540 = vcombine.low %v4532, %v4539
      %v4541 = vcombine.low %v2906, %v2913
      %v4542 = vcombine.low %v2920, %v2948
      %v4544 = vunpack.c.l.s4 1966171168
      %v4545 = vunpack.c.0.s8 %v4544
      %v4546 = vlaneseq
      %v4547 = vshrl.u32 %v4546, 7
      %v4548 = vsub.s32 %v4545, %v4547
      %v4549 = vrot.slane %v4541, %v4548
      %v4551 = vunpack.c.l.s4 1966171168
      %v4552 = vunpack.c.0.s8 %v4551
      %v4553 = vlaneseq
      %v4554 = vshrl.u32 %v4553, 7
      %v4555 = vsub.s32 %v4552, %v4554
      %v4556 = vrot.slane %v4542, %v4555
      %v4557 = vcombine.low %v4549, %v4556
      %v4558 = vcombine.low %v3780, %v4406
      %v4560 = vunpack.c.l.s4 1966171168
      %v4561 = vunpack.c.0.s8 %v4560
      %v4562 = vlaneseq
      %v4563 = vshrl.u32 %v4562, 7
      %v4564 = vsub.s32 %v4561, %v4563
      %v4565 = vrot.slane %v4558, %v4564
      %v4566 = vcombine.low %v2955, %v4565
      %v4567 = vcombine.low %v2969, %v2997
      %v4569 = vunpack.c.l.s4 1966171168
      %v4570 = vunpack.c.0.s8 %v4569
      %v4571 = vlaneseq
      %v4572 = vshrl.u32 %v4571, 7
      %v4573 = vsub.s32 %v4570, %v4572
      %v4574 = vrot.slane %v4566, %v4573
      %v4576 = vunpack.c.l.s4 1966171168
      %v4577 = vunpack.c.0.s8 %v4576
      %v4578 = vlaneseq
      %v4579 = vshrl.u32 %v4578, 7
      %v4580 = vsub.s32 %v4577, %v4579
      %v4581 = vrot.slane %v4567, %v4580
      %v4582 = vcombine.low %v4574, %v4581
      %v4583 = vcombine.low %v2579, %v3781
      %v4585 = vunpack.c.l.s4 1966171168
      %v4586 = vunpack.c.0.s8 %v4585
      %v4587 = vlaneseq
      %v4588 = vshrl.u32 %v4587, 7
      %v4589 = vsub.s32 %v4586, %v4588
      %v4590 = vrot.slane %v4583, %v4589
      %v4591 = vcombine.low %v3004, %v3011
      %v4592 = vcombine.low %v3018, %v4590
      %v4594 = vunpack.c.l.s4 1966171168
      %v4595 = vunpack.c.0.s8 %v4594
      %v4596 = vlaneseq
      %v4597 = vshrl.u32 %v4596, 7
      %v4598 = vsub.s32 %v4595, %v4597
      %v4599 = vrot.slane %v4591, %v4598
      %v4601 = vunpack.c.l.s4 1966171168
      %v4602 = vunpack.c.0.s8 %v4601
      %v4603 = vlaneseq
      %v4604 = vshrl.u32 %v4603, 7
      %v4605 = vsub.s32 %v4602, %v4604
      %v4606 = vrot.slane %v4592, %v4605
      %v4607 = vcombine.low %v4599, %v4606
      %v4608 = vcombine.low %v4407, %v794
      %v4610 = vunpack.c.l.s4 1966171168
      %v4611 = vunpack.c.0.s8 %v4610
      %v4612 = vlaneseq
      %v4613 = vshrl.u32 %v4612, 7
      %v4614 = vsub.s32 %v4611, %v4613
      %v4615 = vrot.slane %v4608, %v4614
      %v4616 = vcombine.low %v4615, %v3060
      %v4617 = vcombine.low %v3067, %v3095
      %v4619 = vunpack.c.l.s4 1966171168
      %v4620 = vunpack.c.0.s8 %v4619
      %v4621 = vlaneseq
      %v4622 = vshrl.u32 %v4621, 7
      %v4623 = vsub.s32 %v4620, %v4622
      %v4624 = vrot.slane %v4616, %v4623
      %v4626 = vunpack.c.l.s4 1966171168
      %v4627 = vunpack.c.0.s8 %v4626
      %v4628 = vlaneseq
      %v4629 = vshrl.u32 %v4628, 7
      %v4630 = vsub.s32 %v4627, %v4629
      %v4631 = vrot.slane %v4617, %v4630
      %v4632 = vcombine.low %v4624, %v4631
      %v4633 = vcombine.low %v3782, %v4408
      %v4635 = vunpack.c.l.s4 1966171168
      %v4636 = vunpack.c.0.s8 %v4635
      %v4637 = vlaneseq
      %v4638 = vshrl.u32 %v4637, 7
      %v4639 = vsub.s32 %v4636, %v4638
      %v4640 = vrot.slane %v4633, %v4639
      %v4641 = vcombine.low %v3102, %v3109
      %v4642 = vcombine.low %v4640, %v3144
      %v4644 = vunpack.c.l.s4 1966171168
      %v4645 = vunpack.c.0.s8 %v4644
      %v4646 = vlaneseq
      %v4647 = vshrl.u32 %v4646, 7
      %v4648 = vsub.s32 %v4645, %v4647
      %v4649 = vrot.slane %v4641, %v4648
      %v4651 = vunpack.c.l.s4 1966171168
      %v4652 = vunpack.c.0.s8 %v4651
      %v4653 = vlaneseq
      %v4654 = vshrl.u32 %v4653, 7
      %v4655 = vsub.s32 %v4652, %v4654
      %v4656 = vrot.slane %v4642, %v4655
      %v4657 = vcombine.low %v4649, %v4656
      %v4658 = vcombine.low %v3151, %v3158
      %v4659 = vcombine.low %v3165, %v3193
      %v4661 = vunpack.c.l.s4 1966171168
      %v4662 = vunpack.c.0.s8 %v4661
      %v4663 = vlaneseq
      %v4664 = vshrl.u32 %v4663, 7
      %v4665 = vsub.s32 %v4662, %v4664
      %v4666 = vrot.slane %v4658, %v4665
      %v4668 = vunpack.c.l.s4 1966171168
      %v4669 = vunpack.c.0.s8 %v4668
      %v4670 = vlaneseq
      %v4671 = vshrl.u32 %v4670, 7
      %v4672 = vsub.s32 %v4669, %v4671
      %v4673 = vrot.slane %v4659, %v4672
      %v4674 = vcombine.low %v4666, %v4673
      %v4675 = vcombine.low %v2595, %v3783
      %v4676 = vcombine.low %v4409, %v970
      %v4678 = vunpack.c.l.s4 1966171168
      %v4679 = vunpack.c.0.s8 %v4678
      %v4680 = vlaneseq
      %v4681 = vshrl.u32 %v4680, 7
      %v4682 = vsub.s32 %v4679, %v4681
      %v4683 = vrot.slane %v4675, %v4682
      %v4685 = vunpack.c.l.s4 1966171168
      %v4686 = vunpack.c.0.s8 %v4685
      %v4687 = vlaneseq
      %v4688 = vshrl.u32 %v4687, 7
      %v4689 = vsub.s32 %v4686, %v4688
      %v4690 = vrot.slane %v4676, %v4689
      %v4691 = vcombine.low %v4683, %v4690
      %v4692 = vcombine.low %v3214, %v3242
      %v4694 = vunpack.c.l.s4 1966171168
      %v4695 = vunpack.c.0.s8 %v4694
      %v4696 = vlaneseq
      %v4697 = vshrl.u32 %v4696, 7
      %v4698 = vsub.s32 %v4695, %v4697
      %v4699 = vrot.slane %v4691, %v4698
      %v4701 = vunpack.c.l.s4 1966171168
      %v4702 = vunpack.c.0.s8 %v4701
      %v4703 = vlaneseq
      %v4704 = vshrl.u32 %v4703, 7
      %v4705 = vsub.s32 %v4702, %v4704
      %v4706 = vrot.slane %v4692, %v4705
      %v4707 = vcombine.low %v4699, %v4706
      %v4708 = vcombine.low %v3784, %v4410
      %v4710 = vunpack.c.l.s4 1966171168
      %v4711 = vunpack.c.0.s8 %v4710
      %v4712 = vlaneseq
      %v4713 = vshrl.u32 %v4712, 7
      %v4714 = vsub.s32 %v4711, %v4713
      %v4715 = vrot.slane %v4708, %v4714
      %v4716 = vcombine.low %v3249, %v3256
      %v4717 = vcombine.low %v3263, %v4715
      %v4719 = vunpack.c.l.s4 1966171168
      %v4720 = vunpack.c.0.s8 %v4719
      %v4721 = vlaneseq
      %v4722 = vshrl.u32 %v4721, 7
      %v4723 = vsub.s32 %v4720, %v4722
      %v4724 = vrot.slane %v4716, %v4723
      %v4726 = vunpack.c.l.s4 1966171168
      %v4727 = vunpack.c.0.s8 %v4726
      %v4728 = vlaneseq
      %v4729 = vshrl.u32 %v4728, 7
      %v4730 = vsub.s32 %v4727, %v4729
      %v4731 = vrot.slane %v4717, %v4730
      %v4732 = vcombine.low %v4724, %v4731
      %v4733 = vcombine.low %v3298, %v3305
      %v4734 = vcombine.low %v3312, %v3340
      %v4736 = vunpack.c.l.s4 1966171168
      %v4737 = vunpack.c.0.s8 %v4736
      %v4738 = vlaneseq
      %v4739 = vshrl.u32 %v4738, 7
      %v4740 = vsub.s32 %v4737, %v4739
      %v4741 = vrot.slane %v4733, %v4740
      %v4743 = vunpack.c.l.s4 1966171168
      %v4744 = vunpack.c.0.s8 %v4743
      %v4745 = vlaneseq
      %v4746 = vshrl.u32 %v4745, 7
      %v4747 = vsub.s32 %v4744, %v4746
      %v4748 = vrot.slane %v4734, %v4747
      %v4749 = vcombine.low %v4741, %v4748
      %v4750 = vcombine.low %v2611, %v3785
      %v4751 = vcombine.low %v4411, %v1146
      %v4753 = vunpack.c.l.s4 1966171168
      %v4754 = vunpack.c.0.s8 %v4753
      %v4755 = vlaneseq
      %v4756 = vshrl.u32 %v4755, 7
      %v4757 = vsub.s32 %v4754, %v4756
      %v4758 = vrot.slane %v4750, %v4757
      %v4760 = vunpack.c.l.s4 1966171168
      %v4761 = vunpack.c.0.s8 %v4760
      %v4762 = vlaneseq
      %v4763 = vshrl.u32 %v4762, 7
      %v4764 = vsub.s32 %v4761, %v4763
      %v4765 = vrot.slane %v4751, %v4764
      %v4766 = vcombine.low %v3347, %v4758
      %v4767 = vcombine.low %v4765, %v3389
      %v4769 = vunpack.c.l.s4 1966171168
      %v4770 = vunpack.c.0.s8 %v4769
      %v4771 = vlaneseq
      %v4772 = vshrl.u32 %v4771, 7
      %v4773 = vsub.s32 %v4770, %v4772
      %v4774 = vrot.slane %v4766, %v4773
      %v4776 = vunpack.c.l.s4 1966171168
      %v4777 = vunpack.c.0.s8 %v4776
      %v4778 = vlaneseq
      %v4779 = vshrl.u32 %v4778, 7
      %v4780 = vsub.s32 %v4777, %v4779
      %v4781 = vrot.slane %v4767, %v4780
      %v4782 = vcombine.low %v4774, %v4781
      %v4783 = vcombine.low %v3396, %v3403
      %v4784 = vcombine.low %v3410, %v3438
      %v4786 = vunpack.c.l.s4 1966171168
      %v4787 = vunpack.c.0.s8 %v4786
      %v4788 = vlaneseq
      %v4789 = vshrl.u32 %v4788, 7
      %v4790 = vsub.s32 %v4787, %v4789
      %v4791 = vrot.slane %v4783, %v4790
      %v4793 = vunpack.c.l.s4 1966171168
      %v4794 = vunpack.c.0.s8 %v4793
      %v4795 = vlaneseq
      %v4796 = vshrl.u32 %v4795, 7
      %v4797 = vsub.s32 %v4794, %v4796
      %v4798 = vrot.slane %v4784, %v4797
      %v4799 = vcombine.low %v4791, %v4798
      %v4800 = vcombine.low %v3786, %v4412
      %v4802 = vunpack.c.l.s4 1966171168
      %v4803 = vunpack.c.0.s8 %v4802
      %v4804 = vlaneseq
      %v4805 = vshrl.u32 %v4804, 7
      %v4806 = vsub.s32 %v4803, %v4805
      %v4807 = vrot.slane %v4800, %v4806
      %v4808 = vcombine.low %v4807, %v3452
      %v4809 = vcombine.low %v3459, %v3487
      %v4811 = vunpack.c.l.s4 1966171168
      %v4812 = vunpack.c.0.s8 %v4811
      %v4813 = vlaneseq
      %v4814 = vshrl.u32 %v4813, 7
      %v4815 = vsub.s32 %v4812, %v4814
      %v4816 = vrot.slane %v4808, %v4815
      %v4818 = vunpack.c.l.s4 1966171168
      %v4819 = vunpack.c.0.s8 %v4818
      %v4820 = vlaneseq
      %v4821 = vshrl.u32 %v4820, 7
      %v4822 = vsub.s32 %v4819, %v4821
      %v4823 = vrot.slane %v4809, %v4822
      %v4824 = vcombine.low %v4816, %v4823
      %v4825 = vcombine.low %v2627, %v3787
      %v4826 = vcombine.low %v4413, %v1322
      %v4828 = vunpack.c.l.s4 1966171168
      %v4829 = vunpack.c.0.s8 %v4828
      %v4830 = vlaneseq
      %v4831 = vshrl.u32 %v4830, 7
      %v4832 = vsub.s32 %v4829, %v4831
      %v4833 = vrot.slane %v4825, %v4832
      %v4835 = vunpack.c.l.s4 1966171168
      %v4836 = vunpack.c.0.s8 %v4835
      %v4837 = vlaneseq
      %v4838 = vshrl.u32 %v4837, 7
      %v4839 = vsub.s32 %v4836, %v4838
      %v4840 = vrot.slane %v4826, %v4839
      %v4841 = vcombine.low %v3494, %v3501
      %v4842 = vcombine.low %v4833, %v4840
      %v4844 = vunpack.c.l.s4 1966171168
      %v4845 = vunpack.c.0.s8 %v4844
      %v4846 = vlaneseq
      %v4847 = vshrl.u32 %v4846, 7
      %v4848 = vsub.s32 %v4845, %v4847
      %v4849 = vrot.slane %v4841, %v4848
      %v4851 = vunpack.c.l.s4 1966171168
      %v4852 = vunpack.c.0.s8 %v4851
      %v4853 = vlaneseq
      %v4854 = vshrl.u32 %v4853, 7
      %v4855 = vsub.s32 %v4852, %v4854
      %v4856 = vrot.slane %v4842, %v4855
      %v4857 = vcombine.low %v4849, %v4856
      %v4858 = vcombine.low %v3543, %v3550
      %v4859 = vcombine.low %v3557, %v3585
      %v4861 = vunpack.c.l.s4 1966171168
      %v4862 = vunpack.c.0.s8 %v4861
      %v4863 = vlaneseq
      %v4864 = vshrl.u32 %v4863, 7
      %v4865 = vsub.s32 %v4862, %v4864
      %v4866 = vrot.slane %v4858, %v4865
      %v4868 = vunpack.c.l.s4 1966171168
      %v4869 = vunpack.c.0.s8 %v4868
      %v4870 = vlaneseq
      %v4871 = vshrl.u32 %v4870, 7
      %v4872 = vsub.s32 %v4869, %v4871
      %v4873 = vrot.slane %v4859, %v4872
      %v4874 = vcombine.low %v4866, %v4873
      %v4875 = vcombine.low %v3788, %v4414
      %v4877 = vunpack.c.l.s4 1966171168
      %v4878 = vunpack.c.0.s8 %v4877
      %v4879 = vlaneseq
      %v4880 = vshrl.u32 %v4879, 7
      %v4881 = vsub.s32 %v4878, %v4880
      %v4882 = vrot.slane %v4875, %v4881
      %v4883 = vcombine.low %v3592, %v4882
      %v4884 = vcombine.low %v3606, %v3634
      %v4886 = vunpack.c.l.s4 1966171168
      %v4887 = vunpack.c.0.s8 %v4886
      %v4888 = vlaneseq
      %v4889 = vshrl.u32 %v4888, 7
      %v4890 = vsub.s32 %v4887, %v4889
      %v4891 = vrot.slane %v4883, %v4890
      %v4893 = vunpack.c.l.s4 1966171168
      %v4894 = vunpack.c.0.s8 %v4893
      %v4895 = vlaneseq
      %v4896 = vshrl.u32 %v4895, 7
      %v4897 = vsub.s32 %v4894, %v4896
      %v4898 = vrot.slane %v4884, %v4897
      %v4899 = vcombine.low %v4891, %v4898
      %v4900 = vcombine.low %v2643, %v3789
      %v4902 = vunpack.c.l.s4 1966171168
      %v4903 = vunpack.c.0.s8 %v4902
      %v4904 = vlaneseq
      %v4905 = vshrl.u32 %v4904, 7
      %v4906 = vsub.s32 %v4903, %v4905
      %v4907 = vrot.slane %v4900, %v4906
      %v4908 = vcombine.low %v3641, %v3648
      %v4909 = vcombine.low %v3655, %v4907
      %v4911 = vunpack.c.l.s4 1966171168
      %v4912 = vunpack.c.0.s8 %v4911
      %v4913 = vlaneseq
      %v4914 = vshrl.u32 %v4913, 7
      %v4915 = vsub.s32 %v4912, %v4914
      %v4916 = vrot.slane %v4908, %v4915
      %v4918 = vunpack.c.l.s4 1966171168
      %v4919 = vunpack.c.0.s8 %v4918
      %v4920 = vlaneseq
      %v4921 = vshrl.u32 %v4920, 7
      %v4922 = vsub.s32 %v4919, %v4921
      %v4923 = vrot.slane %v4909, %v4922
      %v4924 = vcombine.low %v4916, %v4923
      %v4926 = vunpack.c.l.s4 1966171168
      %v4927 = vunpack.c.0.s8 %v4926
      %v4928 = vlaneseq
      %v4929 = vshrl.u32 %v4928, 7
      %v4930 = vsub.s32 %v4927, %v4929
      %v4931 = vrot.slane %v4415, %v4930
      %v4933 = vunpack.c.l.s4 1966171168
      %v4934 = vunpack.c.0.s8 %v4933
      %v4935 = vlaneseq
      %v4936 = vshrl.u32 %v4935, 7
      %v4937 = vsub.s32 %v4934, %v4936
      %v4938 = vrot.slane %v4931, %v4937
      %4939 = vrot.lane.b32.xlu0 %v4432, 12
      %v4940 = vpop.permute.xlu0 %4939
      %4941 = vrot.lane.b32.xlu0 %v4465, 12
      %v4942 = vpop.permute.xlu0 %4941
      %4943 = vrot.lane.b32.xlu0 %v4482, 12
      %v4944 = vpop.permute.xlu0 %4943
      %4945 = vrot.lane.b32.xlu0 %v4507, 12
      %v4946 = vpop.permute.xlu0 %4945
      %4947 = vrot.lane.b32.xlu0 %v4540, 12
      %v4948 = vpop.permute.xlu0 %4947
      %4949 = vrot.lane.b32.xlu0 %v4557, 12
      %v4950 = vpop.permute.xlu0 %4949
      %4951 = vrot.lane.b32.xlu0 %v4582, 12
      %v4952 = vpop.permute.xlu0 %4951
      %4953 = vrot.lane.b32.xlu0 %v4607, 12
      %v4954 = vpop.permute.xlu0 %4953
      %4955 = vrot.lane.b32.xlu0 %v4632, 12
      %v4956 = vpop.permute.xlu0 %4955
      %4957 = vrot.lane.b32.xlu0 %v4657, 12
      %v4958 = vpop.permute.xlu0 %4957
      %4959 = vrot.lane.b32.xlu0 %v4674, 12
      %v4960 = vpop.permute.xlu0 %4959
      %4961 = vrot.lane.b32.xlu0 %v4707, 12
      %v4962 = vpop.permute.xlu0 %4961
      %4963 = vrot.lane.b32.xlu0 %v4732, 12
      %v4964 = vpop.permute.xlu0 %4963
      %4965 = vrot.lane.b32.xlu0 %v4749, 12
      %v4966 = vpop.permute.xlu0 %4965
      %4967 = vrot.lane.b32.xlu0 %v4782, 12
      %v4968 = vpop.permute.xlu0 %4967
      %4969 = vrot.lane.b32.xlu0 %v4799, 12
      %v4970 = vpop.permute.xlu0 %4969
      %4971 = vrot.lane.b32.xlu0 %v4824, 12
      %v4972 = vpop.permute.xlu0 %4971
      %4973 = vrot.lane.b32.xlu0 %v4857, 12
      %v4974 = vpop.permute.xlu0 %4973
      %4975 = vrot.lane.b32.xlu0 %v4874, 12
      %v4976 = vpop.permute.xlu0 %4975
      %4977 = vrot.lane.b32.xlu0 %v4899, 12
      %v4978 = vpop.permute.xlu0 %4977
      %4979 = vrot.lane.b32.xlu0 %v4924, 12
      %v4980 = vpop.permute.xlu0 %4979
      %4981 = vrot.lane.b32.xlu0 %v4938, 12
      %v4982 = vpop.permute.xlu0 %4981
      %vm5005 = vcmask 130144
      %5006 = vst.msk [vmem:[#allocation2] sm:$0xff] %vm5005, %v4940
      %5007 = vst.msk [vmem:[#allocation2 + $0x8] sm:$0xff] %vm5005, %v4942
      %5008 = vst.msk [vmem:[#allocation2 + $0x10] sm:$0xff] %vm5005, %v4944
      %5009 = vst.msk [vmem:[#allocation2 + $0x18] sm:$0xff] %vm5005, %v4946
      %5010 = vst.msk [vmem:[#allocation2 + $0x20] sm:$0xff] %vm5005, %v4948
      %5011 = vst.msk [vmem:[#allocation2 + $0x28] sm:$0xff] %vm5005, %v4950
      %5012 = vst.msk [vmem:[#allocation2 + $0x30] sm:$0xff] %vm5005, %v4952
      %5013 = vst.msk [vmem:[#allocation2 + $0x38] sm:$0xff] %vm5005, %v4954
      %5014 = vst.msk [vmem:[#allocation2 + $0x40] sm:$0xff] %vm5005, %v4956
      %5015 = vst.msk [vmem:[#allocation2 + $0x48] sm:$0xff] %vm5005, %v4958
      %5016 = vst.msk [vmem:[#allocation2 + $0x50] sm:$0xff] %vm5005, %v4960
      %5017 = vst.msk [vmem:[#allocation2 + $0x58] sm:$0xff] %vm5005, %v4962
      %5018 = vst.msk [vmem:[#allocation2 + $0x60] sm:$0xff] %vm5005, %v4964
      %5019 = vst.msk [vmem:[#allocation2 + $0x68] sm:$0xff] %vm5005, %v4966
      %5020 = vst.msk [vmem:[#allocation2 + $0x70] sm:$0xff] %vm5005, %v4968
      %5021 = vst.msk [vmem:[#allocation2 + $0x78] sm:$0xff] %vm5005, %v4970
      %5022 = vst.msk [vmem:[#allocation2 + $0x80] sm:$0xff] %vm5005, %v4972
      %5023 = vst.msk [vmem:[#allocation2 + $0x88] sm:$0xff] %vm5005, %v4974
      %5024 = vst.msk [vmem:[#allocation2 + $0x90] sm:$0xff] %vm5005, %v4976
      %5025 = vst.msk [vmem:[#allocation2 + $0x98] sm:$0xff] %vm5005, %v4978
      %5026 = vst.msk [vmem:[#allocation2 + $0xa0] sm:$0xff] %vm5005, %v4980
      %vm5027 = vcmask 122976
      %5028 = vst.msk [vmem:[#allocation2 + $0xa8] sm:$0x1] %vm5027, %v4982
      %v5031 = vcombine.high %v251, %v251
      %v5033 = vunpack.c.l.s4 1966171168
      %v5034 = vunpack.c.0.s8 %v5033
      %v5035 = vlaneseq
      %v5036 = vshrl.u32 %v5035, 7
      %v5037 = vsub.s32 %v5034, %v5036
      %v5038 = vrot.slane %v251, %v5037
      %v5040 = vunpack.c.l.s4 1966171168
      %v5041 = vunpack.c.0.s8 %v5040
      %v5042 = vlaneseq
      %v5043 = vshrl.u32 %v5042, 7
      %v5044 = vsub.s32 %v5041, %v5043
      %v5045 = vrot.slane %v5031, %v5044
      %v5046 = vcombine.high %v5038, %v5038
      %v5047 = vcombine.high %v5045, %v5045
      %v5049 = vunpack.c.l.s4 1966171168
      %v5050 = vunpack.c.0.s8 %v5049
      %v5051 = vlaneseq
      %v5052 = vshrl.u32 %v5051, 7
      %v5053 = vsub.s32 %v5050, %v5052
      %v5054 = vrot.slane %v5038, %v5053
      %v5056 = vunpack.c.l.s4 1966171168
      %v5057 = vunpack.c.0.s8 %v5056
      %v5058 = vlaneseq
      %v5059 = vshrl.u32 %v5058, 7
      %v5060 = vsub.s32 %v5057, %v5059
      %v5061 = vrot.slane %v5045, %v5060
      %v5063 = vunpack.c.l.s4 1966171168
      %v5064 = vunpack.c.0.s8 %v5063
      %v5065 = vlaneseq
      %v5066 = vshrl.u32 %v5065, 7
      %v5067 = vsub.s32 %v5064, %v5066
      %v5068 = vrot.slane %v5046, %v5067
      %v5070 = vunpack.c.l.s4 1966171168
      %v5071 = vunpack.c.0.s8 %v5070
      %v5072 = vlaneseq
      %v5073 = vshrl.u32 %v5072, 7
      %v5074 = vsub.s32 %v5071, %v5073
      %v5075 = vrot.slane %v5047, %v5074
      %v5076 = vcombine.high %v5054, %v5054
      %v5077 = vcombine.high %v5061, %v5061
      %v5078 = vcombine.high %v5068, %v5068
      %v5079 = vcombine.high %v5075, %v5075
      %v5080 = vcombine.high %v252, %v252
      %v5082 = vunpack.c.l.s4 1966171168
      %v5083 = vunpack.c.0.s8 %v5082
      %v5084 = vlaneseq
      %v5085 = vshrl.u32 %v5084, 7
      %v5086 = vsub.s32 %v5083, %v5085
      %v5087 = vrot.slane %v252, %v5086
      %v5089 = vunpack.c.l.s4 1966171168
      %v5090 = vunpack.c.0.s8 %v5089
      %v5091 = vlaneseq
      %v5092 = vshrl.u32 %v5091, 7
      %v5093 = vsub.s32 %v5090, %v5092
      %v5094 = vrot.slane %v5080, %v5093
      %v5095 = vcombine.high %v5087, %v5087
      %v5097 = vunpack.c.l.s4 1966171168
      %v5098 = vunpack.c.0.s8 %v5097
      %v5099 = vlaneseq
      %v5100 = vshrl.u32 %v5099, 7
      %v5101 = vsub.s32 %v5098, %v5100
      %v5102 = vrot.slane %v5087, %v5101
      %v5104 = vunpack.c.l.s4 1966171168
      %v5105 = vunpack.c.0.s8 %v5104
      %v5106 = vlaneseq
      %v5107 = vshrl.u32 %v5106, 7
      %v5108 = vsub.s32 %v5105, %v5107
      %v5109 = vrot.slane %v5094, %v5108
      %v5111 = vunpack.c.l.s4 1966171168
      %v5112 = vunpack.c.0.s8 %v5111
      %v5113 = vlaneseq
      %v5114 = vshrl.u32 %v5113, 7
      %v5115 = vsub.s32 %v5112, %v5114
      %v5116 = vrot.slane %v5095, %v5115
      %v5117 = vcombine.high %v5102, %v5102
      %v5118 = vcombine.high %v5116, %v5116
      %v5119 = vcombine.low %v418, %v432
      %v5121 = vunpack.c.l.s4 1966171168
      %v5122 = vunpack.c.0.s8 %v5121
      %v5123 = vlaneseq
      %v5124 = vshrl.u32 %v5123, 7
      %v5125 = vsub.s32 %v5122, %v5124
      %v5126 = vrot.slane %v5119, %v5125
      %v5127 = vcombine.low %v5126, %v2724
      %v5129 = vunpack.c.l.s4 1966171168
      %v5130 = vunpack.c.0.s8 %v5129
      %v5131 = vlaneseq
      %v5132 = vshrl.u32 %v5131, 7
      %v5133 = vsub.s32 %v5130, %v5132
      %v5134 = vrot.slane %v5127, %v5133
      %v5135 = vcombine.low %v5134, %v2782
      %v5136 = vcombine.low %v473, %v506
      %v5138 = vunpack.c.l.s4 1966171168
      %v5139 = vunpack.c.0.s8 %v5138
      %v5140 = vlaneseq
      %v5141 = vshrl.u32 %v5140, 7
      %v5142 = vsub.s32 %v5139, %v5141
      %v5143 = vrot.slane %v5136, %v5142
      %v5144 = vcombine.low %v5143, %v2808
      %v5146 = vunpack.c.l.s4 1966171168
      %v5147 = vunpack.c.0.s8 %v5146
      %v5148 = vlaneseq
      %v5149 = vshrl.u32 %v5148, 7
      %v5150 = vsub.s32 %v5147, %v5149
      %v5151 = vrot.slane %v5144, %v5150
      %v5152 = vcombine.low %v2789, %v5151
      %v5153 = vcombine.low %v2838, %v2880
      %v5154 = vcombine.low %v594, %v608
      %v5156 = vunpack.c.l.s4 1966171168
      %v5157 = vunpack.c.0.s8 %v5156
      %v5158 = vlaneseq
      %v5159 = vshrl.u32 %v5158, 7
      %v5160 = vsub.s32 %v5157, %v5159
      %v5161 = vrot.slane %v5154, %v5160
      %v5162 = vcombine.low %v2864, %v5161
      %v5164 = vunpack.c.l.s4 1966171168
      %v5165 = vunpack.c.0.s8 %v5164
      %v5166 = vlaneseq
      %v5167 = vshrl.u32 %v5166, 7
      %v5168 = vsub.s32 %v5165, %v5167
      %v5169 = vrot.slane %v5162, %v5168
      %v5170 = vcombine.low %v5169, %v2929
      %v5171 = vcombine.low %v649, %v682
      %v5173 = vunpack.c.l.s4 1966171168
      %v5174 = vunpack.c.0.s8 %v5173
      %v5175 = vlaneseq
      %v5176 = vshrl.u32 %v5175, 7
      %v5177 = vsub.s32 %v5174, %v5176
      %v5178 = vrot.slane %v5171, %v5177
      %v5179 = vcombine.low %v2948, %v5178
      %v5181 = vunpack.c.l.s4 1966171168
      %v5182 = vunpack.c.0.s8 %v5181
      %v5183 = vlaneseq
      %v5184 = vshrl.u32 %v5183, 7
      %v5185 = vsub.s32 %v5182, %v5184
      %v5186 = vrot.slane %v5179, %v5185
      %v5187 = vcombine.low %v2936, %v5186
      %v5188 = vcombine.low %v2985, %v3027
      %v5189 = vcombine.low %v770, %v784
      %v5191 = vunpack.c.l.s4 1966171168
      %v5192 = vunpack.c.0.s8 %v5191
      %v5193 = vlaneseq
      %v5194 = vshrl.u32 %v5193, 7
      %v5195 = vsub.s32 %v5192, %v5194
      %v5196 = vrot.slane %v5189, %v5195
      %v5197 = vcombine.low %v5196, %v3053
      %v5199 = vunpack.c.l.s4 1966171168
      %v5200 = vunpack.c.0.s8 %v5199
      %v5201 = vlaneseq
      %v5202 = vshrl.u32 %v5201, 7
      %v5203 = vsub.s32 %v5200, %v5202
      %v5204 = vrot.slane %v5197, %v5203
      %v5205 = vcombine.low %v3034, %v5204
      %v5206 = vcombine.low %v3083, %v3125
      %v5207 = vcombine.low %v825, %v858
      %v5209 = vunpack.c.l.s4 1966171168
      %v5210 = vunpack.c.0.s8 %v5209
      %v5211 = vlaneseq
      %v5212 = vshrl.u32 %v5211, 7
      %v5213 = vsub.s32 %v5210, %v5212
      %v5214 = vrot.slane %v5207, %v5213
      %v5215 = vcombine.low %v5214, %v3116
      %v5217 = vunpack.c.l.s4 1966171168
      %v5218 = vunpack.c.0.s8 %v5217
      %v5219 = vlaneseq
      %v5220 = vshrl.u32 %v5219, 7
      %v5221 = vsub.s32 %v5218, %v5220
      %v5222 = vrot.slane %v5215, %v5221
      %v5223 = vcombine.low %v5222, %v3174
      %v5224 = vcombine.low %v946, %v960
      %v5226 = vunpack.c.l.s4 1966171168
      %v5227 = vunpack.c.0.s8 %v5226
      %v5228 = vlaneseq
      %v5229 = vshrl.u32 %v5228, 7
      %v5230 = vsub.s32 %v5227, %v5229
      %v5231 = vrot.slane %v5224, %v5230
      %v5232 = vcombine.low %v3193, %v5231
      %v5234 = vunpack.c.l.s4 1966171168
      %v5235 = vunpack.c.0.s8 %v5234
      %v5236 = vlaneseq
      %v5237 = vshrl.u32 %v5236, 7
      %v5238 = vsub.s32 %v5235, %v5237
      %v5239 = vrot.slane %v5232, %v5238
      %v5240 = vcombine.low %v3181, %v5239
      %v5241 = vcombine.low %v3230, %v3272
      %v5242 = vcombine.low %v1001, %v1034
      %v5244 = vunpack.c.l.s4 1966171168
      %v5245 = vunpack.c.0.s8 %v5244
      %v5246 = vlaneseq
      %v5247 = vshrl.u32 %v5246, 7
      %v5248 = vsub.s32 %v5245, %v5247
      %v5249 = vrot.slane %v5242, %v5248
      %v5250 = vcombine.low %v3256, %v5249
      %v5252 = vunpack.c.l.s4 1966171168
      %v5253 = vunpack.c.0.s8 %v5252
      %v5254 = vlaneseq
      %v5255 = vshrl.u32 %v5254, 7
      %v5256 = vsub.s32 %v5253, %v5255
      %v5257 = vrot.slane %v5250, %v5256
      %v5258 = vcombine.low %v5257, %v3321
      %v5259 = vcombine.low %v3328, %v3370
      %v5260 = vcombine.low %v1122, %v1136
      %v5262 = vunpack.c.l.s4 1966171168
      %v5263 = vunpack.c.0.s8 %v5262
      %v5264 = vlaneseq
      %v5265 = vshrl.u32 %v5264, 7
      %v5266 = vsub.s32 %v5263, %v5265
      %v5267 = vrot.slane %v5260, %v5266
      %v5268 = vcombine.low %v5267, %v3361
      %v5270 = vunpack.c.l.s4 1966171168
      %v5271 = vunpack.c.0.s8 %v5270
      %v5272 = vlaneseq
      %v5273 = vshrl.u32 %v5272, 7
      %v5274 = vsub.s32 %v5271, %v5273
      %v5275 = vrot.slane %v5268, %v5274
      %v5276 = vcombine.low %v5275, %v3419
      %v5277 = vcombine.low %v1177, %v1210
      %v5279 = vunpack.c.l.s4 1966171168
      %v5280 = vunpack.c.0.s8 %v5279
      %v5281 = vlaneseq
      %v5282 = vshrl.u32 %v5281, 7
      %v5283 = vsub.s32 %v5280, %v5282
      %v5284 = vrot.slane %v5277, %v5283
      %v5285 = vcombine.low %v5284, %v3445
      %v5287 = vunpack.c.l.s4 1966171168
      %v5288 = vunpack.c.0.s8 %v5287
      %v5289 = vlaneseq
      %v5290 = vshrl.u32 %v5289, 7
      %v5291 = vsub.s32 %v5288, %v5290
      %v5292 = vrot.slane %v5285, %v5291
      %v5293 = vcombine.low %v3426, %v5292
      %v5294 = vcombine.low %v3475, %v3517
      %v5295 = vcombine.low %v1298, %v1312
      %v5297 = vunpack.c.l.s4 1966171168
      %v5298 = vunpack.c.0.s8 %v5297
      %v5299 = vlaneseq
      %v5300 = vshrl.u32 %v5299, 7
      %v5301 = vsub.s32 %v5298, %v5300
      %v5302 = vrot.slane %v5295, %v5301
      %v5303 = vcombine.low %v3501, %v5302
      %v5305 = vunpack.c.l.s4 1966171168
      %v5306 = vunpack.c.0.s8 %v5305
      %v5307 = vlaneseq
      %v5308 = vshrl.u32 %v5307, 7
      %v5309 = vsub.s32 %v5306, %v5308
      %v5310 = vrot.slane %v5303, %v5309
      %v5311 = vcombine.low %v5310, %v3566
      %v5312 = vcombine.low %v1353, %v1386
      %v5314 = vunpack.c.l.s4 1966171168
      %v5315 = vunpack.c.0.s8 %v5314
      %v5316 = vlaneseq
      %v5317 = vshrl.u32 %v5316, 7
      %v5318 = vsub.s32 %v5315, %v5317
      %v5319 = vrot.slane %v5312, %v5318
      %v5320 = vcombine.low %v3585, %v5319
      %v5322 = vunpack.c.l.s4 1966171168
      %v5323 = vunpack.c.0.s8 %v5322
      %v5324 = vlaneseq
      %v5325 = vshrl.u32 %v5324, 7
      %v5326 = vsub.s32 %v5323, %v5325
      %v5327 = vrot.slane %v5320, %v5326
      %v5328 = vcombine.low %v3573, %v5327
      %v5329 = vcombine.low %v3622, %v3664
      %v5330 = vcombine.low %v5054, %v5068
      %v5331 = vcombine.low %v5076, %v5078
      %v5333 = vunpack.c.l.s4 1966171168
      %v5334 = vunpack.c.0.s8 %v5333
      %v5335 = vlaneseq
      %v5336 = vshrl.u32 %v5335, 7
      %v5337 = vsub.s32 %v5334, %v5336
      %v5338 = vrot.slane %v5330, %v5337
      %v5340 = vunpack.c.l.s4 1966171168
      %v5341 = vunpack.c.0.s8 %v5340
      %v5342 = vlaneseq
      %v5343 = vshrl.u32 %v5342, 7
      %v5344 = vsub.s32 %v5341, %v5343
      %v5345 = vrot.slane %v5331, %v5344
      %v5346 = vcombine.low %v5338, %v5345
      %v5348 = vunpack.c.l.s4 1966171168
      %v5349 = vunpack.c.0.s8 %v5348
      %v5350 = vlaneseq
      %v5351 = vshrl.u32 %v5350, 7
      %v5352 = vsub.s32 %v5349, %v5351
      %v5353 = vrot.slane %v5346, %v5352
      %v5354 = vcombine.low %v3671, %v5353
      %v5355 = vcombine.low %v5061, %v5075
      %v5356 = vcombine.low %v5077, %v5079
      %v5357 = vcombine.low %v5102, %v5116
      %v5358 = vcombine.low %v5117, %v5118
      %v5360 = vunpack.c.l.s4 1966171168
      %v5361 = vunpack.c.0.s8 %v5360
      %v5362 = vlaneseq
      %v5363 = vshrl.u32 %v5362, 7
      %v5364 = vsub.s32 %v5361, %v5363
      %v5365 = vrot.slane %v5355, %v5364
      %v5367 = vunpack.c.l.s4 1966171168
      %v5368 = vunpack.c.0.s8 %v5367
      %v5369 = vlaneseq
      %v5370 = vshrl.u32 %v5369, 7
      %v5371 = vsub.s32 %v5368, %v5370
      %v5372 = vrot.slane %v5356, %v5371
      %v5374 = vunpack.c.l.s4 1966171168
      %v5375 = vunpack.c.0.s8 %v5374
      %v5376 = vlaneseq
      %v5377 = vshrl.u32 %v5376, 7
      %v5378 = vsub.s32 %v5375, %v5377
      %v5379 = vrot.slane %v5357, %v5378
      %v5381 = vunpack.c.l.s4 1966171168
      %v5382 = vunpack.c.0.s8 %v5381
      %v5383 = vlaneseq
      %v5384 = vshrl.u32 %v5383, 7
      %v5385 = vsub.s32 %v5382, %v5384
      %v5386 = vrot.slane %v5358, %v5385
      %v5387 = vcombine.low %v5365, %v5372
      %v5388 = vcombine.low %v5379, %v5386
      %v5390 = vunpack.c.l.s4 1966171168
      %v5391 = vunpack.c.0.s8 %v5390
      %v5392 = vlaneseq
      %v5393 = vshrl.u32 %v5392, 7
      %v5394 = vsub.s32 %v5391, %v5393
      %v5395 = vrot.slane %v5387, %v5394
      %v5397 = vunpack.c.l.s4 1966171168
      %v5398 = vunpack.c.0.s8 %v5397
      %v5399 = vlaneseq
      %v5400 = vshrl.u32 %v5399, 7
      %v5401 = vsub.s32 %v5398, %v5400
      %v5402 = vrot.slane %v5388, %v5401
      %v5403 = vcombine.low %v5395, %v5402
      %v5405 = vunpack.c.l.s4 1966171168
      %v5406 = vunpack.c.0.s8 %v5405
      %v5407 = vlaneseq
      %v5408 = vshrl.u32 %v5407, 7
      %v5409 = vsub.s32 %v5406, %v5408
      %v5410 = vrot.slane %v5109, %v5409
      %v5412 = vunpack.c.l.s4 1966171168
      %v5413 = vunpack.c.0.s8 %v5412
      %v5414 = vlaneseq
      %v5415 = vshrl.u32 %v5414, 7
      %v5416 = vsub.s32 %v5413, %v5415
      %v5417 = vrot.slane %v5410, %v5416
      %5418 = vrot.lane.b32.xlu0 %v5135, 16
      %v5419 = vpop.permute.xlu0 %5418
      %5420 = vrot.lane.b32.xlu0 %v5152, 16
      %v5421 = vpop.permute.xlu0 %5420
      %5422 = vrot.lane.b32.xlu0 %v5153, 16
      %v5423 = vpop.permute.xlu0 %5422
      %5424 = vrot.lane.b32.xlu0 %v5170, 16
      %v5425 = vpop.permute.xlu0 %5424
      %5426 = vrot.lane.b32.xlu0 %v5187, 16
      %v5427 = vpop.permute.xlu0 %5426
      %5428 = vrot.lane.b32.xlu0 %v5188, 16
      %v5429 = vpop.permute.xlu0 %5428
      %5430 = vrot.lane.b32.xlu0 %v5205, 16
      %v5431 = vpop.permute.xlu0 %5430
      %5432 = vrot.lane.b32.xlu0 %v5206, 16
      %v5433 = vpop.permute.xlu0 %5432
      %5434 = vrot.lane.b32.xlu0 %v5223, 16
      %v5435 = vpop.permute.xlu0 %5434
      %5436 = vrot.lane.b32.xlu0 %v5240, 16
      %v5437 = vpop.permute.xlu0 %5436
      %5438 = vrot.lane.b32.xlu0 %v5241, 16
      %v5439 = vpop.permute.xlu0 %5438
      %5440 = vrot.lane.b32.xlu0 %v5258, 16
      %v5441 = vpop.permute.xlu0 %5440
      %5442 = vrot.lane.b32.xlu0 %v5259, 16
      %v5443 = vpop.permute.xlu0 %5442
      %5444 = vrot.lane.b32.xlu0 %v5276, 16
      %v5445 = vpop.permute.xlu0 %5444
      %5446 = vrot.lane.b32.xlu0 %v5293, 16
      %v5447 = vpop.permute.xlu0 %5446
      %5448 = vrot.lane.b32.xlu0 %v5294, 16
      %v5449 = vpop.permute.xlu0 %5448
      %5450 = vrot.lane.b32.xlu0 %v5311, 16
      %v5451 = vpop.permute.xlu0 %5450
      %5452 = vrot.lane.b32.xlu0 %v5328, 16
      %v5453 = vpop.permute.xlu0 %5452
      %5454 = vrot.lane.b32.xlu0 %v5329, 16
      %v5455 = vpop.permute.xlu0 %5454
      %5456 = vrot.lane.b32.xlu0 %v5354, 16
      %v5457 = vpop.permute.xlu0 %5456
      %5458 = vrot.lane.b32.xlu0 %v5403, 16
      %v5459 = vpop.permute.xlu0 %5458
      %5460 = vrot.lane.b32.xlu0 %v5417, 16
      %v5461 = vpop.permute.xlu0 %5460
      %vm5484 = vcmask 162944
      %5485 = vst.msk [vmem:[#allocation2] sm:$0xff] %vm5484, %v5419
      %5486 = vst.msk [vmem:[#allocation2 + $0x8] sm:$0xff] %vm5484, %v5421
      %5487 = vst.msk [vmem:[#allocation2 + $0x10] sm:$0xff] %vm5484, %v5423
      %5488 = vst.msk [vmem:[#allocation2 + $0x18] sm:$0xff] %vm5484, %v5425
      %5489 = vst.msk [vmem:[#allocation2 + $0x20] sm:$0xff] %vm5484, %v5427
      %5490 = vst.msk [vmem:[#allocation2 + $0x28] sm:$0xff] %vm5484, %v5429
      %5491 = vst.msk [vmem:[#allocation2 + $0x30] sm:$0xff] %vm5484, %v5431
      %5492 = vst.msk [vmem:[#allocation2 + $0x38] sm:$0xff] %vm5484, %v5433
      %5493 = vst.msk [vmem:[#allocation2 + $0x40] sm:$0xff] %vm5484, %v5435
      %5494 = vst.msk [vmem:[#allocation2 + $0x48] sm:$0xff] %vm5484, %v5437
      %5495 = vst.msk [vmem:[#allocation2 + $0x50] sm:$0xff] %vm5484, %v5439
      %5496 = vst.msk [vmem:[#allocation2 + $0x58] sm:$0xff] %vm5484, %v5441
      %5497 = vst.msk [vmem:[#allocation2 + $0x60] sm:$0xff] %vm5484, %v5443
      %5498 = vst.msk [vmem:[#allocation2 + $0x68] sm:$0xff] %vm5484, %v5445
      %5499 = vst.msk [vmem:[#allocation2 + $0x70] sm:$0xff] %vm5484, %v5447
      %5500 = vst.msk [vmem:[#allocation2 + $0x78] sm:$0xff] %vm5484, %v5449
      %5501 = vst.msk [vmem:[#allocation2 + $0x80] sm:$0xff] %vm5484, %v5451
      %5502 = vst.msk [vmem:[#allocation2 + $0x88] sm:$0xff] %vm5484, %v5453
      %5503 = vst.msk [vmem:[#allocation2 + $0x90] sm:$0xff] %vm5484, %v5455
      %5504 = vst.msk [vmem:[#allocation2 + $0x98] sm:$0xff] %vm5484, %v5457
      %5505 = vst.msk [vmem:[#allocation2 + $0xa0] sm:$0xff] %vm5484, %v5459
      %vm5506 = vcmask 155776
      %5507 = vst.msk [vmem:[#allocation2 + $0xa8] sm:$0x1] %vm5506, %v5461
      %v5508 = vcombine.high %v5094, %v5094
      %v5510 = vunpack.c.l.s4 1966171168
      %v5511 = vunpack.c.0.s8 %v5510
      %v5512 = vlaneseq
      %v5513 = vshrl.u32 %v5512, 7
      %v5514 = vsub.s32 %v5511, %v5513
      %v5515 = vrot.slane %v5508, %v5514
      %v5516 = vcombine.low %v1531, %v1559
      %v5518 = vunpack.c.l.s4 1966171168
      %v5519 = vunpack.c.0.s8 %v5518
      %v5520 = vlaneseq
      %v5521 = vshrl.u32 %v5520, 7
      %v5522 = vsub.s32 %v5519, %v5521
      %v5523 = vrot.slane %v5516, %v5522
      %v5524 = vcombine.low %v5523, %v3848
      %v5525 = vcombine.low %v2555, %v520
      %v5527 = vunpack.c.l.s4 1966171168
      %v5528 = vunpack.c.0.s8 %v5527
      %v5529 = vlaneseq
      %v5530 = vshrl.u32 %v5529, 7
      %v5531 = vsub.s32 %v5528, %v5530
      %v5532 = vrot.slane %v5525, %v5531
      %v5533 = vcombine.low %v5532, %v1622
      %v5535 = vunpack.c.l.s4 1966171168
      %v5536 = vunpack.c.0.s8 %v5535
      %v5537 = vlaneseq
      %v5538 = vshrl.u32 %v5537, 7
      %v5539 = vsub.s32 %v5536, %v5538
      %v5540 = vrot.slane %v5533, %v5539
      %v5541 = vcombine.low %v3855, %v5540
      %v5542 = vcombine.low %v3880, %v3906
      %v5543 = vcombine.low %v3890, %v1706
      %v5545 = vunpack.c.l.s4 1966171168
      %v5546 = vunpack.c.0.s8 %v5545
      %v5547 = vlaneseq
      %v5548 = vshrl.u32 %v5547, 7
      %v5549 = vsub.s32 %v5546, %v5548
      %v5550 = vrot.slane %v5543, %v5549
      %v5551 = vcombine.low %v5550, %v3923
      %v5552 = vcombine.low %v2571, %v696
      %v5554 = vunpack.c.l.s4 1966171168
      %v5555 = vunpack.c.0.s8 %v5554
      %v5556 = vlaneseq
      %v5557 = vshrl.u32 %v5556, 7
      %v5558 = vsub.s32 %v5555, %v5557
      %v5559 = vrot.slane %v5552, %v5558
      %v5560 = vcombine.low %v1762, %v5559
      %v5562 = vunpack.c.l.s4 1966171168
      %v5563 = vunpack.c.0.s8 %v5562
      %v5564 = vlaneseq
      %v5565 = vshrl.u32 %v5564, 7
      %v5566 = vsub.s32 %v5563, %v5565
      %v5567 = vrot.slane %v5560, %v5566
      %v5568 = vcombine.low %v3930, %v5567
      %v5569 = vcombine.low %v3955, %v3973
      %v5570 = vcombine.low %v1860, %v1867
      %v5572 = vunpack.c.l.s4 1966171168
      %v5573 = vunpack.c.0.s8 %v5572
      %v5574 = vlaneseq
      %v5575 = vshrl.u32 %v5574, 7
      %v5576 = vsub.s32 %v5573, %v5575
      %v5577 = vrot.slane %v5570, %v5576
      %v5578 = vcombine.low %v3980, %v5577
      %v5579 = vcombine.low %v4005, %v4023
      %v5580 = vcombine.low %v2587, %v872
      %v5582 = vunpack.c.l.s4 1966171168
      %v5583 = vunpack.c.0.s8 %v5582
      %v5584 = vlaneseq
      %v5585 = vshrl.u32 %v5584, 7
      %v5586 = vsub.s32 %v5583, %v5585
      %v5587 = vrot.slane %v5580, %v5586
      %v5588 = vcombine.low %v5587, %v1951
      %v5590 = vunpack.c.l.s4 1966171168
      %v5591 = vunpack.c.0.s8 %v5590
      %v5592 = vlaneseq
      %v5593 = vshrl.u32 %v5592, 7
      %v5594 = vsub.s32 %v5591, %v5593
      %v5595 = vrot.slane %v5588, %v5594
      %v5596 = vcombine.low %v5595, %v4040
      %v5597 = vcombine.low %v4057, %v2014
      %v5599 = vunpack.c.l.s4 1966171168
      %v5600 = vunpack.c.0.s8 %v5599
      %v5601 = vlaneseq
      %v5602 = vshrl.u32 %v5601, 7
      %v5603 = vsub.s32 %v5600, %v5602
      %v5604 = vrot.slane %v5597, %v5603
      %v5605 = vcombine.low %v4047, %v5604
      %v5606 = vcombine.low %v4080, %v4098
      %v5607 = vcombine.low %v2603, %v1048
      %v5609 = vunpack.c.l.s4 1966171168
      %v5610 = vunpack.c.0.s8 %v5609
      %v5611 = vlaneseq
      %v5612 = vshrl.u32 %v5611, 7
      %v5613 = vsub.s32 %v5610, %v5612
      %v5614 = vrot.slane %v5607, %v5613
      %v5615 = vcombine.low %v2070, %v5614
      %v5617 = vunpack.c.l.s4 1966171168
      %v5618 = vunpack.c.0.s8 %v5617
      %v5619 = vlaneseq
      %v5620 = vshrl.u32 %v5619, 7
      %v5621 = vsub.s32 %v5618, %v5620
      %v5622 = vrot.slane %v5615, %v5621
      %v5623 = vcombine.low %v5622, %v4115
      %v5624 = vcombine.low %v4122, %v4148
      %v5625 = vcombine.low %v2168, %v2196
      %v5627 = vunpack.c.l.s4 1966171168
      %v5628 = vunpack.c.0.s8 %v5627
      %v5629 = vlaneseq
      %v5630 = vshrl.u32 %v5629, 7
      %v5631 = vsub.s32 %v5628, %v5630
      %v5632 = vrot.slane %v5625, %v5631
      %v5633 = vcombine.low %v5632, %v4165
      %v5634 = vcombine.low %v2619, %v1224
      %v5636 = vunpack.c.l.s4 1966171168
      %v5637 = vunpack.c.0.s8 %v5636
      %v5638 = vlaneseq
      %v5639 = vshrl.u32 %v5638, 7
      %v5640 = vsub.s32 %v5637, %v5639
      %v5641 = vrot.slane %v5634, %v5640
      %v5642 = vcombine.low %v5641, %v2259
      %v5644 = vunpack.c.l.s4 1966171168
      %v5645 = vunpack.c.0.s8 %v5644
      %v5646 = vlaneseq
      %v5647 = vshrl.u32 %v5646, 7
      %v5648 = vsub.s32 %v5645, %v5647
      %v5649 = vrot.slane %v5642, %v5648
      %v5650 = vcombine.low %v4172, %v5649
      %v5651 = vcombine.low %v4197, %v4223
      %v5652 = vcombine.low %v4207, %v2343
      %v5654 = vunpack.c.l.s4 1966171168
      %v5655 = vunpack.c.0.s8 %v5654
      %v5656 = vlaneseq
      %v5657 = vshrl.u32 %v5656, 7
      %v5658 = vsub.s32 %v5655, %v5657
      %v5659 = vrot.slane %v5652, %v5658
      %v5660 = vcombine.low %v5659, %v4240
      %v5661 = vcombine.low %v2635, %v1400
      %v5663 = vunpack.c.l.s4 1966171168
      %v5664 = vunpack.c.0.s8 %v5663
      %v5665 = vlaneseq
      %v5666 = vshrl.u32 %v5665, 7
      %v5667 = vsub.s32 %v5664, %v5666
      %v5668 = vrot.slane %v5661, %v5667
      %v5669 = vcombine.low %v2399, %v5668
      %v5671 = vunpack.c.l.s4 1966171168
      %v5672 = vunpack.c.0.s8 %v5671
      %v5673 = vlaneseq
      %v5674 = vshrl.u32 %v5673, 7
      %v5675 = vsub.s32 %v5672, %v5674
      %v5676 = vrot.slane %v5669, %v5675
      %v5677 = vcombine.low %v4247, %v5676
      %v5678 = vcombine.low %v4272, %v4290
      %v5679 = vcombine.low %v5068, %v5076
      %v5680 = vcombine.low %v5078, %v5061
      %v5682 = vunpack.c.l.s4 1966171168
      %v5683 = vunpack.c.0.s8 %v5682
      %v5684 = vlaneseq
      %v5685 = vshrl.u32 %v5684, 7
      %v5686 = vsub.s32 %v5683, %v5685
      %v5687 = vrot.slane %v5679, %v5686
      %v5689 = vunpack.c.l.s4 1966171168
      %v5690 = vunpack.c.0.s8 %v5689
      %v5691 = vlaneseq
      %v5692 = vshrl.u32 %v5691, 7
      %v5693 = vsub.s32 %v5690, %v5692
      %v5694 = vrot.slane %v5680, %v5693
      %v5695 = vcombine.low %v5687, %v5694
      %v5697 = vunpack.c.l.s4 1966171168
      %v5698 = vunpack.c.0.s8 %v5697
      %v5699 = vlaneseq
      %v5700 = vshrl.u32 %v5699, 7
      %v5701 = vsub.s32 %v5698, %v5700
      %v5702 = vrot.slane %v5695, %v5701
      %v5703 = vcombine.low %v4297, %v5702
      %v5704 = vcombine.low %v5075, %v5077
      %v5705 = vcombine.low %v5079, %v5102
      %v5706 = vcombine.low %v5116, %v5117
      %v5707 = vcombine.low %v5118, %v5109
      %v5709 = vunpack.c.l.s4 1966171168
      %v5710 = vunpack.c.0.s8 %v5709
      %v5711 = vlaneseq
      %v5712 = vshrl.u32 %v5711, 7
      %v5713 = vsub.s32 %v5710, %v5712
      %v5714 = vrot.slane %v5704, %v5713
      %v5716 = vunpack.c.l.s4 1966171168
      %v5717 = vunpack.c.0.s8 %v5716
      %v5718 = vlaneseq
      %v5719 = vshrl.u32 %v5718, 7
      %v5720 = vsub.s32 %v5717, %v5719
      %v5721 = vrot.slane %v5705, %v5720
      %v5723 = vunpack.c.l.s4 1966171168
      %v5724 = vunpack.c.0.s8 %v5723
      %v5725 = vlaneseq
      %v5726 = vshrl.u32 %v5725, 7
      %v5727 = vsub.s32 %v5724, %v5726
      %v5728 = vrot.slane %v5706, %v5727
      %v5730 = vunpack.c.l.s4 1966171168
      %v5731 = vunpack.c.0.s8 %v5730
      %v5732 = vlaneseq
      %v5733 = vshrl.u32 %v5732, 7
      %v5734 = vsub.s32 %v5731, %v5733
      %v5735 = vrot.slane %v5707, %v5734
      %v5736 = vcombine.low %v5714, %v5721
      %v5737 = vcombine.low %v5728, %v5735
      %v5739 = vunpack.c.l.s4 1966171168
      %v5740 = vunpack.c.0.s8 %v5739
      %v5741 = vlaneseq
      %v5742 = vshrl.u32 %v5741, 7
      %v5743 = vsub.s32 %v5740, %v5742
      %v5744 = vrot.slane %v5736, %v5743
      %v5746 = vunpack.c.l.s4 1966171168
      %v5747 = vunpack.c.0.s8 %v5746
      %v5748 = vlaneseq
      %v5749 = vshrl.u32 %v5748, 7
      %v5750 = vsub.s32 %v5747, %v5749
      %v5751 = vrot.slane %v5737, %v5750
      %v5752 = vcombine.low %v5744, %v5751
      %v5754 = vunpack.c.l.s4 1966171168
      %v5755 = vunpack.c.0.s8 %v5754
      %v5756 = vlaneseq
      %v5757 = vshrl.u32 %v5756, 7
      %v5758 = vsub.s32 %v5755, %v5757
      %v5759 = vrot.slane %v5515, %v5758
      %v5761 = vunpack.c.l.s4 1966171168
      %v5762 = vunpack.c.0.s8 %v5761
      %v5763 = vlaneseq
      %v5764 = vshrl.u32 %v5763, 7
      %v5765 = vsub.s32 %v5762, %v5764
      %v5766 = vrot.slane %v5759, %v5765
      %5767 = vrot.lane.b32.xlu0 %v5524, 20
      %v5768 = vpop.permute.xlu0 %5767
      %5769 = vrot.lane.b32.xlu0 %v5541, 20
      %v5770 = vpop.permute.xlu0 %5769
      %5771 = vrot.lane.b32.xlu0 %v5542, 20
      %v5772 = vpop.permute.xlu0 %5771
      %5773 = vrot.lane.b32.xlu0 %v5551, 20
      %v5774 = vpop.permute.xlu0 %5773
      %5775 = vrot.lane.b32.xlu0 %v5568, 20
      %v5776 = vpop.permute.xlu0 %5775
      %5777 = vrot.lane.b32.xlu0 %v5569, 20
      %v5778 = vpop.permute.xlu0 %5777
      %5779 = vrot.lane.b32.xlu0 %v5578, 20
      %v5780 = vpop.permute.xlu0 %5779
      %5781 = vrot.lane.b32.xlu0 %v5579, 20
      %v5782 = vpop.permute.xlu0 %5781
      %5783 = vrot.lane.b32.xlu0 %v5596, 20
      %v5784 = vpop.permute.xlu0 %5783
      %5785 = vrot.lane.b32.xlu0 %v5605, 20
      %v5786 = vpop.permute.xlu0 %5785
      %5787 = vrot.lane.b32.xlu0 %v5606, 20
      %v5788 = vpop.permute.xlu0 %5787
      %5789 = vrot.lane.b32.xlu0 %v5623, 20
      %v5790 = vpop.permute.xlu0 %5789
      %5791 = vrot.lane.b32.xlu0 %v5624, 20
      %v5792 = vpop.permute.xlu0 %5791
      %5793 = vrot.lane.b32.xlu0 %v5633, 20
      %v5794 = vpop.permute.xlu0 %5793
      %5795 = vrot.lane.b32.xlu0 %v5650, 20
      %v5796 = vpop.permute.xlu0 %5795
      %5797 = vrot.lane.b32.xlu0 %v5651, 20
      %v5798 = vpop.permute.xlu0 %5797
      %5799 = vrot.lane.b32.xlu0 %v5660, 20
      %v5800 = vpop.permute.xlu0 %5799
      %5801 = vrot.lane.b32.xlu0 %v5677, 20
      %v5802 = vpop.permute.xlu0 %5801
      %5803 = vrot.lane.b32.xlu0 %v5678, 20
      %v5804 = vpop.permute.xlu0 %5803
      %5805 = vrot.lane.b32.xlu0 %v5703, 20
      %v5806 = vpop.permute.xlu0 %5805
      %5807 = vrot.lane.b32.xlu0 %v5752, 20
      %v5808 = vpop.permute.xlu0 %5807
      %5809 = vrot.lane.b32.xlu0 %v5766, 20
      %v5810 = vpop.permute.xlu0 %5809
      %vm5833 = vcmask 195744
      %5834 = vst.msk [vmem:[#allocation2] sm:$0xff] %vm5833, %v5768
      %5835 = vst.msk [vmem:[#allocation2 + $0x8] sm:$0xff] %vm5833, %v5770
      %5836 = vst.msk [vmem:[#allocation2 + $0x10] sm:$0xff] %vm5833, %v5772
      %5837 = vst.msk [vmem:[#allocation2 + $0x18] sm:$0xff] %vm5833, %v5774
      %5838 = vst.msk [vmem:[#allocation2 + $0x20] sm:$0xff] %vm5833, %v5776
      %5839 = vst.msk [vmem:[#allocation2 + $0x28] sm:$0xff] %vm5833, %v5778
      %5840 = vst.msk [vmem:[#allocation2 + $0x30] sm:$0xff] %vm5833, %v5780
      %5841 = vst.msk [vmem:[#allocation2 + $0x38] sm:$0xff] %vm5833, %v5782
      %5842 = vst.msk [vmem:[#allocation2 + $0x40] sm:$0xff] %vm5833, %v5784
      %5843 = vst.msk [vmem:[#allocation2 + $0x48] sm:$0xff] %vm5833, %v5786
      %5844 = vst.msk [vmem:[#allocation2 + $0x50] sm:$0xff] %vm5833, %v5788
      %5845 = vst.msk [vmem:[#allocation2 + $0x58] sm:$0xff] %vm5833, %v5790
      %5846 = vst.msk [vmem:[#allocation2 + $0x60] sm:$0xff] %vm5833, %v5792
      %5847 = vst.msk [vmem:[#allocation2 + $0x68] sm:$0xff] %vm5833, %v5794
      %5848 = vst.msk [vmem:[#allocation2 + $0x70] sm:$0xff] %vm5833, %v5796
      %5849 = vst.msk [vmem:[#allocation2 + $0x78] sm:$0xff] %vm5833, %v5798
      %5850 = vst.msk [vmem:[#allocation2 + $0x80] sm:$0xff] %vm5833, %v5800
      %5851 = vst.msk [vmem:[#allocation2 + $0x88] sm:$0xff] %vm5833, %v5802
      %5852 = vst.msk [vmem:[#allocation2 + $0x90] sm:$0xff] %vm5833, %v5804
      %5853 = vst.msk [vmem:[#allocation2 + $0x98] sm:$0xff] %vm5833, %v5806
      %5854 = vst.msk [vmem:[#allocation2 + $0xa0] sm:$0xff] %vm5833, %v5808
      %vm5855 = vcmask 188576
      %5856 = vst.msk [vmem:[#allocation2 + $0xa8] sm:$0x1] %vm5855, %v5810
      %v5857 = vcombine.high %v5109, %v5109
      %v5858 = vcombine.low %v2724, %v2752
      %v5860 = vunpack.c.l.s4 1966171168
      %v5861 = vunpack.c.0.s8 %v5860
      %v5862 = vlaneseq
      %v5863 = vshrl.u32 %v5862, 7
      %v5864 = vsub.s32 %v5861, %v5863
      %v5865 = vrot.slane %v5858, %v5864
      %v5866 = vcombine.low %v5865, %v4474
      %v5867 = vcombine.low %v3778, %v528
      %v5869 = vunpack.c.l.s4 1966171168
      %v5870 = vunpack.c.0.s8 %v5869
      %v5871 = vlaneseq
      %v5872 = vshrl.u32 %v5871, 7
      %v5873 = vsub.s32 %v5870, %v5872
      %v5874 = vrot.slane %v5867, %v5873
      %v5875 = vcombine.low %v5874, %v2815
      %v5877 = vunpack.c.l.s4 1966171168
      %v5878 = vunpack.c.0.s8 %v5877
      %v5879 = vlaneseq
      %v5880 = vshrl.u32 %v5879, 7
      %v5881 = vsub.s32 %v5878, %v5880
      %v5882 = vrot.slane %v5875, %v5881
      %v5883 = vcombine.low %v4481, %v5882
      %v5884 = vcombine.low %v4506, %v4532
      %v5885 = vcombine.low %v4516, %v2899
      %v5887 = vunpack.c.l.s4 1966171168
      %v5888 = vunpack.c.0.s8 %v5887
      %v5889 = vlaneseq
      %v5890 = vshrl.u32 %v5889, 7
      %v5891 = vsub.s32 %v5888, %v5890
      %v5892 = vrot.slane %v5885, %v5891
      %v5893 = vcombine.low %v5892, %v4549
      %v5894 = vcombine.low %v3780, %v704
      %v5896 = vunpack.c.l.s4 1966171168
      %v5897 = vunpack.c.0.s8 %v5896
      %v5898 = vlaneseq
      %v5899 = vshrl.u32 %v5898, 7
      %v5900 = vsub.s32 %v5897, %v5899
      %v5901 = vrot.slane %v5894, %v5900
      %v5902 = vcombine.low %v2955, %v5901
      %v5904 = vunpack.c.l.s4 1966171168
      %v5905 = vunpack.c.0.s8 %v5904
      %v5906 = vlaneseq
      %v5907 = vshrl.u32 %v5906, 7
      %v5908 = vsub.s32 %v5905, %v5907
      %v5909 = vrot.slane %v5902, %v5908
      %v5910 = vcombine.low %v4556, %v5909
      %v5911 = vcombine.low %v4581, %v4599
      %v5912 = vcombine.low %v3053, %v3060
      %v5914 = vunpack.c.l.s4 1966171168
      %v5915 = vunpack.c.0.s8 %v5914
      %v5916 = vlaneseq
      %v5917 = vshrl.u32 %v5916, 7
      %v5918 = vsub.s32 %v5915, %v5917
      %v5919 = vrot.slane %v5912, %v5918
      %v5920 = vcombine.low %v4606, %v5919
      %v5921 = vcombine.low %v4631, %v4649
      %v5922 = vcombine.low %v3782, %v880
      %v5924 = vunpack.c.l.s4 1966171168
      %v5925 = vunpack.c.0.s8 %v5924
      %v5926 = vlaneseq
      %v5927 = vshrl.u32 %v5926, 7
      %v5928 = vsub.s32 %v5925, %v5927
      %v5929 = vrot.slane %v5922, %v5928
      %v5930 = vcombine.low %v5929, %v3144
      %v5932 = vunpack.c.l.s4 1966171168
      %v5933 = vunpack.c.0.s8 %v5932
      %v5934 = vlaneseq
      %v5935 = vshrl.u32 %v5934, 7
      %v5936 = vsub.s32 %v5933, %v5935
      %v5937 = vrot.slane %v5930, %v5936
      %v5938 = vcombine.low %v5937, %v4666
      %v5939 = vcombine.low %v4683, %v3207
      %v5941 = vunpack.c.l.s4 1966171168
      %v5942 = vunpack.c.0.s8 %v5941
      %v5943 = vlaneseq
      %v5944 = vshrl.u32 %v5943, 7
      %v5945 = vsub.s32 %v5942, %v5944
      %v5946 = vrot.slane %v5939, %v5945
      %v5947 = vcombine.low %v4673, %v5946
      %v5948 = vcombine.low %v4706, %v4724
      %v5949 = vcombine.low %v3784, %v1056
      %v5951 = vunpack.c.l.s4 1966171168
      %v5952 = vunpack.c.0.s8 %v5951
      %v5953 = vlaneseq
      %v5954 = vshrl.u32 %v5953, 7
      %v5955 = vsub.s32 %v5952, %v5954
      %v5956 = vrot.slane %v5949, %v5955
      %v5957 = vcombine.low %v3263, %v5956
      %v5959 = vunpack.c.l.s4 1966171168
      %v5960 = vunpack.c.0.s8 %v5959
      %v5961 = vlaneseq
      %v5962 = vshrl.u32 %v5961, 7
      %v5963 = vsub.s32 %v5960, %v5962
      %v5964 = vrot.slane %v5957, %v5963
      %v5965 = vcombine.low %v5964, %v4741
      %v5966 = vcombine.low %v4748, %v4774
      %v5967 = vcombine.low %v3361, %v3389
      %v5969 = vunpack.c.l.s4 1966171168
      %v5970 = vunpack.c.0.s8 %v5969
      %v5971 = vlaneseq
      %v5972 = vshrl.u32 %v5971, 7
      %v5973 = vsub.s32 %v5970, %v5972
      %v5974 = vrot.slane %v5967, %v5973
      %v5975 = vcombine.low %v5974, %v4791
      %v5976 = vcombine.low %v3786, %v1232
      %v5978 = vunpack.c.l.s4 1966171168
      %v5979 = vunpack.c.0.s8 %v5978
      %v5980 = vlaneseq
      %v5981 = vshrl.u32 %v5980, 7
      %v5982 = vsub.s32 %v5979, %v5981
      %v5983 = vrot.slane %v5976, %v5982
      %v5984 = vcombine.low %v5983, %v3452
      %v5986 = vunpack.c.l.s4 1966171168
      %v5987 = vunpack.c.0.s8 %v5986
      %v5988 = vlaneseq
      %v5989 = vshrl.u32 %v5988, 7
      %v5990 = vsub.s32 %v5987, %v5989
      %v5991 = vrot.slane %v5984, %v5990
      %v5992 = vcombine.low %v4798, %v5991
      %v5993 = vcombine.low %v4823, %v4849
      %v5994 = vcombine.low %v4833, %v3536
      %v5996 = vunpack.c.l.s4 1966171168
      %v5997 = vunpack.c.0.s8 %v5996
      %v5998 = vlaneseq
      %v5999 = vshrl.u32 %v5998, 7
      %v6000 = vsub.s32 %v5997, %v5999
      %v6001 = vrot.slane %v5994, %v6000
      %v6002 = vcombine.low %v6001, %v4866
      %v6003 = vcombine.low %v3788, %v1408
      %v6005 = vunpack.c.l.s4 1966171168
      %v6006 = vunpack.c.0.s8 %v6005
      %v6007 = vlaneseq
      %v6008 = vshrl.u32 %v6007, 7
      %v6009 = vsub.s32 %v6006, %v6008
      %v6010 = vrot.slane %v6003, %v6009
      %v6011 = vcombine.low %v3592, %v6010
      %v6013 = vunpack.c.l.s4 1966171168
      %v6014 = vunpack.c.0.s8 %v6013
      %v6015 = vlaneseq
      %v6016 = vshrl.u32 %v6015, 7
      %v6017 = vsub.s32 %v6014, %v6016
      %v6018 = vrot.slane %v6011, %v6017
      %v6019 = vcombine.low %v4873, %v6018
      %v6020 = vcombine.low %v4898, %v4916
      %v6021 = vcombine.low %v5345, %v5365
      %v6023 = vunpack.c.l.s4 1966171168
      %v6024 = vunpack.c.0.s8 %v6023
      %v6025 = vlaneseq
      %v6026 = vshrl.u32 %v6025, 7
      %v6027 = vsub.s32 %v6024, %v6026
      %v6028 = vrot.slane %v6021, %v6027
      %v6029 = vcombine.low %v4923, %v6028
      %v6030 = vcombine.low %v5109, %v5515
      %v6032 = vunpack.c.l.s4 1966171168
      %v6033 = vunpack.c.0.s8 %v6032
      %v6034 = vlaneseq
      %v6035 = vshrl.u32 %v6034, 7
      %v6036 = vsub.s32 %v6033, %v6035
      %v6037 = vrot.slane %v6030, %v6036
      %v6038 = vcombine.low %v5372, %v5379
      %v6039 = vcombine.low %v5386, %v6037
      %v6041 = vunpack.c.l.s4 1966171168
      %v6042 = vunpack.c.0.s8 %v6041
      %v6043 = vlaneseq
      %v6044 = vshrl.u32 %v6043, 7
      %v6045 = vsub.s32 %v6042, %v6044
      %v6046 = vrot.slane %v6038, %v6045
      %v6048 = vunpack.c.l.s4 1966171168
      %v6049 = vunpack.c.0.s8 %v6048
      %v6050 = vlaneseq
      %v6051 = vshrl.u32 %v6050, 7
      %v6052 = vsub.s32 %v6049, %v6051
      %v6053 = vrot.slane %v6039, %v6052
      %v6054 = vcombine.low %v6046, %v6053
      %v6056 = vunpack.c.l.s4 1966171168
      %v6057 = vunpack.c.0.s8 %v6056
      %v6058 = vlaneseq
      %v6059 = vshrl.u32 %v6058, 7
      %v6060 = vsub.s32 %v6057, %v6059
      %v6061 = vrot.slane %v5857, %v6060
      %v6063 = vunpack.c.l.s4 1966171168
      %v6064 = vunpack.c.0.s8 %v6063
      %v6065 = vlaneseq
      %v6066 = vshrl.u32 %v6065, 7
      %v6067 = vsub.s32 %v6064, %v6066
      %v6068 = vrot.slane %v6061, %v6067
      %6069 = vrot.lane.b32.xlu0 %v5866, 24
      %v6070 = vpop.permute.xlu0 %6069
      %6071 = vrot.lane.b32.xlu0 %v5883, 24
      %v6072 = vpop.permute.xlu0 %6071
      %6073 = vrot.lane.b32.xlu0 %v5884, 24
      %v6074 = vpop.permute.xlu0 %6073
      %6075 = vrot.lane.b32.xlu0 %v5893, 24
      %v6076 = vpop.permute.xlu0 %6075
      %6077 = vrot.lane.b32.xlu0 %v5910, 24
      %v6078 = vpop.permute.xlu0 %6077
      %6079 = vrot.lane.b32.xlu0 %v5911, 24
      %v6080 = vpop.permute.xlu0 %6079
      %6081 = vrot.lane.b32.xlu0 %v5920, 24
      %v6082 = vpop.permute.xlu0 %6081
      %6083 = vrot.lane.b32.xlu0 %v5921, 24
      %v6084 = vpop.permute.xlu0 %6083
      %6085 = vrot.lane.b32.xlu0 %v5938, 24
      %v6086 = vpop.permute.xlu0 %6085
      %6087 = vrot.lane.b32.xlu0 %v5947, 24
      %v6088 = vpop.permute.xlu0 %6087
      %6089 = vrot.lane.b32.xlu0 %v5948, 24
      %v6090 = vpop.permute.xlu0 %6089
      %6091 = vrot.lane.b32.xlu0 %v5965, 24
      %v6092 = vpop.permute.xlu0 %6091
      %6093 = vrot.lane.b32.xlu0 %v5966, 24
      %v6094 = vpop.permute.xlu0 %6093
      %6095 = vrot.lane.b32.xlu0 %v5975, 24
      %v6096 = vpop.permute.xlu0 %6095
      %6097 = vrot.lane.b32.xlu0 %v5992, 24
      %v6098 = vpop.permute.xlu0 %6097
      %6099 = vrot.lane.b32.xlu0 %v5993, 24
      %v6100 = vpop.permute.xlu0 %6099
      %6101 = vrot.lane.b32.xlu0 %v6002, 24
      %v6102 = vpop.permute.xlu0 %6101
      %6103 = vrot.lane.b32.xlu0 %v6019, 24
      %v6104 = vpop.permute.xlu0 %6103
      %6105 = vrot.lane.b32.xlu0 %v6020, 24
      %v6106 = vpop.permute.xlu0 %6105
      %6107 = vrot.lane.b32.xlu0 %v6029, 24
      %v6108 = vpop.permute.xlu0 %6107
      %6109 = vrot.lane.b32.xlu0 %v6054, 24
      %v6110 = vpop.permute.xlu0 %6109
      %6111 = vrot.lane.b32.xlu0 %v6068, 24
      %v6112 = vpop.permute.xlu0 %6111
      %vm6135 = vcmask 228544
      %6136 = vst.msk [vmem:[#allocation2] sm:$0xff] %vm6135, %v6070
      %6137 = vst.msk [vmem:[#allocation2 + $0x8] sm:$0xff] %vm6135, %v6072
      %6138 = vst.msk [vmem:[#allocation2 + $0x10] sm:$0xff] %vm6135, %v6074
      %6139 = vst.msk [vmem:[#allocation2 + $0x18] sm:$0xff] %vm6135, %v6076
      %6140 = vst.msk [vmem:[#allocation2 + $0x20] sm:$0xff] %vm6135, %v6078
      %6141 = vst.msk [vmem:[#allocation2 + $0x28] sm:$0xff] %vm6135, %v6080
      %6142 = vst.msk [vmem:[#allocation2 + $0x30] sm:$0xff] %vm6135, %v6082
      %6143 = vst.msk [vmem:[#allocation2 + $0x38] sm:$0xff] %vm6135, %v6084
      %6144 = vst.msk [vmem:[#allocation2 + $0x40] sm:$0xff] %vm6135, %v6086
      %6145 = vst.msk [vmem:[#allocation2 + $0x48] sm:$0xff] %vm6135, %v6088
      %6146 = vst.msk [vmem:[#allocation2 + $0x50] sm:$0xff] %vm6135, %v6090
      %6147 = vst.msk [vmem:[#allocation2 + $0x58] sm:$0xff] %vm6135, %v6092
      %6148 = vst.msk [vmem:[#allocation2 + $0x60] sm:$0xff] %vm6135, %v6094
      %6149 = vst.msk [vmem:[#allocation2 + $0x68] sm:$0xff] %vm6135, %v6096
      %6150 = vst.msk [vmem:[#allocation2 + $0x70] sm:$0xff] %vm6135, %v6098
      %6151 = vst.msk [vmem:[#allocation2 + $0x78] sm:$0xff] %vm6135, %v6100
      %6152 = vst.msk [vmem:[#allocation2 + $0x80] sm:$0xff] %vm6135, %v6102
      %6153 = vst.msk [vmem:[#allocation2 + $0x88] sm:$0xff] %vm6135, %v6104
      %6154 = vst.msk [vmem:[#allocation2 + $0x90] sm:$0xff] %vm6135, %v6106
      %6155 = vst.msk [vmem:[#allocation2 + $0x98] sm:$0xff] %vm6135, %v6108
      %6156 = vst.msk [vmem:[#allocation2 + $0xa0] sm:$0xff] %vm6135, %v6110
      %vm6157 = vcmask 221376
      %6158 = vst.msk [vmem:[#allocation2 + $0xa8] sm:$0x1] %vm6157, %v6112
      %v6159 = vcombine.high %v5515, %v5515
      %v6160 = vcombine.low %v4404, %v530
      %v6162 = vunpack.c.l.s4 1966171168
      %v6163 = vunpack.c.0.s8 %v6162
      %v6164 = vlaneseq
      %v6165 = vshrl.u32 %v6164, 7
      %v6166 = vsub.s32 %v6163, %v6165
      %v6167 = vrot.slane %v6160, %v6166
      %v6168 = vcombine.low %v1608, %v3864
      %v6169 = vcombine.low %v6167, %v1629
      %v6171 = vunpack.c.l.s4 1966171168
      %v6172 = vunpack.c.0.s8 %v6171
      %v6173 = vlaneseq
      %v6174 = vshrl.u32 %v6173, 7
      %v6175 = vsub.s32 %v6172, %v6174
      %v6176 = vrot.slane %v6168, %v6175
      %v6178 = vunpack.c.l.s4 1966171168
      %v6179 = vunpack.c.0.s8 %v6178
      %v6180 = vlaneseq
      %v6181 = vshrl.u32 %v6180, 7
      %v6182 = vsub.s32 %v6179, %v6181
      %v6183 = vrot.slane %v6169, %v6182
      %v6184 = vcombine.low %v6176, %v6183
      %v6185 = vcombine.low %v1671, %v3890
      %v6187 = vunpack.c.l.s4 1966171168
      %v6188 = vunpack.c.0.s8 %v6187
      %v6189 = vlaneseq
      %v6190 = vshrl.u32 %v6189, 7
      %v6191 = vsub.s32 %v6188, %v6190
      %v6192 = vrot.slane %v6185, %v6191
      %v6193 = vcombine.low %v1687, %v6192
      %v6194 = vcombine.low %v3779, %v4405
      %v6196 = vunpack.c.l.s4 1966171168
      %v6197 = vunpack.c.0.s8 %v6196
      %v6198 = vlaneseq
      %v6199 = vshrl.u32 %v6198, 7
      %v6200 = vsub.s32 %v6197, %v6199
      %v6201 = vrot.slane %v6194, %v6200
      %v6202 = vcombine.low %v6201, %v1713
      %v6204 = vunpack.c.l.s4 1966171168
      %v6205 = vunpack.c.0.s8 %v6204
      %v6206 = vlaneseq
      %v6207 = vshrl.u32 %v6206, 7
      %v6208 = vsub.s32 %v6205, %v6207
      %v6209 = vrot.slane %v6202, %v6208
      %v6210 = vcombine.low %v6209, %v1743
      %v6211 = vcombine.low %v4406, %v706
      %v6213 = vunpack.c.l.s4 1966171168
      %v6214 = vunpack.c.0.s8 %v6213
      %v6215 = vlaneseq
      %v6216 = vshrl.u32 %v6215, 7
      %v6217 = vsub.s32 %v6214, %v6216
      %v6218 = vrot.slane %v6211, %v6217
      %v6219 = vcombine.low %v3939, %v6218
      %v6221 = vunpack.c.l.s4 1966171168
      %v6222 = vunpack.c.0.s8 %v6221
      %v6223 = vlaneseq
      %v6224 = vshrl.u32 %v6223, 7
      %v6225 = vsub.s32 %v6222, %v6224
      %v6226 = vrot.slane %v6219, %v6225
      %v6227 = vcombine.low %v1785, %v6226
      %v6228 = vcombine.low %v3781, %v4407
      %v6230 = vunpack.c.l.s4 1966171168
      %v6231 = vunpack.c.0.s8 %v6230
      %v6232 = vlaneseq
      %v6233 = vshrl.u32 %v6232, 7
      %v6234 = vsub.s32 %v6231, %v6233
      %v6235 = vrot.slane %v6228, %v6234
      %v6236 = vcombine.low %v3964, %v6235
      %v6238 = vunpack.c.l.s4 1966171168
      %v6239 = vunpack.c.0.s8 %v6238
      %v6240 = vlaneseq
      %v6241 = vshrl.u32 %v6240, 7
      %v6242 = vsub.s32 %v6239, %v6241
      %v6243 = vrot.slane %v6236, %v6242
      %v6244 = vcombine.low %v6243, %v1890
      %v6245 = vcombine.low %v1916, %v4014
      %v6247 = vunpack.c.l.s4 1966171168
      %v6248 = vunpack.c.0.s8 %v6247
      %v6249 = vlaneseq
      %v6250 = vshrl.u32 %v6249, 7
      %v6251 = vsub.s32 %v6248, %v6250
      %v6252 = vrot.slane %v6245, %v6251
      %v6253 = vcombine.low %v1932, %v6252
      %v6254 = vcombine.low %v4408, %v882
      %v6256 = vunpack.c.l.s4 1966171168
      %v6257 = vunpack.c.0.s8 %v6256
      %v6258 = vlaneseq
      %v6259 = vshrl.u32 %v6258, 7
      %v6260 = vsub.s32 %v6257, %v6259
      %v6261 = vrot.slane %v6254, %v6260
      %v6262 = vcombine.low %v6261, %v1958
      %v6264 = vunpack.c.l.s4 1966171168
      %v6265 = vunpack.c.0.s8 %v6264
      %v6266 = vlaneseq
      %v6267 = vshrl.u32 %v6266, 7
      %v6268 = vsub.s32 %v6265, %v6267
      %v6269 = vrot.slane %v6262, %v6268
      %v6270 = vcombine.low %v6269, %v1988
      %v6271 = vcombine.low %v3783, %v4409
      %v6273 = vunpack.c.l.s4 1966171168
      %v6274 = vunpack.c.0.s8 %v6273
      %v6275 = vlaneseq
      %v6276 = vshrl.u32 %v6275, 7
      %v6277 = vsub.s32 %v6274, %v6276
      %v6278 = vrot.slane %v6271, %v6277
      %v6279 = vcombine.low %v2000, %v4057
      %v6280 = vcombine.low %v6278, %v2021
      %v6282 = vunpack.c.l.s4 1966171168
      %v6283 = vunpack.c.0.s8 %v6282
      %v6284 = vlaneseq
      %v6285 = vshrl.u32 %v6284, 7
      %v6286 = vsub.s32 %v6283, %v6285
      %v6287 = vrot.slane %v6279, %v6286
      %v6289 = vunpack.c.l.s4 1966171168
      %v6290 = vunpack.c.0.s8 %v6289
      %v6291 = vlaneseq
      %v6292 = vshrl.u32 %v6291, 7
      %v6293 = vsub.s32 %v6290, %v6292
      %v6294 = vrot.slane %v6280, %v6293
      %v6295 = vcombine.low %v6287, %v6294
      %v6296 = vcombine.low %v4410, %v1058
      %v6298 = vunpack.c.l.s4 1966171168
      %v6299 = vunpack.c.0.s8 %v6298
      %v6300 = vlaneseq
      %v6301 = vshrl.u32 %v6300, 7
      %v6302 = vsub.s32 %v6299, %v6301
      %v6303 = vrot.slane %v6296, %v6302
      %v6304 = vcombine.low %v4089, %v6303
      %v6306 = vunpack.c.l.s4 1966171168
      %v6307 = vunpack.c.0.s8 %v6306
      %v6308 = vlaneseq
      %v6309 = vshrl.u32 %v6308, 7
      %v6310 = vsub.s32 %v6307, %v6309
      %v6311 = vrot.slane %v6304, %v6310
      %v6312 = vcombine.low %v6311, %v2135
      %v6313 = vcombine.low %v3785, %v4411
      %v6315 = vunpack.c.l.s4 1966171168
      %v6316 = vunpack.c.0.s8 %v6315
      %v6317 = vlaneseq
      %v6318 = vshrl.u32 %v6317, 7
      %v6319 = vsub.s32 %v6316, %v6318
      %v6320 = vrot.slane %v6313, %v6319
      %v6321 = vcombine.low %v4132, %v6320
      %v6323 = vunpack.c.l.s4 1966171168
      %v6324 = vunpack.c.0.s8 %v6323
      %v6325 = vlaneseq
      %v6326 = vshrl.u32 %v6325, 7
      %v6327 = vsub.s32 %v6324, %v6326
      %v6328 = vrot.slane %v6321, %v6327
      %v6329 = vcombine.low %v2177, %v6328
      %v6330 = vcombine.low %v4412, %v1234
      %v6332 = vunpack.c.l.s4 1966171168
      %v6333 = vunpack.c.0.s8 %v6332
      %v6334 = vlaneseq
      %v6335 = vshrl.u32 %v6334, 7
      %v6336 = vsub.s32 %v6333, %v6335
      %v6337 = vrot.slane %v6330, %v6336
      %v6338 = vcombine.low %v2245, %v4181
      %v6339 = vcombine.low %v6337, %v2266
      %v6341 = vunpack.c.l.s4 1966171168
      %v6342 = vunpack.c.0.s8 %v6341
      %v6343 = vlaneseq
      %v6344 = vshrl.u32 %v6343, 7
      %v6345 = vsub.s32 %v6342, %v6344
      %v6346 = vrot.slane %v6338, %v6345
      %v6348 = vunpack.c.l.s4 1966171168
      %v6349 = vunpack.c.0.s8 %v6348
      %v6350 = vlaneseq
      %v6351 = vshrl.u32 %v6350, 7
      %v6352 = vsub.s32 %v6349, %v6351
      %v6353 = vrot.slane %v6339, %v6352
      %v6354 = vcombine.low %v6346, %v6353
      %v6355 = vcombine.low %v2308, %v4207
      %v6357 = vunpack.c.l.s4 1966171168
      %v6358 = vunpack.c.0.s8 %v6357
      %v6359 = vlaneseq
      %v6360 = vshrl.u32 %v6359, 7
      %v6361 = vsub.s32 %v6358, %v6360
      %v6362 = vrot.slane %v6355, %v6361
      %v6363 = vcombine.low %v2324, %v6362
      %v6364 = vcombine.low %v3787, %v4413
      %v6366 = vunpack.c.l.s4 1966171168
      %v6367 = vunpack.c.0.s8 %v6366
      %v6368 = vlaneseq
      %v6369 = vshrl.u32 %v6368, 7
      %v6370 = vsub.s32 %v6367, %v6369
      %v6371 = vrot.slane %v6364, %v6370
      %v6372 = vcombine.low %v6371, %v2350
      %v6374 = vunpack.c.l.s4 1966171168
      %v6375 = vunpack.c.0.s8 %v6374
      %v6376 = vlaneseq
      %v6377 = vshrl.u32 %v6376, 7
      %v6378 = vsub.s32 %v6375, %v6377
      %v6379 = vrot.slane %v6372, %v6378
      %v6380 = vcombine.low %v6379, %v2380
      %v6381 = vcombine.low %v4414, %v1410
      %v6383 = vunpack.c.l.s4 1966171168
      %v6384 = vunpack.c.0.s8 %v6383
      %v6385 = vlaneseq
      %v6386 = vshrl.u32 %v6385, 7
      %v6387 = vsub.s32 %v6384, %v6386
      %v6388 = vrot.slane %v6381, %v6387
      %v6389 = vcombine.low %v4256, %v6388
      %v6391 = vunpack.c.l.s4 1966171168
      %v6392 = vunpack.c.0.s8 %v6391
      %v6393 = vlaneseq
      %v6394 = vshrl.u32 %v6393, 7
      %v6395 = vsub.s32 %v6392, %v6394
      %v6396 = vrot.slane %v6389, %v6395
      %v6397 = vcombine.low %v2422, %v6396
      %v6398 = vcombine.low %v3789, %v4415
      %v6400 = vunpack.c.l.s4 1966171168
      %v6401 = vunpack.c.0.s8 %v6400
      %v6402 = vlaneseq
      %v6403 = vshrl.u32 %v6402, 7
      %v6404 = vsub.s32 %v6401, %v6403
      %v6405 = vrot.slane %v6398, %v6404
      %v6406 = vcombine.low %v4281, %v6405
      %v6407 = vcombine.low %v5694, %v5714
      %v6409 = vunpack.c.l.s4 1966171168
      %v6410 = vunpack.c.0.s8 %v6409
      %v6411 = vlaneseq
      %v6412 = vshrl.u32 %v6411, 7
      %v6413 = vsub.s32 %v6410, %v6412
      %v6414 = vrot.slane %v6406, %v6413
      %v6416 = vunpack.c.l.s4 1966171168
      %v6417 = vunpack.c.0.s8 %v6416
      %v6418 = vlaneseq
      %v6419 = vshrl.u32 %v6418, 7
      %v6420 = vsub.s32 %v6417, %v6419
      %v6421 = vrot.slane %v6407, %v6420
      %v6422 = vcombine.low %v6414, %v6421
      %v6423 = vcombine.low %v5515, %v5857
      %v6425 = vunpack.c.l.s4 1966171168
      %v6426 = vunpack.c.0.s8 %v6425
      %v6427 = vlaneseq
      %v6428 = vshrl.u32 %v6427, 7
      %v6429 = vsub.s32 %v6426, %v6428
      %v6430 = vrot.slane %v6423, %v6429
      %v6431 = vcombine.low %v5721, %v5728
      %v6432 = vcombine.low %v5735, %v6430
      %v6434 = vunpack.c.l.s4 1966171168
      %v6435 = vunpack.c.0.s8 %v6434
      %v6436 = vlaneseq
      %v6437 = vshrl.u32 %v6436, 7
      %v6438 = vsub.s32 %v6435, %v6437
      %v6439 = vrot.slane %v6431, %v6438
      %v6441 = vunpack.c.l.s4 1966171168
      %v6442 = vunpack.c.0.s8 %v6441
      %v6443 = vlaneseq
      %v6444 = vshrl.u32 %v6443, 7
      %v6445 = vsub.s32 %v6442, %v6444
      %v6446 = vrot.slane %v6432, %v6445
      %v6447 = vcombine.low %v6439, %v6446
      %v6449 = vunpack.c.l.s4 1966171168
      %v6450 = vunpack.c.0.s8 %v6449
      %v6451 = vlaneseq
      %v6452 = vshrl.u32 %v6451, 7
      %v6453 = vsub.s32 %v6450, %v6452
      %v6454 = vrot.slane %v6159, %v6453
      %v6456 = vunpack.c.l.s4 1966171168
      %v6457 = vunpack.c.0.s8 %v6456
      %v6458 = vlaneseq
      %v6459 = vshrl.u32 %v6458, 7
      %v6460 = vsub.s32 %v6457, %v6459
      %v6461 = vrot.slane %v6454, %v6460
      %6462 = vrot.lane.b32.xlu0 %v1597, 28
      %v6463 = vpop.permute.xlu0 %6462
      %6464 = vrot.lane.b32.xlu0 %v6184, 28
      %v6465 = vpop.permute.xlu0 %6464
      %6466 = vrot.lane.b32.xlu0 %v6193, 28
      %v6467 = vpop.permute.xlu0 %6466
      %6468 = vrot.lane.b32.xlu0 %v6210, 28
      %v6469 = vpop.permute.xlu0 %6468
      %6470 = vrot.lane.b32.xlu0 %v6227, 28
      %v6471 = vpop.permute.xlu0 %6470
      %6472 = vrot.lane.b32.xlu0 %v1842, 28
      %v6473 = vpop.permute.xlu0 %6472
      %6474 = vrot.lane.b32.xlu0 %v6244, 28
      %v6475 = vpop.permute.xlu0 %6474
      %6476 = vrot.lane.b32.xlu0 %v6253, 28
      %v6477 = vpop.permute.xlu0 %6476
      %6478 = vrot.lane.b32.xlu0 %v6270, 28
      %v6479 = vpop.permute.xlu0 %6478
      %6480 = vrot.lane.b32.xlu0 %v6295, 28
      %v6481 = vpop.permute.xlu0 %6480
      %6482 = vrot.lane.b32.xlu0 %v2087, 28
      %v6483 = vpop.permute.xlu0 %6482
      %6484 = vrot.lane.b32.xlu0 %v6312, 28
      %v6485 = vpop.permute.xlu0 %6484
      %6486 = vrot.lane.b32.xlu0 %v6329, 28
      %v6487 = vpop.permute.xlu0 %6486
      %6488 = vrot.lane.b32.xlu0 %v2234, 28
      %v6489 = vpop.permute.xlu0 %6488
      %6490 = vrot.lane.b32.xlu0 %v6354, 28
      %v6491 = vpop.permute.xlu0 %6490
      %6492 = vrot.lane.b32.xlu0 %v6363, 28
      %v6493 = vpop.permute.xlu0 %6492
      %6494 = vrot.lane.b32.xlu0 %v6380, 28
      %v6495 = vpop.permute.xlu0 %6494
      %6496 = vrot.lane.b32.xlu0 %v6397, 28
      %v6497 = vpop.permute.xlu0 %6496
      %6498 = vrot.lane.b32.xlu0 %v2479, 28
      %v6499 = vpop.permute.xlu0 %6498
      %6500 = vrot.lane.b32.xlu0 %v6422, 28
      %v6501 = vpop.permute.xlu0 %6500
      %6502 = vrot.lane.b32.xlu0 %v6447, 28
      %v6503 = vpop.permute.xlu0 %6502
      %6504 = vrot.lane.b32.xlu0 %v6461, 28
      %v6505 = vpop.permute.xlu0 %6504
      %vm6528 = vcmask 261344
      %6529 = vst.msk [vmem:[#allocation2] sm:$0xff] %vm6528, %v6463
      %6530 = vst.msk [vmem:[#allocation2 + $0x8] sm:$0xff] %vm6528, %v6465
      %6531 = vst.msk [vmem:[#allocation2 + $0x10] sm:$0xff] %vm6528, %v6467
      %6532 = vst.msk [vmem:[#allocation2 + $0x18] sm:$0xff] %vm6528, %v6469
      %6533 = vst.msk [vmem:[#allocation2 + $0x20] sm:$0xff] %vm6528, %v6471
      %6534 = vst.msk [vmem:[#allocation2 + $0x28] sm:$0xff] %vm6528, %v6473
      %6535 = vst.msk [vmem:[#allocation2 + $0x30] sm:$0xff] %vm6528, %v6475
      %6536 = vst.msk [vmem:[#allocation2 + $0x38] sm:$0xff] %vm6528, %v6477
      %6537 = vst.msk [vmem:[#allocation2 + $0x40] sm:$0xff] %vm6528, %v6479
      %6538 = vst.msk [vmem:[#allocation2 + $0x48] sm:$0xff] %vm6528, %v6481
      %6539 = vst.msk [vmem:[#allocation2 + $0x50] sm:$0xff] %vm6528, %v6483
      %6540 = vst.msk [vmem:[#allocation2 + $0x58] sm:$0xff] %vm6528, %v6485
      %6541 = vst.msk [vmem:[#allocation2 + $0x60] sm:$0xff] %vm6528, %v6487
      %6542 = vst.msk [vmem:[#allocation2 + $0x68] sm:$0xff] %vm6528, %v6489
      %6543 = vst.msk [vmem:[#allocation2 + $0x70] sm:$0xff] %vm6528, %v6491
      %6544 = vst.msk [vmem:[#allocation2 + $0x78] sm:$0xff] %vm6528, %v6493
      %6545 = vst.msk [vmem:[#allocation2 + $0x80] sm:$0xff] %vm6528, %v6495
      %6546 = vst.msk [vmem:[#allocation2 + $0x88] sm:$0xff] %vm6528, %v6497
      %6547 = vst.msk [vmem:[#allocation2 + $0x90] sm:$0xff] %vm6528, %v6499
      %6548 = vst.msk [vmem:[#allocation2 + $0x98] sm:$0xff] %vm6528, %v6501
      %6549 = vst.msk [vmem:[#allocation2 + $0xa0] sm:$0xff] %vm6528, %v6503
      %vm6550 = vcmask 254176
      %6551 = vst.msk [vmem:[#allocation2 + $0xa8] sm:$0x1] %vm6550, %v6505
      %v6554 = vcombine.high %v253, %v253
      %v6556 = vunpack.c.l.s4 1966171168
      %v6557 = vunpack.c.0.s8 %v6556
      %v6558 = vlaneseq
      %v6559 = vshrl.u32 %v6558, 7
      %v6560 = vsub.s32 %v6557, %v6559
      %v6561 = vrot.slane %v253, %v6560
      %v6563 = vunpack.c.l.s4 1966171168
      %v6564 = vunpack.c.0.s8 %v6563
      %v6565 = vlaneseq
      %v6566 = vshrl.u32 %v6565, 7
      %v6567 = vsub.s32 %v6564, %v6566
      %v6568 = vrot.slane %v6554, %v6567
      %v6569 = vcombine.high %v6561, %v6561
      %v6570 = vcombine.high %v6568, %v6568
      %v6572 = vunpack.c.l.s4 1966171168
      %v6573 = vunpack.c.0.s8 %v6572
      %v6574 = vlaneseq
      %v6575 = vshrl.u32 %v6574, 7
      %v6576 = vsub.s32 %v6573, %v6575
      %v6577 = vrot.slane %v6561, %v6576
      %v6579 = vunpack.c.l.s4 1966171168
      %v6580 = vunpack.c.0.s8 %v6579
      %v6581 = vlaneseq
      %v6582 = vshrl.u32 %v6581, 7
      %v6583 = vsub.s32 %v6580, %v6582
      %v6584 = vrot.slane %v6568, %v6583
      %v6586 = vunpack.c.l.s4 1966171168
      %v6587 = vunpack.c.0.s8 %v6586
      %v6588 = vlaneseq
      %v6589 = vshrl.u32 %v6588, 7
      %v6590 = vsub.s32 %v6587, %v6589
      %v6591 = vrot.slane %v6569, %v6590
      %v6593 = vunpack.c.l.s4 1966171168
      %v6594 = vunpack.c.0.s8 %v6593
      %v6595 = vlaneseq
      %v6596 = vshrl.u32 %v6595, 7
      %v6597 = vsub.s32 %v6594, %v6596
      %v6598 = vrot.slane %v6570, %v6597
      %v6599 = vcombine.high %v6577, %v6577
      %v6600 = vcombine.high %v6584, %v6584
      %v6601 = vcombine.high %v6591, %v6591
      %v6602 = vcombine.high %v6598, %v6598
      %v6603 = vcombine.high %v254, %v254
      %v6605 = vunpack.c.l.s4 1966171168
      %v6606 = vunpack.c.0.s8 %v6605
      %v6607 = vlaneseq
      %v6608 = vshrl.u32 %v6607, 7
      %v6609 = vsub.s32 %v6606, %v6608
      %v6610 = vrot.slane %v254, %v6609
      %v6612 = vunpack.c.l.s4 1966171168
      %v6613 = vunpack.c.0.s8 %v6612
      %v6614 = vlaneseq
      %v6615 = vshrl.u32 %v6614, 7
      %v6616 = vsub.s32 %v6613, %v6615
      %v6617 = vrot.slane %v6603, %v6616
      %v6618 = vcombine.high %v6610, %v6610
      %v6620 = vunpack.c.l.s4 1966171168
      %v6621 = vunpack.c.0.s8 %v6620
      %v6622 = vlaneseq
      %v6623 = vshrl.u32 %v6622, 7
      %v6624 = vsub.s32 %v6621, %v6623
      %v6625 = vrot.slane %v6610, %v6624
      %v6627 = vunpack.c.l.s4 1966171168
      %v6628 = vunpack.c.0.s8 %v6627
      %v6629 = vlaneseq
      %v6630 = vshrl.u32 %v6629, 7
      %v6631 = vsub.s32 %v6628, %v6630
      %v6632 = vrot.slane %v6617, %v6631
      %v6634 = vunpack.c.l.s4 1966171168
      %v6635 = vunpack.c.0.s8 %v6634
      %v6636 = vlaneseq
      %v6637 = vshrl.u32 %v6636, 7
      %v6638 = vsub.s32 %v6635, %v6637
      %v6639 = vrot.slane %v6618, %v6638
      %v6640 = vcombine.high %v6625, %v6625
      %v6641 = vcombine.high %v6639, %v6639
      %v6642 = vcombine.low %v1615, %v1622
      %v6644 = vunpack.c.l.s4 1966171168
      %v6645 = vunpack.c.0.s8 %v6644
      %v6646 = vlaneseq
      %v6647 = vshrl.u32 %v6646, 7
      %v6648 = vsub.s32 %v6645, %v6647
      %v6649 = vrot.slane %v6642, %v6648
      %v6650 = vcombine.low %v6649, %v3880
      %v6651 = vcombine.low %v1678, %v1706
      %v6653 = vunpack.c.l.s4 1966171168
      %v6654 = vunpack.c.0.s8 %v6653
      %v6655 = vlaneseq
      %v6656 = vshrl.u32 %v6655, 7
      %v6657 = vsub.s32 %v6654, %v6656
      %v6658 = vrot.slane %v6651, %v6657
      %v6659 = vcombine.low %v3906, %v6658
      %v6660 = vcombine.low %v1762, %v1769
      %v6662 = vunpack.c.l.s4 1966171168
      %v6663 = vunpack.c.0.s8 %v6662
      %v6664 = vlaneseq
      %v6665 = vshrl.u32 %v6664, 7
      %v6666 = vsub.s32 %v6663, %v6665
      %v6667 = vrot.slane %v6660, %v6666
      %v6668 = vcombine.low %v6667, %v3955
      %v6669 = vcombine.low %v1825, %v1853
      %v6671 = vunpack.c.l.s4 1966171168
      %v6672 = vunpack.c.0.s8 %v6671
      %v6673 = vlaneseq
      %v6674 = vshrl.u32 %v6673, 7
      %v6675 = vsub.s32 %v6672, %v6674
      %v6676 = vrot.slane %v6669, %v6675
      %v6677 = vcombine.low %v3973, %v6676
      %v6678 = vcombine.low %v5577, %v4005
      %v6679 = vcombine.low %v1923, %v1951
      %v6681 = vunpack.c.l.s4 1966171168
      %v6682 = vunpack.c.0.s8 %v6681
      %v6683 = vlaneseq
      %v6684 = vshrl.u32 %v6683, 7
      %v6685 = vsub.s32 %v6682, %v6684
      %v6686 = vrot.slane %v6679, %v6685
      %v6687 = vcombine.low %v4023, %v6686
      %v6688 = vcombine.low %v2007, %v2014
      %v6690 = vunpack.c.l.s4 1966171168
      %v6691 = vunpack.c.0.s8 %v6690
      %v6692 = vlaneseq
      %v6693 = vshrl.u32 %v6692, 7
      %v6694 = vsub.s32 %v6691, %v6693
      %v6695 = vrot.slane %v6688, %v6694
      %v6696 = vcombine.low %v6695, %v4080
      %v6697 = vcombine.low %v2070, %v2098
      %v6699 = vunpack.c.l.s4 1966171168
      %v6700 = vunpack.c.0.s8 %v6699
      %v6701 = vlaneseq
      %v6702 = vshrl.u32 %v6701, 7
      %v6703 = vsub.s32 %v6700, %v6702
      %v6704 = vrot.slane %v6697, %v6703
      %v6705 = vcombine.low %v4098, %v6704
      %v6706 = vcombine.low %v2154, %v2161
      %v6708 = vunpack.c.l.s4 1966171168
      %v6709 = vunpack.c.0.s8 %v6708
      %v6710 = vlaneseq
      %v6711 = vshrl.u32 %v6710, 7
      %v6712 = vsub.s32 %v6709, %v6711
      %v6713 = vrot.slane %v6706, %v6712
      %v6714 = vcombine.low %v6713, %v5632
      %v6715 = vcombine.low %v2252, %v2259
      %v6717 = vunpack.c.l.s4 1966171168
      %v6718 = vunpack.c.0.s8 %v6717
      %v6719 = vlaneseq
      %v6720 = vshrl.u32 %v6719, 7
      %v6721 = vsub.s32 %v6718, %v6720
      %v6722 = vrot.slane %v6715, %v6721
      %v6723 = vcombine.low %v6722, %v4197
      %v6724 = vcombine.low %v2315, %v2343
      %v6726 = vunpack.c.l.s4 1966171168
      %v6727 = vunpack.c.0.s8 %v6726
      %v6728 = vlaneseq
      %v6729 = vshrl.u32 %v6728, 7
      %v6730 = vsub.s32 %v6727, %v6729
      %v6731 = vrot.slane %v6724, %v6730
      %v6732 = vcombine.low %v4223, %v6731
      %v6733 = vcombine.low %v2399, %v2406
      %v6735 = vunpack.c.l.s4 1966171168
      %v6736 = vunpack.c.0.s8 %v6735
      %v6737 = vlaneseq
      %v6738 = vshrl.u32 %v6737, 7
      %v6739 = vsub.s32 %v6736, %v6738
      %v6740 = vrot.slane %v6733, %v6739
      %v6741 = vcombine.low %v6740, %v4272
      %v6742 = vcombine.low %v1441, %v5054
      %v6744 = vunpack.c.l.s4 1966171168
      %v6745 = vunpack.c.0.s8 %v6744
      %v6746 = vlaneseq
      %v6747 = vshrl.u32 %v6746, 7
      %v6748 = vsub.s32 %v6745, %v6747
      %v6749 = vrot.slane %v6742, %v6748
      %v6750 = vcombine.low %v2462, %v6749
      %v6752 = vunpack.c.l.s4 1966171168
      %v6753 = vunpack.c.0.s8 %v6752
      %v6754 = vlaneseq
      %v6755 = vshrl.u32 %v6754, 7
      %v6756 = vsub.s32 %v6753, %v6755
      %v6757 = vrot.slane %v6750, %v6756
      %v6758 = vcombine.low %v4290, %v6757
      %v6759 = vcombine.low %v5702, %v5744
      %v6760 = vcombine.low %v6577, %v6591
      %v6761 = vcombine.low %v6599, %v6601
      %v6763 = vunpack.c.l.s4 1966171168
      %v6764 = vunpack.c.0.s8 %v6763
      %v6765 = vlaneseq
      %v6766 = vshrl.u32 %v6765, 7
      %v6767 = vsub.s32 %v6764, %v6766
      %v6768 = vrot.slane %v6760, %v6767
      %v6770 = vunpack.c.l.s4 1966171168
      %v6771 = vunpack.c.0.s8 %v6770
      %v6772 = vlaneseq
      %v6773 = vshrl.u32 %v6772, 7
      %v6774 = vsub.s32 %v6771, %v6773
      %v6775 = vrot.slane %v6761, %v6774
      %v6776 = vcombine.low %v6768, %v6775
      %v6778 = vunpack.c.l.s4 1966171168
      %v6779 = vunpack.c.0.s8 %v6778
      %v6780 = vlaneseq
      %v6781 = vshrl.u32 %v6780, 7
      %v6782 = vsub.s32 %v6779, %v6781
      %v6783 = vrot.slane %v6776, %v6782
      %v6784 = vcombine.low %v5751, %v6783
      %v6785 = vcombine.low %v6584, %v6598
      %v6786 = vcombine.low %v6600, %v6602
      %v6787 = vcombine.low %v6625, %v6639
      %v6788 = vcombine.low %v6640, %v6641
      %v6790 = vunpack.c.l.s4 1966171168
      %v6791 = vunpack.c.0.s8 %v6790
      %v6792 = vlaneseq
      %v6793 = vshrl.u32 %v6792, 7
      %v6794 = vsub.s32 %v6791, %v6793
      %v6795 = vrot.slane %v6785, %v6794
      %v6797 = vunpack.c.l.s4 1966171168
      %v6798 = vunpack.c.0.s8 %v6797
      %v6799 = vlaneseq
      %v6800 = vshrl.u32 %v6799, 7
      %v6801 = vsub.s32 %v6798, %v6800
      %v6802 = vrot.slane %v6786, %v6801
      %v6804 = vunpack.c.l.s4 1966171168
      %v6805 = vunpack.c.0.s8 %v6804
      %v6806 = vlaneseq
      %v6807 = vshrl.u32 %v6806, 7
      %v6808 = vsub.s32 %v6805, %v6807
      %v6809 = vrot.slane %v6787, %v6808
      %v6811 = vunpack.c.l.s4 1966171168
      %v6812 = vunpack.c.0.s8 %v6811
      %v6813 = vlaneseq
      %v6814 = vshrl.u32 %v6813, 7
      %v6815 = vsub.s32 %v6812, %v6814
      %v6816 = vrot.slane %v6788, %v6815
      %v6817 = vcombine.low %v6795, %v6802
      %v6818 = vcombine.low %v6809, %v6816
      %v6820 = vunpack.c.l.s4 1966171168
      %v6821 = vunpack.c.0.s8 %v6820
      %v6822 = vlaneseq
      %v6823 = vshrl.u32 %v6822, 7
      %v6824 = vsub.s32 %v6821, %v6823
      %v6825 = vrot.slane %v6817, %v6824
      %v6827 = vunpack.c.l.s4 1966171168
      %v6828 = vunpack.c.0.s8 %v6827
      %v6829 = vlaneseq
      %v6830 = vshrl.u32 %v6829, 7
      %v6831 = vsub.s32 %v6828, %v6830
      %v6832 = vrot.slane %v6818, %v6831
      %v6833 = vcombine.low %v6825, %v6832
      %v6835 = vunpack.c.l.s4 1966171168
      %v6836 = vunpack.c.0.s8 %v6835
      %v6837 = vlaneseq
      %v6838 = vshrl.u32 %v6837, 7
      %v6839 = vsub.s32 %v6836, %v6838
      %v6840 = vrot.slane %v6632, %v6839
      %v6842 = vunpack.c.l.s4 1966171168
      %v6843 = vunpack.c.0.s8 %v6842
      %v6844 = vlaneseq
      %v6845 = vshrl.u32 %v6844, 7
      %v6846 = vsub.s32 %v6843, %v6845
      %v6847 = vrot.slane %v6840, %v6846
      %6848 = vrot.lane.b32.xlu0 %v6650, 32
      %v6849 = vpop.permute.xlu0 %6848
      %6850 = vrot.lane.b32.xlu0 %v6659, 32
      %v6851 = vpop.permute.xlu0 %6850
      %6852 = vrot.lane.b32.xlu0 %v3931, 32
      %v6853 = vpop.permute.xlu0 %6852
      %6854 = vrot.lane.b32.xlu0 %v6668, 32
      %v6855 = vpop.permute.xlu0 %6854
      %6856 = vrot.lane.b32.xlu0 %v6677, 32
      %v6857 = vpop.permute.xlu0 %6856
      %6858 = vrot.lane.b32.xlu0 %v6678, 32
      %v6859 = vpop.permute.xlu0 %6858
      %6860 = vrot.lane.b32.xlu0 %v6687, 32
      %v6861 = vpop.permute.xlu0 %6860
      %6862 = vrot.lane.b32.xlu0 %v4048, 32
      %v6863 = vpop.permute.xlu0 %6862
      %6864 = vrot.lane.b32.xlu0 %v6696, 32
      %v6865 = vpop.permute.xlu0 %6864
      %6866 = vrot.lane.b32.xlu0 %v6705, 32
      %v6867 = vpop.permute.xlu0 %6866
      %6868 = vrot.lane.b32.xlu0 %v4123, 32
      %v6869 = vpop.permute.xlu0 %6868
      %6870 = vrot.lane.b32.xlu0 %v6714, 32
      %v6871 = vpop.permute.xlu0 %6870
      %6872 = vrot.lane.b32.xlu0 %v4173, 32
      %v6873 = vpop.permute.xlu0 %6872
      %6874 = vrot.lane.b32.xlu0 %v6723, 32
      %v6875 = vpop.permute.xlu0 %6874
      %6876 = vrot.lane.b32.xlu0 %v6732, 32
      %v6877 = vpop.permute.xlu0 %6876
      %6878 = vrot.lane.b32.xlu0 %v4248, 32
      %v6879 = vpop.permute.xlu0 %6878
      %6880 = vrot.lane.b32.xlu0 %v6741, 32
      %v6881 = vpop.permute.xlu0 %6880
      %6882 = vrot.lane.b32.xlu0 %v6758, 32
      %v6883 = vpop.permute.xlu0 %6882
      %6884 = vrot.lane.b32.xlu0 %v6759, 32
      %v6885 = vpop.permute.xlu0 %6884
      %6886 = vrot.lane.b32.xlu0 %v6784, 32
      %v6887 = vpop.permute.xlu0 %6886
      %6888 = vrot.lane.b32.xlu0 %v6833, 32
      %v6889 = vpop.permute.xlu0 %6888
      %6890 = vrot.lane.b32.xlu0 %v6847, 32
      %v6891 = vpop.permute.xlu0 %6890
      %vm6914 = vcmask 294144
      %6915 = vst.msk [vmem:[#allocation2] sm:$0xff] %vm6914, %v6849
      %6916 = vst.msk [vmem:[#allocation2 + $0x8] sm:$0xff] %vm6914, %v6851
      %6917 = vst.msk [vmem:[#allocation2 + $0x10] sm:$0xff] %vm6914, %v6853
      %6918 = vst.msk [vmem:[#allocation2 + $0x18] sm:$0xff] %vm6914, %v6855
      %6919 = vst.msk [vmem:[#allocation2 + $0x20] sm:$0xff] %vm6914, %v6857
      %6920 = vst.msk [vmem:[#allocation2 + $0x28] sm:$0xff] %vm6914, %v6859
      %6921 = vst.msk [vmem:[#allocation2 + $0x30] sm:$0xff] %vm6914, %v6861
      %6922 = vst.msk [vmem:[#allocation2 + $0x38] sm:$0xff] %vm6914, %v6863
      %6923 = vst.msk [vmem:[#allocation2 + $0x40] sm:$0xff] %vm6914, %v6865
      %6924 = vst.msk [vmem:[#allocation2 + $0x48] sm:$0xff] %vm6914, %v6867
      %6925 = vst.msk [vmem:[#allocation2 + $0x50] sm:$0xff] %vm6914, %v6869
      %6926 = vst.msk [vmem:[#allocation2 + $0x58] sm:$0xff] %vm6914, %v6871
      %6927 = vst.msk [vmem:[#allocation2 + $0x60] sm:$0xff] %vm6914, %v6873
      %6928 = vst.msk [vmem:[#allocation2 + $0x68] sm:$0xff] %vm6914, %v6875
      %6929 = vst.msk [vmem:[#allocation2 + $0x70] sm:$0xff] %vm6914, %v6877
      %6930 = vst.msk [vmem:[#allocation2 + $0x78] sm:$0xff] %vm6914, %v6879
      %6931 = vst.msk [vmem:[#allocation2 + $0x80] sm:$0xff] %vm6914, %v6881
      %6932 = vst.msk [vmem:[#allocation2 + $0x88] sm:$0xff] %vm6914, %v6883
      %6933 = vst.msk [vmem:[#allocation2 + $0x90] sm:$0xff] %vm6914, %v6885
      %6934 = vst.msk [vmem:[#allocation2 + $0x98] sm:$0xff] %vm6914, %v6887
      %6935 = vst.msk [vmem:[#allocation2 + $0xa0] sm:$0xff] %vm6914, %v6889
      %vm6936 = vcmask 286976
      %6937 = vst.msk [vmem:[#allocation2 + $0xa8] sm:$0x1] %vm6936, %v6891
      %v6938 = vcombine.high %v6617, %v6617
      %v6940 = vunpack.c.l.s4 1966171168
      %v6941 = vunpack.c.0.s8 %v6940
      %v6942 = vlaneseq
      %v6943 = vshrl.u32 %v6942, 7
      %v6944 = vsub.s32 %v6941, %v6943
      %v6945 = vrot.slane %v6938, %v6944
      %v6946 = vcombine.low %v2808, %v2815
      %v6948 = vunpack.c.l.s4 1966171168
      %v6949 = vunpack.c.0.s8 %v6948
      %v6950 = vlaneseq
      %v6951 = vshrl.u32 %v6950, 7
      %v6952 = vsub.s32 %v6949, %v6951
      %v6953 = vrot.slane %v6946, %v6952
      %v6954 = vcombine.low %v6953, %v4506
      %v6955 = vcombine.low %v2871, %v2899
      %v6957 = vunpack.c.l.s4 1966171168
      %v6958 = vunpack.c.0.s8 %v6957
      %v6959 = vlaneseq
      %v6960 = vshrl.u32 %v6959, 7
      %v6961 = vsub.s32 %v6958, %v6960
      %v6962 = vrot.slane %v6955, %v6961
      %v6963 = vcombine.low %v4532, %v6962
      %v6964 = vcombine.low %v2955, %v2962
      %v6966 = vunpack.c.l.s4 1966171168
      %v6967 = vunpack.c.0.s8 %v6966
      %v6968 = vlaneseq
      %v6969 = vshrl.u32 %v6968, 7
      %v6970 = vsub.s32 %v6967, %v6969
      %v6971 = vrot.slane %v6964, %v6970
      %v6972 = vcombine.low %v6971, %v4581
      %v6973 = vcombine.low %v3018, %v3046
      %v6975 = vunpack.c.l.s4 1966171168
      %v6976 = vunpack.c.0.s8 %v6975
      %v6977 = vlaneseq
      %v6978 = vshrl.u32 %v6977, 7
      %v6979 = vsub.s32 %v6976, %v6978
      %v6980 = vrot.slane %v6973, %v6979
      %v6981 = vcombine.low %v4599, %v6980
      %v6982 = vcombine.low %v5919, %v4631
      %v6983 = vcombine.low %v3116, %v3144
      %v6985 = vunpack.c.l.s4 1966171168
      %v6986 = vunpack.c.0.s8 %v6985
      %v6987 = vlaneseq
      %v6988 = vshrl.u32 %v6987, 7
      %v6989 = vsub.s32 %v6986, %v6988
      %v6990 = vrot.slane %v6983, %v6989
      %v6991 = vcombine.low %v4649, %v6990
      %v6992 = vcombine.low %v3200, %v3207
      %v6994 = vunpack.c.l.s4 1966171168
      %v6995 = vunpack.c.0.s8 %v6994
      %v6996 = vlaneseq
      %v6997 = vshrl.u32 %v6996, 7
      %v6998 = vsub.s32 %v6995, %v6997
      %v6999 = vrot.slane %v6992, %v6998
      %v7000 = vcombine.low %v6999, %v4706
      %v7001 = vcombine.low %v3263, %v3291
      %v7003 = vunpack.c.l.s4 1966171168
      %v7004 = vunpack.c.0.s8 %v7003
      %v7005 = vlaneseq
      %v7006 = vshrl.u32 %v7005, 7
      %v7007 = vsub.s32 %v7004, %v7006
      %v7008 = vrot.slane %v7001, %v7007
      %v7009 = vcombine.low %v4724, %v7008
      %v7010 = vcombine.low %v3347, %v3354
      %v7012 = vunpack.c.l.s4 1966171168
      %v7013 = vunpack.c.0.s8 %v7012
      %v7014 = vlaneseq
      %v7015 = vshrl.u32 %v7014, 7
      %v7016 = vsub.s32 %v7013, %v7015
      %v7017 = vrot.slane %v7010, %v7016
      %v7018 = vcombine.low %v7017, %v5974
      %v7019 = vcombine.low %v3445, %v3452
      %v7021 = vunpack.c.l.s4 1966171168
      %v7022 = vunpack.c.0.s8 %v7021
      %v7023 = vlaneseq
      %v7024 = vshrl.u32 %v7023, 7
      %v7025 = vsub.s32 %v7022, %v7024
      %v7026 = vrot.slane %v7019, %v7025
      %v7027 = vcombine.low %v7026, %v4823
      %v7028 = vcombine.low %v3508, %v3536
      %v7030 = vunpack.c.l.s4 1966171168
      %v7031 = vunpack.c.0.s8 %v7030
      %v7032 = vlaneseq
      %v7033 = vshrl.u32 %v7032, 7
      %v7034 = vsub.s32 %v7031, %v7033
      %v7035 = vrot.slane %v7028, %v7034
      %v7036 = vcombine.low %v4849, %v7035
      %v7037 = vcombine.low %v3592, %v3599
      %v7039 = vunpack.c.l.s4 1966171168
      %v7040 = vunpack.c.0.s8 %v7039
      %v7041 = vlaneseq
      %v7042 = vshrl.u32 %v7041, 7
      %v7043 = vsub.s32 %v7040, %v7042
      %v7044 = vrot.slane %v7037, %v7043
      %v7045 = vcombine.low %v7044, %v4898
      %v7046 = vcombine.low %v2643, %v5068
      %v7048 = vunpack.c.l.s4 1966171168
      %v7049 = vunpack.c.0.s8 %v7048
      %v7050 = vlaneseq
      %v7051 = vshrl.u32 %v7050, 7
      %v7052 = vsub.s32 %v7049, %v7051
      %v7053 = vrot.slane %v7046, %v7052
      %v7054 = vcombine.low %v3655, %v7053
      %v7056 = vunpack.c.l.s4 1966171168
      %v7057 = vunpack.c.0.s8 %v7056
      %v7058 = vlaneseq
      %v7059 = vshrl.u32 %v7058, 7
      %v7060 = vsub.s32 %v7057, %v7059
      %v7061 = vrot.slane %v7054, %v7060
      %v7062 = vcombine.low %v4916, %v7061
      %v7063 = vcombine.low %v6028, %v6046
      %v7064 = vcombine.low %v6591, %v6599
      %v7065 = vcombine.low %v6601, %v6584
      %v7067 = vunpack.c.l.s4 1966171168
      %v7068 = vunpack.c.0.s8 %v7067
      %v7069 = vlaneseq
      %v7070 = vshrl.u32 %v7069, 7
      %v7071 = vsub.s32 %v7068, %v7070
      %v7072 = vrot.slane %v7064, %v7071
      %v7074 = vunpack.c.l.s4 1966171168
      %v7075 = vunpack.c.0.s8 %v7074
      %v7076 = vlaneseq
      %v7077 = vshrl.u32 %v7076, 7
      %v7078 = vsub.s32 %v7075, %v7077
      %v7079 = vrot.slane %v7065, %v7078
      %v7080 = vcombine.low %v7072, %v7079
      %v7082 = vunpack.c.l.s4 1966171168
      %v7083 = vunpack.c.0.s8 %v7082
      %v7084 = vlaneseq
      %v7085 = vshrl.u32 %v7084, 7
      %v7086 = vsub.s32 %v7083, %v7085
      %v7087 = vrot.slane %v7080, %v7086
      %v7088 = vcombine.low %v6053, %v7087
      %v7089 = vcombine.low %v6598, %v6600
      %v7090 = vcombine.low %v6602, %v6625
      %v7091 = vcombine.low %v6639, %v6640
      %v7092 = vcombine.low %v6641, %v6632
      %v7094 = vunpack.c.l.s4 1966171168
      %v7095 = vunpack.c.0.s8 %v7094
      %v7096 = vlaneseq
      %v7097 = vshrl.u32 %v7096, 7
      %v7098 = vsub.s32 %v7095, %v7097
      %v7099 = vrot.slane %v7089, %v7098
      %v7101 = vunpack.c.l.s4 1966171168
      %v7102 = vunpack.c.0.s8 %v7101
      %v7103 = vlaneseq
      %v7104 = vshrl.u32 %v7103, 7
      %v7105 = vsub.s32 %v7102, %v7104
      %v7106 = vrot.slane %v7090, %v7105
      %v7108 = vunpack.c.l.s4 1966171168
      %v7109 = vunpack.c.0.s8 %v7108
      %v7110 = vlaneseq
      %v7111 = vshrl.u32 %v7110, 7
      %v7112 = vsub.s32 %v7109, %v7111
      %v7113 = vrot.slane %v7091, %v7112
      %v7115 = vunpack.c.l.s4 1966171168
      %v7116 = vunpack.c.0.s8 %v7115
      %v7117 = vlaneseq
      %v7118 = vshrl.u32 %v7117, 7
      %v7119 = vsub.s32 %v7116, %v7118
      %v7120 = vrot.slane %v7092, %v7119
      %v7121 = vcombine.low %v7099, %v7106
      %v7122 = vcombine.low %v7113, %v7120
      %v7124 = vunpack.c.l.s4 1966171168
      %v7125 = vunpack.c.0.s8 %v7124
      %v7126 = vlaneseq
      %v7127 = vshrl.u32 %v7126, 7
      %v7128 = vsub.s32 %v7125, %v7127
      %v7129 = vrot.slane %v7121, %v7128
      %v7131 = vunpack.c.l.s4 1966171168
      %v7132 = vunpack.c.0.s8 %v7131
      %v7133 = vlaneseq
      %v7134 = vshrl.u32 %v7133, 7
      %v7135 = vsub.s32 %v7132, %v7134
      %v7136 = vrot.slane %v7122, %v7135
      %v7137 = vcombine.low %v7129, %v7136
      %v7139 = vunpack.c.l.s4 1966171168
      %v7140 = vunpack.c.0.s8 %v7139
      %v7141 = vlaneseq
      %v7142 = vshrl.u32 %v7141, 7
      %v7143 = vsub.s32 %v7140, %v7142
      %v7144 = vrot.slane %v6945, %v7143
      %v7146 = vunpack.c.l.s4 1966171168
      %v7147 = vunpack.c.0.s8 %v7146
      %v7148 = vlaneseq
      %v7149 = vshrl.u32 %v7148, 7
      %v7150 = vsub.s32 %v7147, %v7149
      %v7151 = vrot.slane %v7144, %v7150
      %7152 = vrot.lane.b32.xlu0 %v6954, 36
      %v7153 = vpop.permute.xlu0 %7152
      %7154 = vrot.lane.b32.xlu0 %v6963, 36
      %v7155 = vpop.permute.xlu0 %7154
      %7156 = vrot.lane.b32.xlu0 %v4557, 36
      %v7157 = vpop.permute.xlu0 %7156
      %7158 = vrot.lane.b32.xlu0 %v6972, 36
      %v7159 = vpop.permute.xlu0 %7158
      %7160 = vrot.lane.b32.xlu0 %v6981, 36
      %v7161 = vpop.permute.xlu0 %7160
      %7162 = vrot.lane.b32.xlu0 %v6982, 36
      %v7163 = vpop.permute.xlu0 %7162
      %7164 = vrot.lane.b32.xlu0 %v6991, 36
      %v7165 = vpop.permute.xlu0 %7164
      %7166 = vrot.lane.b32.xlu0 %v4674, 36
      %v7167 = vpop.permute.xlu0 %7166
      %7168 = vrot.lane.b32.xlu0 %v7000, 36
      %v7169 = vpop.permute.xlu0 %7168
      %7170 = vrot.lane.b32.xlu0 %v7009, 36
      %v7171 = vpop.permute.xlu0 %7170
      %7172 = vrot.lane.b32.xlu0 %v4749, 36
      %v7173 = vpop.permute.xlu0 %7172
      %7174 = vrot.lane.b32.xlu0 %v7018, 36
      %v7175 = vpop.permute.xlu0 %7174
      %7176 = vrot.lane.b32.xlu0 %v4799, 36
      %v7177 = vpop.permute.xlu0 %7176
      %7178 = vrot.lane.b32.xlu0 %v7027, 36
      %v7179 = vpop.permute.xlu0 %7178
      %7180 = vrot.lane.b32.xlu0 %v7036, 36
      %v7181 = vpop.permute.xlu0 %7180
      %7182 = vrot.lane.b32.xlu0 %v4874, 36
      %v7183 = vpop.permute.xlu0 %7182
      %7184 = vrot.lane.b32.xlu0 %v7045, 36
      %v7185 = vpop.permute.xlu0 %7184
      %7186 = vrot.lane.b32.xlu0 %v7062, 36
      %v7187 = vpop.permute.xlu0 %7186
      %7188 = vrot.lane.b32.xlu0 %v7063, 36
      %v7189 = vpop.permute.xlu0 %7188
      %7190 = vrot.lane.b32.xlu0 %v7088, 36
      %v7191 = vpop.permute.xlu0 %7190
      %7192 = vrot.lane.b32.xlu0 %v7137, 36
      %v7193 = vpop.permute.xlu0 %7192
      %7194 = vrot.lane.b32.xlu0 %v7151, 36
      %v7195 = vpop.permute.xlu0 %7194
      %vm7218 = vcmask 326944
      %7219 = vst.msk [vmem:[#allocation2] sm:$0xff] %vm7218, %v7153
      %7220 = vst.msk [vmem:[#allocation2 + $0x8] sm:$0xff] %vm7218, %v7155
      %7221 = vst.msk [vmem:[#allocation2 + $0x10] sm:$0xff] %vm7218, %v7157
      %7222 = vst.msk [vmem:[#allocation2 + $0x18] sm:$0xff] %vm7218, %v7159
      %7223 = vst.msk [vmem:[#allocation2 + $0x20] sm:$0xff] %vm7218, %v7161
      %7224 = vst.msk [vmem:[#allocation2 + $0x28] sm:$0xff] %vm7218, %v7163
      %7225 = vst.msk [vmem:[#allocation2 + $0x30] sm:$0xff] %vm7218, %v7165
      %7226 = vst.msk [vmem:[#allocation2 + $0x38] sm:$0xff] %vm7218, %v7167
      %7227 = vst.msk [vmem:[#allocation2 + $0x40] sm:$0xff] %vm7218, %v7169
      %7228 = vst.msk [vmem:[#allocation2 + $0x48] sm:$0xff] %vm7218, %v7171
      %7229 = vst.msk [vmem:[#allocation2 + $0x50] sm:$0xff] %vm7218, %v7173
      %7230 = vst.msk [vmem:[#allocation2 + $0x58] sm:$0xff] %vm7218, %v7175
      %7231 = vst.msk [vmem:[#allocation2 + $0x60] sm:$0xff] %vm7218, %v7177
      %7232 = vst.msk [vmem:[#allocation2 + $0x68] sm:$0xff] %vm7218, %v7179
      %7233 = vst.msk [vmem:[#allocation2 + $0x70] sm:$0xff] %vm7218, %v7181
      %7234 = vst.msk [vmem:[#allocation2 + $0x78] sm:$0xff] %vm7218, %v7183
      %7235 = vst.msk [vmem:[#allocation2 + $0x80] sm:$0xff] %vm7218, %v7185
      %7236 = vst.msk [vmem:[#allocation2 + $0x88] sm:$0xff] %vm7218, %v7187
      %7237 = vst.msk [vmem:[#allocation2 + $0x90] sm:$0xff] %vm7218, %v7189
      %7238 = vst.msk [vmem:[#allocation2 + $0x98] sm:$0xff] %vm7218, %v7191
      %7239 = vst.msk [vmem:[#allocation2 + $0xa0] sm:$0xff] %vm7218, %v7193
      %vm7240 = vcmask 319776
      %7241 = vst.msk [vmem:[#allocation2 + $0xa8] sm:$0x1] %vm7240, %v7195
      %v7242 = vcombine.high %v6632, %v6632
      %v7243 = vcombine.low %v1645, %v1687
      %v7244 = vcombine.low %v3897, %v1713
      %v7246 = vunpack.c.l.s4 1966171168
      %v7247 = vunpack.c.0.s8 %v7246
      %v7248 = vlaneseq
      %v7249 = vshrl.u32 %v7248, 7
      %v7250 = vsub.s32 %v7247, %v7249
      %v7251 = vrot.slane %v7244, %v7250
      %v7252 = vcombine.low %v6192, %v7251
      %v7253 = vcombine.low %v1743, %v1785
      %v7254 = vcombine.low %v3939, %v1776
      %v7256 = vunpack.c.l.s4 1966171168
      %v7257 = vunpack.c.0.s8 %v7256
      %v7258 = vlaneseq
      %v7259 = vshrl.u32 %v7258, 7
      %v7260 = vsub.s32 %v7257, %v7259
      %v7261 = vrot.slane %v7254, %v7260
      %v7262 = vcombine.low %v7261, %v1834
      %v7263 = vcombine.low %v3964, %v3989
      %v7265 = vunpack.c.l.s4 1966171168
      %v7266 = vunpack.c.0.s8 %v7265
      %v7267 = vlaneseq
      %v7268 = vshrl.u32 %v7267, 7
      %v7269 = vsub.s32 %v7266, %v7268
      %v7270 = vrot.slane %v7263, %v7269
      %v7271 = vcombine.low %v1841, %v7270
      %v7272 = vcombine.low %v1890, %v1932
      %v7273 = vcombine.low %v6252, %v1981
      %v7274 = vcombine.low %v1988, %v6287
      %v7275 = vcombine.low %v4064, %v2021
      %v7277 = vunpack.c.l.s4 1966171168
      %v7278 = vunpack.c.0.s8 %v7277
      %v7279 = vlaneseq
      %v7280 = vshrl.u32 %v7279, 7
      %v7281 = vsub.s32 %v7278, %v7280
      %v7282 = vrot.slane %v7275, %v7281
      %v7283 = vcombine.low %v7282, %v2079
      %v7284 = vcombine.low %v4089, %v2105
      %v7286 = vunpack.c.l.s4 1966171168
      %v7287 = vunpack.c.0.s8 %v7286
      %v7288 = vlaneseq
      %v7289 = vshrl.u32 %v7288, 7
      %v7290 = vsub.s32 %v7287, %v7289
      %v7291 = vrot.slane %v7284, %v7290
      %v7292 = vcombine.low %v2086, %v7291
      %v7293 = vcombine.low %v2135, %v2177
      %v7294 = vcombine.low %v4132, %v4139
      %v7296 = vunpack.c.l.s4 1966171168
      %v7297 = vunpack.c.0.s8 %v7296
      %v7298 = vlaneseq
      %v7299 = vshrl.u32 %v7298, 7
      %v7300 = vsub.s32 %v7297, %v7299
      %v7301 = vrot.slane %v7294, %v7300
      %v7302 = vcombine.low %v7301, %v2226
      %v7303 = vcombine.low %v2233, %v6346
      %v7304 = vcombine.low %v2282, %v2324
      %v7305 = vcombine.low %v4214, %v2350
      %v7307 = vunpack.c.l.s4 1966171168
      %v7308 = vunpack.c.0.s8 %v7307
      %v7309 = vlaneseq
      %v7310 = vshrl.u32 %v7309, 7
      %v7311 = vsub.s32 %v7308, %v7310
      %v7312 = vrot.slane %v7305, %v7311
      %v7313 = vcombine.low %v6362, %v7312
      %v7314 = vcombine.low %v2380, %v2422
      %v7315 = vcombine.low %v4256, %v2413
      %v7317 = vunpack.c.l.s4 1966171168
      %v7318 = vunpack.c.0.s8 %v7317
      %v7319 = vlaneseq
      %v7320 = vshrl.u32 %v7319, 7
      %v7321 = vsub.s32 %v7318, %v7320
      %v7322 = vrot.slane %v7315, %v7321
      %v7323 = vcombine.low %v7322, %v2471
      %v7324 = vcombine.low %v3789, %v5076
      %v7326 = vunpack.c.l.s4 1966171168
      %v7327 = vunpack.c.0.s8 %v7326
      %v7328 = vlaneseq
      %v7329 = vshrl.u32 %v7328, 7
      %v7330 = vsub.s32 %v7327, %v7329
      %v7331 = vrot.slane %v7324, %v7330
      %v7332 = vcombine.low %v4281, %v7331
      %v7334 = vunpack.c.l.s4 1966171168
      %v7335 = vunpack.c.0.s8 %v7334
      %v7336 = vlaneseq
      %v7337 = vshrl.u32 %v7336, 7
      %v7338 = vsub.s32 %v7335, %v7337
      %v7339 = vrot.slane %v7332, %v7338
      %v7340 = vcombine.low %v2478, %v7339
      %v7341 = vcombine.low %v6421, %v6439
      %v7342 = vcombine.low %v6775, %v6795
      %v7344 = vunpack.c.l.s4 1966171168
      %v7345 = vunpack.c.0.s8 %v7344
      %v7346 = vlaneseq
      %v7347 = vshrl.u32 %v7346, 7
      %v7348 = vsub.s32 %v7345, %v7347
      %v7349 = vrot.slane %v7342, %v7348
      %v7350 = vcombine.low %v6446, %v7349
      %v7351 = vcombine.low %v6632, %v6945
      %v7353 = vunpack.c.l.s4 1966171168
      %v7354 = vunpack.c.0.s8 %v7353
      %v7355 = vlaneseq
      %v7356 = vshrl.u32 %v7355, 7
      %v7357 = vsub.s32 %v7354, %v7356
      %v7358 = vrot.slane %v7351, %v7357
      %v7359 = vcombine.low %v6802, %v6809
      %v7360 = vcombine.low %v6816, %v7358
      %v7362 = vunpack.c.l.s4 1966171168
      %v7363 = vunpack.c.0.s8 %v7362
      %v7364 = vlaneseq
      %v7365 = vshrl.u32 %v7364, 7
      %v7366 = vsub.s32 %v7363, %v7365
      %v7367 = vrot.slane %v7359, %v7366
      %v7369 = vunpack.c.l.s4 1966171168
      %v7370 = vunpack.c.0.s8 %v7369
      %v7371 = vlaneseq
      %v7372 = vshrl.u32 %v7371, 7
      %v7373 = vsub.s32 %v7370, %v7372
      %v7374 = vrot.slane %v7360, %v7373
      %v7375 = vcombine.low %v7367, %v7374
      %v7377 = vunpack.c.l.s4 1966171168
      %v7378 = vunpack.c.0.s8 %v7377
      %v7379 = vlaneseq
      %v7380 = vshrl.u32 %v7379, 7
      %v7381 = vsub.s32 %v7378, %v7380
      %v7382 = vrot.slane %v7242, %v7381
      %v7384 = vunpack.c.l.s4 1966171168
      %v7385 = vunpack.c.0.s8 %v7384
      %v7386 = vlaneseq
      %v7387 = vshrl.u32 %v7386, 7
      %v7388 = vsub.s32 %v7385, %v7387
      %v7389 = vrot.slane %v7382, %v7388
      %7390 = vrot.lane.b32.xlu0 %v7243, 40
      %v7391 = vpop.permute.xlu0 %7390
      %7392 = vrot.lane.b32.xlu0 %v7252, 40
      %v7393 = vpop.permute.xlu0 %7392
      %7394 = vrot.lane.b32.xlu0 %v7253, 40
      %v7395 = vpop.permute.xlu0 %7394
      %7396 = vrot.lane.b32.xlu0 %v7262, 40
      %v7397 = vpop.permute.xlu0 %7396
      %7398 = vrot.lane.b32.xlu0 %v7271, 40
      %v7399 = vpop.permute.xlu0 %7398
      %7400 = vrot.lane.b32.xlu0 %v7272, 40
      %v7401 = vpop.permute.xlu0 %7400
      %7402 = vrot.lane.b32.xlu0 %v7273, 40
      %v7403 = vpop.permute.xlu0 %7402
      %7404 = vrot.lane.b32.xlu0 %v7274, 40
      %v7405 = vpop.permute.xlu0 %7404
      %7406 = vrot.lane.b32.xlu0 %v7283, 40
      %v7407 = vpop.permute.xlu0 %7406
      %7408 = vrot.lane.b32.xlu0 %v7292, 40
      %v7409 = vpop.permute.xlu0 %7408
      %7410 = vrot.lane.b32.xlu0 %v7293, 40
      %v7411 = vpop.permute.xlu0 %7410
      %7412 = vrot.lane.b32.xlu0 %v7302, 40
      %v7413 = vpop.permute.xlu0 %7412
      %7414 = vrot.lane.b32.xlu0 %v7303, 40
      %v7415 = vpop.permute.xlu0 %7414
      %7416 = vrot.lane.b32.xlu0 %v7304, 40
      %v7417 = vpop.permute.xlu0 %7416
      %7418 = vrot.lane.b32.xlu0 %v7313, 40
      %v7419 = vpop.permute.xlu0 %7418
      %7420 = vrot.lane.b32.xlu0 %v7314, 40
      %v7421 = vpop.permute.xlu0 %7420
      %7422 = vrot.lane.b32.xlu0 %v7323, 40
      %v7423 = vpop.permute.xlu0 %7422
      %7424 = vrot.lane.b32.xlu0 %v7340, 40
      %v7425 = vpop.permute.xlu0 %7424
      %7426 = vrot.lane.b32.xlu0 %v7341, 40
      %v7427 = vpop.permute.xlu0 %7426
      %7428 = vrot.lane.b32.xlu0 %v7350, 40
      %v7429 = vpop.permute.xlu0 %7428
      %7430 = vrot.lane.b32.xlu0 %v7375, 40
      %v7431 = vpop.permute.xlu0 %7430
      %7432 = vrot.lane.b32.xlu0 %v7389, 40
      %v7433 = vpop.permute.xlu0 %7432
      %vm7456 = vcmask 359744
      %7457 = vst.msk [vmem:[#allocation2] sm:$0xff] %vm7456, %v7391
      %7458 = vst.msk [vmem:[#allocation2 + $0x8] sm:$0xff] %vm7456, %v7393
      %7459 = vst.msk [vmem:[#allocation2 + $0x10] sm:$0xff] %vm7456, %v7395
      %7460 = vst.msk [vmem:[#allocation2 + $0x18] sm:$0xff] %vm7456, %v7397
      %7461 = vst.msk [vmem:[#allocation2 + $0x20] sm:$0xff] %vm7456, %v7399
      %7462 = vst.msk [vmem:[#allocation2 + $0x28] sm:$0xff] %vm7456, %v7401
      %7463 = vst.msk [vmem:[#allocation2 + $0x30] sm:$0xff] %vm7456, %v7403
      %7464 = vst.msk [vmem:[#allocation2 + $0x38] sm:$0xff] %vm7456, %v7405
      %7465 = vst.msk [vmem:[#allocation2 + $0x40] sm:$0xff] %vm7456, %v7407
      %7466 = vst.msk [vmem:[#allocation2 + $0x48] sm:$0xff] %vm7456, %v7409
      %7467 = vst.msk [vmem:[#allocation2 + $0x50] sm:$0xff] %vm7456, %v7411
      %7468 = vst.msk [vmem:[#allocation2 + $0x58] sm:$0xff] %vm7456, %v7413
      %7469 = vst.msk [vmem:[#allocation2 + $0x60] sm:$0xff] %vm7456, %v7415
      %7470 = vst.msk [vmem:[#allocation2 + $0x68] sm:$0xff] %vm7456, %v7417
      %7471 = vst.msk [vmem:[#allocation2 + $0x70] sm:$0xff] %vm7456, %v7419
      %7472 = vst.msk [vmem:[#allocation2 + $0x78] sm:$0xff] %vm7456, %v7421
      %7473 = vst.msk [vmem:[#allocation2 + $0x80] sm:$0xff] %vm7456, %v7423
      %7474 = vst.msk [vmem:[#allocation2 + $0x88] sm:$0xff] %vm7456, %v7425
      %7475 = vst.msk [vmem:[#allocation2 + $0x90] sm:$0xff] %vm7456, %v7427
      %7476 = vst.msk [vmem:[#allocation2 + $0x98] sm:$0xff] %vm7456, %v7429
      %7477 = vst.msk [vmem:[#allocation2 + $0xa0] sm:$0xff] %vm7456, %v7431
      %vm7478 = vcmask 352576
      %7479 = vst.msk [vmem:[#allocation2 + $0xa8] sm:$0x1] %vm7478, %v7433
      %v7480 = vcombine.high %v6945, %v6945
      %v7481 = vcombine.low %v2864, %v4516
      %v7482 = vcombine.low %v4523, %v2906
      %v7484 = vunpack.c.l.s4 1966171168
      %v7485 = vunpack.c.0.s8 %v7484
      %v7486 = vlaneseq
      %v7487 = vshrl.u32 %v7486, 7
      %v7488 = vsub.s32 %v7485, %v7487
      %v7489 = vrot.slane %v7481, %v7488
      %v7491 = vunpack.c.l.s4 1966171168
      %v7492 = vunpack.c.0.s8 %v7491
      %v7493 = vlaneseq
      %v7494 = vshrl.u32 %v7493, 7
      %v7495 = vsub.s32 %v7492, %v7494
      %v7496 = vrot.slane %v7482, %v7495
      %v7497 = vcombine.low %v7489, %v7496
      %v7498 = vcombine.low %v2936, %v2978
      %v7499 = vcombine.low %v4565, %v2969
      %v7501 = vunpack.c.l.s4 1966171168
      %v7502 = vunpack.c.0.s8 %v7501
      %v7503 = vlaneseq
      %v7504 = vshrl.u32 %v7503, 7
      %v7505 = vsub.s32 %v7502, %v7504
      %v7506 = vrot.slane %v7499, %v7505
      %v7507 = vcombine.low %v7506, %v3027
      %v7508 = vcombine.low %v4590, %v4615
      %v7510 = vunpack.c.l.s4 1966171168
      %v7511 = vunpack.c.0.s8 %v7510
      %v7512 = vlaneseq
      %v7513 = vshrl.u32 %v7512, 7
      %v7514 = vsub.s32 %v7511, %v7513
      %v7515 = vrot.slane %v7508, %v7514
      %v7516 = vcombine.low %v3034, %v7515
      %v7517 = vcombine.low %v3109, %v4640
      %v7519 = vunpack.c.l.s4 1966171168
      %v7520 = vunpack.c.0.s8 %v7519
      %v7521 = vlaneseq
      %v7522 = vshrl.u32 %v7521, 7
      %v7523 = vsub.s32 %v7520, %v7522
      %v7524 = vrot.slane %v7517, %v7523
      %v7525 = vcombine.low %v7524, %v3174
      %v7526 = vcombine.low %v3193, %v4683
      %v7528 = vunpack.c.l.s4 1966171168
      %v7529 = vunpack.c.0.s8 %v7528
      %v7530 = vlaneseq
      %v7531 = vshrl.u32 %v7530, 7
      %v7532 = vsub.s32 %v7529, %v7531
      %v7533 = vrot.slane %v7526, %v7532
      %v7534 = vcombine.low %v3181, %v7533
      %v7535 = vcombine.low %v4690, %v3214
      %v7537 = vunpack.c.l.s4 1966171168
      %v7538 = vunpack.c.0.s8 %v7537
      %v7539 = vlaneseq
      %v7540 = vshrl.u32 %v7539, 7
      %v7541 = vsub.s32 %v7538, %v7540
      %v7542 = vrot.slane %v7535, %v7541
      %v7543 = vcombine.low %v7542, %v3272
      %v7544 = vcombine.low %v4715, %v3298
      %v7546 = vunpack.c.l.s4 1966171168
      %v7547 = vunpack.c.0.s8 %v7546
      %v7548 = vlaneseq
      %v7549 = vshrl.u32 %v7548, 7
      %v7550 = vsub.s32 %v7547, %v7549
      %v7551 = vrot.slane %v7544, %v7550
      %v7552 = vcombine.low %v3279, %v7551
      %v7553 = vcombine.low %v4758, %v4765
      %v7555 = vunpack.c.l.s4 1966171168
      %v7556 = vunpack.c.0.s8 %v7555
      %v7557 = vlaneseq
      %v7558 = vshrl.u32 %v7557, 7
      %v7559 = vsub.s32 %v7556, %v7558
      %v7560 = vrot.slane %v7553, %v7559
      %v7561 = vcombine.low %v7560, %v3419
      %v7562 = vcombine.low %v3438, %v4807
      %v7564 = vunpack.c.l.s4 1966171168
      %v7565 = vunpack.c.0.s8 %v7564
      %v7566 = vlaneseq
      %v7567 = vshrl.u32 %v7566, 7
      %v7568 = vsub.s32 %v7565, %v7567
      %v7569 = vrot.slane %v7562, %v7568
      %v7570 = vcombine.low %v3426, %v7569
      %v7571 = vcombine.low %v3501, %v4833
      %v7572 = vcombine.low %v4840, %v3543
      %v7574 = vunpack.c.l.s4 1966171168
      %v7575 = vunpack.c.0.s8 %v7574
      %v7576 = vlaneseq
      %v7577 = vshrl.u32 %v7576, 7
      %v7578 = vsub.s32 %v7575, %v7577
      %v7579 = vrot.slane %v7571, %v7578
      %v7581 = vunpack.c.l.s4 1966171168
      %v7582 = vunpack.c.0.s8 %v7581
      %v7583 = vlaneseq
      %v7584 = vshrl.u32 %v7583, 7
      %v7585 = vsub.s32 %v7582, %v7584
      %v7586 = vrot.slane %v7572, %v7585
      %v7587 = vcombine.low %v7579, %v7586
      %v7588 = vcombine.low %v3573, %v3615
      %v7589 = vcombine.low %v4882, %v3606
      %v7591 = vunpack.c.l.s4 1966171168
      %v7592 = vunpack.c.0.s8 %v7591
      %v7593 = vlaneseq
      %v7594 = vshrl.u32 %v7593, 7
      %v7595 = vsub.s32 %v7592, %v7594
      %v7596 = vrot.slane %v7589, %v7595
      %v7597 = vcombine.low %v7596, %v3664
      %v7598 = vcombine.low %v4415, %v5078
      %v7600 = vunpack.c.l.s4 1966171168
      %v7601 = vunpack.c.0.s8 %v7600
      %v7602 = vlaneseq
      %v7603 = vshrl.u32 %v7602, 7
      %v7604 = vsub.s32 %v7601, %v7603
      %v7605 = vrot.slane %v7598, %v7604
      %v7606 = vcombine.low %v4907, %v7605
      %v7608 = vunpack.c.l.s4 1966171168
      %v7609 = vunpack.c.0.s8 %v7608
      %v7610 = vlaneseq
      %v7611 = vshrl.u32 %v7610, 7
      %v7612 = vsub.s32 %v7609, %v7611
      %v7613 = vrot.slane %v7606, %v7612
      %v7614 = vcombine.low %v3671, %v7613
      %v7615 = vcombine.low %v5857, %v6159
      %v7617 = vunpack.c.l.s4 1966171168
      %v7618 = vunpack.c.0.s8 %v7617
      %v7619 = vlaneseq
      %v7620 = vshrl.u32 %v7619, 7
      %v7621 = vsub.s32 %v7618, %v7620
      %v7622 = vrot.slane %v7615, %v7621
      %v7623 = vcombine.low %v6037, %v7622
      %v7624 = vcombine.low %v7079, %v7099
      %v7626 = vunpack.c.l.s4 1966171168
      %v7627 = vunpack.c.0.s8 %v7626
      %v7628 = vlaneseq
      %v7629 = vshrl.u32 %v7628, 7
      %v7630 = vsub.s32 %v7627, %v7629
      %v7631 = vrot.slane %v7623, %v7630
      %v7633 = vunpack.c.l.s4 1966171168
      %v7634 = vunpack.c.0.s8 %v7633
      %v7635 = vlaneseq
      %v7636 = vshrl.u32 %v7635, 7
      %v7637 = vsub.s32 %v7634, %v7636
      %v7638 = vrot.slane %v7624, %v7637
      %v7639 = vcombine.low %v7631, %v7638
      %v7640 = vcombine.low %v6945, %v7242
      %v7642 = vunpack.c.l.s4 1966171168
      %v7643 = vunpack.c.0.s8 %v7642
      %v7644 = vlaneseq
      %v7645 = vshrl.u32 %v7644, 7
      %v7646 = vsub.s32 %v7643, %v7645
      %v7647 = vrot.slane %v7640, %v7646
      %v7648 = vcombine.low %v7106, %v7113
      %v7649 = vcombine.low %v7120, %v7647
      %v7651 = vunpack.c.l.s4 1966171168
      %v7652 = vunpack.c.0.s8 %v7651
      %v7653 = vlaneseq
      %v7654 = vshrl.u32 %v7653, 7
      %v7655 = vsub.s32 %v7652, %v7654
      %v7656 = vrot.slane %v7648, %v7655
      %v7658 = vunpack.c.l.s4 1966171168
      %v7659 = vunpack.c.0.s8 %v7658
      %v7660 = vlaneseq
      %v7661 = vshrl.u32 %v7660, 7
      %v7662 = vsub.s32 %v7659, %v7661
      %v7663 = vrot.slane %v7649, %v7662
      %v7664 = vcombine.low %v7656, %v7663
      %v7666 = vunpack.c.l.s4 1966171168
      %v7667 = vunpack.c.0.s8 %v7666
      %v7668 = vlaneseq
      %v7669 = vshrl.u32 %v7668, 7
      %v7670 = vsub.s32 %v7667, %v7669
      %v7671 = vrot.slane %v7480, %v7670
      %v7673 = vunpack.c.l.s4 1966171168
      %v7674 = vunpack.c.0.s8 %v7673
      %v7675 = vlaneseq
      %v7676 = vshrl.u32 %v7675, 7
      %v7677 = vsub.s32 %v7674, %v7676
      %v7678 = vrot.slane %v7671, %v7677
      %7679 = vrot.lane.b32.xlu0 %v5153, 44
      %v7680 = vpop.permute.xlu0 %7679
      %7681 = vrot.lane.b32.xlu0 %v7497, 44
      %v7682 = vpop.permute.xlu0 %7681
      %7683 = vrot.lane.b32.xlu0 %v7498, 44
      %v7684 = vpop.permute.xlu0 %7683
      %7685 = vrot.lane.b32.xlu0 %v7507, 44
      %v7686 = vpop.permute.xlu0 %7685
      %7687 = vrot.lane.b32.xlu0 %v7516, 44
      %v7688 = vpop.permute.xlu0 %7687
      %7689 = vrot.lane.b32.xlu0 %v5206, 44
      %v7690 = vpop.permute.xlu0 %7689
      %7691 = vrot.lane.b32.xlu0 %v7525, 44
      %v7692 = vpop.permute.xlu0 %7691
      %7693 = vrot.lane.b32.xlu0 %v7534, 44
      %v7694 = vpop.permute.xlu0 %7693
      %7695 = vrot.lane.b32.xlu0 %v7543, 44
      %v7696 = vpop.permute.xlu0 %7695
      %7697 = vrot.lane.b32.xlu0 %v7552, 44
      %v7698 = vpop.permute.xlu0 %7697
      %7699 = vrot.lane.b32.xlu0 %v5259, 44
      %v7700 = vpop.permute.xlu0 %7699
      %7701 = vrot.lane.b32.xlu0 %v7561, 44
      %v7702 = vpop.permute.xlu0 %7701
      %7703 = vrot.lane.b32.xlu0 %v7570, 44
      %v7704 = vpop.permute.xlu0 %7703
      %7705 = vrot.lane.b32.xlu0 %v5294, 44
      %v7706 = vpop.permute.xlu0 %7705
      %7707 = vrot.lane.b32.xlu0 %v7587, 44
      %v7708 = vpop.permute.xlu0 %7707
      %7709 = vrot.lane.b32.xlu0 %v7588, 44
      %v7710 = vpop.permute.xlu0 %7709
      %7711 = vrot.lane.b32.xlu0 %v7597, 44
      %v7712 = vpop.permute.xlu0 %7711
      %7713 = vrot.lane.b32.xlu0 %v7614, 44
      %v7714 = vpop.permute.xlu0 %7713
      %7715 = vrot.lane.b32.xlu0 %v5403, 44
      %v7716 = vpop.permute.xlu0 %7715
      %7717 = vrot.lane.b32.xlu0 %v7639, 44
      %v7718 = vpop.permute.xlu0 %7717
      %7719 = vrot.lane.b32.xlu0 %v7664, 44
      %v7720 = vpop.permute.xlu0 %7719
      %7721 = vrot.lane.b32.xlu0 %v7678, 44
      %v7722 = vpop.permute.xlu0 %7721
      %vm7745 = vcmask 392544
      %7746 = vst.msk [vmem:[#allocation2] sm:$0xff] %vm7745, %v7680
      %7747 = vst.msk [vmem:[#allocation2 + $0x8] sm:$0xff] %vm7745, %v7682
      %7748 = vst.msk [vmem:[#allocation2 + $0x10] sm:$0xff] %vm7745, %v7684
      %7749 = vst.msk [vmem:[#allocation2 + $0x18] sm:$0xff] %vm7745, %v7686
      %7750 = vst.msk [vmem:[#allocation2 + $0x20] sm:$0xff] %vm7745, %v7688
      %7751 = vst.msk [vmem:[#allocation2 + $0x28] sm:$0xff] %vm7745, %v7690
      %7752 = vst.msk [vmem:[#allocation2 + $0x30] sm:$0xff] %vm7745, %v7692
      %7753 = vst.msk [vmem:[#allocation2 + $0x38] sm:$0xff] %vm7745, %v7694
      %7754 = vst.msk [vmem:[#allocation2 + $0x40] sm:$0xff] %vm7745, %v7696
      %7755 = vst.msk [vmem:[#allocation2 + $0x48] sm:$0xff] %vm7745, %v7698
      %7756 = vst.msk [vmem:[#allocation2 + $0x50] sm:$0xff] %vm7745, %v7700
      %7757 = vst.msk [vmem:[#allocation2 + $0x58] sm:$0xff] %vm7745, %v7702
      %7758 = vst.msk [vmem:[#allocation2 + $0x60] sm:$0xff] %vm7745, %v7704
      %7759 = vst.msk [vmem:[#allocation2 + $0x68] sm:$0xff] %vm7745, %v7706
      %7760 = vst.msk [vmem:[#allocation2 + $0x70] sm:$0xff] %vm7745, %v7708
      %7761 = vst.msk [vmem:[#allocation2 + $0x78] sm:$0xff] %vm7745, %v7710
      %7762 = vst.msk [vmem:[#allocation2 + $0x80] sm:$0xff] %vm7745, %v7712
      %7763 = vst.msk [vmem:[#allocation2 + $0x88] sm:$0xff] %vm7745, %v7714
      %7764 = vst.msk [vmem:[#allocation2 + $0x90] sm:$0xff] %vm7745, %v7716
      %7765 = vst.msk [vmem:[#allocation2 + $0x98] sm:$0xff] %vm7745, %v7718
      %7766 = vst.msk [vmem:[#allocation2 + $0xa0] sm:$0xff] %vm7745, %v7720
      %vm7767 = vcmask 385376
      %7768 = vst.msk [vmem:[#allocation2 + $0xa8] sm:$0x1] %vm7767, %v7722
      %v7771 = vcombine.high %v255, %v255
      %v7773 = vunpack.c.l.s4 1966171168
      %v7774 = vunpack.c.0.s8 %v7773
      %v7775 = vlaneseq
      %v7776 = vshrl.u32 %v7775, 7
      %v7777 = vsub.s32 %v7774, %v7776
      %v7778 = vrot.slane %v255, %v7777
      %v7780 = vunpack.c.l.s4 1966171168
      %v7781 = vunpack.c.0.s8 %v7780
      %v7782 = vlaneseq
      %v7783 = vshrl.u32 %v7782, 7
      %v7784 = vsub.s32 %v7781, %v7783
      %v7785 = vrot.slane %v7771, %v7784
      %v7786 = vcombine.high %v7778, %v7778
      %v7787 = vcombine.high %v7785, %v7785
      %v7789 = vunpack.c.l.s4 1966171168
      %v7790 = vunpack.c.0.s8 %v7789
      %v7791 = vlaneseq
      %v7792 = vshrl.u32 %v7791, 7
      %v7793 = vsub.s32 %v7790, %v7792
      %v7794 = vrot.slane %v7778, %v7793
      %v7796 = vunpack.c.l.s4 1966171168
      %v7797 = vunpack.c.0.s8 %v7796
      %v7798 = vlaneseq
      %v7799 = vshrl.u32 %v7798, 7
      %v7800 = vsub.s32 %v7797, %v7799
      %v7801 = vrot.slane %v7785, %v7800
      %v7803 = vunpack.c.l.s4 1966171168
      %v7804 = vunpack.c.0.s8 %v7803
      %v7805 = vlaneseq
      %v7806 = vshrl.u32 %v7805, 7
      %v7807 = vsub.s32 %v7804, %v7806
      %v7808 = vrot.slane %v7786, %v7807
      %v7810 = vunpack.c.l.s4 1966171168
      %v7811 = vunpack.c.0.s8 %v7810
      %v7812 = vlaneseq
      %v7813 = vshrl.u32 %v7812, 7
      %v7814 = vsub.s32 %v7811, %v7813
      %v7815 = vrot.slane %v7787, %v7814
      %v7816 = vcombine.high %v7794, %v7794
      %v7817 = vcombine.high %v7801, %v7801
      %v7818 = vcombine.high %v7808, %v7808
      %v7819 = vcombine.high %v7815, %v7815
      %v7820 = vcombine.high %v256, %v256
      %v7822 = vunpack.c.l.s4 1966171168
      %v7823 = vunpack.c.0.s8 %v7822
      %v7824 = vlaneseq
      %v7825 = vshrl.u32 %v7824, 7
      %v7826 = vsub.s32 %v7823, %v7825
      %v7827 = vrot.slane %v256, %v7826
      %v7829 = vunpack.c.l.s4 1966171168
      %v7830 = vunpack.c.0.s8 %v7829
      %v7831 = vlaneseq
      %v7832 = vshrl.u32 %v7831, 7
      %v7833 = vsub.s32 %v7830, %v7832
      %v7834 = vrot.slane %v7820, %v7833
      %v7835 = vcombine.high %v7827, %v7827
      %v7837 = vunpack.c.l.s4 1966171168
      %v7838 = vunpack.c.0.s8 %v7837
      %v7839 = vlaneseq
      %v7840 = vshrl.u32 %v7839, 7
      %v7841 = vsub.s32 %v7838, %v7840
      %v7842 = vrot.slane %v7827, %v7841
      %v7844 = vunpack.c.l.s4 1966171168
      %v7845 = vunpack.c.0.s8 %v7844
      %v7846 = vlaneseq
      %v7847 = vshrl.u32 %v7846, 7
      %v7848 = vsub.s32 %v7845, %v7847
      %v7849 = vrot.slane %v7834, %v7848
      %v7851 = vunpack.c.l.s4 1966171168
      %v7852 = vunpack.c.0.s8 %v7851
      %v7853 = vlaneseq
      %v7854 = vshrl.u32 %v7853, 7
      %v7855 = vsub.s32 %v7852, %v7854
      %v7856 = vrot.slane %v7835, %v7855
      %v7857 = vcombine.high %v7842, %v7842
      %v7858 = vcombine.high %v7856, %v7856
      %v7859 = vcombine.low %v5161, %v2899
      %v7861 = vunpack.c.l.s4 1966171168
      %v7862 = vunpack.c.0.s8 %v7861
      %v7863 = vlaneseq
      %v7864 = vshrl.u32 %v7863, 7
      %v7865 = vsub.s32 %v7862, %v7864
      %v7866 = vrot.slane %v7859, %v7865
      %v7867 = vcombine.low %v7866, %v4549
      %v7868 = vcombine.low %v5178, %v2962
      %v7870 = vunpack.c.l.s4 1966171168
      %v7871 = vunpack.c.0.s8 %v7870
      %v7872 = vlaneseq
      %v7873 = vshrl.u32 %v7872, 7
      %v7874 = vsub.s32 %v7871, %v7873
      %v7875 = vrot.slane %v7868, %v7874
      %v7876 = vcombine.low %v4556, %v7875
      %v7877 = vcombine.low %v3018, %v5196
      %v7879 = vunpack.c.l.s4 1966171168
      %v7880 = vunpack.c.0.s8 %v7879
      %v7881 = vlaneseq
      %v7882 = vshrl.u32 %v7881, 7
      %v7883 = vsub.s32 %v7880, %v7882
      %v7884 = vrot.slane %v7877, %v7883
      %v7885 = vcombine.low %v7884, %v5919
      %v7886 = vcombine.low %v3102, %v5214
      %v7888 = vunpack.c.l.s4 1966171168
      %v7889 = vunpack.c.0.s8 %v7888
      %v7890 = vlaneseq
      %v7891 = vshrl.u32 %v7890, 7
      %v7892 = vsub.s32 %v7889, %v7891
      %v7893 = vrot.slane %v7886, %v7892
      %v7894 = vcombine.low %v4631, %v7893
      %v7895 = vcombine.low %v6990, %v4666
      %v7896 = vcombine.low %v5231, %v3207
      %v7898 = vunpack.c.l.s4 1966171168
      %v7899 = vunpack.c.0.s8 %v7898
      %v7900 = vlaneseq
      %v7901 = vshrl.u32 %v7900, 7
      %v7902 = vsub.s32 %v7899, %v7901
      %v7903 = vrot.slane %v7896, %v7902
      %v7904 = vcombine.low %v4673, %v7903
      %v7905 = vcombine.low %v5249, %v3291
      %v7907 = vunpack.c.l.s4 1966171168
      %v7908 = vunpack.c.0.s8 %v7907
      %v7909 = vlaneseq
      %v7910 = vshrl.u32 %v7909, 7
      %v7911 = vsub.s32 %v7908, %v7910
      %v7912 = vrot.slane %v7905, %v7911
      %v7913 = vcombine.low %v7912, %v4741
      %v7914 = vcombine.low %v3347, %v5267
      %v7916 = vunpack.c.l.s4 1966171168
      %v7917 = vunpack.c.0.s8 %v7916
      %v7918 = vlaneseq
      %v7919 = vshrl.u32 %v7918, 7
      %v7920 = vsub.s32 %v7917, %v7919
      %v7921 = vrot.slane %v7914, %v7920
      %v7922 = vcombine.low %v4748, %v7921
      %v7923 = vcombine.low %v3410, %v5284
      %v7925 = vunpack.c.l.s4 1966171168
      %v7926 = vunpack.c.0.s8 %v7925
      %v7927 = vlaneseq
      %v7928 = vshrl.u32 %v7927, 7
      %v7929 = vsub.s32 %v7926, %v7928
      %v7930 = vrot.slane %v7923, %v7929
      %v7931 = vcombine.low %v7930, %v7026
      %v7932 = vcombine.low %v5302, %v3536
      %v7934 = vunpack.c.l.s4 1966171168
      %v7935 = vunpack.c.0.s8 %v7934
      %v7936 = vlaneseq
      %v7937 = vshrl.u32 %v7936, 7
      %v7938 = vsub.s32 %v7935, %v7937
      %v7939 = vrot.slane %v7932, %v7938
      %v7940 = vcombine.low %v7939, %v4866
      %v7941 = vcombine.low %v5319, %v3599
      %v7943 = vunpack.c.l.s4 1966171168
      %v7944 = vunpack.c.0.s8 %v7943
      %v7945 = vlaneseq
      %v7946 = vshrl.u32 %v7945, 7
      %v7947 = vsub.s32 %v7944, %v7946
      %v7948 = vrot.slane %v7941, %v7947
      %v7949 = vcombine.low %v4873, %v7948
      %v7950 = vcombine.low %v3655, %v5338
      %v7952 = vunpack.c.l.s4 1966171168
      %v7953 = vunpack.c.0.s8 %v7952
      %v7954 = vlaneseq
      %v7955 = vshrl.u32 %v7954, 7
      %v7956 = vsub.s32 %v7953, %v7955
      %v7957 = vrot.slane %v7950, %v7956
      %v7958 = vcombine.low %v7957, %v6028
      %v7959 = vcombine.low %v5109, %v6577
      %v7961 = vunpack.c.l.s4 1966171168
      %v7962 = vunpack.c.0.s8 %v7961
      %v7963 = vlaneseq
      %v7964 = vshrl.u32 %v7963, 7
      %v7965 = vsub.s32 %v7962, %v7964
      %v7966 = vrot.slane %v7959, %v7965
      %v7967 = vcombine.low %v5386, %v7966
      %v7969 = vunpack.c.l.s4 1966171168
      %v7970 = vunpack.c.0.s8 %v7969
      %v7971 = vlaneseq
      %v7972 = vshrl.u32 %v7971, 7
      %v7973 = vsub.s32 %v7970, %v7972
      %v7974 = vrot.slane %v7967, %v7973
      %v7975 = vcombine.low %v6046, %v7974
      %v7976 = vcombine.low %v7087, %v7129
      %v7977 = vcombine.low %v7794, %v7808
      %v7978 = vcombine.low %v7816, %v7818
      %v7980 = vunpack.c.l.s4 1966171168
      %v7981 = vunpack.c.0.s8 %v7980
      %v7982 = vlaneseq
      %v7983 = vshrl.u32 %v7982, 7
      %v7984 = vsub.s32 %v7981, %v7983
      %v7985 = vrot.slane %v7977, %v7984
      %v7987 = vunpack.c.l.s4 1966171168
      %v7988 = vunpack.c.0.s8 %v7987
      %v7989 = vlaneseq
      %v7990 = vshrl.u32 %v7989, 7
      %v7991 = vsub.s32 %v7988, %v7990
      %v7992 = vrot.slane %v7978, %v7991
      %v7993 = vcombine.low %v7985, %v7992
      %v7995 = vunpack.c.l.s4 1966171168
      %v7996 = vunpack.c.0.s8 %v7995
      %v7997 = vlaneseq
      %v7998 = vshrl.u32 %v7997, 7
      %v7999 = vsub.s32 %v7996, %v7998
      %v8000 = vrot.slane %v7993, %v7999
      %v8001 = vcombine.low %v7136, %v8000
      %v8002 = vcombine.low %v7801, %v7815
      %v8003 = vcombine.low %v7817, %v7819
      %v8004 = vcombine.low %v7842, %v7856
      %v8005 = vcombine.low %v7857, %v7858
      %v8007 = vunpack.c.l.s4 1966171168
      %v8008 = vunpack.c.0.s8 %v8007
      %v8009 = vlaneseq
      %v8010 = vshrl.u32 %v8009, 7
      %v8011 = vsub.s32 %v8008, %v8010
      %v8012 = vrot.slane %v8002, %v8011
      %v8014 = vunpack.c.l.s4 1966171168
      %v8015 = vunpack.c.0.s8 %v8014
      %v8016 = vlaneseq
      %v8017 = vshrl.u32 %v8016, 7
      %v8018 = vsub.s32 %v8015, %v8017
      %v8019 = vrot.slane %v8003, %v8018
      %v8021 = vunpack.c.l.s4 1966171168
      %v8022 = vunpack.c.0.s8 %v8021
      %v8023 = vlaneseq
      %v8024 = vshrl.u32 %v8023, 7
      %v8025 = vsub.s32 %v8022, %v8024
      %v8026 = vrot.slane %v8004, %v8025
      %v8028 = vunpack.c.l.s4 1966171168
      %v8029 = vunpack.c.0.s8 %v8028
      %v8030 = vlaneseq
      %v8031 = vshrl.u32 %v8030, 7
      %v8032 = vsub.s32 %v8029, %v8031
      %v8033 = vrot.slane %v8005, %v8032
      %v8034 = vcombine.low %v8012, %v8019
      %v8035 = vcombine.low %v8026, %v8033
      %v8037 = vunpack.c.l.s4 1966171168
      %v8038 = vunpack.c.0.s8 %v8037
      %v8039 = vlaneseq
      %v8040 = vshrl.u32 %v8039, 7
      %v8041 = vsub.s32 %v8038, %v8040
      %v8042 = vrot.slane %v8034, %v8041
      %v8044 = vunpack.c.l.s4 1966171168
      %v8045 = vunpack.c.0.s8 %v8044
      %v8046 = vlaneseq
      %v8047 = vshrl.u32 %v8046, 7
      %v8048 = vsub.s32 %v8045, %v8047
      %v8049 = vrot.slane %v8035, %v8048
      %v8050 = vcombine.low %v8042, %v8049
      %v8052 = vunpack.c.l.s4 1966171168
      %v8053 = vunpack.c.0.s8 %v8052
      %v8054 = vlaneseq
      %v8055 = vshrl.u32 %v8054, 7
      %v8056 = vsub.s32 %v8053, %v8055
      %v8057 = vrot.slane %v7849, %v8056
      %v8059 = vunpack.c.l.s4 1966171168
      %v8060 = vunpack.c.0.s8 %v8059
      %v8061 = vlaneseq
      %v8062 = vshrl.u32 %v8061, 7
      %v8063 = vsub.s32 %v8060, %v8062
      %v8064 = vrot.slane %v8057, %v8063
      %8065 = vrot.lane.b32.xlu0 %v7867, 48
      %v8066 = vpop.permute.xlu0 %8065
      %8067 = vrot.lane.b32.xlu0 %v7876, 48
      %v8068 = vpop.permute.xlu0 %8067
      %8069 = vrot.lane.b32.xlu0 %v5911, 48
      %v8070 = vpop.permute.xlu0 %8069
      %8071 = vrot.lane.b32.xlu0 %v7885, 48
      %v8072 = vpop.permute.xlu0 %8071
      %8073 = vrot.lane.b32.xlu0 %v7894, 48
      %v8074 = vpop.permute.xlu0 %8073
      %8075 = vrot.lane.b32.xlu0 %v7895, 48
      %v8076 = vpop.permute.xlu0 %8075
      %8077 = vrot.lane.b32.xlu0 %v7904, 48
      %v8078 = vpop.permute.xlu0 %8077
      %8079 = vrot.lane.b32.xlu0 %v5948, 48
      %v8080 = vpop.permute.xlu0 %8079
      %8081 = vrot.lane.b32.xlu0 %v7913, 48
      %v8082 = vpop.permute.xlu0 %8081
      %8083 = vrot.lane.b32.xlu0 %v7922, 48
      %v8084 = vpop.permute.xlu0 %8083
      %8085 = vrot.lane.b32.xlu0 %v5975, 48
      %v8086 = vpop.permute.xlu0 %8085
      %8087 = vrot.lane.b32.xlu0 %v7931, 48
      %v8088 = vpop.permute.xlu0 %8087
      %8089 = vrot.lane.b32.xlu0 %v5993, 48
      %v8090 = vpop.permute.xlu0 %8089
      %8091 = vrot.lane.b32.xlu0 %v7940, 48
      %v8092 = vpop.permute.xlu0 %8091
      %8093 = vrot.lane.b32.xlu0 %v7949, 48
      %v8094 = vpop.permute.xlu0 %8093
      %8095 = vrot.lane.b32.xlu0 %v6020, 48
      %v8096 = vpop.permute.xlu0 %8095
      %8097 = vrot.lane.b32.xlu0 %v7958, 48
      %v8098 = vpop.permute.xlu0 %8097
      %8099 = vrot.lane.b32.xlu0 %v7975, 48
      %v8100 = vpop.permute.xlu0 %8099
      %8101 = vrot.lane.b32.xlu0 %v7976, 48
      %v8102 = vpop.permute.xlu0 %8101
      %8103 = vrot.lane.b32.xlu0 %v8001, 48
      %v8104 = vpop.permute.xlu0 %8103
      %8105 = vrot.lane.b32.xlu0 %v8050, 48
      %v8106 = vpop.permute.xlu0 %8105
      %8107 = vrot.lane.b32.xlu0 %v8064, 48
      %v8108 = vpop.permute.xlu0 %8107
      %vm8131 = vcmask 425344
      %8132 = vst.msk [vmem:[#allocation2] sm:$0xff] %vm8131, %v8066
      %8133 = vst.msk [vmem:[#allocation2 + $0x8] sm:$0xff] %vm8131, %v8068
      %8134 = vst.msk [vmem:[#allocation2 + $0x10] sm:$0xff] %vm8131, %v8070
      %8135 = vst.msk [vmem:[#allocation2 + $0x18] sm:$0xff] %vm8131, %v8072
      %8136 = vst.msk [vmem:[#allocation2 + $0x20] sm:$0xff] %vm8131, %v8074
      %8137 = vst.msk [vmem:[#allocation2 + $0x28] sm:$0xff] %vm8131, %v8076
      %8138 = vst.msk [vmem:[#allocation2 + $0x30] sm:$0xff] %vm8131, %v8078
      %8139 = vst.msk [vmem:[#allocation2 + $0x38] sm:$0xff] %vm8131, %v8080
      %8140 = vst.msk [vmem:[#allocation2 + $0x40] sm:$0xff] %vm8131, %v8082
      %8141 = vst.msk [vmem:[#allocation2 + $0x48] sm:$0xff] %vm8131, %v8084
      %8142 = vst.msk [vmem:[#allocation2 + $0x50] sm:$0xff] %vm8131, %v8086
      %8143 = vst.msk [vmem:[#allocation2 + $0x58] sm:$0xff] %vm8131, %v8088
      %8144 = vst.msk [vmem:[#allocation2 + $0x60] sm:$0xff] %vm8131, %v8090
      %8145 = vst.msk [vmem:[#allocation2 + $0x68] sm:$0xff] %vm8131, %v8092
      %8146 = vst.msk [vmem:[#allocation2 + $0x70] sm:$0xff] %vm8131, %v8094
      %8147 = vst.msk [vmem:[#allocation2 + $0x78] sm:$0xff] %vm8131, %v8096
      %8148 = vst.msk [vmem:[#allocation2 + $0x80] sm:$0xff] %vm8131, %v8098
      %8149 = vst.msk [vmem:[#allocation2 + $0x88] sm:$0xff] %vm8131, %v8100
      %8150 = vst.msk [vmem:[#allocation2 + $0x90] sm:$0xff] %vm8131, %v8102
      %8151 = vst.msk [vmem:[#allocation2 + $0x98] sm:$0xff] %vm8131, %v8104
      %8152 = vst.msk [vmem:[#allocation2 + $0xa0] sm:$0xff] %vm8131, %v8106
      %vm8153 = vcmask 418176
      %8154 = vst.msk [vmem:[#allocation2 + $0xa8] sm:$0x1] %vm8153, %v8108
      %v8155 = vcombine.high %v7834, %v7834
      %v8157 = vunpack.c.l.s4 1966171168
      %v8158 = vunpack.c.0.s8 %v8157
      %v8159 = vlaneseq
      %v8160 = vshrl.u32 %v8159, 7
      %v8161 = vsub.s32 %v8158, %v8160
      %v8162 = vrot.slane %v8155, %v8161
      %v8163 = vcombine.low %v5559, %v1776
      %v8165 = vunpack.c.l.s4 1966171168
      %v8166 = vunpack.c.0.s8 %v8165
      %v8167 = vlaneseq
      %v8168 = vshrl.u32 %v8167, 7
      %v8169 = vsub.s32 %v8166, %v8168
      %v8170 = vrot.slane %v8163, %v8169
      %v8171 = vcombine.low %v1785, %v8170
      %v8172 = vcombine.low %v3964, %v1860
      %v8174 = vunpack.c.l.s4 1966171168
      %v8175 = vunpack.c.0.s8 %v8174
      %v8176 = vlaneseq
      %v8177 = vshrl.u32 %v8176, 7
      %v8178 = vsub.s32 %v8175, %v8177
      %v8179 = vrot.slane %v8172, %v8178
      %v8180 = vcombine.low %v8179, %v1890
      %v8181 = vcombine.low %v1916, %v5587
      %v8183 = vunpack.c.l.s4 1966171168
      %v8184 = vunpack.c.0.s8 %v8183
      %v8185 = vlaneseq
      %v8186 = vshrl.u32 %v8185, 7
      %v8187 = vsub.s32 %v8184, %v8186
      %v8188 = vrot.slane %v8181, %v8187
      %v8189 = vcombine.low %v1932, %v8188
      %v8190 = vcombine.low %v6287, %v2037
      %v8191 = vcombine.low %v5614, %v2105
      %v8193 = vunpack.c.l.s4 1966171168
      %v8194 = vunpack.c.0.s8 %v8193
      %v8195 = vlaneseq
      %v8196 = vshrl.u32 %v8195, 7
      %v8197 = vsub.s32 %v8194, %v8196
      %v8198 = vrot.slane %v8191, %v8197
      %v8199 = vcombine.low %v8198, %v2135
      %v8200 = vcombine.low %v4132, %v2168
      %v8202 = vunpack.c.l.s4 1966171168
      %v8203 = vunpack.c.0.s8 %v8202
      %v8204 = vlaneseq
      %v8205 = vshrl.u32 %v8204, 7
      %v8206 = vsub.s32 %v8203, %v8205
      %v8207 = vrot.slane %v8200, %v8206
      %v8208 = vcombine.low %v2177, %v8207
      %v8209 = vcombine.low %v2245, %v5641
      %v8211 = vunpack.c.l.s4 1966171168
      %v8212 = vunpack.c.0.s8 %v8211
      %v8213 = vlaneseq
      %v8214 = vshrl.u32 %v8213, 7
      %v8215 = vsub.s32 %v8212, %v8214
      %v8216 = vrot.slane %v8209, %v8215
      %v8217 = vcombine.low %v8216, %v2282
      %v8218 = vcombine.low %v5668, %v2413
      %v8220 = vunpack.c.l.s4 1966171168
      %v8221 = vunpack.c.0.s8 %v8220
      %v8222 = vlaneseq
      %v8223 = vshrl.u32 %v8222, 7
      %v8224 = vsub.s32 %v8221, %v8223
      %v8225 = vrot.slane %v8218, %v8224
      %v8226 = vcombine.low %v2422, %v8225
      %v8227 = vcombine.low %v4281, %v5687
      %v8229 = vunpack.c.l.s4 1966171168
      %v8230 = vunpack.c.0.s8 %v8229
      %v8231 = vlaneseq
      %v8232 = vshrl.u32 %v8231, 7
      %v8233 = vsub.s32 %v8230, %v8232
      %v8234 = vrot.slane %v8227, %v8233
      %v8235 = vcombine.low %v8234, %v6421
      %v8236 = vcombine.low %v5515, %v6591
      %v8238 = vunpack.c.l.s4 1966171168
      %v8239 = vunpack.c.0.s8 %v8238
      %v8240 = vlaneseq
      %v8241 = vshrl.u32 %v8240, 7
      %v8242 = vsub.s32 %v8239, %v8241
      %v8243 = vrot.slane %v8236, %v8242
      %v8244 = vcombine.low %v5735, %v8243
      %v8246 = vunpack.c.l.s4 1966171168
      %v8247 = vunpack.c.0.s8 %v8246
      %v8248 = vlaneseq
      %v8249 = vshrl.u32 %v8248, 7
      %v8250 = vsub.s32 %v8247, %v8249
      %v8251 = vrot.slane %v8244, %v8250
      %v8252 = vcombine.low %v6439, %v8251
      %v8253 = vcombine.low %v7349, %v7367
      %v8254 = vcombine.low %v7808, %v7816
      %v8255 = vcombine.low %v7818, %v7801
      %v8257 = vunpack.c.l.s4 1966171168
      %v8258 = vunpack.c.0.s8 %v8257
      %v8259 = vlaneseq
      %v8260 = vshrl.u32 %v8259, 7
      %v8261 = vsub.s32 %v8258, %v8260
      %v8262 = vrot.slane %v8254, %v8261
      %v8264 = vunpack.c.l.s4 1966171168
      %v8265 = vunpack.c.0.s8 %v8264
      %v8266 = vlaneseq
      %v8267 = vshrl.u32 %v8266, 7
      %v8268 = vsub.s32 %v8265, %v8267
      %v8269 = vrot.slane %v8255, %v8268
      %v8270 = vcombine.low %v8262, %v8269
      %v8272 = vunpack.c.l.s4 1966171168
      %v8273 = vunpack.c.0.s8 %v8272
      %v8274 = vlaneseq
      %v8275 = vshrl.u32 %v8274, 7
      %v8276 = vsub.s32 %v8273, %v8275
      %v8277 = vrot.slane %v8270, %v8276
      %v8278 = vcombine.low %v7374, %v8277
      %v8279 = vcombine.low %v7815, %v7817
      %v8280 = vcombine.low %v7819, %v7842
      %v8281 = vcombine.low %v7856, %v7857
      %v8282 = vcombine.low %v7858, %v7849
      %v8284 = vunpack.c.l.s4 1966171168
      %v8285 = vunpack.c.0.s8 %v8284
      %v8286 = vlaneseq
      %v8287 = vshrl.u32 %v8286, 7
      %v8288 = vsub.s32 %v8285, %v8287
      %v8289 = vrot.slane %v8279, %v8288
      %v8291 = vunpack.c.l.s4 1966171168
      %v8292 = vunpack.c.0.s8 %v8291
      %v8293 = vlaneseq
      %v8294 = vshrl.u32 %v8293, 7
      %v8295 = vsub.s32 %v8292, %v8294
      %v8296 = vrot.slane %v8280, %v8295
      %v8298 = vunpack.c.l.s4 1966171168
      %v8299 = vunpack.c.0.s8 %v8298
      %v8300 = vlaneseq
      %v8301 = vshrl.u32 %v8300, 7
      %v8302 = vsub.s32 %v8299, %v8301
      %v8303 = vrot.slane %v8281, %v8302
      %v8305 = vunpack.c.l.s4 1966171168
      %v8306 = vunpack.c.0.s8 %v8305
      %v8307 = vlaneseq
      %v8308 = vshrl.u32 %v8307, 7
      %v8309 = vsub.s32 %v8306, %v8308
      %v8310 = vrot.slane %v8282, %v8309
      %v8311 = vcombine.low %v8289, %v8296
      %v8312 = vcombine.low %v8303, %v8310
      %v8314 = vunpack.c.l.s4 1966171168
      %v8315 = vunpack.c.0.s8 %v8314
      %v8316 = vlaneseq
      %v8317 = vshrl.u32 %v8316, 7
      %v8318 = vsub.s32 %v8315, %v8317
      %v8319 = vrot.slane %v8311, %v8318
      %v8321 = vunpack.c.l.s4 1966171168
      %v8322 = vunpack.c.0.s8 %v8321
      %v8323 = vlaneseq
      %v8324 = vshrl.u32 %v8323, 7
      %v8325 = vsub.s32 %v8322, %v8324
      %v8326 = vrot.slane %v8312, %v8325
      %v8327 = vcombine.low %v8319, %v8326
      %v8329 = vunpack.c.l.s4 1966171168
      %v8330 = vunpack.c.0.s8 %v8329
      %v8331 = vlaneseq
      %v8332 = vshrl.u32 %v8331, 7
      %v8333 = vsub.s32 %v8330, %v8332
      %v8334 = vrot.slane %v8162, %v8333
      %v8336 = vunpack.c.l.s4 1966171168
      %v8337 = vunpack.c.0.s8 %v8336
      %v8338 = vlaneseq
      %v8339 = vshrl.u32 %v8338, 7
      %v8340 = vsub.s32 %v8337, %v8339
      %v8341 = vrot.slane %v8334, %v8340
      %8342 = vrot.lane.b32.xlu0 %v1744, 52
      %v8343 = vpop.permute.xlu0 %8342
      %8344 = vrot.lane.b32.xlu0 %v8171, 52
      %v8345 = vpop.permute.xlu0 %8344
      %8346 = vrot.lane.b32.xlu0 %v1842, 52
      %v8347 = vpop.permute.xlu0 %8346
      %8348 = vrot.lane.b32.xlu0 %v8180, 52
      %v8349 = vpop.permute.xlu0 %8348
      %8350 = vrot.lane.b32.xlu0 %v8189, 52
      %v8351 = vpop.permute.xlu0 %8350
      %8352 = vrot.lane.b32.xlu0 %v1989, 52
      %v8353 = vpop.permute.xlu0 %8352
      %8354 = vrot.lane.b32.xlu0 %v8190, 52
      %v8355 = vpop.permute.xlu0 %8354
      %8356 = vrot.lane.b32.xlu0 %v2087, 52
      %v8357 = vpop.permute.xlu0 %8356
      %8358 = vrot.lane.b32.xlu0 %v8199, 52
      %v8359 = vpop.permute.xlu0 %8358
      %8360 = vrot.lane.b32.xlu0 %v8208, 52
      %v8361 = vpop.permute.xlu0 %8360
      %8362 = vrot.lane.b32.xlu0 %v2234, 52
      %v8363 = vpop.permute.xlu0 %8362
      %8364 = vrot.lane.b32.xlu0 %v8217, 52
      %v8365 = vpop.permute.xlu0 %8364
      %8366 = vrot.lane.b32.xlu0 %v6363, 52
      %v8367 = vpop.permute.xlu0 %8366
      %8368 = vrot.lane.b32.xlu0 %v2381, 52
      %v8369 = vpop.permute.xlu0 %8368
      %8370 = vrot.lane.b32.xlu0 %v8226, 52
      %v8371 = vpop.permute.xlu0 %8370
      %8372 = vrot.lane.b32.xlu0 %v2479, 52
      %v8373 = vpop.permute.xlu0 %8372
      %8374 = vrot.lane.b32.xlu0 %v8235, 52
      %v8375 = vpop.permute.xlu0 %8374
      %8376 = vrot.lane.b32.xlu0 %v8252, 52
      %v8377 = vpop.permute.xlu0 %8376
      %8378 = vrot.lane.b32.xlu0 %v8253, 52
      %v8379 = vpop.permute.xlu0 %8378
      %8380 = vrot.lane.b32.xlu0 %v8278, 52
      %v8381 = vpop.permute.xlu0 %8380
      %8382 = vrot.lane.b32.xlu0 %v8327, 52
      %v8383 = vpop.permute.xlu0 %8382
      %8384 = vrot.lane.b32.xlu0 %v8341, 52
      %v8385 = vpop.permute.xlu0 %8384
      %vm8408 = vcmask 458144
      %8409 = vst.msk [vmem:[#allocation2] sm:$0xff] %vm8408, %v8343
      %8410 = vst.msk [vmem:[#allocation2 + $0x8] sm:$0xff] %vm8408, %v8345
      %8411 = vst.msk [vmem:[#allocation2 + $0x10] sm:$0xff] %vm8408, %v8347
      %8412 = vst.msk [vmem:[#allocation2 + $0x18] sm:$0xff] %vm8408, %v8349
      %8413 = vst.msk [vmem:[#allocation2 + $0x20] sm:$0xff] %vm8408, %v8351
      %8414 = vst.msk [vmem:[#allocation2 + $0x28] sm:$0xff] %vm8408, %v8353
      %8415 = vst.msk [vmem:[#allocation2 + $0x30] sm:$0xff] %vm8408, %v8355
      %8416 = vst.msk [vmem:[#allocation2 + $0x38] sm:$0xff] %vm8408, %v8357
      %8417 = vst.msk [vmem:[#allocation2 + $0x40] sm:$0xff] %vm8408, %v8359
      %8418 = vst.msk [vmem:[#allocation2 + $0x48] sm:$0xff] %vm8408, %v8361
      %8419 = vst.msk [vmem:[#allocation2 + $0x50] sm:$0xff] %vm8408, %v8363
      %8420 = vst.msk [vmem:[#allocation2 + $0x58] sm:$0xff] %vm8408, %v8365
      %8421 = vst.msk [vmem:[#allocation2 + $0x60] sm:$0xff] %vm8408, %v8367
      %8422 = vst.msk [vmem:[#allocation2 + $0x68] sm:$0xff] %vm8408, %v8369
      %8423 = vst.msk [vmem:[#allocation2 + $0x70] sm:$0xff] %vm8408, %v8371
      %8424 = vst.msk [vmem:[#allocation2 + $0x78] sm:$0xff] %vm8408, %v8373
      %8425 = vst.msk [vmem:[#allocation2 + $0x80] sm:$0xff] %vm8408, %v8375
      %8426 = vst.msk [vmem:[#allocation2 + $0x88] sm:$0xff] %vm8408, %v8377
      %8427 = vst.msk [vmem:[#allocation2 + $0x90] sm:$0xff] %vm8408, %v8379
      %8428 = vst.msk [vmem:[#allocation2 + $0x98] sm:$0xff] %vm8408, %v8381
      %8429 = vst.msk [vmem:[#allocation2 + $0xa0] sm:$0xff] %vm8408, %v8383
      %vm8430 = vcmask 450976
      %8431 = vst.msk [vmem:[#allocation2 + $0xa8] sm:$0x1] %vm8430, %v8385
      %v8432 = vcombine.high %v7849, %v7849
      %v8433 = vcombine.low %v5901, %v2969
      %v8435 = vunpack.c.l.s4 1966171168
      %v8436 = vunpack.c.0.s8 %v8435
      %v8437 = vlaneseq
      %v8438 = vshrl.u32 %v8437, 7
      %v8439 = vsub.s32 %v8436, %v8438
      %v8440 = vrot.slane %v8433, %v8439
      %v8441 = vcombine.low %v2978, %v8440
      %v8442 = vcombine.low %v4590, %v3053
      %v8444 = vunpack.c.l.s4 1966171168
      %v8445 = vunpack.c.0.s8 %v8444
      %v8446 = vlaneseq
      %v8447 = vshrl.u32 %v8446, 7
      %v8448 = vsub.s32 %v8445, %v8447
      %v8449 = vrot.slane %v8442, %v8448
      %v8450 = vcombine.low %v8449, %v3083
      %v8451 = vcombine.low %v3109, %v5929
      %v8453 = vunpack.c.l.s4 1966171168
      %v8454 = vunpack.c.0.s8 %v8453
      %v8455 = vlaneseq
      %v8456 = vshrl.u32 %v8455, 7
      %v8457 = vsub.s32 %v8454, %v8456
      %v8458 = vrot.slane %v8451, %v8457
      %v8459 = vcombine.low %v3125, %v8458
      %v8460 = vcombine.low %v7533, %v3230
      %v8461 = vcombine.low %v5956, %v3298
      %v8463 = vunpack.c.l.s4 1966171168
      %v8464 = vunpack.c.0.s8 %v8463
      %v8465 = vlaneseq
      %v8466 = vshrl.u32 %v8465, 7
      %v8467 = vsub.s32 %v8464, %v8466
      %v8468 = vrot.slane %v8461, %v8467
      %v8469 = vcombine.low %v8468, %v3328
      %v8470 = vcombine.low %v4758, %v3361
      %v8472 = vunpack.c.l.s4 1966171168
      %v8473 = vunpack.c.0.s8 %v8472
      %v8474 = vlaneseq
      %v8475 = vshrl.u32 %v8474, 7
      %v8476 = vsub.s32 %v8473, %v8475
      %v8477 = vrot.slane %v8470, %v8476
      %v8478 = vcombine.low %v3370, %v8477
      %v8479 = vcombine.low %v3438, %v5983
      %v8481 = vunpack.c.l.s4 1966171168
      %v8482 = vunpack.c.0.s8 %v8481
      %v8483 = vlaneseq
      %v8484 = vshrl.u32 %v8483, 7
      %v8485 = vsub.s32 %v8482, %v8484
      %v8486 = vrot.slane %v8479, %v8485
      %v8487 = vcombine.low %v8486, %v3475
      %v8488 = vcombine.low %v3517, %v7579
      %v8489 = vcombine.low %v6010, %v3606
      %v8491 = vunpack.c.l.s4 1966171168
      %v8492 = vunpack.c.0.s8 %v8491
      %v8493 = vlaneseq
      %v8494 = vshrl.u32 %v8493, 7
      %v8495 = vsub.s32 %v8492, %v8494
      %v8496 = vrot.slane %v8489, %v8495
      %v8497 = vcombine.low %v3615, %v8496
      %v8498 = vcombine.low %v4907, %v5345
      %v8500 = vunpack.c.l.s4 1966171168
      %v8501 = vunpack.c.0.s8 %v8500
      %v8502 = vlaneseq
      %v8503 = vshrl.u32 %v8502, 7
      %v8504 = vsub.s32 %v8501, %v8503
      %v8505 = vrot.slane %v8498, %v8504
      %v8506 = vcombine.low %v8505, %v5395
      %v8507 = vcombine.low %v5857, %v6599
      %v8509 = vunpack.c.l.s4 1966171168
      %v8510 = vunpack.c.0.s8 %v8509
      %v8511 = vlaneseq
      %v8512 = vshrl.u32 %v8511, 7
      %v8513 = vsub.s32 %v8510, %v8512
      %v8514 = vrot.slane %v8507, %v8513
      %v8515 = vcombine.low %v6037, %v8514
      %v8517 = vunpack.c.l.s4 1966171168
      %v8518 = vunpack.c.0.s8 %v8517
      %v8519 = vlaneseq
      %v8520 = vshrl.u32 %v8519, 7
      %v8521 = vsub.s32 %v8518, %v8520
      %v8522 = vrot.slane %v8515, %v8521
      %v8523 = vcombine.low %v5402, %v8522
      %v8524 = vcombine.low %v7638, %v7656
      %v8525 = vcombine.low %v7992, %v8012
      %v8527 = vunpack.c.l.s4 1966171168
      %v8528 = vunpack.c.0.s8 %v8527
      %v8529 = vlaneseq
      %v8530 = vshrl.u32 %v8529, 7
      %v8531 = vsub.s32 %v8528, %v8530
      %v8532 = vrot.slane %v8525, %v8531
      %v8533 = vcombine.low %v7663, %v8532
      %v8534 = vcombine.low %v7849, %v8162
      %v8536 = vunpack.c.l.s4 1966171168
      %v8537 = vunpack.c.0.s8 %v8536
      %v8538 = vlaneseq
      %v8539 = vshrl.u32 %v8538, 7
      %v8540 = vsub.s32 %v8537, %v8539
      %v8541 = vrot.slane %v8534, %v8540
      %v8542 = vcombine.low %v8019, %v8026
      %v8543 = vcombine.low %v8033, %v8541
      %v8545 = vunpack.c.l.s4 1966171168
      %v8546 = vunpack.c.0.s8 %v8545
      %v8547 = vlaneseq
      %v8548 = vshrl.u32 %v8547, 7
      %v8549 = vsub.s32 %v8546, %v8548
      %v8550 = vrot.slane %v8542, %v8549
      %v8552 = vunpack.c.l.s4 1966171168
      %v8553 = vunpack.c.0.s8 %v8552
      %v8554 = vlaneseq
      %v8555 = vshrl.u32 %v8554, 7
      %v8556 = vsub.s32 %v8553, %v8555
      %v8557 = vrot.slane %v8543, %v8556
      %v8558 = vcombine.low %v8550, %v8557
      %v8560 = vunpack.c.l.s4 1966171168
      %v8561 = vunpack.c.0.s8 %v8560
      %v8562 = vlaneseq
      %v8563 = vshrl.u32 %v8562, 7
      %v8564 = vsub.s32 %v8561, %v8563
      %v8565 = vrot.slane %v8432, %v8564
      %v8567 = vunpack.c.l.s4 1966171168
      %v8568 = vunpack.c.0.s8 %v8567
      %v8569 = vlaneseq
      %v8570 = vshrl.u32 %v8569, 7
      %v8571 = vsub.s32 %v8568, %v8570
      %v8572 = vrot.slane %v8565, %v8571
      %8573 = vrot.lane.b32.xlu0 %v2937, 56
      %v8574 = vpop.permute.xlu0 %8573
      %8575 = vrot.lane.b32.xlu0 %v8441, 56
      %v8576 = vpop.permute.xlu0 %8575
      %8577 = vrot.lane.b32.xlu0 %v3035, 56
      %v8578 = vpop.permute.xlu0 %8577
      %8579 = vrot.lane.b32.xlu0 %v8450, 56
      %v8580 = vpop.permute.xlu0 %8579
      %8581 = vrot.lane.b32.xlu0 %v8459, 56
      %v8582 = vpop.permute.xlu0 %8581
      %8583 = vrot.lane.b32.xlu0 %v3182, 56
      %v8584 = vpop.permute.xlu0 %8583
      %8585 = vrot.lane.b32.xlu0 %v8460, 56
      %v8586 = vpop.permute.xlu0 %8585
      %8587 = vrot.lane.b32.xlu0 %v3280, 56
      %v8588 = vpop.permute.xlu0 %8587
      %8589 = vrot.lane.b32.xlu0 %v8469, 56
      %v8590 = vpop.permute.xlu0 %8589
      %8591 = vrot.lane.b32.xlu0 %v8478, 56
      %v8592 = vpop.permute.xlu0 %8591
      %8593 = vrot.lane.b32.xlu0 %v3427, 56
      %v8594 = vpop.permute.xlu0 %8593
      %8595 = vrot.lane.b32.xlu0 %v8487, 56
      %v8596 = vpop.permute.xlu0 %8595
      %8597 = vrot.lane.b32.xlu0 %v8488, 56
      %v8598 = vpop.permute.xlu0 %8597
      %8599 = vrot.lane.b32.xlu0 %v3574, 56
      %v8600 = vpop.permute.xlu0 %8599
      %8601 = vrot.lane.b32.xlu0 %v8497, 56
      %v8602 = vpop.permute.xlu0 %8601
      %8603 = vrot.lane.b32.xlu0 %v3672, 56
      %v8604 = vpop.permute.xlu0 %8603
      %8605 = vrot.lane.b32.xlu0 %v8506, 56
      %v8606 = vpop.permute.xlu0 %8605
      %8607 = vrot.lane.b32.xlu0 %v8523, 56
      %v8608 = vpop.permute.xlu0 %8607
      %8609 = vrot.lane.b32.xlu0 %v8524, 56
      %v8610 = vpop.permute.xlu0 %8609
      %8611 = vrot.lane.b32.xlu0 %v8533, 56
      %v8612 = vpop.permute.xlu0 %8611
      %8613 = vrot.lane.b32.xlu0 %v8558, 56
      %v8614 = vpop.permute.xlu0 %8613
      %8615 = vrot.lane.b32.xlu0 %v8572, 56
      %v8616 = vpop.permute.xlu0 %8615
      %vm8639 = vcmask 490944
      %8640 = vst.msk [vmem:[#allocation2] sm:$0xff] %vm8639, %v8574
      %8641 = vst.msk [vmem:[#allocation2 + $0x8] sm:$0xff] %vm8639, %v8576
      %8642 = vst.msk [vmem:[#allocation2 + $0x10] sm:$0xff] %vm8639, %v8578
      %8643 = vst.msk [vmem:[#allocation2 + $0x18] sm:$0xff] %vm8639, %v8580
      %8644 = vst.msk [vmem:[#allocation2 + $0x20] sm:$0xff] %vm8639, %v8582
      %8645 = vst.msk [vmem:[#allocation2 + $0x28] sm:$0xff] %vm8639, %v8584
      %8646 = vst.msk [vmem:[#allocation2 + $0x30] sm:$0xff] %vm8639, %v8586
      %8647 = vst.msk [vmem:[#allocation2 + $0x38] sm:$0xff] %vm8639, %v8588
      %8648 = vst.msk [vmem:[#allocation2 + $0x40] sm:$0xff] %vm8639, %v8590
      %8649 = vst.msk [vmem:[#allocation2 + $0x48] sm:$0xff] %vm8639, %v8592
      %8650 = vst.msk [vmem:[#allocation2 + $0x50] sm:$0xff] %vm8639, %v8594
      %8651 = vst.msk [vmem:[#allocation2 + $0x58] sm:$0xff] %vm8639, %v8596
      %8652 = vst.msk [vmem:[#allocation2 + $0x60] sm:$0xff] %vm8639, %v8598
      %8653 = vst.msk [vmem:[#allocation2 + $0x68] sm:$0xff] %vm8639, %v8600
      %8654 = vst.msk [vmem:[#allocation2 + $0x70] sm:$0xff] %vm8639, %v8602
      %8655 = vst.msk [vmem:[#allocation2 + $0x78] sm:$0xff] %vm8639, %v8604
      %8656 = vst.msk [vmem:[#allocation2 + $0x80] sm:$0xff] %vm8639, %v8606
      %8657 = vst.msk [vmem:[#allocation2 + $0x88] sm:$0xff] %vm8639, %v8608
      %8658 = vst.msk [vmem:[#allocation2 + $0x90] sm:$0xff] %vm8639, %v8610
      %8659 = vst.msk [vmem:[#allocation2 + $0x98] sm:$0xff] %vm8639, %v8612
      %8660 = vst.msk [vmem:[#allocation2 + $0xa0] sm:$0xff] %vm8639, %v8614
      %vm8661 = vcmask 483776
      %8662 = vst.msk [vmem:[#allocation2 + $0xa8] sm:$0x1] %vm8661, %v8616
      %v8663 = vcombine.high %v8162, %v8162
      %v8664 = vcombine.low %v6218, %v1804
      %v8666 = vunpack.c.l.s4 1966171168
      %v8667 = vunpack.c.0.s8 %v8666
      %v8668 = vlaneseq
      %v8669 = vshrl.u32 %v8668, 7
      %v8670 = vsub.s32 %v8667, %v8669
      %v8671 = vrot.slane %v8664, %v8670
      %v8672 = vcombine.low %v3948, %v8671
      %v8673 = vcombine.low %v6235, %v1867
      %v8675 = vunpack.c.l.s4 1966171168
      %v8676 = vunpack.c.0.s8 %v8675
      %v8677 = vlaneseq
      %v8678 = vshrl.u32 %v8677, 7
      %v8679 = vsub.s32 %v8676, %v8678
      %v8680 = vrot.slane %v8673, %v8679
      %v8681 = vcombine.low %v8680, %v4005
      %v8682 = vcombine.low %v4014, %v6261
      %v8684 = vunpack.c.l.s4 1966171168
      %v8685 = vunpack.c.0.s8 %v8684
      %v8686 = vlaneseq
      %v8687 = vshrl.u32 %v8686, 7
      %v8688 = vsub.s32 %v8685, %v8687
      %v8689 = vrot.slane %v8682, %v8688
      %v8690 = vcombine.low %v4023, %v8689
      %v8691 = vcombine.low %v4057, %v6278
      %v8693 = vunpack.c.l.s4 1966171168
      %v8694 = vunpack.c.0.s8 %v8693
      %v8695 = vlaneseq
      %v8696 = vshrl.u32 %v8695, 7
      %v8697 = vsub.s32 %v8694, %v8696
      %v8698 = vrot.slane %v8691, %v8697
      %v8699 = vcombine.low %v8698, %v4080
      %v8700 = vcombine.low %v6303, %v2112
      %v8702 = vunpack.c.l.s4 1966171168
      %v8703 = vunpack.c.0.s8 %v8702
      %v8704 = vlaneseq
      %v8705 = vshrl.u32 %v8704, 7
      %v8706 = vsub.s32 %v8703, %v8705
      %v8707 = vrot.slane %v8700, %v8706
      %v8708 = vcombine.low %v8707, %v4122
      %v8709 = vcombine.low %v6320, %v2196
      %v8711 = vunpack.c.l.s4 1966171168
      %v8712 = vunpack.c.0.s8 %v8711
      %v8713 = vlaneseq
      %v8714 = vshrl.u32 %v8713, 7
      %v8715 = vsub.s32 %v8712, %v8714
      %v8716 = vrot.slane %v8709, %v8715
      %v8717 = vcombine.low %v4148, %v8716
      %v8718 = vcombine.low %v4181, %v6337
      %v8720 = vunpack.c.l.s4 1966171168
      %v8721 = vunpack.c.0.s8 %v8720
      %v8722 = vlaneseq
      %v8723 = vshrl.u32 %v8722, 7
      %v8724 = vsub.s32 %v8721, %v8723
      %v8725 = vrot.slane %v8718, %v8724
      %v8726 = vcombine.low %v8725, %v4197
      %v8727 = vcombine.low %v4207, %v6371
      %v8729 = vunpack.c.l.s4 1966171168
      %v8730 = vunpack.c.0.s8 %v8729
      %v8731 = vlaneseq
      %v8732 = vshrl.u32 %v8731, 7
      %v8733 = vsub.s32 %v8730, %v8732
      %v8734 = vrot.slane %v8727, %v8733
      %v8735 = vcombine.low %v4223, %v8734
      %v8736 = vcombine.low %v6388, %v2441
      %v8738 = vunpack.c.l.s4 1966171168
      %v8739 = vunpack.c.0.s8 %v8738
      %v8740 = vlaneseq
      %v8741 = vshrl.u32 %v8740, 7
      %v8742 = vsub.s32 %v8739, %v8741
      %v8743 = vrot.slane %v8736, %v8742
      %v8744 = vcombine.low %v4265, %v8743
      %v8745 = vcombine.low %v6405, %v5694
      %v8747 = vunpack.c.l.s4 1966171168
      %v8748 = vunpack.c.0.s8 %v8747
      %v8749 = vlaneseq
      %v8750 = vshrl.u32 %v8749, 7
      %v8751 = vsub.s32 %v8748, %v8750
      %v8752 = vrot.slane %v8745, %v8751
      %v8753 = vcombine.low %v8752, %v5744
      %v8754 = vcombine.low %v6159, %v6601
      %v8756 = vunpack.c.l.s4 1966171168
      %v8757 = vunpack.c.0.s8 %v8756
      %v8758 = vlaneseq
      %v8759 = vshrl.u32 %v8758, 7
      %v8760 = vsub.s32 %v8757, %v8759
      %v8761 = vrot.slane %v8754, %v8760
      %v8762 = vcombine.low %v6430, %v8761
      %v8764 = vunpack.c.l.s4 1966171168
      %v8765 = vunpack.c.0.s8 %v8764
      %v8766 = vlaneseq
      %v8767 = vshrl.u32 %v8766, 7
      %v8768 = vsub.s32 %v8765, %v8767
      %v8769 = vrot.slane %v8762, %v8768
      %v8770 = vcombine.low %v5751, %v8769
      %v8771 = vcombine.low %v7242, %v7480
      %v8773 = vunpack.c.l.s4 1966171168
      %v8774 = vunpack.c.0.s8 %v8773
      %v8775 = vlaneseq
      %v8776 = vshrl.u32 %v8775, 7
      %v8777 = vsub.s32 %v8774, %v8776
      %v8778 = vrot.slane %v8771, %v8777
      %v8779 = vcombine.low %v7358, %v8778
      %v8780 = vcombine.low %v8269, %v8289
      %v8782 = vunpack.c.l.s4 1966171168
      %v8783 = vunpack.c.0.s8 %v8782
      %v8784 = vlaneseq
      %v8785 = vshrl.u32 %v8784, 7
      %v8786 = vsub.s32 %v8783, %v8785
      %v8787 = vrot.slane %v8779, %v8786
      %v8789 = vunpack.c.l.s4 1966171168
      %v8790 = vunpack.c.0.s8 %v8789
      %v8791 = vlaneseq
      %v8792 = vshrl.u32 %v8791, 7
      %v8793 = vsub.s32 %v8790, %v8792
      %v8794 = vrot.slane %v8780, %v8793
      %v8795 = vcombine.low %v8787, %v8794
      %v8796 = vcombine.low %v8162, %v8432
      %v8798 = vunpack.c.l.s4 1966171168
      %v8799 = vunpack.c.0.s8 %v8798
      %v8800 = vlaneseq
      %v8801 = vshrl.u32 %v8800, 7
      %v8802 = vsub.s32 %v8799, %v8801
      %v8803 = vrot.slane %v8796, %v8802
      %v8804 = vcombine.low %v8296, %v8303
      %v8805 = vcombine.low %v8310, %v8803
      %v8807 = vunpack.c.l.s4 1966171168
      %v8808 = vunpack.c.0.s8 %v8807
      %v8809 = vlaneseq
      %v8810 = vshrl.u32 %v8809, 7
      %v8811 = vsub.s32 %v8808, %v8810
      %v8812 = vrot.slane %v8804, %v8811
      %v8814 = vunpack.c.l.s4 1966171168
      %v8815 = vunpack.c.0.s8 %v8814
      %v8816 = vlaneseq
      %v8817 = vshrl.u32 %v8816, 7
      %v8818 = vsub.s32 %v8815, %v8817
      %v8819 = vrot.slane %v8805, %v8818
      %v8820 = vcombine.low %v8812, %v8819
      %v8822 = vunpack.c.l.s4 1966171168
      %v8823 = vunpack.c.0.s8 %v8822
      %v8824 = vlaneseq
      %v8825 = vshrl.u32 %v8824, 7
      %v8826 = vsub.s32 %v8823, %v8825
      %v8827 = vrot.slane %v8663, %v8826
      %v8829 = vunpack.c.l.s4 1966171168
      %v8830 = vunpack.c.0.s8 %v8829
      %v8831 = vlaneseq
      %v8832 = vshrl.u32 %v8831, 7
      %v8833 = vsub.s32 %v8830, %v8832
      %v8834 = vrot.slane %v8827, %v8833
      %8835 = vrot.lane.b32.xlu0 %v3931, 60
      %v8836 = vpop.permute.xlu0 %8835
      %8837 = vrot.lane.b32.xlu0 %v8672, 60
      %v8838 = vpop.permute.xlu0 %8837
      %8839 = vrot.lane.b32.xlu0 %v3981, 60
      %v8840 = vpop.permute.xlu0 %8839
      %8841 = vrot.lane.b32.xlu0 %v8681, 60
      %v8842 = vpop.permute.xlu0 %8841
      %8843 = vrot.lane.b32.xlu0 %v8690, 60
      %v8844 = vpop.permute.xlu0 %8843
      %8845 = vrot.lane.b32.xlu0 %v4048, 60
      %v8846 = vpop.permute.xlu0 %8845
      %8847 = vrot.lane.b32.xlu0 %v8699, 60
      %v8848 = vpop.permute.xlu0 %8847
      %8849 = vrot.lane.b32.xlu0 %v4106, 60
      %v8850 = vpop.permute.xlu0 %8849
      %8851 = vrot.lane.b32.xlu0 %v8708, 60
      %v8852 = vpop.permute.xlu0 %8851
      %8853 = vrot.lane.b32.xlu0 %v8717, 60
      %v8854 = vpop.permute.xlu0 %8853
      %8855 = vrot.lane.b32.xlu0 %v4173, 60
      %v8856 = vpop.permute.xlu0 %8855
      %8857 = vrot.lane.b32.xlu0 %v8726, 60
      %v8858 = vpop.permute.xlu0 %8857
      %8859 = vrot.lane.b32.xlu0 %v8735, 60
      %v8860 = vpop.permute.xlu0 %8859
      %8861 = vrot.lane.b32.xlu0 %v4248, 60
      %v8862 = vpop.permute.xlu0 %8861
      %8863 = vrot.lane.b32.xlu0 %v8744, 60
      %v8864 = vpop.permute.xlu0 %8863
      %8865 = vrot.lane.b32.xlu0 %v4298, 60
      %v8866 = vpop.permute.xlu0 %8865
      %8867 = vrot.lane.b32.xlu0 %v8753, 60
      %v8868 = vpop.permute.xlu0 %8867
      %8869 = vrot.lane.b32.xlu0 %v8770, 60
      %v8870 = vpop.permute.xlu0 %8869
      %8871 = vrot.lane.b32.xlu0 %v6833, 60
      %v8872 = vpop.permute.xlu0 %8871
      %8873 = vrot.lane.b32.xlu0 %v8795, 60
      %v8874 = vpop.permute.xlu0 %8873
      %8875 = vrot.lane.b32.xlu0 %v8820, 60
      %v8876 = vpop.permute.xlu0 %8875
      %8877 = vrot.lane.b32.xlu0 %v8834, 60
      %v8878 = vpop.permute.xlu0 %8877
      %vm8901 = vcmask 523744
      %8902 = vst.msk [vmem:[#allocation2] sm:$0xff] %vm8901, %v8836
      %8903 = vst.msk [vmem:[#allocation2 + $0x8] sm:$0xff] %vm8901, %v8838
      %8904 = vst.msk [vmem:[#allocation2 + $0x10] sm:$0xff] %vm8901, %v8840
      %8905 = vst.msk [vmem:[#allocation2 + $0x18] sm:$0xff] %vm8901, %v8842
      %8906 = vst.msk [vmem:[#allocation2 + $0x20] sm:$0xff] %vm8901, %v8844
      %8907 = vst.msk [vmem:[#allocation2 + $0x28] sm:$0xff] %vm8901, %v8846
      %8908 = vst.msk [vmem:[#allocation2 + $0x30] sm:$0xff] %vm8901, %v8848
      %8909 = vst.msk [vmem:[#allocation2 + $0x38] sm:$0xff] %vm8901, %v8850
      %8910 = vst.msk [vmem:[#allocation2 + $0x40] sm:$0xff] %vm8901, %v8852
      %8911 = vst.msk [vmem:[#allocation2 + $0x48] sm:$0xff] %vm8901, %v8854
      %8912 = vst.msk [vmem:[#allocation2 + $0x50] sm:$0xff] %vm8901, %v8856
      %8913 = vst.msk [vmem:[#allocation2 + $0x58] sm:$0xff] %vm8901, %v8858
      %8914 = vst.msk [vmem:[#allocation2 + $0x60] sm:$0xff] %vm8901, %v8860
      %8915 = vst.msk [vmem:[#allocation2 + $0x68] sm:$0xff] %vm8901, %v8862
      %8916 = vst.msk [vmem:[#allocation2 + $0x70] sm:$0xff] %vm8901, %v8864
      %8917 = vst.msk [vmem:[#allocation2 + $0x78] sm:$0xff] %vm8901, %v8866
      %8918 = vst.msk [vmem:[#allocation2 + $0x80] sm:$0xff] %vm8901, %v8868
      %8919 = vst.msk [vmem:[#allocation2 + $0x88] sm:$0xff] %vm8901, %v8870
      %8920 = vst.msk [vmem:[#allocation2 + $0x90] sm:$0xff] %vm8901, %v8872
      %8921 = vst.msk [vmem:[#allocation2 + $0x98] sm:$0xff] %vm8901, %v8874
      %8922 = vst.msk [vmem:[#allocation2 + $0xa0] sm:$0xff] %vm8901, %v8876
      %vm8923 = vcmask 516576
      %8924 = vst.msk [vmem:[#allocation2 + $0xa8] sm:$0x1] %vm8923, %v8878
      %v8925 = vld [vmem:[#allocation2] sm:$0xff]
      %v8926 = vld [vmem:[#allocation2 + $0x8] sm:$0xff]
      %v8927 = vld [vmem:[#allocation2 + $0x10] sm:$0xff]
      %v8928 = vld [vmem:[#allocation2 + $0x18] sm:$0xff]
      %v8929 = vld [vmem:[#allocation2 + $0x20] sm:$0xff]
      %v8930 = vld [vmem:[#allocation2 + $0x28] sm:$0xff]
      %v8931 = vld [vmem:[#allocation2 + $0x30] sm:$0xff]
      %v8932 = vld [vmem:[#allocation2 + $0x38] sm:$0xff]
      %v8933 = vld [vmem:[#allocation2 + $0x40] sm:$0xff]
      %v8934 = vld [vmem:[#allocation2 + $0x48] sm:$0xff]
      %v8935 = vld [vmem:[#allocation2 + $0x50] sm:$0xff]
      %v8936 = vld [vmem:[#allocation2 + $0x58] sm:$0xff]
      %v8937 = vld [vmem:[#allocation2 + $0x60] sm:$0xff]
      %v8938 = vld [vmem:[#allocation2 + $0x68] sm:$0xff]
      %v8939 = vld [vmem:[#allocation2 + $0x70] sm:$0xff]
      %v8940 = vld [vmem:[#allocation2 + $0x78] sm:$0xff]
      %v8941 = vld [vmem:[#allocation2 + $0x80] sm:$0xff]
      %v8942 = vld [vmem:[#allocation2 + $0x88] sm:$0xff]
      %v8943 = vld [vmem:[#allocation2 + $0x90] sm:$0xff]
      %v8944 = vld [vmem:[#allocation2 + $0x98] sm:$0xff]
      %v8945 = vld [vmem:[#allocation2 + $0xa0] sm:$0xff]
      %v8946 = vld [vmem:[#allocation2 + $0xa8] sm:$0x1]
      %v8947 = vld [vmem:[%s1] sm:$0xff]
      %v8948 = vld [vmem:[%s1 + $0x8] sm:$0xff]
      %v8949 = vld [vmem:[%s1 + $0x10] sm:$0xff]
      %v8950 = vld [vmem:[%s1 + $0x18] sm:$0xff]
      %v8951 = vld [vmem:[%s1 + $0x20] sm:$0xff]
      %v8952 = vld [vmem:[%s1 + $0x28] sm:$0xff]
      %v8953 = vld [vmem:[%s1 + $0x30] sm:$0xff]
      %v8954 = vld [vmem:[%s1 + $0x38] sm:$0xff]
      %v8955 = vld [vmem:[%s1 + $0x40] sm:$0xff]
      %v8956 = vld [vmem:[%s1 + $0x48] sm:$0xff]
      %v8957 = vld [vmem:[%s1 + $0x50] sm:$0xff]
      %v8958 = vld [vmem:[%s1 + $0x58] sm:$0xff]
      %v8959 = vld [vmem:[%s1 + $0x60] sm:$0xff]
      %v8960 = vld [vmem:[%s1 + $0x68] sm:$0xff]
      %v8961 = vld [vmem:[%s1 + $0x70] sm:$0xff]
      %v8962 = vld [vmem:[%s1 + $0x78] sm:$0xff]
      %8963 = vmatprep.subr.mxu0 0.0
      %8964 = vmatpush1.msra.mxu0 %v8962
      %8965 = vmatprep.subr.mxu0 0.0
      %8966 = vmatpush1.msra.mxu0 %v8961
      %8967 = vmatprep.subr.mxu0 0.0
      %8968 = vmatpush1.msra.mxu0 %v8960
      %8969 = vmatprep.subr.mxu0 0.0
      %8970 = vmatpush1.msra.mxu0 %v8959
      %8971 = vmatprep.subr.mxu0 0.0
      %8972 = vmatpush1.msra.mxu0 %v8958
      %8973 = vmatprep.subr.mxu0 0.0
      %8974 = vmatpush1.msra.mxu0 %v8957
      %8975 = vmatprep.subr.mxu0 0.0
      %8976 = vmatpush1.msra.mxu0 %v8956
      %8977 = vmatprep.subr.mxu0 0.0
      %8978 = vmatpush1.msra.mxu0 %v8955
      %8979 = vmatprep.subr.mxu0 0.0
      %8980 = vmatpush1.msra.mxu0 %v8954
      %8981 = vmatprep.subr.mxu0 0.0
      %8982 = vmatpush1.msra.mxu0 %v8953
      %8983 = vmatprep.subr.mxu0 0.0
      %8984 = vmatpush1.msra.mxu0 %v8952
      %8985 = vmatprep.subr.mxu0 0.0
      %8986 = vmatpush1.msra.mxu0 %v8951
      %8987 = vmatprep.subr.mxu0 0.0
      %8988 = vmatpush1.msra.mxu0 %v8950
      %8989 = vmatprep.subr.mxu0 0.0
      %8990 = vmatpush1.msra.mxu0 %v8949
      %8991 = vmatprep.subr.mxu0 0.0
      %8992 = vmatpush1.msra.mxu0 %v8948
      %8993 = vmatprep.subr.mxu0 0.0
      %8994 = vmatpush1.msra.mxu0 %v8947
      %8995 = vmatprep.subr.mxu0 0.0
      %8996 = vmatpush2.msra.mxu0 0.0
      %8997 = vmatprep.subr.mxu0 0.0
      %8998 = vmatpush2.msra.mxu0 0.0
      %8999 = vmatprep.subr.mxu0 0.0
      %9000 = vmatpush2.msra.mxu0 0.0
      %9001 = vmatprep.subr.mxu0 0.0
      %9002 = vmatpush2.msra.mxu0 0.0
      %9003 = vmatprep.subr.mxu0 0.0
      %9004 = vmatpush2.msra.mxu0 0.0
      %9005 = vmatprep.subr.mxu0 0.0
      %9006 = vmatpush2.msra.mxu0 0.0
      %9007 = vmatprep.subr.mxu0 0.0
      %9008 = vmatpush2.msra.mxu0 0.0
      %9009 = vmatprep.subr.mxu0 0.0
      %9010 = vmatpush2.msra.mxu0 0.0
      %9011 = vmatprep.subr.mxu0 0.0
      %9012 = vmatpush2.msra.mxu0 0.0
      %9013 = vmatprep.subr.mxu0 0.0
      %9014 = vmatpush2.msra.mxu0 0.0
      %9015 = vmatprep.subr.mxu0 0.0
      %9016 = vmatpush2.msra.mxu0 0.0
      %9017 = vmatprep.subr.mxu0 0.0
      %9018 = vmatpush2.msra.mxu0 0.0
      %9019 = vmatprep.subr.mxu0 0.0
      %9020 = vmatpush2.msra.mxu0 0.0
      %9021 = vmatprep.subr.mxu0 0.0
      %9022 = vmatpush2.msra.mxu0 0.0
      %9023 = vmatprep.subr.mxu0 0.0
      %9024 = vmatpush2.msra.mxu0 0.0
      %9025 = vmatprep.subr.mxu0 0.0
      %9026 = vmatpush2.msra.mxu0 0.0
      %9027 = vmatprep.mubr.f32.mxu0 0.0
      %9028 = vmatmul.mubr.f32.gmra.mxu0 %v8925
      %v9029 = vpop.f32.mrf.mxu0
      %v9030 = vadd.f32 0.0, %v9029
      %v9031 = vpop.f32.mrf.mxu0
      %9032 = vmatprep.mubr.f32.mxu0 0.0
      %9033 = vmatmul.mubr.f32.gmra.mxu0 %v8926
      %v9034 = vpop.f32.mrf.mxu0
      %v9035 = vadd.f32 0.0, %v9034
      %v9036 = vpop.f32.mrf.mxu0
      %9037 = vmatprep.mubr.f32.mxu0 0.0
      %9038 = vmatmul.mubr.f32.gmra.mxu0 %v8927
      %v9039 = vpop.f32.mrf.mxu0
      %v9040 = vadd.f32 0.0, %v9039
      %v9041 = vpop.f32.mrf.mxu0
      %9042 = vmatprep.mubr.f32.mxu0 0.0
      %9043 = vmatmul.mubr.f32.gmra.mxu0 %v8928
      %v9044 = vpop.f32.mrf.mxu0
      %v9045 = vadd.f32 0.0, %v9044
      %v9046 = vpop.f32.mrf.mxu0
      %9047 = vmatprep.mubr.f32.mxu0 0.0
      %9048 = vmatmul.mubr.f32.gmra.mxu0 %v8929
      %v9049 = vpop.f32.mrf.mxu0
      %v9050 = vadd.f32 0.0, %v9049
      %v9051 = vpop.f32.mrf.mxu0
      %9052 = vmatprep.mubr.f32.mxu0 0.0
      %9053 = vmatmul.mubr.f32.gmra.mxu0 %v8930
      %v9054 = vpop.f32.mrf.mxu0
      %v9055 = vadd.f32 0.0, %v9054
      %v9056 = vpop.f32.mrf.mxu0
      %9057 = vmatprep.mubr.f32.mxu0 0.0
      %9058 = vmatmul.mubr.f32.gmra.mxu0 %v8931
      %v9059 = vpop.f32.mrf.mxu0
      %v9060 = vadd.f32 0.0, %v9059
      %v9061 = vpop.f32.mrf.mxu0
      %9062 = vmatprep.mubr.f32.mxu0 0.0
      %9063 = vmatmul.mubr.f32.gmra.mxu0 %v8932
      %v9064 = vpop.f32.mrf.mxu0
      %v9065 = vadd.f32 0.0, %v9064
      %v9066 = vpop.f32.mrf.mxu0
      %9067 = vmatprep.mubr.f32.mxu0 0.0
      %9068 = vmatmul.mubr.f32.gmra.mxu0 %v8933
      %v9069 = vpop.f32.mrf.mxu0
      %v9070 = vadd.f32 0.0, %v9069
      %v9071 = vpop.f32.mrf.mxu0
      %9072 = vmatprep.mubr.f32.mxu0 0.0
      %9073 = vmatmul.mubr.f32.gmra.mxu0 %v8934
      %v9074 = vpop.f32.mrf.mxu0
      %v9075 = vadd.f32 0.0, %v9074
      %v9076 = vpop.f32.mrf.mxu0
      %9077 = vmatprep.mubr.f32.mxu0 0.0
      %9078 = vmatmul.mubr.f32.gmra.mxu0 %v8935
      %v9079 = vpop.f32.mrf.mxu0
      %v9080 = vadd.f32 0.0, %v9079
      %v9081 = vpop.f32.mrf.mxu0
      %9082 = vmatprep.mubr.f32.mxu0 0.0
      %9083 = vmatmul.mubr.f32.gmra.mxu0 %v8936
      %v9084 = vpop.f32.mrf.mxu0
      %v9085 = vadd.f32 0.0, %v9084
      %v9086 = vpop.f32.mrf.mxu0
      %9087 = vmatprep.mubr.f32.mxu0 0.0
      %9088 = vmatmul.mubr.f32.gmra.mxu0 %v8937
      %v9089 = vpop.f32.mrf.mxu0
      %v9090 = vadd.f32 0.0, %v9089
      %v9091 = vpop.f32.mrf.mxu0
      %9092 = vmatprep.mubr.f32.mxu0 0.0
      %9093 = vmatmul.mubr.f32.gmra.mxu0 %v8938
      %v9094 = vpop.f32.mrf.mxu0
      %v9095 = vadd.f32 0.0, %v9094
      %v9096 = vpop.f32.mrf.mxu0
      %9097 = vmatprep.mubr.f32.mxu0 0.0
      %9098 = vmatmul.mubr.f32.gmra.mxu0 %v8939
      %v9099 = vpop.f32.mrf.mxu0
      %v9100 = vadd.f32 0.0, %v9099
      %v9101 = vpop.f32.mrf.mxu0
      %9102 = vmatprep.mubr.f32.mxu0 0.0
      %9103 = vmatmul.mubr.f32.gmra.mxu0 %v8940
      %v9104 = vpop.f32.mrf.mxu0
      %v9105 = vadd.f32 0.0, %v9104
      %v9106 = vpop.f32.mrf.mxu0
      %9107 = vmatprep.mubr.f32.mxu0 0.0
      %9108 = vmatmul.mubr.f32.gmra.mxu0 %v8941
      %v9109 = vpop.f32.mrf.mxu0
      %v9110 = vadd.f32 0.0, %v9109
      %v9111 = vpop.f32.mrf.mxu0
      %9112 = vmatprep.mubr.f32.mxu0 0.0
      %9113 = vmatmul.mubr.f32.gmra.mxu0 %v8942
      %v9114 = vpop.f32.mrf.mxu0
      %v9115 = vadd.f32 0.0, %v9114
      %v9116 = vpop.f32.mrf.mxu0
      %9117 = vmatprep.mubr.f32.mxu0 0.0
      %9118 = vmatmul.mubr.f32.gmra.mxu0 %v8943
      %v9119 = vpop.f32.mrf.mxu0
      %v9120 = vadd.f32 0.0, %v9119
      %v9121 = vpop.f32.mrf.mxu0
      %9122 = vmatprep.mubr.f32.mxu0 0.0
      %9123 = vmatmul.mubr.f32.gmra.mxu0 %v8944
      %v9124 = vpop.f32.mrf.mxu0
      %v9125 = vadd.f32 0.0, %v9124
      %v9126 = vpop.f32.mrf.mxu0
      %9127 = vmatprep.mubr.f32.mxu0 0.0
      %9128 = vmatmul.mubr.f32.gmra.mxu0 %v8945
      %v9129 = vpop.f32.mrf.mxu0
      %v9130 = vadd.f32 0.0, %v9129
      %v9131 = vpop.f32.mrf.mxu0
      %9132 = vmatprep.mubr.f32.mxu0 0.0
      %9133 = vmatmul.mubr.f32.gmra.mxu0 %v8946
      %v9134 = vpop.f32.mrf.mxu0
      %v9135 = vadd.f32 0.0, %v9134
      %v9136 = vpop.f32.mrf.mxu0
      %9137 = vdwg.mxu0
      %v9138 = vadd.f32 %v9030, %v9035
      %v9139 = vadd.f32 %v9138, %v9040
      %v9140 = vadd.f32 %v9139, %v9045
      %v9141 = vadd.f32 %v9140, %v9050
      %v9142 = vadd.f32 %v9141, %v9055
      %v9143 = vadd.f32 %v9142, %v9060
      %v9144 = vadd.f32 %v9143, %v9065
      %v9145 = vadd.f32 %v9144, %v9070
      %v9146 = vadd.f32 %v9145, %v9075
      %v9147 = vadd.f32 %v9146, %v9080
      %v9148 = vadd.f32 %v9147, %v9085
      %v9149 = vadd.f32 %v9148, %v9090
      %v9150 = vadd.f32 %v9149, %v9095
      %v9151 = vadd.f32 %v9150, %v9100
      %v9152 = vadd.f32 %v9151, %v9105
      %v9153 = vadd.f32 %v9152, %v9110
      %v9154 = vadd.f32 %v9153, %v9115
      %v9155 = vadd.f32 %v9154, %v9120
      %v9156 = vadd.f32 %v9155, %v9125
      %v9157 = vadd.f32 %v9156, %v9130
      %vm9158 = vcmask 1040384
      %v9159 = vsel %vm9158, %v9135, 0.0
      %v9160 = vadd.f32 %v9157, %v9159
      %v9161 = vrot.slane %v9160, 4
      %v9162 = vadd.f32 %v9160, %v9161
      %v9163 = vrot.slane %v9162, 2
      %v9164 = vadd.f32 %v9162, %v9163
      %v9165 = vrot.slane %v9164, 1
      %v9166 = vadd.f32 %v9164, %v9165
      %v9167 = vrcp.pop 169.0
      %v9168 = vmul.f32 %v9166, %v9167
      %v9169 = vsub.f32 %v9030, %v9168
      %v9170 = vsub.f32 %v9035, %v9168
      %v9171 = vsub.f32 %v9040, %v9168
      %v9172 = vsub.f32 %v9045, %v9168
      %v9173 = vsub.f32 %v9050, %v9168
      %v9174 = vsub.f32 %v9055, %v9168
      %v9175 = vsub.f32 %v9060, %v9168
      %v9176 = vsub.f32 %v9065, %v9168
      %v9177 = vsub.f32 %v9070, %v9168
      %v9178 = vsub.f32 %v9075, %v9168
      %v9179 = vsub.f32 %v9080, %v9168
      %v9180 = vsub.f32 %v9085, %v9168
      %v9181 = vsub.f32 %v9090, %v9168
      %v9182 = vsub.f32 %v9095, %v9168
      %v9183 = vsub.f32 %v9100, %v9168
      %v9184 = vsub.f32 %v9105, %v9168
      %v9185 = vsub.f32 %v9110, %v9168
      %v9186 = vsub.f32 %v9115, %v9168
      %v9187 = vsub.f32 %v9120, %v9168
      %v9188 = vsub.f32 %v9125, %v9168
      %v9189 = vsub.f32 %v9130, %v9168
      %v9190 = vsub.f32 %v9135, %v9168
      %v9191 = vmul.f32 %v9169, %v9169
      %v9192 = vmul.f32 %v9170, %v9170
      %v9193 = vmul.f32 %v9171, %v9171
      %v9194 = vmul.f32 %v9172, %v9172
      %v9195 = vmul.f32 %v9173, %v9173
      %v9196 = vmul.f32 %v9174, %v9174
      %v9197 = vmul.f32 %v9175, %v9175
      %v9198 = vmul.f32 %v9176, %v9176
      %v9199 = vmul.f32 %v9177, %v9177
      %v9200 = vmul.f32 %v9178, %v9178
      %v9201 = vmul.f32 %v9179, %v9179
      %v9202 = vmul.f32 %v9180, %v9180
      %v9203 = vmul.f32 %v9181, %v9181
      %v9204 = vmul.f32 %v9182, %v9182
      %v9205 = vmul.f32 %v9183, %v9183
      %v9206 = vmul.f32 %v9184, %v9184
      %v9207 = vmul.f32 %v9185, %v9185
      %v9208 = vmul.f32 %v9186, %v9186
      %v9209 = vmul.f32 %v9187, %v9187
      %v9210 = vmul.f32 %v9188, %v9188
      %v9211 = vmul.f32 %v9189, %v9189
      %v9212 = vmul.f32 %v9190, %v9190
      %v9213 = vadd.f32 %v9191, %v9192
      %v9214 = vadd.f32 %v9213, %v9193
      %v9215 = vadd.f32 %v9214, %v9194
      %v9216 = vadd.f32 %v9215, %v9195
      %v9217 = vadd.f32 %v9216, %v9196
      %v9218 = vadd.f32 %v9217, %v9197
      %v9219 = vadd.f32 %v9218, %v9198
      %v9220 = vadd.f32 %v9219, %v9199
      %v9221 = vadd.f32 %v9220, %v9200
      %v9222 = vadd.f32 %v9221, %v9201
      %v9223 = vadd.f32 %v9222, %v9202
      %v9224 = vadd.f32 %v9223, %v9203
      %v9225 = vadd.f32 %v9224, %v9204
      %v9226 = vadd.f32 %v9225, %v9205
      %v9227 = vadd.f32 %v9226, %v9206
      %v9228 = vadd.f32 %v9227, %v9207
      %v9229 = vadd.f32 %v9228, %v9208
      %v9230 = vadd.f32 %v9229, %v9209
      %v9231 = vadd.f32 %v9230, %v9210
      %v9232 = vadd.f32 %v9231, %v9211
      %v9233 = vsel %vm9158, %v9212, 0.0
      %v9234 = vadd.f32 %v9232, %v9233
      %v9235 = vrot.slane %v9234, 4
      %v9236 = vadd.f32 %v9234, %v9235
      %v9237 = vrot.slane %v9236, 2
      %v9238 = vadd.f32 %v9236, %v9237
      %v9239 = vrot.slane %v9238, 1
      %v9240 = vadd.f32 %v9238, %v9239
      %v9241 = vmul.f32 %v9240, %v9167
      %v9242 = vadd.f32 %v9241, 1e-05
      %v9243 = vrsqrt.pop %v9242
      %v9244 = vmul.f32 %v9169, %v9243
      %v9245 = vmul.f32 %v9170, %v9243
      %v9246 = vmul.f32 %v9171, %v9243
      %v9247 = vmul.f32 %v9172, %v9243
      %v9248 = vmul.f32 %v9173, %v9243
      %v9249 = vmul.f32 %v9174, %v9243
      %v9250 = vmul.f32 %v9175, %v9243
      %v9251 = vmul.f32 %v9176, %v9243
      %v9252 = vmul.f32 %v9177, %v9243
      %v9253 = vmul.f32 %v9178, %v9243
      %v9254 = vmul.f32 %v9179, %v9243
      %v9255 = vmul.f32 %v9180, %v9243
      %v9256 = vmul.f32 %v9181, %v9243
      %v9257 = vmul.f32 %v9182, %v9243
      %v9258 = vmul.f32 %v9183, %v9243
      %v9259 = vmul.f32 %v9184, %v9243
      %v9260 = vmul.f32 %v9185, %v9243
      %v9261 = vmul.f32 %v9186, %v9243
      %v9262 = vmul.f32 %v9187, %v9243
      %v9263 = vmul.f32 %v9188, %v9243
      %v9264 = vmul.f32 %v9189, %v9243
      %v9265 = vmul.f32 %v9190, %v9243
      %v9266 = vld [vmem:[%s3] sm:$0x1]
      %v9268 = vlaneseq
      %v9269 = vshrl.u32 %v9268, 7
      %v9270 = vsub.s32 0, %v9269
      %v9271 = vrot.slane %v9266, %v9270
      %v9273 = vmul.f32 %v9244, %v9271
      %v9274 = vmul.f32 %v9245, %v9271
      %v9275 = vmul.f32 %v9246, %v9271
      %v9276 = vmul.f32 %v9247, %v9271
      %v9277 = vmul.f32 %v9248, %v9271
      %v9278 = vmul.f32 %v9249, %v9271
      %v9279 = vmul.f32 %v9250, %v9271
      %v9280 = vmul.f32 %v9251, %v9271
      %v9281 = vmul.f32 %v9252, %v9271
      %v9282 = vmul.f32 %v9253, %v9271
      %v9283 = vmul.f32 %v9254, %v9271
      %v9284 = vmul.f32 %v9255, %v9271
      %v9285 = vmul.f32 %v9256, %v9271
      %v9286 = vmul.f32 %v9257, %v9271
      %v9287 = vmul.f32 %v9258, %v9271
      %v9288 = vmul.f32 %v9259, %v9271
      %v9289 = vmul.f32 %v9260, %v9271
      %v9290 = vmul.f32 %v9261, %v9271
      %v9291 = vmul.f32 %v9262, %v9271
      %v9292 = vmul.f32 %v9263, %v9271
      %v9293 = vmul.f32 %v9264, %v9271
      %v9294 = vmul.f32 %v9265, %v9271
      %v9295 = vld [vmem:[%s4] sm:$0x1]
      %v9297 = vlaneseq
      %v9298 = vshrl.u32 %v9297, 7
      %v9299 = vsub.s32 0, %v9298
      %v9300 = vrot.slane %v9295, %v9299
      %v9302 = vadd.f32 %v9273, %v9300
      %v9303 = vadd.f32 %v9274, %v9300
      %v9304 = vadd.f32 %v9275, %v9300
      %v9305 = vadd.f32 %v9276, %v9300
      %v9306 = vadd.f32 %v9277, %v9300
      %v9307 = vadd.f32 %v9278, %v9300
      %v9308 = vadd.f32 %v9279, %v9300
      %v9309 = vadd.f32 %v9280, %v9300
      %v9310 = vadd.f32 %v9281, %v9300
      %v9311 = vadd.f32 %v9282, %v9300
      %v9312 = vadd.f32 %v9283, %v9300
      %v9313 = vadd.f32 %v9284, %v9300
      %v9314 = vadd.f32 %v9285, %v9300
      %v9315 = vadd.f32 %v9286, %v9300
      %v9316 = vadd.f32 %v9287, %v9300
      %v9317 = vadd.f32 %v9288, %v9300
      %v9318 = vadd.f32 %v9289, %v9300
      %v9319 = vadd.f32 %v9290, %v9300
      %v9320 = vadd.f32 %v9291, %v9300
      %v9321 = vadd.f32 %v9292, %v9300
      %v9322 = vadd.f32 %v9293, %v9300
      %v9323 = vadd.f32 %v9294, %v9300
      %vm9324 = vcmp.ge.f32.partialorder %v9302, 0.0
      %vm9325 = vcmp.ge.f32.partialorder %v9303, 0.0
      %vm9326 = vcmp.ge.f32.partialorder %v9304, 0.0
      %vm9327 = vcmp.ge.f32.partialorder %v9305, 0.0
      %vm9328 = vcmp.ge.f32.partialorder %v9306, 0.0
      %vm9329 = vcmp.ge.f32.partialorder %v9307, 0.0
      %vm9330 = vcmp.ge.f32.partialorder %v9308, 0.0
      %vm9331 = vcmp.ge.f32.partialorder %v9309, 0.0
      %vm9332 = vcmp.ge.f32.partialorder %v9310, 0.0
      %vm9333 = vcmp.ge.f32.partialorder %v9311, 0.0
      %vm9334 = vcmp.ge.f32.partialorder %v9312, 0.0
      %vm9335 = vcmp.ge.f32.partialorder %v9313, 0.0
      %vm9336 = vcmp.ge.f32.partialorder %v9314, 0.0
      %vm9337 = vcmp.ge.f32.partialorder %v9315, 0.0
      %vm9338 = vcmp.ge.f32.partialorder %v9316, 0.0
      %vm9339 = vcmp.ge.f32.partialorder %v9317, 0.0
      %vm9340 = vcmp.ge.f32.partialorder %v9318, 0.0
      %vm9341 = vcmp.ge.f32.partialorder %v9319, 0.0
      %vm9342 = vcmp.ge.f32.partialorder %v9320, 0.0
      %vm9343 = vcmp.ge.f32.partialorder %v9321, 0.0
      %vm9344 = vcmp.ge.f32.partialorder %v9322, 0.0
      %vm9345 = vcmp.ge.f32.partialorder %v9323, 0.0
      %v9346 = vmul.f32 %v9302, 0.2
      %v9347 = vmul.f32 %v9303, 0.2
      %v9348 = vmul.f32 %v9304, 0.2
      %v9349 = vmul.f32 %v9305, 0.2
      %v9350 = vmul.f32 %v9306, 0.2
      %v9351 = vmul.f32 %v9307, 0.2
      %v9352 = vmul.f32 %v9308, 0.2
      %v9353 = vmul.f32 %v9309, 0.2
      %v9354 = vmul.f32 %v9310, 0.2
      %v9355 = vmul.f32 %v9311, 0.2
      %v9356 = vmul.f32 %v9312, 0.2
      %v9357 = vmul.f32 %v9313, 0.2
      %v9358 = vmul.f32 %v9314, 0.2
      %v9359 = vmul.f32 %v9315, 0.2
      %v9360 = vmul.f32 %v9316, 0.2
      %v9361 = vmul.f32 %v9317, 0.2
      %v9362 = vmul.f32 %v9318, 0.2
      %v9363 = vmul.f32 %v9319, 0.2
      %v9364 = vmul.f32 %v9320, 0.2
      %v9365 = vmul.f32 %v9321, 0.2
      %v9366 = vmul.f32 %v9322, 0.2
      %v9367 = vmul.f32 %v9323, 0.2
      %v9368 = vsel %vm9324, %v9302, %v9346
      %v9369 = vsel %vm9325, %v9303, %v9347
      %v9370 = vsel %vm9326, %v9304, %v9348
      %v9371 = vsel %vm9327, %v9305, %v9349
      %v9372 = vsel %vm9328, %v9306, %v9350
      %v9373 = vsel %vm9329, %v9307, %v9351
      %v9374 = vsel %vm9330, %v9308, %v9352
      %v9375 = vsel %vm9331, %v9309, %v9353
      %v9376 = vsel %vm9332, %v9310, %v9354
      %v9377 = vsel %vm9333, %v9311, %v9355
      %v9378 = vsel %vm9334, %v9312, %v9356
      %v9379 = vsel %vm9335, %v9313, %v9357
      %v9380 = vsel %vm9336, %v9314, %v9358
      %v9381 = vsel %vm9337, %v9315, %v9359
      %v9382 = vsel %vm9338, %v9316, %v9360
      %v9383 = vsel %vm9339, %v9317, %v9361
      %v9384 = vsel %vm9340, %v9318, %v9362
      %v9385 = vsel %vm9341, %v9319, %v9363
      %v9386 = vsel %vm9342, %v9320, %v9364
      %v9387 = vsel %vm9343, %v9321, %v9365
      %v9388 = vsel %vm9344, %v9322, %v9366
      %v9389 = vsel %vm9345, %v9323, %v9367
      %9390 = vst [vmem:[#allocation3] sm:$0xff] %v9368
      %9391 = vst [vmem:[#allocation3 + $0x8] sm:$0xff] %v9369
      %9392 = vst [vmem:[#allocation3 + $0x10] sm:$0xff] %v9370
      %9393 = vst [vmem:[#allocation3 + $0x18] sm:$0xff] %v9371
      %9394 = vst [vmem:[#allocation3 + $0x20] sm:$0xff] %v9372
      %9395 = vst [vmem:[#allocation3 + $0x28] sm:$0xff] %v9373
      %9396 = vst [vmem:[#allocation3 + $0x30] sm:$0xff] %v9374
      %9397 = vst [vmem:[#allocation3 + $0x38] sm:$0xff] %v9375
      %9398 = vst [vmem:[#allocation3 + $0x40] sm:$0xff] %v9376
      %9399 = vst [vmem:[#allocation3 + $0x48] sm:$0xff] %v9377
      %9400 = vst [vmem:[#allocation3 + $0x50] sm:$0xff] %v9378
      %9401 = vst [vmem:[#allocation3 + $0x58] sm:$0xff] %v9379
      %9402 = vst [vmem:[#allocation3 + $0x60] sm:$0xff] %v9380
      %9403 = vst [vmem:[#allocation3 + $0x68] sm:$0xff] %v9381
      %9404 = vst [vmem:[#allocation3 + $0x70] sm:$0xff] %v9382
      %9405 = vst [vmem:[#allocation3 + $0x78] sm:$0xff] %v9383
      %9406 = vst [vmem:[#allocation3 + $0x80] sm:$0xff] %v9384
      %9407 = vst [vmem:[#allocation3 + $0x88] sm:$0xff] %v9385
      %9408 = vst [vmem:[#allocation3 + $0x90] sm:$0xff] %v9386
      %9409 = vst [vmem:[#allocation3 + $0x98] sm:$0xff] %v9387
      %9410 = vst [vmem:[#allocation3 + $0xa0] sm:$0xff] %v9388
      %9411 = vst [vmem:[#allocation3 + $0xa8] sm:$0x1] %v9389
      %v9412 = vld [vmem:[#allocation3] ss:$2 sm:$0x3f]
      %s9413 = scalar_lea.vmem [#allocation3], 1
      %v9414 = vld [vmem:[%s9413] ss:$2 sm:$0x3f]
      %v9415 = vadd.f32 %v9412, %v9414
      %s9416 = scalar_lea.vmem [#allocation3], 13
      %v9417 = vld [vmem:[%s9416] ss:$2 sm:$0x3f]
      %v9418 = vadd.f32 %v9415, %v9417
      %s9419 = scalar_lea.vmem [#allocation3], 14
      %v9420 = vld [vmem:[%s9419] ss:$2 sm:$0x3f]
      %v9421 = vadd.f32 %v9418, %v9420
      %v9422 = vmul.f32 %v9421, 0.25
      %9423 = vst [vmem:[%s224] sm:$0x3f] %v9422
      %s9424 = scalar_lea.vmem [#allocation3], 26
      %v9425 = vld [vmem:[%s9424] ss:$2 sm:$0x3f]
      %s9426 = scalar_lea.vmem [#allocation3], 27
      %v9427 = vld [vmem:[%s9426] ss:$2 sm:$0x3f]
      %v9428 = vadd.f32 %v9425, %v9427
      %s9429 = scalar_lea.vmem [#allocation3], 39
      %v9430 = vld [vmem:[%s9429] ss:$2 sm:$0x3f]
      %v9431 = vadd.f32 %v9428, %v9430
      %s9432 = scalar_lea.vmem [#allocation3], 40
      %v9433 = vld [vmem:[%s9432] ss:$2 sm:$0x3f]
      %v9434 = vadd.f32 %v9431, %v9433
      %v9435 = vmul.f32 %v9434, 0.25
      %s9436 = scalar_lea.vmem %s224, 8
      %9437 = vst [vmem:[%s9436] sm:$0x3f] %v9435
      %s9438 = scalar_lea.vmem [#allocation3], 52
      %v9439 = vld [vmem:[%s9438] ss:$2 sm:$0x3f]
      %s9440 = scalar_lea.vmem [#allocation3], 53
      %v9441 = vld [vmem:[%s9440] ss:$2 sm:$0x3f]
      %v9442 = vadd.f32 %v9439, %v9441
      %s9443 = scalar_lea.vmem [#allocation3], 65
      %v9444 = vld [vmem:[%s9443] ss:$2 sm:$0x3f]
      %v9445 = vadd.f32 %v9442, %v9444
      %s9446 = scalar_lea.vmem [#allocation3], 66
      %v9447 = vld [vmem:[%s9446] ss:$2 sm:$0x3f]
      %v9448 = vadd.f32 %v9445, %v9447
      %v9449 = vmul.f32 %v9448, 0.25
      %s9450 = scalar_lea.vmem %s224, 16
      %9451 = vst [vmem:[%s9450] sm:$0x3f] %v9449
      %s9452 = scalar_lea.vmem [#allocation3], 78
      %v9453 = vld [vmem:[%s9452] ss:$2 sm:$0x3f]
      %s9454 = scalar_lea.vmem [#allocation3], 79
      %v9455 = vld [vmem:[%s9454] ss:$2 sm:$0x3f]
      %v9456 = vadd.f32 %v9453, %v9455
      %s9457 = scalar_lea.vmem [#allocation3], 91
      %v9458 = vld [vmem:[%s9457] ss:$2 sm:$0x3f]
      %v9459 = vadd.f32 %v9456, %v9458
      %s9460 = scalar_lea.vmem [#allocation3], 92
      %v9461 = vld [vmem:[%s9460] ss:$2 sm:$0x3f]
      %v9462 = vadd.f32 %v9459, %v9461
      %v9463 = vmul.f32 %v9462, 0.25
      %s9464 = scalar_lea.vmem %s224, 24
      %9465 = vst [vmem:[%s9464] sm:$0x3f] %v9463
      %s9466 = scalar_lea.vmem [#allocation3], 104
      %v9467 = vld [vmem:[%s9466] ss:$2 sm:$0x3f]
      %s9468 = scalar_lea.vmem [#allocation3], 105
      %v9469 = vld [vmem:[%s9468] ss:$2 sm:$0x3f]
      %v9470 = vadd.f32 %v9467, %v9469
      %s9471 = scalar_lea.vmem [#allocation3], 117
      %v9472 = vld [vmem:[%s9471] ss:$2 sm:$0x3f]
      %v9473 = vadd.f32 %v9470, %v9472
      %s9474 = scalar_lea.vmem [#allocation3], 118
      %v9475 = vld [vmem:[%s9474] ss:$2 sm:$0x3f]
      %v9476 = vadd.f32 %v9473, %v9475
      %v9477 = vmul.f32 %v9476, 0.25
      %s9478 = scalar_lea.vmem %s224, 32
      %9479 = vst [vmem:[%s9478] sm:$0x3f] %v9477
      %s9480 = scalar_lea.vmem [#allocation3], 130
      %v9481 = vld [vmem:[%s9480] ss:$2 sm:$0x3f]
      %s9482 = scalar_lea.vmem [#allocation3], 131
      %v9483 = vld [vmem:[%s9482] ss:$2 sm:$0x3f]
      %v9484 = vadd.f32 %v9481, %v9483
      %s9485 = scalar_lea.vmem [#allocation3], 143
      %v9486 = vld [vmem:[%s9485] ss:$2 sm:$0x3f]
      %v9487 = vadd.f32 %v9484, %v9486
      %s9488 = scalar_lea.vmem [#allocation3], 144
      %v9489 = vld [vmem:[%s9488] ss:$2 sm:$0x3f]
      %v9490 = vadd.f32 %v9487, %v9489
      %v9491 = vmul.f32 %v9490, 0.25
      %s9492 = scalar_lea.vmem %s224, 40
      %9493 = vst [vmem:[%s9492] sm:$0x3f] %v9491
      %p9494 = scmp.lt.s32.totalorder %s16, 1
      %s9495 = scalar_select %p9494, %s16, 1
      %s9496 = smul.addr %s9495, 6
      %s9497 = smul.addr %s9496, 8
      %s9498 = scalar_lea.vmem %s5, %s9497
      // Predicated region
      $region41: #{tpu_custom_call.1} parent=39 // pred_check
        %p9499 = pneg %p144
      $region42: #{tpu_custom_call.1} parent=39 // pred_check_branch
        %9501 = sbr.rel (%p9499) target = $region44
      $region43: #{tpu_custom_call.1} parent=39 // pred_region
        _
      $region44: #{tpu_custom_call.1} parent=39 // pred_fallthru
        _
    $region40: #{tpu_custom_call.1} parent=5 // pred_fallthru
      _
    %p9502 = scmp.le.s32.totalorder 2, %s11
    // Predicated region
    $region45: #{tpu_custom_call.1} parent=5 // pred_check
      %p9503 = pneg %p9502
    $region46: #{tpu_custom_call.1} parent=5 // pred_check_branch
      %9505 = sbr.rel (%p9503) target = $region48
    $region47: #{tpu_custom_call.1} parent=5 // pred_region
      %s9506 = ssub.s32 %s11, 2
      // Predicated region
      $region49: #{tpu_custom_call.1} parent=47 // pred_check
        %p9507 = pneg %p150
      $region50: #{tpu_custom_call.1} parent=47 // pred_check_branch
        %9509 = sbr.rel (%p9507) target = $region52
      $region51: #{tpu_custom_call.1} parent=47 // pred_region
        %p9510 = scmp.lt.s32.totalorder %s17, 1
        %s9511 = scalar_select %p9510, %s17, 1
        %s9512 = smul.addr %s9511, 6
        %s9513 = smul.addr %s9512, 8
        %s9514 = scalar_lea.vmem %s5, %s9513
      $region52: #{tpu_custom_call.1} parent=47 // pred_fallthru
        _
    $region48: #{tpu_custom_call.1} parent=5 // pred_fallthru
      _
  $region6: #{tpu_custom_call.1} parent=0 // loop_footer
    %s15 = sadd.s32 1, %s11
  $region7: #{tpu_custom_call.1} parent=0 // loop_footer_branch
    %10 = sbr.rel target = $region3
  $region8: #{tpu_custom_call.1} parent=0 // loop_exit
    _

</llo_original>
